<compile_context>
chip_gen: v7x
topology: tpu7x:2x2x1
jax: 0.10.0
libtpu: 0.0.40
codegen_flags: <defaults>
</compile_context>

<pallas_src>
import functools
import math

import jax
import jax.numpy as jnp
from jax import lax
from jax.experimental import pallas as pl
from jax.experimental.pallas import tpu as pltpu

LEAKY_SLOPE = 0.2
BN_EPS = 1e-5


# ----------------------------------------------------------------------------
# Pallas kernels
# ----------------------------------------------------------------------------
def _conv_tap_kernel(x_ref, w_ref, y_ref, s_ref):
    """Pass 1: one output depth-plane of one batch element.

    x_ref: (1, 2, OD+1, OH*OW, 16*Cin) bf16  -- depth-parity split, (H,W)-unfolded
    w_ref: (4, 16*Cin, Cout)           bf16  -- one weight slab per depth tap
    y_ref: (1, 1, OH*OW, Cout)         f32   -- pre-BN conv output
    s_ref: (1, 1, 2, Cout)             f32   -- per-tile [sum, sum of squares]
    """
    z = pl.program_id(1)
    # Depth tap dz reads padded plane 2z+dz == parity (dz%2), plane index z+dz//2.
    acc = jnp.dot(x_ref[0, 0, z], w_ref[0], preferred_element_type=jnp.float32)
    for dz in range(1, 4):
        acc = acc + jnp.dot(
            x_ref[0, dz % 2, z + dz // 2], w_ref[dz],
            preferred_element_type=jnp.float32)
    y_ref[0, 0] = acc
    s_ref[0, 0, 0:1, :] = jnp.sum(acc, axis=0, keepdims=True)
    s_ref[0, 0, 1:2, :] = jnp.sum(acc * acc, axis=0, keepdims=True)


def _bn_lrelu_kernel(y_ref, s_ref, g_ref, b_ref, o_ref, *, inv_count):
    """Pass 2: combine stat partials, normalize (biased var) + LeakyReLU(0.2)."""
    s = jnp.sum(jnp.sum(s_ref[...], axis=0), axis=0)          # (2, C)
    mean = s[0:1, :] * inv_count                               # (1, C)
    var = s[1:2, :] * inv_count - mean * mean                  # E[y^2] - mu^2
    scale = lax.rsqrt(var + BN_EPS) * g_ref[...]
    y = y_ref[0, 0]                                            # (OH*OW, C) f32
    yn = (y - mean) * scale + b_ref[...]
    o_ref[0, 0] = jnp.where(yn >= 0.0, yn, LEAKY_SLOPE * yn).astype(o_ref.dtype)


def _linear_kernel(x_ref, w_ref, b_ref, o_ref):
    # w stays in PyTorch (out, in) layout: contract the last dims (no transpose copy).
    o_ref[...] = lax.dot_general(
        x_ref[...], w_ref[...],
        dimension_numbers=(((1,), (1,)), ((), ())),
        preferred_element_type=jnp.float32) + b_ref[...]


# ----------------------------------------------------------------------------
# Pallas wrappers
# ----------------------------------------------------------------------------
def _conv_pass(xs, wk, out_spatial):
    """xs: (B, 2, OD+1, OH*OW, 16*Cin) bf16, wk: (4, 16*Cin, Cout) bf16."""
    B = xs.shape[0]
    OD, OH, OW = out_spatial
    OHW = OH * OW
    K = xs.shape[-1]
    Cout = wk.shape[-1]
    return pl.pallas_call(
        _conv_tap_kernel,
        out_shape=(
            jax.ShapeDtypeStruct((B, OD, OHW, Cout), jnp.float32),
            jax.ShapeDtypeStruct((B, OD, 2, Cout), jnp.float32),
        ),
        grid=(B, OD),
        in_specs=[
            pl.BlockSpec((1, 2, OD + 1, OHW, K), lambda b, z: (b, 0, 0, 0, 0)),
            pl.BlockSpec((4, K, Cout), lambda b, z: (0, 0, 0)),
        ],
        out_specs=(
            pl.BlockSpec((1, 1, OHW, Cout), lambda b, z: (b, z, 0, 0)),
            pl.BlockSpec((1, 1, 2, Cout), lambda b, z: (b, z, 0, 0)),
        ),
        compiler_params=pltpu.CompilerParams(
            dimension_semantics=("parallel", "parallel")),
    )(xs, wk)


def _bn_lrelu(y, stats, gamma, beta):
    B, OD, OHW, C = y.shape
    inv_count = 1.0 / float(B * OD * OHW)
    kernel = functools.partial(_bn_lrelu_kernel, inv_count=inv_count)
    return pl.pallas_call(
        kernel,
        out_shape=jax.ShapeDtypeStruct((B, OD, OHW, C), jnp.bfloat16),
        grid=(B, OD),
        in_specs=[
            pl.BlockSpec((1, 1, OHW, C), lambda b, z: (b, z, 0, 0)),
            pl.BlockSpec((B, OD, 2, C), lambda b, z: (0, 0, 0, 0)),
            pl.BlockSpec((1, C), lambda b, z: (0, 0)),
            pl.BlockSpec((1, C), lambda b, z: (0, 0)),
        ],
        out_specs=pl.BlockSpec((1, 1, OHW, C), lambda b, z: (b, z, 0, 0)),
        compiler_params=pltpu.CompilerParams(
            dimension_semantics=("parallel", "parallel")),
    )(y, stats, gamma.reshape(1, C), beta.reshape(1, C))


def _linear(x, w, bias):
    """x: (M, K) bf16, w: (N, K) bf16 (PyTorch layout), bias: (N,) f32."""
    M, K = x.shape
    N = w.shape[0]
    return pl.pallas_call(
        _linear_kernel,
        out_shape=jax.ShapeDtypeStruct((M, N), jnp.float32),
        grid=(1,),
        in_specs=[
            pl.BlockSpec((M, K), lambda i: (0, 0)),
            pl.BlockSpec((N, K), lambda i: (0, 0)),
            pl.BlockSpec((1, N), lambda i: (0, 0)),
        ],
        out_specs=pl.BlockSpec((M, N), lambda i: (0, 0)),
        compiler_params=pltpu.CompilerParams(dimension_semantics=("arbitrary",)),
    )(x, w, bias.reshape(1, N))


# ----------------------------------------------------------------------------
# Glue: pad + (H, W) unfold + depth parity split (channels-last, bf16)
# ----------------------------------------------------------------------------
def _unfold_stride2_k4(act):
    """act: (B, D, H, W, C) -> (B, 2, D//2+1, (H//2)*(W//2), 16*C) bf16.

    Unfolds the 4x4 (dy, dx) taps of a stride-2 / pad-1 conv into the minor axis
    (tap-major, channel-minor) and splits the padded depth axis by parity so the
    kernel's 4 depth taps are contiguous plane reads from VMEM.
    """
    B, D, H, W, C = act.shape
    OH, OW = H // 2, W // 2
    a = act.astype(jnp.bfloat16)
    ap = jnp.pad(a, ((0, 0), (1, 1), (1, 1), (1, 1), (0, 0)))
    cols = []
    for dy in range(4):
        for dx in range(4):
            cols.append(ap[:, :, dy:dy + 2 * OH:2, dx:dx + 2 * OW:2, :])
    u = jnp.stack(cols, axis=4)                       # (B, D+2, OH, OW, 16, C)
    u = u.reshape(B, D + 2, OH * OW, 16 * C)
    return jnp.stack([u[:, 0::2], u[:, 1::2]], axis=1)  # (B, 2, OD+1, OHW, 16C)


def _pack_conv_weight(w):
    """(Cout, Cin, 4, 4, 4) OIDHW -> (4, 16*Cin, Cout) bf16, (dz | dy,dx,ci)."""
    cout, cin = w.shape[0], w.shape[1]
    wt = jnp.transpose(w, (2, 3, 4, 1, 0)).reshape(4, 16 * cin, cout)
    return wt.astype(jnp.bfloat16)


# ----------------------------------------------------------------------------
# Conv3dEncoder: parameters + forward
# ----------------------------------------------------------------------------
def init_params(key, bd, in_channels=3, dim=32, out_conv_channels=512):
    c1 = out_conv_channels // 8
    c2 = out_conv_channels // 4
    c3 = out_conv_channels // 2
    c4 = out_conv_channels
    out_dim = dim // 16
    fd = out_conv_channels * out_dim ** 3

    keys = jax.random.split(key, 14)

    def conv_w(k, cout, cin):
        bound = 1.0 / math.sqrt(cin * 4 ** 3)
        return jax.random.uniform(k, (cout, cin, 4, 4, 4), jnp.float32, -bound, bound)

    params = {}
    chans = [(c1, in_channels), (c2, c1), (c3, c2), (c4, c3)]
    for i, (co, ci) in enumerate(chans, start=1):
        w = conv_w(keys[3 * i - 3], co, ci)
        params[f"w{i}"] = w                          # PyTorch layout (reference)
        params[f"wk{i}"] = _pack_conv_weight(w)      # kernel layout, bf16 (hoisted)
        params[f"g{i}"] = 1.0 + 0.1 * jax.random.normal(keys[3 * i - 2], (co,), jnp.float32)
        params[f"b{i}"] = 0.1 * jax.random.normal(keys[3 * i - 1], (co,), jnp.float32)
    lb = 1.0 / math.sqrt(fd)
    params["fc_w"] = jax.random.uniform(keys[12], (bd, fd), jnp.float32, -lb, lb)
    params["fc_wk"] = params["fc_w"].astype(jnp.bfloat16)   # hoisted bf16 copy
    params["fc_b"] = jax.random.uniform(keys[13], (bd,), jnp.float32, -lb, lb)
    return params


def conv3d_encoder_forward(x, params):
    # Module input is (B, nb, nb, nb, C) channels-last.  PyTorch permutes it to
    # NCDHW only to feed nn.Conv3d; doing channels-last convs on the original
    # tensor is numerically identical, so activations stay channels-last.
    act = x
    for i in range(1, 5):
        B, D, H, W, _ = act.shape
        OD, OH, OW = D // 2, H // 2, W // 2
        xs = _unfold_stride2_k4(act)
        y, stats = _conv_pass(xs, params[f"wk{i}"], (OD, OH, OW))
        act = _bn_lrelu(y, stats, params[f"g{i}"], params[f"b{i}"])
        act = act.reshape(B, OD, OH, OW, act.shape[-1])
    # Match PyTorch's x.view(-1, fd) on an NCDHW tensor: channel-major flatten.
    B, od = act.shape[0], act.shape[1]
    c4 = act.shape[-1]
    spatial = od * od * od
    xf = act.reshape(B, spatial, c4).transpose(0, 2, 1).reshape(B, c4 * spatial)
    return _linear(xf, params["fc_wk"], params["fc_b"])


# ----------------------------------------------------------------------------
# Pure-JAX reference.  emulate_bf16=True rounds GEMM operands to bf16 (same
# precision policy as the kernels: bf16 inputs, f32 accumulation / BN math).
# ----------------------------------------------------------------------------
def ref_forward(x, params, emulate_bf16=True):
    def rnd(a):
        return a.astype(jnp.bfloat16).astype(jnp.float32) if emulate_bf16 else a

    bs, ic, nb = x.shape[0], x.shape[-1], x.shape[1]
    xr = x.reshape(bs, -1, ic)
    xr = jnp.swapaxes(xr, 1, 2)
    xr = xr.reshape(bs, ic, nb, nb, nb)
    for i in range(1, 5):
        y = lax.conv_general_dilated(
            rnd(xr), rnd(params[f"w{i}"]), window_strides=(2, 2, 2),
            padding=((1, 1), (1, 1), (1, 1)),
            dimension_numbers=("NCDHW", "OIDHW", "NCDHW"),
            precision=lax.Precision.HIGHEST)
        mu = jnp.mean(y, axis=(0, 2, 3, 4), keepdims=True)
        var = jnp.mean((y - mu) ** 2, axis=(0, 2, 3, 4), keepdims=True)
        g = params[f"g{i}"].reshape(1, -1, 1, 1, 1)
        b = params[f"b{i}"].reshape(1, -1, 1, 1, 1)
        y = (y - mu) * lax.rsqrt(var + BN_EPS) * g + b
        xr = jnp.where(y >= 0.0, y, LEAKY_SLOPE * y)
    fd = xr.shape[1] * xr.shape[2] * xr.shape[3] * xr.shape[4]
    xf = xr.reshape(bs, fd)
    return jnp.dot(rnd(xf), rnd(params["fc_w"]).T,
                   precision=lax.Precision.HIGHEST) + params["fc_b"]


# ----------------------------------------------------------------------------
if __name__ == "__main__":
    # Small but structurally consistent config: dim must be a multiple of 16.
    BD = 32
    IN_CHANNELS = 3
    DIM = 16                  # spatial: 16 -> 8 -> 4 -> 2 -> 1
    OUT_CONV_CHANNELS = 64    # channels: 3 -> 8 -> 16 -> 32 -> 64
    BATCH = 2

    key = jax.random.PRNGKey(0)
    k_param, k_x = jax.random.split(key)
    params = init_params(k_param, BD, IN_CHANNELS, DIM, OUT_CONV_CHANNELS)

    # Module input layout: (batch, nb, nb, nb, in_channels), channels-last.
    x = jax.random.normal(k_x, (BATCH, DIM, DIM, DIM, IN_CHANNELS), jnp.float32)

    out = jax.block_until_ready(jax.jit(conv3d_encoder_forward)(x, params))
    assert out.shape == (BATCH, BD), out.shape

    # Precision-matched reference (bf16 GEMM operands, f32 accumulation/BN).
    ref = jax.block_until_ready(ref_forward(x, params, emulate_bf16=True))
    max_err = float(jnp.max(jnp.abs(out - ref)))
    assert jnp.allclose(out, ref, rtol=5e-3, atol=5e-3), max_err

    print("KERNEL_OK")
</pallas_src>

<mosaic_0001>
module attributes {stable_mosaic.version = 11 : i64} {
  func.func @_conv_tap_kernel(%arg0: i32, %arg1: i32, %arg2: memref<1x2x9x64x48xbf16, #tpu.memory_space<vmem>>, %arg3: memref<4x48x8xbf16, #tpu.memory_space<vmem>>, %arg4: memref<1x1x64x8xf32, #tpu.memory_space<vmem>>, %arg5: memref<1x1x2x8xf32, #tpu.memory_space<vmem>>) attributes {dimension_semantics = [#tpu.dimension_semantics<parallel>, #tpu.dimension_semantics<parallel>], iteration_bounds = array<i64: 2, 8>, scalar_prefetch = 0 : i64, scratch_operands = 0 : i64, tpu.core_type = #tpu.core_type<tc>, window_params = [{transform_indices = @transform_0, window_bounds = array<i64: 1, 2, 9, 64, 48>}, {pipeline_mode = #tpu.pipeline_mode<synchronous>, transform_indices = @transform_1, window_bounds = array<i64: 4, 48, 8>}, {transform_indices = @transform_2, window_bounds = array<i64: 1, 1, 64, 8>}, {transform_indices = @transform_3, window_bounds = array<i64: 1, 1, 2, 8>}]} {
    %c0 = arith.constant 0 : index
    %c0_0 = arith.constant 0 : index
    %0 = arith.index_cast %arg1 : i32 to index
    %c0_1 = arith.constant 0 : index
    %c0_2 = arith.constant 0 : index
    %1 = vector.load %arg2[%c0, %c0_0, %0, %c0_1, %c0_2] : memref<1x2x9x64x48xbf16, #tpu.memory_space<vmem>>, vector<1x1x1x64x48xbf16>
    %2 = vector.shape_cast %1 : vector<1x1x1x64x48xbf16> to vector<64x48xbf16>
    %c0_3 = arith.constant 0 : index
    %c0_4 = arith.constant 0 : index
    %c0_5 = arith.constant 0 : index
    %3 = vector.load %arg3[%c0_3, %c0_4, %c0_5] : memref<4x48x8xbf16, #tpu.memory_space<vmem>>, vector<1x48x8xbf16>
    %4 = vector.shape_cast %3 : vector<1x48x8xbf16> to vector<48x8xbf16>
    %cst = arith.constant dense<0.000000e+00> : vector<64x8xf32>
    %5 = tpu.matmul %2, %4, %cst {dimension_numbers = #tpu.dot_dimension_numbers<[1], [0], [0], [1], [0, 0, 1, 1], [], []>} : vector<64x48xbf16>, vector<48x8xbf16>, vector<64x8xf32> -> vector<64x8xf32>
    %c0_i32 = arith.constant 0 : i32
    %6 = arith.addi %arg1, %c0_i32 : i32
    %c0_6 = arith.constant 0 : index
    %c1 = arith.constant 1 : index
    %7 = arith.index_cast %6 : i32 to index
    %c0_7 = arith.constant 0 : index
    %c0_8 = arith.constant 0 : index
    %8 = vector.load %arg2[%c0_6, %c1, %7, %c0_7, %c0_8] : memref<1x2x9x64x48xbf16, #tpu.memory_space<vmem>>, vector<1x1x1x64x48xbf16>
    %9 = vector.shape_cast %8 : vector<1x1x1x64x48xbf16> to vector<64x48xbf16>
    %c1_9 = arith.constant 1 : index
    %c0_10 = arith.constant 0 : index
    %c0_11 = arith.constant 0 : index
    %10 = vector.load %arg3[%c1_9, %c0_10, %c0_11] : memref<4x48x8xbf16, #tpu.memory_space<vmem>>, vector<1x48x8xbf16>
    %11 = vector.shape_cast %10 : vector<1x48x8xbf16> to vector<48x8xbf16>
    %cst_12 = arith.constant dense<0.000000e+00> : vector<64x8xf32>
    %12 = tpu.matmul %9, %11, %cst_12 {dimension_numbers = #tpu.dot_dimension_numbers<[1], [0], [0], [1], [0, 0, 1, 1], [], []>} : vector<64x48xbf16>, vector<48x8xbf16>, vector<64x8xf32> -> vector<64x8xf32>
    %13 = arith.addf %5, %12 : vector<64x8xf32>
    %c1_i32 = arith.constant 1 : i32
    %14 = arith.addi %arg1, %c1_i32 : i32
    %c0_13 = arith.constant 0 : index
    %c0_14 = arith.constant 0 : index
    %15 = arith.index_cast %14 : i32 to index
    %c0_15 = arith.constant 0 : index
    %c0_16 = arith.constant 0 : index
    %16 = vector.load %arg2[%c0_13, %c0_14, %15, %c0_15, %c0_16] : memref<1x2x9x64x48xbf16, #tpu.memory_space<vmem>>, vector<1x1x1x64x48xbf16>
    %17 = vector.shape_cast %16 : vector<1x1x1x64x48xbf16> to vector<64x48xbf16>
    %c2 = arith.constant 2 : index
    %c0_17 = arith.constant 0 : index
    %c0_18 = arith.constant 0 : index
    %18 = vector.load %arg3[%c2, %c0_17, %c0_18] : memref<4x48x8xbf16, #tpu.memory_space<vmem>>, vector<1x48x8xbf16>
    %19 = vector.shape_cast %18 : vector<1x48x8xbf16> to vector<48x8xbf16>
    %cst_19 = arith.constant dense<0.000000e+00> : vector<64x8xf32>
    %20 = tpu.matmul %17, %19, %cst_19 {dimension_numbers = #tpu.dot_dimension_numbers<[1], [0], [0], [1], [0, 0, 1, 1], [], []>} : vector<64x48xbf16>, vector<48x8xbf16>, vector<64x8xf32> -> vector<64x8xf32>
    %21 = arith.addf %13, %20 : vector<64x8xf32>
    %c1_i32_20 = arith.constant 1 : i32
    %22 = arith.addi %arg1, %c1_i32_20 : i32
    %c0_21 = arith.constant 0 : index
    %c1_22 = arith.constant 1 : index
    %23 = arith.index_cast %22 : i32 to index
    %c0_23 = arith.constant 0 : index
    %c0_24 = arith.constant 0 : index
    %24 = vector.load %arg2[%c0_21, %c1_22, %23, %c0_23, %c0_24] : memref<1x2x9x64x48xbf16, #tpu.memory_space<vmem>>, vector<1x1x1x64x48xbf16>
    %25 = vector.shape_cast %24 : vector<1x1x1x64x48xbf16> to vector<64x48xbf16>
    %c3 = arith.constant 3 : index
    %c0_25 = arith.constant 0 : index
    %c0_26 = arith.constant 0 : index
    %26 = vector.load %arg3[%c3, %c0_25, %c0_26] : memref<4x48x8xbf16, #tpu.memory_space<vmem>>, vector<1x48x8xbf16>
    %27 = vector.shape_cast %26 : vector<1x48x8xbf16> to vector<48x8xbf16>
    %cst_27 = arith.constant dense<0.000000e+00> : vector<64x8xf32>
    %28 = tpu.matmul %25, %27, %cst_27 {dimension_numbers = #tpu.dot_dimension_numbers<[1], [0], [0], [1], [0, 0, 1, 1], [], []>} : vector<64x48xbf16>, vector<48x8xbf16>, vector<64x8xf32> -> vector<64x8xf32>
    %29 = arith.addf %21, %28 : vector<64x8xf32>
    %c0_28 = arith.constant 0 : index
    %c0_29 = arith.constant 0 : index
    %c0_30 = arith.constant 0 : index
    %c0_31 = arith.constant 0 : index
    %30 = vector.load %arg4[%c0_28, %c0_29, %c0_30, %c0_31] : memref<1x1x64x8xf32, #tpu.memory_space<vmem>>, vector<1x1x64x8xf32>
    %31 = vector.shape_cast %30 : vector<1x1x64x8xf32> to vector<64x8xf32>
    %32 = vector.shape_cast %29 : vector<64x8xf32> to vector<1x1x64x8xf32>
    tpu.vector_store %arg4[%c0_28, %c0_29, %c0_30, %c0_31], %32 {strides = array<i32>} : memref<1x1x64x8xf32, #tpu.memory_space<vmem>>, vector<1x1x64x8xf32>,
    %cst_32 = arith.constant dense<0.000000e+00> : vector<8xf32>
    %33 = vector.multi_reduction <add>, %29, %cst_32 [0] : vector<64x8xf32> to vector<8xf32>
    %34 = vector.shape_cast %33 : vector<8xf32> to vector<1x8xf32>
    %c0_33 = arith.constant 0 : index
    %c0_34 = arith.constant 0 : index
    %c0_35 = arith.constant 0 : index
    %c0_36 = arith.constant 0 : index
    %35 = vector.load %arg5[%c0_33, %c0_34, %c0_35, %c0_36] : memref<1x1x2x8xf32, #tpu.memory_space<vmem>>, vector<1x1x1x8xf32>
    %36 = vector.shape_cast %35 : vector<1x1x1x8xf32> to vector<1x8xf32>
    %37 = vector.shape_cast %34 : vector<1x8xf32> to vector<1x1x1x8xf32>
    tpu.vector_store %arg5[%c0_33, %c0_34, %c0_35, %c0_36], %37 {strides = array<i32>} : memref<1x1x2x8xf32, #tpu.memory_space<vmem>>, vector<1x1x1x8xf32>,
    %38 = arith.mulf %29, %29 : vector<64x8xf32>
    %cst_37 = arith.constant dense<0.000000e+00> : vector<8xf32>
    %39 = vector.multi_reduction <add>, %38, %cst_37 [0] : vector<64x8xf32> to vector<8xf32>
    %40 = vector.shape_cast %39 : vector<8xf32> to vector<1x8xf32>
    %c0_38 = arith.constant 0 : index
    %c0_39 = arith.constant 0 : index
    %c1_40 = arith.constant 1 : index
    %c0_41 = arith.constant 0 : index
    %41 = vector.load %arg5[%c0_38, %c0_39, %c1_40, %c0_41] : memref<1x1x2x8xf32, #tpu.memory_space<vmem>>, vector<1x1x1x8xf32>
    %42 = vector.shape_cast %41 : vector<1x1x1x8xf32> to vector<1x8xf32>
    %43 = vector.shape_cast %40 : vector<1x8xf32> to vector<1x1x1x8xf32>
    tpu.vector_store %arg5[%c0_38, %c0_39, %c1_40, %c0_41], %43 {strides = array<i32>} : memref<1x1x2x8xf32, #tpu.memory_space<vmem>>, vector<1x1x1x8xf32>,
    return
  }
  func.func @transform_0(%arg0: i32, %arg1: i32) -> (i32, i32, i32, i32, i32) {
    %c0_i32 = arith.constant 0 : i32
    %c0_i32_0 = arith.constant 0 : i32
    %c0_i32_1 = arith.constant 0 : i32
    %c0_i32_2 = arith.constant 0 : i32
    %c0_i32_3 = arith.constant 0 : i32
    return %arg0, %c0_i32, %c0_i32_0, %c0_i32_1, %c0_i32_2 : i32, i32, i32, i32, i32
  }
  func.func @transform_1(%arg0: i32, %arg1: i32) -> (i32, i32, i32) {
    %c0_i32 = arith.constant 0 : i32
    %c0_i32_0 = arith.constant 0 : i32
    %c0_i32_1 = arith.constant 0 : i32
    %c0_i32_2 = arith.constant 0 : i32
    return %c0_i32, %c0_i32_0, %c0_i32_1 : i32, i32, i32
  }
  func.func @transform_2(%arg0: i32, %arg1: i32) -> (i32, i32, i32, i32) {
    %c0_i32 = arith.constant 0 : i32
    %c0_i32_0 = arith.constant 0 : i32
    %c0_i32_1 = arith.constant 0 : i32
    return %arg0, %arg1, %c0_i32, %c0_i32_0 : i32, i32, i32, i32
  }
  func.func @transform_3(%arg0: i32, %arg1: i32) -> (i32, i32, i32, i32) {
    %c0_i32 = arith.constant 0 : i32
    %c0_i32_0 = arith.constant 0 : i32
    %c0_i32_1 = arith.constant 0 : i32
    return %arg0, %arg1, %c0_i32, %c0_i32_0 : i32, i32, i32, i32
  }
}

module attributes {stable_mosaic.version = 11 : i64} {
  func.func @_bn_lrelu_kernel(%arg0: i32, %arg1: i32, %arg2: memref<1x1x64x8xf32, #tpu.memory_space<vmem>>, %arg3: memref<2x8x2x8xf32, #tpu.memory_space<vmem>>, %arg4: memref<1x8xf32, #tpu.memory_space<vmem>>, %arg5: memref<1x8xf32, #tpu.memory_space<vmem>>, %arg6: memref<1x1x64x8xbf16, #tpu.memory_space<vmem>>) attributes {dimension_semantics = [#tpu.dimension_semantics<parallel>, #tpu.dimension_semantics<parallel>], iteration_bounds = array<i64: 2, 8>, scalar_prefetch = 0 : i64, scratch_operands = 0 : i64, tpu.core_type = #tpu.core_type<tc>, window_params = [{transform_indices = @transform_0, window_bounds = array<i64: 1, 1, 64, 8>}, {pipeline_mode = #tpu.pipeline_mode<synchronous>, transform_indices = @transform_1, window_bounds = array<i64: 2, 8, 2, 8>}, {pipeline_mode = #tpu.pipeline_mode<synchronous>, transform_indices = @transform_2, window_bounds = array<i64: 1, 8>}, {pipeline_mode = #tpu.pipeline_mode<synchronous>, transform_indices = @transform_3, window_bounds = array<i64: 1, 8>}, {transform_indices = @transform_4, window_bounds = array<i64: 1, 1, 64, 8>}]} {
    %c0 = arith.constant 0 : index
    %c0_0 = arith.constant 0 : index
    %c0_1 = arith.constant 0 : index
    %c0_2 = arith.constant 0 : index
    %0 = vector.load %arg3[%c0, %c0_0, %c0_1, %c0_2] : memref<2x8x2x8xf32, #tpu.memory_space<vmem>>, vector<2x8x2x8xf32>
    %cst = arith.constant dense<0.000000e+00> : vector<8x2x8xf32>
    %1 = vector.multi_reduction <add>, %0, %cst [0] : vector<2x8x2x8xf32> to vector<8x2x8xf32>
    %cst_3 = arith.constant dense<0.000000e+00> : vector<2x8xf32>
    %2 = vector.multi_reduction <add>, %1, %cst_3 [0] : vector<8x2x8xf32> to vector<2x8xf32>
    %3 = vector.extract_strided_slice %2 {offsets = [0, 0], sizes = [1, 8], strides = [1, 1]} : vector<2x8xf32> to vector<1x8xf32>
    %cst_4 = arith.constant 9.765625E-4 : f32
    %4 = vector.broadcast %cst_4 : f32 to vector<1x8xf32>
    %5 = arith.mulf %3, %4 : vector<1x8xf32>
    %6 = vector.extract_strided_slice %2 {offsets = [1, 0], sizes = [1, 8], strides = [1, 1]} : vector<2x8xf32> to vector<1x8xf32>
    %cst_5 = arith.constant 9.765625E-4 : f32
    %7 = vector.broadcast %cst_5 : f32 to vector<1x8xf32>
    %8 = arith.mulf %6, %7 : vector<1x8xf32>
    %9 = arith.mulf %5, %5 : vector<1x8xf32>
    %10 = arith.subf %8, %9 : vector<1x8xf32>
    %cst_6 = arith.constant 9.99999974E-6 : f32
    %11 = vector.broadcast %cst_6 : f32 to vector<1x8xf32>
    %12 = arith.addf %10, %11 : vector<1x8xf32>
    %13 = math.rsqrt %12 : vector<1x8xf32>
    %c0_7 = arith.constant 0 : index
    %c0_8 = arith.constant 0 : index
    %14 = vector.load %arg4[%c0_7, %c0_8] : memref<1x8xf32, #tpu.memory_space<vmem>>, vector<1x8xf32>
    %15 = arith.mulf %13, %14 : vector<1x8xf32>
    %c0_9 = arith.constant 0 : index
    %c0_10 = arith.constant 0 : index
    %c0_11 = arith.constant 0 : index
    %c0_12 = arith.constant 0 : index
    %16 = vector.load %arg2[%c0_9, %c0_10, %c0_11, %c0_12] : memref<1x1x64x8xf32, #tpu.memory_space<vmem>>, vector<1x1x64x8xf32>
    %17 = vector.shape_cast %16 : vector<1x1x64x8xf32> to vector<64x8xf32>
    %18 = vector.broadcast %5 : vector<1x8xf32> to vector<64x8xf32>
    %19 = arith.subf %17, %18 : vector<64x8xf32>
    %20 = vector.broadcast %15 : vector<1x8xf32> to vector<64x8xf32>
    %21 = arith.mulf %19, %20 : vector<64x8xf32>
    %c0_13 = arith.constant 0 : index
    %c0_14 = arith.constant 0 : index
    %22 = vector.load %arg5[%c0_13, %c0_14] : memref<1x8xf32, #tpu.memory_space<vmem>>, vector<1x8xf32>
    %23 = vector.broadcast %22 : vector<1x8xf32> to vector<64x8xf32>
    %24 = arith.addf %21, %23 : vector<64x8xf32>
    %cst_15 = arith.constant 0.000000e+00 : f32
    %25 = vector.broadcast %cst_15 : f32 to vector<64x8xf32>
    %26 = arith.cmpf oge, %24, %25 : vector<64x8xf32>
    %cst_16 = arith.constant 2.000000e-01 : f32
    %27 = vector.broadcast %cst_16 : f32 to vector<64x8xf32>
    %28 = arith.mulf %27, %24 : vector<64x8xf32>
    %29 = arith.select %26, %24, %28 : vector<64x8xi1>, vector<64x8xf32>
    %30 = arith.truncf %29 : vector<64x8xf32> to vector<64x8xbf16>
    %c0_17 = arith.constant 0 : index
    %c0_18 = arith.constant 0 : index
    %c0_19 = arith.constant 0 : index
    %c0_20 = arith.constant 0 : index
    %31 = vector.load %arg6[%c0_17, %c0_18, %c0_19, %c0_20] : memref<1x1x64x8xbf16, #tpu.memory_space<vmem>>, vector<1x1x64x8xbf16>
    %32 = vector.shape_cast %31 : vector<1x1x64x8xbf16> to vector<64x8xbf16>
    %33 = vector.shape_cast %30 : vector<64x8xbf16> to vector<1x1x64x8xbf16>
    tpu.vector_store %arg6[%c0_17, %c0_18, %c0_19, %c0_20], %33 {strides = array<i32>} : memref<1x1x64x8xbf16, #tpu.memory_space<vmem>>, vector<1x1x64x8xbf16>,
    return
  }
  func.func @transform_0(%arg0: i32, %arg1: i32) -> (i32, i32, i32, i32) {
    %c0_i32 = arith.constant 0 : i32
    %c0_i32_0 = arith.constant 0 : i32
    %c0_i32_1 = arith.constant 0 : i32
    return %arg0, %arg1, %c0_i32, %c0_i32_0 : i32, i32, i32, i32
  }
  func.func @transform_1(%arg0: i32, %arg1: i32) -> (i32, i32, i32, i32) {
    %c0_i32 = arith.constant 0 : i32
    %c0_i32_0 = arith.constant 0 : i32
    %c0_i32_1 = arith.constant 0 : i32
    %c0_i32_2 = arith.constant 0 : i32
    %c0_i32_3 = arith.constant 0 : i32
    return %c0_i32, %c0_i32_0, %c0_i32_1, %c0_i32_2 : i32, i32, i32, i32
  }
  func.func @transform_2(%arg0: i32, %arg1: i32) -> (i32, i32) {
    %c0_i32 = arith.constant 0 : i32
    %c0_i32_0 = arith.constant 0 : i32
    %c0_i32_1 = arith.constant 0 : i32
    return %c0_i32, %c0_i32_0 : i32, i32
  }
  func.func @transform_3(%arg0: i32, %arg1: i32) -> (i32, i32) {
    %c0_i32 = arith.constant 0 : i32
    %c0_i32_0 = arith.constant 0 : i32
    %c0_i32_1 = arith.constant 0 : i32
    return %c0_i32, %c0_i32_0 : i32, i32
  }
  func.func @transform_4(%arg0: i32, %arg1: i32) -> (i32, i32, i32, i32) {
    %c0_i32 = arith.constant 0 : i32
    %c0_i32_0 = arith.constant 0 : i32
    %c0_i32_1 = arith.constant 0 : i32
    return %arg0, %arg1, %c0_i32, %c0_i32_0 : i32, i32, i32, i32
  }
}

module attributes {stable_mosaic.version = 11 : i64} {
  func.func @_conv_tap_kernel(%arg0: i32, %arg1: i32, %arg2: memref<1x2x5x16x128xbf16, #tpu.memory_space<vmem>>, %arg3: memref<4x128x16xbf16, #tpu.memory_space<vmem>>, %arg4: memref<1x1x16x16xf32, #tpu.memory_space<vmem>>, %arg5: memref<1x1x2x16xf32, #tpu.memory_space<vmem>>) attributes {dimension_semantics = [#tpu.dimension_semantics<parallel>, #tpu.dimension_semantics<parallel>], iteration_bounds = array<i64: 2, 4>, scalar_prefetch = 0 : i64, scratch_operands = 0 : i64, tpu.core_type = #tpu.core_type<tc>, window_params = [{transform_indices = @transform_0, window_bounds = array<i64: 1, 2, 5, 16, 128>}, {pipeline_mode = #tpu.pipeline_mode<synchronous>, transform_indices = @transform_1, window_bounds = array<i64: 4, 128, 16>}, {transform_indices = @transform_2, window_bounds = array<i64: 1, 1, 16, 16>}, {transform_indices = @transform_3, window_bounds = array<i64: 1, 1, 2, 16>}]} {
    %c0 = arith.constant 0 : index
    %c0_0 = arith.constant 0 : index
    %0 = arith.index_cast %arg1 : i32 to index
    %c0_1 = arith.constant 0 : index
    %c0_2 = arith.constant 0 : index
    %1 = vector.load %arg2[%c0, %c0_0, %0, %c0_1, %c0_2] : memref<1x2x5x16x128xbf16, #tpu.memory_space<vmem>>, vector<1x1x1x16x128xbf16>
    %2 = vector.shape_cast %1 : vector<1x1x1x16x128xbf16> to vector<16x128xbf16>
    %c0_3 = arith.constant 0 : index
    %c0_4 = arith.constant 0 : index
    %c0_5 = arith.constant 0 : index
    %3 = vector.load %arg3[%c0_3, %c0_4, %c0_5] : memref<4x128x16xbf16, #tpu.memory_space<vmem>>, vector<1x128x16xbf16>
    %4 = vector.shape_cast %3 : vector<1x128x16xbf16> to vector<128x16xbf16>
    %cst = arith.constant dense<0.000000e+00> : vector<16x16xf32>
    %5 = tpu.matmul %2, %4, %cst {dimension_numbers = #tpu.dot_dimension_numbers<[1], [0], [0], [1], [0, 0, 1, 1], [], []>} : vector<16x128xbf16>, vector<128x16xbf16>, vector<16x16xf32> -> vector<16x16xf32>
    %c0_i32 = arith.constant 0 : i32
    %6 = arith.addi %arg1, %c0_i32 : i32
    %c0_6 = arith.constant 0 : index
    %c1 = arith.constant 1 : index
    %7 = arith.index_cast %6 : i32 to index
    %c0_7 = arith.constant 0 : index
    %c0_8 = arith.constant 0 : index
    %8 = vector.load %arg2[%c0_6, %c1, %7, %c0_7, %c0_8] : memref<1x2x5x16x128xbf16, #tpu.memory_space<vmem>>, vector<1x1x1x16x128xbf16>
    %9 = vector.shape_cast %8 : vector<1x1x1x16x128xbf16> to vector<16x128xbf16>
    %c1_9 = arith.constant 1 : index
    %c0_10 = arith.constant 0 : index
    %c0_11 = arith.constant 0 : index
    %10 = vector.load %arg3[%c1_9, %c0_10, %c0_11] : memref<4x128x16xbf16, #tpu.memory_space<vmem>>, vector<1x128x16xbf16>
    %11 = vector.shape_cast %10 : vector<1x128x16xbf16> to vector<128x16xbf16>
    %cst_12 = arith.constant dense<0.000000e+00> : vector<16x16xf32>
    %12 = tpu.matmul %9, %11, %cst_12 {dimension_numbers = #tpu.dot_dimension_numbers<[1], [0], [0], [1], [0, 0, 1, 1], [], []>} : vector<16x128xbf16>, vector<128x16xbf16>, vector<16x16xf32> -> vector<16x16xf32>
    %13 = arith.addf %5, %12 : vector<16x16xf32>
    %c1_i32 = arith.constant 1 : i32
    %14 = arith.addi %arg1, %c1_i32 : i32
    %c0_13 = arith.constant 0 : index
    %c0_14 = arith.constant 0 : index
    %15 = arith.index_cast %14 : i32 to index
    %c0_15 = arith.constant 0 : index
    %c0_16 = arith.constant 0 : index
    %16 = vector.load %arg2[%c0_13, %c0_14, %15, %c0_15, %c0_16] : memref<1x2x5x16x128xbf16, #tpu.memory_space<vmem>>, vector<1x1x1x16x128xbf16>
    %17 = vector.shape_cast %16 : vector<1x1x1x16x128xbf16> to vector<16x128xbf16>
    %c2 = arith.constant 2 : index
    %c0_17 = arith.constant 0 : index
    %c0_18 = arith.constant 0 : index
    %18 = vector.load %arg3[%c2, %c0_17, %c0_18] : memref<4x128x16xbf16, #tpu.memory_space<vmem>>, vector<1x128x16xbf16>
    %19 = vector.shape_cast %18 : vector<1x128x16xbf16> to vector<128x16xbf16>
    %cst_19 = arith.constant dense<0.000000e+00> : vector<16x16xf32>
    %20 = tpu.matmul %17, %19, %cst_19 {dimension_numbers = #tpu.dot_dimension_numbers<[1], [0], [0], [1], [0, 0, 1, 1], [], []>} : vector<16x128xbf16>, vector<128x16xbf16>, vector<16x16xf32> -> vector<16x16xf32>
    %21 = arith.addf %13, %20 : vector<16x16xf32>
    %c1_i32_20 = arith.constant 1 : i32
    %22 = arith.addi %arg1, %c1_i32_20 : i32
    %c0_21 = arith.constant 0 : index
    %c1_22 = arith.constant 1 : index
    %23 = arith.index_cast %22 : i32 to index
    %c0_23 = arith.constant 0 : index
    %c0_24 = arith.constant 0 : index
    %24 = vector.load %arg2[%c0_21, %c1_22, %23, %c0_23, %c0_24] : memref<1x2x5x16x128xbf16, #tpu.memory_space<vmem>>, vector<1x1x1x16x128xbf16>
    %25 = vector.shape_cast %24 : vector<1x1x1x16x128xbf16> to vector<16x128xbf16>
    %c3 = arith.constant 3 : index
    %c0_25 = arith.constant 0 : index
    %c0_26 = arith.constant 0 : index
    %26 = vector.load %arg3[%c3, %c0_25, %c0_26] : memref<4x128x16xbf16, #tpu.memory_space<vmem>>, vector<1x128x16xbf16>
    %27 = vector.shape_cast %26 : vector<1x128x16xbf16> to vector<128x16xbf16>
    %cst_27 = arith.constant dense<0.000000e+00> : vector<16x16xf32>
    %28 = tpu.matmul %25, %27, %cst_27 {dimension_numbers = #tpu.dot_dimension_numbers<[1], [0], [0], [1], [0, 0, 1, 1], [], []>} : vector<16x128xbf16>, vector<128x16xbf16>, vector<16x16xf32> -> vector<16x16xf32>
    %29 = arith.addf %21, %28 : vector<16x16xf32>
    %c0_28 = arith.constant 0 : index
    %c0_29 = arith.constant 0 : index
    %c0_30 = arith.constant 0 : index
    %c0_31 = arith.constant 0 : index
    %30 = vector.load %arg4[%c0_28, %c0_29, %c0_30, %c0_31] : memref<1x1x16x16xf32, #tpu.memory_space<vmem>>, vector<1x1x16x16xf32>
    %31 = vector.shape_cast %30 : vector<1x1x16x16xf32> to vector<16x16xf32>
    %32 = vector.shape_cast %29 : vector<16x16xf32> to vector<1x1x16x16xf32>
    tpu.vector_store %arg4[%c0_28, %c0_29, %c0_30, %c0_31], %32 {strides = array<i32>} : memref<1x1x16x16xf32, #tpu.memory_space<vmem>>, vector<1x1x16x16xf32>,
    %cst_32 = arith.constant dense<0.000000e+00> : vector<16xf32>
    %33 = vector.multi_reduction <add>, %29, %cst_32 [0] : vector<16x16xf32> to vector<16xf32>
    %34 = vector.shape_cast %33 : vector<16xf32> to vector<1x16xf32>
    %c0_33 = arith.constant 0 : index
    %c0_34 = arith.constant 0 : index
    %c0_35 = arith.constant 0 : index
    %c0_36 = arith.constant 0 : index
    %35 = vector.load %arg5[%c0_33, %c0_34, %c0_35, %c0_36] : memref<1x1x2x16xf32, #tpu.memory_space<vmem>>, vector<1x1x1x16xf32>
    %36 = vector.shape_cast %35 : vector<1x1x1x16xf32> to vector<1x16xf32>
    %37 = vector.shape_cast %34 : vector<1x16xf32> to vector<1x1x1x16xf32>
    tpu.vector_store %arg5[%c0_33, %c0_34, %c0_35, %c0_36], %37 {strides = array<i32>} : memref<1x1x2x16xf32, #tpu.memory_space<vmem>>, vector<1x1x1x16xf32>,
    %38 = arith.mulf %29, %29 : vector<16x16xf32>
    %cst_37 = arith.constant dense<0.000000e+00> : vector<16xf32>
    %39 = vector.multi_reduction <add>, %38, %cst_37 [0] : vector<16x16xf32> to vector<16xf32>
    %40 = vector.shape_cast %39 : vector<16xf32> to vector<1x16xf32>
    %c0_38 = arith.constant 0 : index
    %c0_39 = arith.constant 0 : index
    %c1_40 = arith.constant 1 : index
    %c0_41 = arith.constant 0 : index
    %41 = vector.load %arg5[%c0_38, %c0_39, %c1_40, %c0_41] : memref<1x1x2x16xf32, #tpu.memory_space<vmem>>, vector<1x1x1x16xf32>
    %42 = vector.shape_cast %41 : vector<1x1x1x16xf32> to vector<1x16xf32>
    %43 = vector.shape_cast %40 : vector<1x16xf32> to vector<1x1x1x16xf32>
    tpu.vector_store %arg5[%c0_38, %c0_39, %c1_40, %c0_41], %43 {strides = array<i32>} : memref<1x1x2x16xf32, #tpu.memory_space<vmem>>, vector<1x1x1x16xf32>,
    return
  }
  func.func @transform_0(%arg0: i32, %arg1: i32) -> (i32, i32, i32, i32, i32) {
    %c0_i32 = arith.constant 0 : i32
    %c0_i32_0 = arith.constant 0 : i32
    %c0_i32_1 = arith.constant 0 : i32
    %c0_i32_2 = arith.constant 0 : i32
    %c0_i32_3 = arith.constant 0 : i32
    return %arg0, %c0_i32, %c0_i32_0, %c0_i32_1, %c0_i32_2 : i32, i32, i32, i32, i32
  }
  func.func @transform_1(%arg0: i32, %arg1: i32) -> (i32, i32, i32) {
    %c0_i32 = arith.constant 0 : i32
    %c0_i32_0 = arith.constant 0 : i32
    %c0_i32_1 = arith.constant 0 : i32
    %c0_i32_2 = arith.constant 0 : i32
    return %c0_i32, %c0_i32_0, %c0_i32_1 : i32, i32, i32
  }
  func.func @transform_2(%arg0: i32, %arg1: i32) -> (i32, i32, i32, i32) {
    %c0_i32 = arith.constant 0 : i32
    %c0_i32_0 = arith.constant 0 : i32
    %c0_i32_1 = arith.constant 0 : i32
    return %arg0, %arg1, %c0_i32, %c0_i32_0 : i32, i32, i32, i32
  }
  func.func @transform_3(%arg0: i32, %arg1: i32) -> (i32, i32, i32, i32) {
    %c0_i32 = arith.constant 0 : i32
    %c0_i32_0 = arith.constant 0 : i32
    %c0_i32_1 = arith.constant 0 : i32
    return %arg0, %arg1, %c0_i32, %c0_i32_0 : i32, i32, i32, i32
  }
}

module attributes {stable_mosaic.version = 11 : i64} {
  func.func @_bn_lrelu_kernel(%arg0: i32, %arg1: i32, %arg2: memref<1x1x16x16xf32, #tpu.memory_space<vmem>>, %arg3: memref<2x4x2x16xf32, #tpu.memory_space<vmem>>, %arg4: memref<1x16xf32, #tpu.memory_space<vmem>>, %arg5: memref<1x16xf32, #tpu.memory_space<vmem>>, %arg6: memref<1x1x16x16xbf16, #tpu.memory_space<vmem>>) attributes {dimension_semantics = [#tpu.dimension_semantics<parallel>, #tpu.dimension_semantics<parallel>], iteration_bounds = array<i64: 2, 4>, scalar_prefetch = 0 : i64, scratch_operands = 0 : i64, tpu.core_type = #tpu.core_type<tc>, window_params = [{transform_indices = @transform_0, window_bounds = array<i64: 1, 1, 16, 16>}, {pipeline_mode = #tpu.pipeline_mode<synchronous>, transform_indices = @transform_1, window_bounds = array<i64: 2, 4, 2, 16>}, {pipeline_mode = #tpu.pipeline_mode<synchronous>, transform_indices = @transform_2, window_bounds = array<i64: 1, 16>}, {pipeline_mode = #tpu.pipeline_mode<synchronous>, transform_indices = @transform_3, window_bounds = array<i64: 1, 16>}, {transform_indices = @transform_4, window_bounds = array<i64: 1, 1, 16, 16>}]} {
    %c0 = arith.constant 0 : index
    %c0_0 = arith.constant 0 : index
    %c0_1 = arith.constant 0 : index
    %c0_2 = arith.constant 0 : index
    %0 = vector.load %arg3[%c0, %c0_0, %c0_1, %c0_2] : memref<2x4x2x16xf32, #tpu.memory_space<vmem>>, vector<2x4x2x16xf32>
    %cst = arith.constant dense<0.000000e+00> : vector<4x2x16xf32>
    %1 = vector.multi_reduction <add>, %0, %cst [0] : vector<2x4x2x16xf32> to vector<4x2x16xf32>
    %cst_3 = arith.constant dense<0.000000e+00> : vector<2x16xf32>
    %2 = vector.multi_reduction <add>, %1, %cst_3 [0] : vector<4x2x16xf32> to vector<2x16xf32>
    %3 = vector.extract_strided_slice %2 {offsets = [0, 0], sizes = [1, 16], strides = [1, 1]} : vector<2x16xf32> to vector<1x16xf32>
    %cst_4 = arith.constant 7.812500e-03 : f32
    %4 = vector.broadcast %cst_4 : f32 to vector<1x16xf32>
    %5 = arith.mulf %3, %4 : vector<1x16xf32>
    %6 = vector.extract_strided_slice %2 {offsets = [1, 0], sizes = [1, 16], strides = [1, 1]} : vector<2x16xf32> to vector<1x16xf32>
    %cst_5 = arith.constant 7.812500e-03 : f32
    %7 = vector.broadcast %cst_5 : f32 to vector<1x16xf32>
    %8 = arith.mulf %6, %7 : vector<1x16xf32>
    %9 = arith.mulf %5, %5 : vector<1x16xf32>
    %10 = arith.subf %8, %9 : vector<1x16xf32>
    %cst_6 = arith.constant 9.99999974E-6 : f32
    %11 = vector.broadcast %cst_6 : f32 to vector<1x16xf32>
    %12 = arith.addf %10, %11 : vector<1x16xf32>
    %13 = math.rsqrt %12 : vector<1x16xf32>
    %c0_7 = arith.constant 0 : index
    %c0_8 = arith.constant 0 : index
    %14 = vector.load %arg4[%c0_7, %c0_8] : memref<1x16xf32, #tpu.memory_space<vmem>>, vector<1x16xf32>
    %15 = arith.mulf %13, %14 : vector<1x16xf32>
    %c0_9 = arith.constant 0 : index
    %c0_10 = arith.constant 0 : index
    %c0_11 = arith.constant 0 : index
    %c0_12 = arith.constant 0 : index
    %16 = vector.load %arg2[%c0_9, %c0_10, %c0_11, %c0_12] : memref<1x1x16x16xf32, #tpu.memory_space<vmem>>, vector<1x1x16x16xf32>
    %17 = vector.shape_cast %16 : vector<1x1x16x16xf32> to vector<16x16xf32>
    %18 = vector.broadcast %5 : vector<1x16xf32> to vector<16x16xf32>
    %19 = arith.subf %17, %18 : vector<16x16xf32>
    %20 = vector.broadcast %15 : vector<1x16xf32> to vector<16x16xf32>
    %21 = arith.mulf %19, %20 : vector<16x16xf32>
    %c0_13 = arith.constant 0 : index
    %c0_14 = arith.constant 0 : index
    %22 = vector.load %arg5[%c0_13, %c0_14] : memref<1x16xf32, #tpu.memory_space<vmem>>, vector<1x16xf32>
    %23 = vector.broadcast %22 : vector<1x16xf32> to vector<16x16xf32>
    %24 = arith.addf %21, %23 : vector<16x16xf32>
    %cst_15 = arith.constant 0.000000e+00 : f32
    %25 = vector.broadcast %cst_15 : f32 to vector<16x16xf32>
    %26 = arith.cmpf oge, %24, %25 : vector<16x16xf32>
    %cst_16 = arith.constant 2.000000e-01 : f32
    %27 = vector.broadcast %cst_16 : f32 to vector<16x16xf32>
    %28 = arith.mulf %27, %24 : vector<16x16xf32>
    %29 = arith.select %26, %24, %28 : vector<16x16xi1>, vector<16x16xf32>
    %30 = arith.truncf %29 : vector<16x16xf32> to vector<16x16xbf16>
    %c0_17 = arith.constant 0 : index
    %c0_18 = arith.constant 0 : index
    %c0_19 = arith.constant 0 : index
    %c0_20 = arith.constant 0 : index
    %31 = vector.load %arg6[%c0_17, %c0_18, %c0_19, %c0_20] : memref<1x1x16x16xbf16, #tpu.memory_space<vmem>>, vector<1x1x16x16xbf16>
    %32 = vector.shape_cast %31 : vector<1x1x16x16xbf16> to vector<16x16xbf16>
    %33 = vector.shape_cast %30 : vector<16x16xbf16> to vector<1x1x16x16xbf16>
    tpu.vector_store %arg6[%c0_17, %c0_18, %c0_19, %c0_20], %33 {strides = array<i32>} : memref<1x1x16x16xbf16, #tpu.memory_space<vmem>>, vector<1x1x16x16xbf16>,
    return
  }
  func.func @transform_0(%arg0: i32, %arg1: i32) -> (i32, i32, i32, i32) {
    %c0_i32 = arith.constant 0 : i32
    %c0_i32_0 = arith.constant 0 : i32
    %c0_i32_1 = arith.constant 0 : i32
    return %arg0, %arg1, %c0_i32, %c0_i32_0 : i32, i32, i32, i32
  }
  func.func @transform_1(%arg0: i32, %arg1: i32) -> (i32, i32, i32, i32) {
    %c0_i32 = arith.constant 0 : i32
    %c0_i32_0 = arith.constant 0 : i32
    %c0_i32_1 = arith.constant 0 : i32
    %c0_i32_2 = arith.constant 0 : i32
    %c0_i32_3 = arith.constant 0 : i32
    return %c0_i32, %c0_i32_0, %c0_i32_1, %c0_i32_2 : i32, i32, i32, i32
  }
  func.func @transform_2(%arg0: i32, %arg1: i32) -> (i32, i32) {
    %c0_i32 = arith.constant 0 : i32
    %c0_i32_0 = arith.constant 0 : i32
    %c0_i32_1 = arith.constant 0 : i32
    return %c0_i32, %c0_i32_0 : i32, i32
  }
  func.func @transform_3(%arg0: i32, %arg1: i32) -> (i32, i32) {
    %c0_i32 = arith.constant 0 : i32
    %c0_i32_0 = arith.constant 0 : i32
    %c0_i32_1 = arith.constant 0 : i32
    return %c0_i32, %c0_i32_0 : i32, i32
  }
  func.func @transform_4(%arg0: i32, %arg1: i32) -> (i32, i32, i32, i32) {
    %c0_i32 = arith.constant 0 : i32
    %c0_i32_0 = arith.constant 0 : i32
    %c0_i32_1 = arith.constant 0 : i32
    return %arg0, %arg1, %c0_i32, %c0_i32_0 : i32, i32, i32, i32
  }
}

module attributes {stable_mosaic.version = 11 : i64} {
  func.func @_bn_lrelu_kernel(%arg0: i32, %arg1: i32, %arg2: memref<1x1x4x32xf32, #tpu.memory_space<vmem>>, %arg3: memref<2x2x2x32xf32, #tpu.memory_space<vmem>>, %arg4: memref<1x32xf32, #tpu.memory_space<vmem>>, %arg5: memref<1x32xf32, #tpu.memory_space<vmem>>, %arg6: memref<1x1x4x32xbf16, #tpu.memory_space<vmem>>) attributes {dimension_semantics = [#tpu.dimension_semantics<parallel>, #tpu.dimension_semantics<parallel>], iteration_bounds = array<i64: 2, 2>, scalar_prefetch = 0 : i64, scratch_operands = 0 : i64, tpu.core_type = #tpu.core_type<tc>, window_params = [{transform_indices = @transform_0, window_bounds = array<i64: 1, 1, 4, 32>}, {pipeline_mode = #tpu.pipeline_mode<synchronous>, transform_indices = @transform_1, window_bounds = array<i64: 2, 2, 2, 32>}, {pipeline_mode = #tpu.pipeline_mode<synchronous>, transform_indices = @transform_2, window_bounds = array<i64: 1, 32>}, {pipeline_mode = #tpu.pipeline_mode<synchronous>, transform_indices = @transform_3, window_bounds = array<i64: 1, 32>}, {transform_indices = @transform_4, window_bounds = array<i64: 1, 1, 4, 32>}]} {
    %c0 = arith.constant 0 : index
    %c0_0 = arith.constant 0 : index
    %c0_1 = arith.constant 0 : index
    %c0_2 = arith.constant 0 : index
    %0 = vector.load %arg3[%c0, %c0_0, %c0_1, %c0_2] : memref<2x2x2x32xf32, #tpu.memory_space<vmem>>, vector<2x2x2x32xf32>
    %cst = arith.constant dense<0.000000e+00> : vector<2x2x32xf32>
    %1 = vector.multi_reduction <add>, %0, %cst [0] : vector<2x2x2x32xf32> to vector<2x2x32xf32>
    %cst_3 = arith.constant dense<0.000000e+00> : vector<2x32xf32>
    %2 = vector.multi_reduction <add>, %1, %cst_3 [0] : vector<2x2x32xf32> to vector<2x32xf32>
    %3 = vector.extract_strided_slice %2 {offsets = [0, 0], sizes = [1, 32], strides = [1, 1]} : vector<2x32xf32> to vector<1x32xf32>
    %cst_4 = arith.constant 6.250000e-02 : f32
    %4 = vector.broadcast %cst_4 : f32 to vector<1x32xf32>
    %5 = arith.mulf %3, %4 : vector<1x32xf32>
    %6 = vector.extract_strided_slice %2 {offsets = [1, 0], sizes = [1, 32], strides = [1, 1]} : vector<2x32xf32> to vector<1x32xf32>
    %cst_5 = arith.constant 6.250000e-02 : f32
    %7 = vector.broadcast %cst_5 : f32 to vector<1x32xf32>
    %8 = arith.mulf %6, %7 : vector<1x32xf32>
    %9 = arith.mulf %5, %5 : vector<1x32xf32>
    %10 = arith.subf %8, %9 : vector<1x32xf32>
    %cst_6 = arith.constant 9.99999974E-6 : f32
    %11 = vector.broadcast %cst_6 : f32 to vector<1x32xf32>
    %12 = arith.addf %10, %11 : vector<1x32xf32>
    %13 = math.rsqrt %12 : vector<1x32xf32>
    %c0_7 = arith.constant 0 : index
    %c0_8 = arith.constant 0 : index
    %14 = vector.load %arg4[%c0_7, %c0_8] : memref<1x32xf32, #tpu.memory_space<vmem>>, vector<1x32xf32>
    %15 = arith.mulf %13, %14 : vector<1x32xf32>
    %c0_9 = arith.constant 0 : index
    %c0_10 = arith.constant 0 : index
    %c0_11 = arith.constant 0 : index
    %c0_12 = arith.constant 0 : index
    %16 = vector.load %arg2[%c0_9, %c0_10, %c0_11, %c0_12] : memref<1x1x4x32xf32, #tpu.memory_space<vmem>>, vector<1x1x4x32xf32>
    %17 = vector.shape_cast %16 : vector<1x1x4x32xf32> to vector<4x32xf32>
    %18 = vector.broadcast %5 : vector<1x32xf32> to vector<4x32xf32>
    %19 = arith.subf %17, %18 : vector<4x32xf32>
    %20 = vector.broadcast %15 : vector<1x32xf32> to vector<4x32xf32>
    %21 = arith.mulf %19, %20 : vector<4x32xf32>
    %c0_13 = arith.constant 0 : index
    %c0_14 = arith.constant 0 : index
    %22 = vector.load %arg5[%c0_13, %c0_14] : memref<1x32xf32, #tpu.memory_space<vmem>>, vector<1x32xf32>
    %23 = vector.broadcast %22 : vector<1x32xf32> to vector<4x32xf32>
    %24 = arith.addf %21, %23 : vector<4x32xf32>
    %cst_15 = arith.constant 0.000000e+00 : f32
    %25 = vector.broadcast %cst_15 : f32 to vector<4x32xf32>
    %26 = arith.cmpf oge, %24, %25 : vector<4x32xf32>
    %cst_16 = arith.constant 2.000000e-01 : f32
    %27 = vector.broadcast %cst_16 : f32 to vector<4x32xf32>
    %28 = arith.mulf %27, %24 : vector<4x32xf32>
    %29 = arith.select %26, %24, %28 : vector<4x32xi1>, vector<4x32xf32>
    %30 = arith.truncf %29 : vector<4x32xf32> to vector<4x32xbf16>
    %c0_17 = arith.constant 0 : index
    %c0_18 = arith.constant 0 : index
    %c0_19 = arith.constant 0 : index
    %c0_20 = arith.constant 0 : index
    %31 = vector.load %arg6[%c0_17, %c0_18, %c0_19, %c0_20] : memref<1x1x4x32xbf16, #tpu.memory_space<vmem>>, vector<1x1x4x32xbf16>
    %32 = vector.shape_cast %31 : vector<1x1x4x32xbf16> to vector<4x32xbf16>
    %33 = vector.shape_cast %30 : vector<4x32xbf16> to vector<1x1x4x32xbf16>
    tpu.vector_store %arg6[%c0_17, %c0_18, %c0_19, %c0_20], %33 {strides = array<i32>} : memref<1x1x4x32xbf16, #tpu.memory_space<vmem>>, vector<1x1x4x32xbf16>,
    return
  }
  func.func @transform_0(%arg0: i32, %arg1: i32) -> (i32, i32, i32, i32) {
    %c0_i32 = arith.constant 0 : i32
    %c0_i32_0 = arith.constant 0 : i32
    %c0_i32_1 = arith.constant 0 : i32
    return %arg0, %arg1, %c0_i32, %c0_i32_0 : i32, i32, i32, i32
  }
  func.func @transform_1(%arg0: i32, %arg1: i32) -> (i32, i32, i32, i32) {
    %c0_i32 = arith.constant 0 : i32
    %c0_i32_0 = arith.constant 0 : i32
    %c0_i32_1 = arith.constant 0 : i32
    %c0_i32_2 = arith.constant 0 : i32
    %c0_i32_3 = arith.constant 0 : i32
    return %c0_i32, %c0_i32_0, %c0_i32_1, %c0_i32_2 : i32, i32, i32, i32
  }
  func.func @transform_2(%arg0: i32, %arg1: i32) -> (i32, i32) {
    %c0_i32 = arith.constant 0 : i32
    %c0_i32_0 = arith.constant 0 : i32
    %c0_i32_1 = arith.constant 0 : i32
    return %c0_i32, %c0_i32_0 : i32, i32
  }
  func.func @transform_3(%arg0: i32, %arg1: i32) -> (i32, i32) {
    %c0_i32 = arith.constant 0 : i32
    %c0_i32_0 = arith.constant 0 : i32
    %c0_i32_1 = arith.constant 0 : i32
    return %c0_i32, %c0_i32_0 : i32, i32
  }
  func.func @transform_4(%arg0: i32, %arg1: i32) -> (i32, i32, i32, i32) {
    %c0_i32 = arith.constant 0 : i32
    %c0_i32_0 = arith.constant 0 : i32
    %c0_i32_1 = arith.constant 0 : i32
    return %arg0, %arg1, %c0_i32, %c0_i32_0 : i32, i32, i32, i32
  }
}

module attributes {stable_mosaic.version = 11 : i64} {
  func.func @_conv_tap_kernel(%arg0: i32, %arg1: i32, %arg2: memref<1x2x3x4x256xbf16, #tpu.memory_space<vmem>>, %arg3: memref<4x256x32xbf16, #tpu.memory_space<vmem>>, %arg4: memref<1x1x4x32xf32, #tpu.memory_space<vmem>>, %arg5: memref<1x1x2x32xf32, #tpu.memory_space<vmem>>) attributes {dimension_semantics = [#tpu.dimension_semantics<parallel>, #tpu.dimension_semantics<parallel>], iteration_bounds = array<i64: 2, 2>, scalar_prefetch = 0 : i64, scratch_operands = 0 : i64, tpu.core_type = #tpu.core_type<tc>, window_params = [{transform_indices = @transform_0, window_bounds = array<i64: 1, 2, 3, 4, 256>}, {pipeline_mode = #tpu.pipeline_mode<synchronous>, transform_indices = @transform_1, window_bounds = array<i64: 4, 256, 32>}, {transform_indices = @transform_2, window_bounds = array<i64: 1, 1, 4, 32>}, {transform_indices = @transform_3, window_bounds = array<i64: 1, 1, 2, 32>}]} {
    %c0 = arith.constant 0 : index
    %c0_0 = arith.constant 0 : index
    %0 = arith.index_cast %arg1 : i32 to index
    %c0_1 = arith.constant 0 : index
    %c0_2 = arith.constant 0 : index
    %1 = vector.load %arg2[%c0, %c0_0, %0, %c0_1, %c0_2] : memref<1x2x3x4x256xbf16, #tpu.memory_space<vmem>>, vector<1x1x1x4x256xbf16>
    %2 = vector.shape_cast %1 : vector<1x1x1x4x256xbf16> to vector<4x256xbf16>
    %c0_3 = arith.constant 0 : index
    %c0_4 = arith.constant 0 : index
    %c0_5 = arith.constant 0 : index
    %3 = vector.load %arg3[%c0_3, %c0_4, %c0_5] : memref<4x256x32xbf16, #tpu.memory_space<vmem>>, vector<1x256x32xbf16>
    %4 = vector.shape_cast %3 : vector<1x256x32xbf16> to vector<256x32xbf16>
    %cst = arith.constant dense<0.000000e+00> : vector<4x32xf32>
    %5 = tpu.matmul %2, %4, %cst {dimension_numbers = #tpu.dot_dimension_numbers<[1], [0], [0], [1], [0, 0, 1, 1], [], []>} : vector<4x256xbf16>, vector<256x32xbf16>, vector<4x32xf32> -> vector<4x32xf32>
    %c0_i32 = arith.constant 0 : i32
    %6 = arith.addi %arg1, %c0_i32 : i32
    %c0_6 = arith.constant 0 : index
    %c1 = arith.constant 1 : index
    %7 = arith.index_cast %6 : i32 to index
    %c0_7 = arith.constant 0 : index
    %c0_8 = arith.constant 0 : index
    %8 = vector.load %arg2[%c0_6, %c1, %7, %c0_7, %c0_8] : memref<1x2x3x4x256xbf16, #tpu.memory_space<vmem>>, vector<1x1x1x4x256xbf16>
    %9 = vector.shape_cast %8 : vector<1x1x1x4x256xbf16> to vector<4x256xbf16>
    %c1_9 = arith.constant 1 : index
    %c0_10 = arith.constant 0 : index
    %c0_11 = arith.constant 0 : index
    %10 = vector.load %arg3[%c1_9, %c0_10, %c0_11] : memref<4x256x32xbf16, #tpu.memory_space<vmem>>, vector<1x256x32xbf16>
    %11 = vector.shape_cast %10 : vector<1x256x32xbf16> to vector<256x32xbf16>
    %cst_12 = arith.constant dense<0.000000e+00> : vector<4x32xf32>
    %12 = tpu.matmul %9, %11, %cst_12 {dimension_numbers = #tpu.dot_dimension_numbers<[1], [0], [0], [1], [0, 0, 1, 1], [], []>} : vector<4x256xbf16>, vector<256x32xbf16>, vector<4x32xf32> -> vector<4x32xf32>
    %13 = arith.addf %5, %12 : vector<4x32xf32>
    %c1_i32 = arith.constant 1 : i32
    %14 = arith.addi %arg1, %c1_i32 : i32
    %c0_13 = arith.constant 0 : index
    %c0_14 = arith.constant 0 : index
    %15 = arith.index_cast %14 : i32 to index
    %c0_15 = arith.constant 0 : index
    %c0_16 = arith.constant 0 : index
    %16 = vector.load %arg2[%c0_13, %c0_14, %15, %c0_15, %c0_16] : memref<1x2x3x4x256xbf16, #tpu.memory_space<vmem>>, vector<1x1x1x4x256xbf16>
    %17 = vector.shape_cast %16 : vector<1x1x1x4x256xbf16> to vector<4x256xbf16>
    %c2 = arith.constant 2 : index
    %c0_17 = arith.constant 0 : index
    %c0_18 = arith.constant 0 : index
    %18 = vector.load %arg3[%c2, %c0_17, %c0_18] : memref<4x256x32xbf16, #tpu.memory_space<vmem>>, vector<1x256x32xbf16>
    %19 = vector.shape_cast %18 : vector<1x256x32xbf16> to vector<256x32xbf16>
    %cst_19 = arith.constant dense<0.000000e+00> : vector<4x32xf32>
    %20 = tpu.matmul %17, %19, %cst_19 {dimension_numbers = #tpu.dot_dimension_numbers<[1], [0], [0], [1], [0, 0, 1, 1], [], []>} : vector<4x256xbf16>, vector<256x32xbf16>, vector<4x32xf32> -> vector<4x32xf32>
    %21 = arith.addf %13, %20 : vector<4x32xf32>
    %c1_i32_20 = arith.constant 1 : i32
    %22 = arith.addi %arg1, %c1_i32_20 : i32
    %c0_21 = arith.constant 0 : index
    %c1_22 = arith.constant 1 : index
    %23 = arith.index_cast %22 : i32 to index
    %c0_23 = arith.constant 0 : index
    %c0_24 = arith.constant 0 : index
    %24 = vector.load %arg2[%c0_21, %c1_22, %23, %c0_23, %c0_24] : memref<1x2x3x4x256xbf16, #tpu.memory_space<vmem>>, vector<1x1x1x4x256xbf16>
    %25 = vector.shape_cast %24 : vector<1x1x1x4x256xbf16> to vector<4x256xbf16>
    %c3 = arith.constant 3 : index
    %c0_25 = arith.constant 0 : index
    %c0_26 = arith.constant 0 : index
    %26 = vector.load %arg3[%c3, %c0_25, %c0_26] : memref<4x256x32xbf16, #tpu.memory_space<vmem>>, vector<1x256x32xbf16>
    %27 = vector.shape_cast %26 : vector<1x256x32xbf16> to vector<256x32xbf16>
    %cst_27 = arith.constant dense<0.000000e+00> : vector<4x32xf32>
    %28 = tpu.matmul %25, %27, %cst_27 {dimension_numbers = #tpu.dot_dimension_numbers<[1], [0], [0], [1], [0, 0, 1, 1], [], []>} : vector<4x256xbf16>, vector<256x32xbf16>, vector<4x32xf32> -> vector<4x32xf32>
    %29 = arith.addf %21, %28 : vector<4x32xf32>
    %c0_28 = arith.constant 0 : index
    %c0_29 = arith.constant 0 : index
    %c0_30 = arith.constant 0 : index
    %c0_31 = arith.constant 0 : index
    %30 = vector.load %arg4[%c0_28, %c0_29, %c0_30, %c0_31] : memref<1x1x4x32xf32, #tpu.memory_space<vmem>>, vector<1x1x4x32xf32>
    %31 = vector.shape_cast %30 : vector<1x1x4x32xf32> to vector<4x32xf32>
    %32 = vector.shape_cast %29 : vector<4x32xf32> to vector<1x1x4x32xf32>
    tpu.vector_store %arg4[%c0_28, %c0_29, %c0_30, %c0_31], %32 {strides = array<i32>} : memref<1x1x4x32xf32, #tpu.memory_space<vmem>>, vector<1x1x4x32xf32>,
    %cst_32 = arith.constant dense<0.000000e+00> : vector<32xf32>
    %33 = vector.multi_reduction <add>, %29, %cst_32 [0] : vector<4x32xf32> to vector<32xf32>
    %34 = vector.shape_cast %33 : vector<32xf32> to vector<1x32xf32>
    %c0_33 = arith.constant 0 : index
    %c0_34 = arith.constant 0 : index
    %c0_35 = arith.constant 0 : index
    %c0_36 = arith.constant 0 : index
    %35 = vector.load %arg5[%c0_33, %c0_34, %c0_35, %c0_36] : memref<1x1x2x32xf32, #tpu.memory_space<vmem>>, vector<1x1x1x32xf32>
    %36 = vector.shape_cast %35 : vector<1x1x1x32xf32> to vector<1x32xf32>
    %37 = vector.shape_cast %34 : vector<1x32xf32> to vector<1x1x1x32xf32>
    tpu.vector_store %arg5[%c0_33, %c0_34, %c0_35, %c0_36], %37 {strides = array<i32>} : memref<1x1x2x32xf32, #tpu.memory_space<vmem>>, vector<1x1x1x32xf32>,
    %38 = arith.mulf %29, %29 : vector<4x32xf32>
    %cst_37 = arith.constant dense<0.000000e+00> : vector<32xf32>
    %39 = vector.multi_reduction <add>, %38, %cst_37 [0] : vector<4x32xf32> to vector<32xf32>
    %40 = vector.shape_cast %39 : vector<32xf32> to vector<1x32xf32>
    %c0_38 = arith.constant 0 : index
    %c0_39 = arith.constant 0 : index
    %c1_40 = arith.constant 1 : index
    %c0_41 = arith.constant 0 : index
    %41 = vector.load %arg5[%c0_38, %c0_39, %c1_40, %c0_41] : memref<1x1x2x32xf32, #tpu.memory_space<vmem>>, vector<1x1x1x32xf32>
    %42 = vector.shape_cast %41 : vector<1x1x1x32xf32> to vector<1x32xf32>
    %43 = vector.shape_cast %40 : vector<1x32xf32> to vector<1x1x1x32xf32>
    tpu.vector_store %arg5[%c0_38, %c0_39, %c1_40, %c0_41], %43 {strides = array<i32>} : memref<1x1x2x32xf32, #tpu.memory_space<vmem>>, vector<1x1x1x32xf32>,
    return
  }
  func.func @transform_0(%arg0: i32, %arg1: i32) -> (i32, i32, i32, i32, i32) {
    %c0_i32 = arith.constant 0 : i32
    %c0_i32_0 = arith.constant 0 : i32
    %c0_i32_1 = arith.constant 0 : i32
    %c0_i32_2 = arith.constant 0 : i32
    %c0_i32_3 = arith.constant 0 : i32
    return %arg0, %c0_i32, %c0_i32_0, %c0_i32_1, %c0_i32_2 : i32, i32, i32, i32, i32
  }
  func.func @transform_1(%arg0: i32, %arg1: i32) -> (i32, i32, i32) {
    %c0_i32 = arith.constant 0 : i32
    %c0_i32_0 = arith.constant 0 : i32
    %c0_i32_1 = arith.constant 0 : i32
    %c0_i32_2 = arith.constant 0 : i32
    return %c0_i32, %c0_i32_0, %c0_i32_1 : i32, i32, i32
  }
  func.func @transform_2(%arg0: i32, %arg1: i32) -> (i32, i32, i32, i32) {
    %c0_i32 = arith.constant 0 : i32
    %c0_i32_0 = arith.constant 0 : i32
    %c0_i32_1 = arith.constant 0 : i32
    return %arg0, %arg1, %c0_i32, %c0_i32_0 : i32, i32, i32, i32
  }
  func.func @transform_3(%arg0: i32, %arg1: i32) -> (i32, i32, i32, i32) {
    %c0_i32 = arith.constant 0 : i32
    %c0_i32_0 = arith.constant 0 : i32
    %c0_i32_1 = arith.constant 0 : i32
    return %arg0, %arg1, %c0_i32, %c0_i32_0 : i32, i32, i32, i32
  }
}

module attributes {stable_mosaic.version = 11 : i64} {
  func.func @_conv_tap_kernel(%arg0: i32, %arg1: i32, %arg2: memref<1x2x2x1x512xbf16, #tpu.memory_space<vmem>>, %arg3: memref<4x512x64xbf16, #tpu.memory_space<vmem>>, %arg4: memref<1x1x1x64xf32, #tpu.memory_space<vmem>>, %arg5: memref<1x1x2x64xf32, #tpu.memory_space<vmem>>) attributes {dimension_semantics = [#tpu.dimension_semantics<parallel>, #tpu.dimension_semantics<parallel>], iteration_bounds = array<i64: 2, 1>, scalar_prefetch = 0 : i64, scratch_operands = 0 : i64, tpu.core_type = #tpu.core_type<tc>, window_params = [{transform_indices = @transform_0, window_bounds = array<i64: 1, 2, 2, 1, 512>}, {pipeline_mode = #tpu.pipeline_mode<synchronous>, transform_indices = @transform_1, window_bounds = array<i64: 4, 512, 64>}, {transform_indices = @transform_2, window_bounds = array<i64: 1, 1, 1, 64>}, {transform_indices = @transform_3, window_bounds = array<i64: 1, 1, 2, 64>}]} {
    %c0 = arith.constant 0 : index
    %c0_0 = arith.constant 0 : index
    %0 = arith.index_cast %arg1 : i32 to index
    %c0_1 = arith.constant 0 : index
    %c0_2 = arith.constant 0 : index
    %1 = vector.load %arg2[%c0, %c0_0, %0, %c0_1, %c0_2] : memref<1x2x2x1x512xbf16, #tpu.memory_space<vmem>>, vector<1x1x1x1x512xbf16>
    %2 = vector.shape_cast %1 : vector<1x1x1x1x512xbf16> to vector<1x512xbf16>
    %c0_3 = arith.constant 0 : index
    %c0_4 = arith.constant 0 : index
    %c0_5 = arith.constant 0 : index
    %3 = vector.load %arg3[%c0_3, %c0_4, %c0_5] : memref<4x512x64xbf16, #tpu.memory_space<vmem>>, vector<1x512x64xbf16>
    %4 = vector.shape_cast %3 : vector<1x512x64xbf16> to vector<512x64xbf16>
    %cst = arith.constant dense<0.000000e+00> : vector<1x64xf32>
    %5 = tpu.matmul %2, %4, %cst {dimension_numbers = #tpu.dot_dimension_numbers<[1], [0], [0], [1], [0, 0, 1, 1], [], []>} : vector<1x512xbf16>, vector<512x64xbf16>, vector<1x64xf32> -> vector<1x64xf32>
    %c0_i32 = arith.constant 0 : i32
    %6 = arith.addi %arg1, %c0_i32 : i32
    %c0_6 = arith.constant 0 : index
    %c1 = arith.constant 1 : index
    %7 = arith.index_cast %6 : i32 to index
    %c0_7 = arith.constant 0 : index
    %c0_8 = arith.constant 0 : index
    %8 = vector.load %arg2[%c0_6, %c1, %7, %c0_7, %c0_8] : memref<1x2x2x1x512xbf16, #tpu.memory_space<vmem>>, vector<1x1x1x1x512xbf16>
    %9 = vector.shape_cast %8 : vector<1x1x1x1x512xbf16> to vector<1x512xbf16>
    %c1_9 = arith.constant 1 : index
    %c0_10 = arith.constant 0 : index
    %c0_11 = arith.constant 0 : index
    %10 = vector.load %arg3[%c1_9, %c0_10, %c0_11] : memref<4x512x64xbf16, #tpu.memory_space<vmem>>, vector<1x512x64xbf16>
    %11 = vector.shape_cast %10 : vector<1x512x64xbf16> to vector<512x64xbf16>
    %cst_12 = arith.constant dense<0.000000e+00> : vector<1x64xf32>
    %12 = tpu.matmul %9, %11, %cst_12 {dimension_numbers = #tpu.dot_dimension_numbers<[1], [0], [0], [1], [0, 0, 1, 1], [], []>} : vector<1x512xbf16>, vector<512x64xbf16>, vector<1x64xf32> -> vector<1x64xf32>
    %13 = arith.addf %5, %12 : vector<1x64xf32>
    %c1_i32 = arith.constant 1 : i32
    %14 = arith.addi %arg1, %c1_i32 : i32
    %c0_13 = arith.constant 0 : index
    %c0_14 = arith.constant 0 : index
    %15 = arith.index_cast %14 : i32 to index
    %c0_15 = arith.constant 0 : index
    %c0_16 = arith.constant 0 : index
    %16 = vector.load %arg2[%c0_13, %c0_14, %15, %c0_15, %c0_16] : memref<1x2x2x1x512xbf16, #tpu.memory_space<vmem>>, vector<1x1x1x1x512xbf16>
    %17 = vector.shape_cast %16 : vector<1x1x1x1x512xbf16> to vector<1x512xbf16>
    %c2 = arith.constant 2 : index
    %c0_17 = arith.constant 0 : index
    %c0_18 = arith.constant 0 : index
    %18 = vector.load %arg3[%c2, %c0_17, %c0_18] : memref<4x512x64xbf16, #tpu.memory_space<vmem>>, vector<1x512x64xbf16>
    %19 = vector.shape_cast %18 : vector<1x512x64xbf16> to vector<512x64xbf16>
    %cst_19 = arith.constant dense<0.000000e+00> : vector<1x64xf32>
    %20 = tpu.matmul %17, %19, %cst_19 {dimension_numbers = #tpu.dot_dimension_numbers<[1], [0], [0], [1], [0, 0, 1, 1], [], []>} : vector<1x512xbf16>, vector<512x64xbf16>, vector<1x64xf32> -> vector<1x64xf32>
    %21 = arith.addf %13, %20 : vector<1x64xf32>
    %c1_i32_20 = arith.constant 1 : i32
    %22 = arith.addi %arg1, %c1_i32_20 : i32
    %c0_21 = arith.constant 0 : index
    %c1_22 = arith.constant 1 : index
    %23 = arith.index_cast %22 : i32 to index
    %c0_23 = arith.constant 0 : index
    %c0_24 = arith.constant 0 : index
    %24 = vector.load %arg2[%c0_21, %c1_22, %23, %c0_23, %c0_24] : memref<1x2x2x1x512xbf16, #tpu.memory_space<vmem>>, vector<1x1x1x1x512xbf16>
    %25 = vector.shape_cast %24 : vector<1x1x1x1x512xbf16> to vector<1x512xbf16>
    %c3 = arith.constant 3 : index
    %c0_25 = arith.constant 0 : index
    %c0_26 = arith.constant 0 : index
    %26 = vector.load %arg3[%c3, %c0_25, %c0_26] : memref<4x512x64xbf16, #tpu.memory_space<vmem>>, vector<1x512x64xbf16>
    %27 = vector.shape_cast %26 : vector<1x512x64xbf16> to vector<512x64xbf16>
    %cst_27 = arith.constant dense<0.000000e+00> : vector<1x64xf32>
    %28 = tpu.matmul %25, %27, %cst_27 {dimension_numbers = #tpu.dot_dimension_numbers<[1], [0], [0], [1], [0, 0, 1, 1], [], []>} : vector<1x512xbf16>, vector<512x64xbf16>, vector<1x64xf32> -> vector<1x64xf32>
    %29 = arith.addf %21, %28 : vector<1x64xf32>
    %c0_28 = arith.constant 0 : index
    %c0_29 = arith.constant 0 : index
    %c0_30 = arith.constant 0 : index
    %c0_31 = arith.constant 0 : index
    %30 = vector.load %arg4[%c0_28, %c0_29, %c0_30, %c0_31] : memref<1x1x1x64xf32, #tpu.memory_space<vmem>>, vector<1x1x1x64xf32>
    %31 = vector.shape_cast %30 : vector<1x1x1x64xf32> to vector<1x64xf32>
    %32 = vector.shape_cast %29 : vector<1x64xf32> to vector<1x1x1x64xf32>
    tpu.vector_store %arg4[%c0_28, %c0_29, %c0_30, %c0_31], %32 {strides = array<i32>} : memref<1x1x1x64xf32, #tpu.memory_space<vmem>>, vector<1x1x1x64xf32>,
    %cst_32 = arith.constant dense<0.000000e+00> : vector<64xf32>
    %33 = vector.multi_reduction <add>, %29, %cst_32 [0] : vector<1x64xf32> to vector<64xf32>
    %34 = vector.shape_cast %33 : vector<64xf32> to vector<1x64xf32>
    %c0_33 = arith.constant 0 : index
    %c0_34 = arith.constant 0 : index
    %c0_35 = arith.constant 0 : index
    %c0_36 = arith.constant 0 : index
    %35 = vector.load %arg5[%c0_33, %c0_34, %c0_35, %c0_36] : memref<1x1x2x64xf32, #tpu.memory_space<vmem>>, vector<1x1x1x64xf32>
    %36 = vector.shape_cast %35 : vector<1x1x1x64xf32> to vector<1x64xf32>
    %37 = vector.shape_cast %34 : vector<1x64xf32> to vector<1x1x1x64xf32>
    tpu.vector_store %arg5[%c0_33, %c0_34, %c0_35, %c0_36], %37 {strides = array<i32>} : memref<1x1x2x64xf32, #tpu.memory_space<vmem>>, vector<1x1x1x64xf32>,
    %38 = arith.mulf %29, %29 : vector<1x64xf32>
    %cst_37 = arith.constant dense<0.000000e+00> : vector<64xf32>
    %39 = vector.multi_reduction <add>, %38, %cst_37 [0] : vector<1x64xf32> to vector<64xf32>
    %40 = vector.shape_cast %39 : vector<64xf32> to vector<1x64xf32>
    %c0_38 = arith.constant 0 : index
    %c0_39 = arith.constant 0 : index
    %c1_40 = arith.constant 1 : index
    %c0_41 = arith.constant 0 : index
    %41 = vector.load %arg5[%c0_38, %c0_39, %c1_40, %c0_41] : memref<1x1x2x64xf32, #tpu.memory_space<vmem>>, vector<1x1x1x64xf32>
    %42 = vector.shape_cast %41 : vector<1x1x1x64xf32> to vector<1x64xf32>
    %43 = vector.shape_cast %40 : vector<1x64xf32> to vector<1x1x1x64xf32>
    tpu.vector_store %arg5[%c0_38, %c0_39, %c1_40, %c0_41], %43 {strides = array<i32>} : memref<1x1x2x64xf32, #tpu.memory_space<vmem>>, vector<1x1x1x64xf32>,
    return
  }
  func.func @transform_0(%arg0: i32, %arg1: i32) -> (i32, i32, i32, i32, i32) {
    %c0_i32 = arith.constant 0 : i32
    %c0_i32_0 = arith.constant 0 : i32
    %c0_i32_1 = arith.constant 0 : i32
    %c0_i32_2 = arith.constant 0 : i32
    %c0_i32_3 = arith.constant 0 : i32
    return %arg0, %c0_i32, %c0_i32_0, %c0_i32_1, %c0_i32_2 : i32, i32, i32, i32, i32
  }
  func.func @transform_1(%arg0: i32, %arg1: i32) -> (i32, i32, i32) {
    %c0_i32 = arith.constant 0 : i32
    %c0_i32_0 = arith.constant 0 : i32
    %c0_i32_1 = arith.constant 0 : i32
    %c0_i32_2 = arith.constant 0 : i32
    return %c0_i32, %c0_i32_0, %c0_i32_1 : i32, i32, i32
  }
  func.func @transform_2(%arg0: i32, %arg1: i32) -> (i32, i32, i32, i32) {
    %c0_i32 = arith.constant 0 : i32
    %c0_i32_0 = arith.constant 0 : i32
    %c0_i32_1 = arith.constant 0 : i32
    return %arg0, %arg1, %c0_i32, %c0_i32_0 : i32, i32, i32, i32
  }
  func.func @transform_3(%arg0: i32, %arg1: i32) -> (i32, i32, i32, i32) {
    %c0_i32 = arith.constant 0 : i32
    %c0_i32_0 = arith.constant 0 : i32
    %c0_i32_1 = arith.constant 0 : i32
    return %arg0, %arg1, %c0_i32, %c0_i32_0 : i32, i32, i32, i32
  }
}

module attributes {stable_mosaic.version = 11 : i64} {
  func.func @_bn_lrelu_kernel(%arg0: i32, %arg1: i32, %arg2: memref<1x1x1x64xf32, #tpu.memory_space<vmem>>, %arg3: memref<2x1x2x64xf32, #tpu.memory_space<vmem>>, %arg4: memref<1x64xf32, #tpu.memory_space<vmem>>, %arg5: memref<1x64xf32, #tpu.memory_space<vmem>>, %arg6: memref<1x1x1x64xbf16, #tpu.memory_space<vmem>>) attributes {dimension_semantics = [#tpu.dimension_semantics<parallel>, #tpu.dimension_semantics<parallel>], iteration_bounds = array<i64: 2, 1>, scalar_prefetch = 0 : i64, scratch_operands = 0 : i64, tpu.core_type = #tpu.core_type<tc>, window_params = [{transform_indices = @transform_0, window_bounds = array<i64: 1, 1, 1, 64>}, {pipeline_mode = #tpu.pipeline_mode<synchronous>, transform_indices = @transform_1, window_bounds = array<i64: 2, 1, 2, 64>}, {pipeline_mode = #tpu.pipeline_mode<synchronous>, transform_indices = @transform_2, window_bounds = array<i64: 1, 64>}, {pipeline_mode = #tpu.pipeline_mode<synchronous>, transform_indices = @transform_3, window_bounds = array<i64: 1, 64>}, {transform_indices = @transform_4, window_bounds = array<i64: 1, 1, 1, 64>}]} {
    %c0 = arith.constant 0 : index
    %c0_0 = arith.constant 0 : index
    %c0_1 = arith.constant 0 : index
    %c0_2 = arith.constant 0 : index
    %0 = vector.load %arg3[%c0, %c0_0, %c0_1, %c0_2] : memref<2x1x2x64xf32, #tpu.memory_space<vmem>>, vector<2x1x2x64xf32>
    %cst = arith.constant dense<0.000000e+00> : vector<1x2x64xf32>
    %1 = vector.multi_reduction <add>, %0, %cst [0] : vector<2x1x2x64xf32> to vector<1x2x64xf32>
    %cst_3 = arith.constant dense<0.000000e+00> : vector<2x64xf32>
    %2 = vector.multi_reduction <add>, %1, %cst_3 [0] : vector<1x2x64xf32> to vector<2x64xf32>
    %3 = vector.extract_strided_slice %2 {offsets = [0, 0], sizes = [1, 64], strides = [1, 1]} : vector<2x64xf32> to vector<1x64xf32>
    %cst_4 = arith.constant 5.000000e-01 : f32
    %4 = vector.broadcast %cst_4 : f32 to vector<1x64xf32>
    %5 = arith.mulf %3, %4 : vector<1x64xf32>
    %6 = vector.extract_strided_slice %2 {offsets = [1, 0], sizes = [1, 64], strides = [1, 1]} : vector<2x64xf32> to vector<1x64xf32>
    %cst_5 = arith.constant 5.000000e-01 : f32
    %7 = vector.broadcast %cst_5 : f32 to vector<1x64xf32>
    %8 = arith.mulf %6, %7 : vector<1x64xf32>
    %9 = arith.mulf %5, %5 : vector<1x64xf32>
    %10 = arith.subf %8, %9 : vector<1x64xf32>
    %cst_6 = arith.constant 9.99999974E-6 : f32
    %11 = vector.broadcast %cst_6 : f32 to vector<1x64xf32>
    %12 = arith.addf %10, %11 : vector<1x64xf32>
    %13 = math.rsqrt %12 : vector<1x64xf32>
    %c0_7 = arith.constant 0 : index
    %c0_8 = arith.constant 0 : index
    %14 = vector.load %arg4[%c0_7, %c0_8] : memref<1x64xf32, #tpu.memory_space<vmem>>, vector<1x64xf32>
    %15 = arith.mulf %13, %14 : vector<1x64xf32>
    %c0_9 = arith.constant 0 : index
    %c0_10 = arith.constant 0 : index
    %c0_11 = arith.constant 0 : index
    %c0_12 = arith.constant 0 : index
    %16 = vector.load %arg2[%c0_9, %c0_10, %c0_11, %c0_12] : memref<1x1x1x64xf32, #tpu.memory_space<vmem>>, vector<1x1x1x64xf32>
    %17 = vector.shape_cast %16 : vector<1x1x1x64xf32> to vector<1x64xf32>
    %18 = arith.subf %17, %5 : vector<1x64xf32>
    %19 = arith.mulf %18, %15 : vector<1x64xf32>
    %c0_13 = arith.constant 0 : index
    %c0_14 = arith.constant 0 : index
    %20 = vector.load %arg5[%c0_13, %c0_14] : memref<1x64xf32, #tpu.memory_space<vmem>>, vector<1x64xf32>
    %21 = arith.addf %19, %20 : vector<1x64xf32>
    %cst_15 = arith.constant 0.000000e+00 : f32
    %22 = vector.broadcast %cst_15 : f32 to vector<1x64xf32>
    %23 = arith.cmpf oge, %21, %22 : vector<1x64xf32>
    %cst_16 = arith.constant 2.000000e-01 : f32
    %24 = vector.broadcast %cst_16 : f32 to vector<1x64xf32>
    %25 = arith.mulf %24, %21 : vector<1x64xf32>
    %26 = arith.select %23, %21, %25 : vector<1x64xi1>, vector<1x64xf32>
    %27 = arith.truncf %26 : vector<1x64xf32> to vector<1x64xbf16>
    %c0_17 = arith.constant 0 : index
    %c0_18 = arith.constant 0 : index
    %c0_19 = arith.constant 0 : index
    %c0_20 = arith.constant 0 : index
    %28 = vector.load %arg6[%c0_17, %c0_18, %c0_19, %c0_20] : memref<1x1x1x64xbf16, #tpu.memory_space<vmem>>, vector<1x1x1x64xbf16>
    %29 = vector.shape_cast %28 : vector<1x1x1x64xbf16> to vector<1x64xbf16>
    %30 = vector.shape_cast %27 : vector<1x64xbf16> to vector<1x1x1x64xbf16>
    tpu.vector_store %arg6[%c0_17, %c0_18, %c0_19, %c0_20], %30 {strides = array<i32>} : memref<1x1x1x64xbf16, #tpu.memory_space<vmem>>, vector<1x1x1x64xbf16>,
    return
  }
  func.func @transform_0(%arg0: i32, %arg1: i32) -> (i32, i32, i32, i32) {
    %c0_i32 = arith.constant 0 : i32
    %c0_i32_0 = arith.constant 0 : i32
    %c0_i32_1 = arith.constant 0 : i32
    return %arg0, %arg1, %c0_i32, %c0_i32_0 : i32, i32, i32, i32
  }
  func.func @transform_1(%arg0: i32, %arg1: i32) -> (i32, i32, i32, i32) {
    %c0_i32 = arith.constant 0 : i32
    %c0_i32_0 = arith.constant 0 : i32
    %c0_i32_1 = arith.constant 0 : i32
    %c0_i32_2 = arith.constant 0 : i32
    %c0_i32_3 = arith.constant 0 : i32
    return %c0_i32, %c0_i32_0, %c0_i32_1, %c0_i32_2 : i32, i32, i32, i32
  }
  func.func @transform_2(%arg0: i32, %arg1: i32) -> (i32, i32) {
    %c0_i32 = arith.constant 0 : i32
    %c0_i32_0 = arith.constant 0 : i32
    %c0_i32_1 = arith.constant 0 : i32
    return %c0_i32, %c0_i32_0 : i32, i32
  }
  func.func @transform_3(%arg0: i32, %arg1: i32) -> (i32, i32) {
    %c0_i32 = arith.constant 0 : i32
    %c0_i32_0 = arith.constant 0 : i32
    %c0_i32_1 = arith.constant 0 : i32
    return %c0_i32, %c0_i32_0 : i32, i32
  }
  func.func @transform_4(%arg0: i32, %arg1: i32) -> (i32, i32, i32, i32) {
    %c0_i32 = arith.constant 0 : i32
    %c0_i32_0 = arith.constant 0 : i32
    %c0_i32_1 = arith.constant 0 : i32
    return %arg0, %arg1, %c0_i32, %c0_i32_0 : i32, i32, i32, i32
  }
}

module attributes {stable_mosaic.version = 11 : i64} {
  func.func @_linear_kernel(%arg0: i32, %arg1: memref<2x64xbf16, #tpu.memory_space<vmem>>, %arg2: memref<32x64xbf16, #tpu.memory_space<vmem>>, %arg3: memref<1x32xf32, #tpu.memory_space<vmem>>, %arg4: memref<2x32xf32, #tpu.memory_space<vmem>>) attributes {dimension_semantics = [#tpu.dimension_semantics<arbitrary>], iteration_bounds = array<i64: 1>, scalar_prefetch = 0 : i64, scratch_operands = 0 : i64, tpu.core_type = #tpu.core_type<tc>, window_params = [{pipeline_mode = #tpu.pipeline_mode<synchronous>, transform_indices = @transform_0, window_bounds = array<i64: 2, 64>}, {pipeline_mode = #tpu.pipeline_mode<synchronous>, transform_indices = @transform_1, window_bounds = array<i64: 32, 64>}, {pipeline_mode = #tpu.pipeline_mode<synchronous>, transform_indices = @transform_2, window_bounds = array<i64: 1, 32>}, {pipeline_mode = #tpu.pipeline_mode<synchronous>, transform_indices = @transform_3, window_bounds = array<i64: 2, 32>}]} {
    %c0 = arith.constant 0 : index
    %c0_0 = arith.constant 0 : index
    %0 = vector.load %arg1[%c0, %c0_0] : memref<2x64xbf16, #tpu.memory_space<vmem>>, vector<2x64xbf16>
    %c0_1 = arith.constant 0 : index
    %c0_2 = arith.constant 0 : index
    %1 = vector.load %arg2[%c0_1, %c0_2] : memref<32x64xbf16, #tpu.memory_space<vmem>>, vector<32x64xbf16>
    %cst = arith.constant dense<0.000000e+00> : vector<2x32xf32>
    %2 = tpu.matmul %0, %1, %cst {dimension_numbers = #tpu.dot_dimension_numbers<[1], [1], [0], [0], [0, 0, 1, 0], [], []>} : vector<2x64xbf16>, vector<32x64xbf16>, vector<2x32xf32> -> vector<2x32xf32>
    %c0_3 = arith.constant 0 : index
    %c0_4 = arith.constant 0 : index
    %3 = vector.load %arg3[%c0_3, %c0_4] : memref<1x32xf32, #tpu.memory_space<vmem>>, vector<1x32xf32>
    %4 = vector.broadcast %3 : vector<1x32xf32> to vector<2x32xf32>
    %5 = arith.addf %2, %4 : vector<2x32xf32>
    %c0_5 = arith.constant 0 : index
    %c0_6 = arith.constant 0 : index
    %6 = vector.load %arg4[%c0_5, %c0_6] : memref<2x32xf32, #tpu.memory_space<vmem>>, vector<2x32xf32>
    tpu.vector_store %arg4[%c0_5, %c0_6], %5 {strides = array<i32>} : memref<2x32xf32, #tpu.memory_space<vmem>>, vector<2x32xf32>,
    return
  }
  func.func @transform_0(%arg0: i32) -> (i32, i32) {
    %c0_i32 = arith.constant 0 : i32
    %c0_i32_0 = arith.constant 0 : i32
    %c0_i32_1 = arith.constant 0 : i32
    return %c0_i32, %c0_i32_0 : i32, i32
  }
  func.func @transform_1(%arg0: i32) -> (i32, i32) {
    %c0_i32 = arith.constant 0 : i32
    %c0_i32_0 = arith.constant 0 : i32
    %c0_i32_1 = arith.constant 0 : i32
    return %c0_i32, %c0_i32_0 : i32, i32
  }
  func.func @transform_2(%arg0: i32) -> (i32, i32) {
    %c0_i32 = arith.constant 0 : i32
    %c0_i32_0 = arith.constant 0 : i32
    %c0_i32_1 = arith.constant 0 : i32
    return %c0_i32, %c0_i32_0 : i32, i32
  }
  func.func @transform_3(%arg0: i32) -> (i32, i32) {
    %c0_i32 = arith.constant 0 : i32
    %c0_i32_0 = arith.constant 0 : i32
    %c0_i32_1 = arith.constant 0 : i32
    return %c0_i32, %c0_i32_0 : i32, i32
  }
}

</mosaic_0001>

<llo_original>
// kernel: conv3d_encoder_forward.10
$region0: #{conv3d_encoder_forward.10}
  #allocation0 [shape = 'u32[]', space=smem, size = 0x4, offset = 0x4, fixed_abs, tag = 'smem constant byte address 0x4 - core index']
  #allocation1 [shape = 'u32[144,128]{1,0:T(1,128)}', space=vmem, size = 0x12000, scoped, tag = 'internal scratch']
  %s0 = inlined_call_operand.vmem [shape: f32[2,8,64,8], index: 0, kind: input, shape index: {}]
  %s1 = inlined_call_operand.vmem [shape: f32[2,8,2,8], index: 1, kind: input, shape index: {}]
  %s2 = inlined_call_operand.vmem [shape: f32[1,8], index: 2, kind: input, shape index: {}]
  %s3 = inlined_call_operand.vmem [shape: f32[1,8], index: 3, kind: input, shape index: {}]
  %s4 = inlined_call_operand.vmem [shape: bf16[2,8,64,8], index: 4, kind: output, shape index: {}]
  %s5 = sld [smem:[#allocation0]]
  $region49: #{conv3d_encoder_forward.10} parent=0
    _
  %s7 = ssub.s32 1, %s5
  %s8 = scalar_select 0, %s7, %s5
  loop: start=0, step=1, limit=18
  $region2: #{conv3d_encoder_forward.10} parent=0 // loop_pre_header
    _
  $region3: #{conv3d_encoder_forward.10} parent=0 // loop_header
    %s10 = sphi 0, %s14
    %p11 = scmp.ge.s32.totalorder %s10, 18
    %s17 = sphi 0, %s29
    %s18 = sphi 0, %s25
    %s19 = sphi 0, %s17
    %s20 = sphi 0, %s18
    %s21 = sphi 0, %s19
    %s22 = sphi 0, %s20
    %s34 = sphi 0, %s36
    %s37 = sphi 0, %s34
    %s38 = sphi 0, %s37
    %s54 = sphi 0, %s38
    %s58 = sphi 0, %s58
    %s60 = sphi 0, %s58
    %s61 = sphi 0, %s60
    %s75 = sphi 0, %s61
    %s79 = sphi 0, %s79
    %s81 = sphi 0, %s79
    %s82 = sphi 0, %s81
    %s96 = sphi 0, %s82
    %s100 = sphi 0, %s100
    %s102 = sphi 0, %s100
    %s103 = sphi 0, %s102
    %s117 = sphi 0, %s103
    %s125 = sphi 0, %s127
    %s128 = sphi 0, %s125
    %s129 = sphi 0, %s128
    %s145 = sphi 0, %s129
  $region4: #{conv3d_encoder_forward.10} parent=0 // loop_header_branch
    %13 = sbr.rel (%p11) target = $region8
  $region5: #{conv3d_encoder_forward.10} parent=0 // loop_body
    %s15 = ssub.s32 %s10, 1
    %s16 = ssub.s32 %s10, 2
    %s23 = sadd.s32 1, %s18
    %p24 = scmp.ge.s32.totalorder %s23, 8
    %s25 = scalar_select %p24, 0, %s23
    %s26 = sadd.s32 1, %s17
    %s27 = scalar_select %p24, %s26, %s17
    %p28 = scmp.ge.s32.totalorder %s27, 2
    %s29 = scalar_select %p28, 0, %s27
    %s30 = ssub.s32 %s17, %s29
    %s31 = ssub.s32 %s18, %s25
    %s32 = sor.u32 %s30, %s31
    %p33 = scmp.eq.s32.totalorder %s32, 0
    %s35 = sadd.s32 %s34, 1
    %s36 = scalar_select %p33, %s34, %s35
    %p39 = pneg %p33
    %p40 = scmp.eq.s32.totalorder %s10, 15
    %p41 = por %p39, %p40
    %p42 = scmp.ne.s32.totalorder %s34, %s37
    %p43 = scmp.eq.s32.totalorder %s10, 0
    %p44 = por %p42, %p43
    %p45 = scmp.ne.s32.totalorder %s34, %s37
    %p46 = scmp.eq.s32.totalorder %s15, 15
    %p47 = por %p45, %p46
    %p48 = scmp.ne.s32.totalorder %s37, %s38
    %p49 = scmp.eq.s32.totalorder %s15, 0
    %p50 = por %p48, %p49
    %p51 = scmp.ne.s32.totalorder %s37, %s38
    %p52 = scmp.eq.s32.totalorder %s16, 15
    %p53 = por %p51, %p52
    %p55 = scmp.ne.s32.totalorder %s38, %s54
    %p56 = scmp.eq.s32.totalorder %s16, 0
    %p57 = por %p55, %p56
    %s59 = sadd.s32 %s58, 1
    %p62 = scmp.eq.s32.totalorder %s10, 15
    %p63 = scmp.ne.s32.totalorder %s58, %s60
    %p64 = scmp.eq.s32.totalorder %s10, 0
    %p65 = por %p63, %p64
    %p66 = scmp.ne.s32.totalorder %s58, %s60
    %p67 = scmp.eq.s32.totalorder %s15, 15
    %p68 = por %p66, %p67
    %p69 = scmp.ne.s32.totalorder %s60, %s61
    %p70 = scmp.eq.s32.totalorder %s15, 0
    %p71 = por %p69, %p70
    %p72 = scmp.ne.s32.totalorder %s60, %s61
    %p73 = scmp.eq.s32.totalorder %s16, 15
    %p74 = por %p72, %p73
    %p76 = scmp.ne.s32.totalorder %s61, %s75
    %p77 = scmp.eq.s32.totalorder %s16, 0
    %p78 = por %p76, %p77
    %s80 = sadd.s32 %s79, 1
    %p83 = scmp.eq.s32.totalorder %s10, 15
    %p84 = scmp.ne.s32.totalorder %s79, %s81
    %p85 = scmp.eq.s32.totalorder %s10, 0
    %p86 = por %p84, %p85
    %p87 = scmp.ne.s32.totalorder %s79, %s81
    %p88 = scmp.eq.s32.totalorder %s15, 15
    %p89 = por %p87, %p88
    %p90 = scmp.ne.s32.totalorder %s81, %s82
    %p91 = scmp.eq.s32.totalorder %s15, 0
    %p92 = por %p90, %p91
    %p93 = scmp.ne.s32.totalorder %s81, %s82
    %p94 = scmp.eq.s32.totalorder %s16, 15
    %p95 = por %p93, %p94
    %p97 = scmp.ne.s32.totalorder %s82, %s96
    %p98 = scmp.eq.s32.totalorder %s16, 0
    %p99 = por %p97, %p98
    %s101 = sadd.s32 %s100, 1
    %p104 = scmp.eq.s32.totalorder %s10, 15
    %p105 = scmp.ne.s32.totalorder %s100, %s102
    %p106 = scmp.eq.s32.totalorder %s10, 0
    %p107 = por %p105, %p106
    %p108 = scmp.ne.s32.totalorder %s100, %s102
    %p109 = scmp.eq.s32.totalorder %s15, 15
    %p110 = por %p108, %p109
    %p111 = scmp.ne.s32.totalorder %s102, %s103
    %p112 = scmp.eq.s32.totalorder %s15, 0
    %p113 = por %p111, %p112
    %p114 = scmp.ne.s32.totalorder %s102, %s103
    %p115 = scmp.eq.s32.totalorder %s16, 15
    %p116 = por %p114, %p115
    %p118 = scmp.ne.s32.totalorder %s103, %s117
    %p119 = scmp.eq.s32.totalorder %s16, 0
    %p120 = por %p118, %p119
    %s121 = ssub.s32 %s17, %s29
    %s122 = ssub.s32 %s18, %s25
    %s123 = sor.u32 %s121, %s122
    %p124 = scmp.eq.s32.totalorder %s123, 0
    %s126 = sadd.s32 %s125, 1
    %s127 = scalar_select %p124, %s125, %s126
    %p130 = pneg %p124
    %p131 = scmp.eq.s32.totalorder %s10, 15
    %p132 = por %p130, %p131
    %p133 = scmp.ne.s32.totalorder %s125, %s128
    %p134 = scmp.eq.s32.totalorder %s10, 0
    %p135 = por %p133, %p134
    %p136 = scmp.ne.s32.totalorder %s125, %s128
    %p137 = scmp.eq.s32.totalorder %s15, 15
    %p138 = por %p136, %p137
    %p139 = scmp.ne.s32.totalorder %s128, %s129
    %p140 = scmp.eq.s32.totalorder %s15, 0
    %p141 = por %p139, %p140
    %p142 = scmp.ne.s32.totalorder %s128, %s129
    %p143 = scmp.eq.s32.totalorder %s16, 15
    %p144 = por %p142, %p143
    %p146 = scmp.ne.s32.totalorder %s129, %s145
    %p147 = scmp.eq.s32.totalorder %s16, 0
    %p148 = por %p146, %p147
    %p149 = scmp.le.s32.totalorder 1, %s10
    %p150 = scmp.lt.s32.totalorder %s10, 17
    %p151 = pnand %p149, %p150
    %p152 = pneg %p151
    // Predicated region
    $region9: #{conv3d_encoder_forward.10} parent=5 // pred_check
      _
    $region10: #{conv3d_encoder_forward.10} parent=5 // pred_check_branch
      %154 = sbr.rel (%p151) target = $region12
    $region11: #{conv3d_encoder_forward.10} parent=5 // pred_region
      %s155 = ssub.s32 %s10, 1
      // Predicated region
      $region13: #{conv3d_encoder_forward.10} parent=11 // pred_check
        %p156 = pneg %p71
      $region14: #{conv3d_encoder_forward.10} parent=11 // pred_check_branch
        %158 = sbr.rel (%p156) target = $region16
      $region15: #{conv3d_encoder_forward.10} parent=11 // pred_region
        _
      $region16: #{conv3d_encoder_forward.10} parent=11 // pred_fallthru
        _
      // Predicated region
      $region17: #{conv3d_encoder_forward.10} parent=11 // pred_check
        %p159 = pneg %p92
      $region18: #{conv3d_encoder_forward.10} parent=11 // pred_check_branch
        %161 = sbr.rel (%p159) target = $region20
      $region19: #{conv3d_encoder_forward.10} parent=11 // pred_region
        _
      $region20: #{conv3d_encoder_forward.10} parent=11 // pred_fallthru
        _
      // Predicated region
      $region21: #{conv3d_encoder_forward.10} parent=11 // pred_check
        %p162 = pneg %p113
      $region22: #{conv3d_encoder_forward.10} parent=11 // pred_check_branch
        %164 = sbr.rel (%p162) target = $region24
      $region23: #{conv3d_encoder_forward.10} parent=11 // pred_region
        _
      $region24: #{conv3d_encoder_forward.10} parent=11 // pred_fallthru
        _
    $region12: #{conv3d_encoder_forward.10} parent=5 // pred_fallthru
      _
    %p165 = scmp.lt.s32.totalorder %s10, 16
    // Predicated region
    $region25: #{conv3d_encoder_forward.10} parent=5 // pred_check
      %p166 = pneg %p165
    $region26: #{conv3d_encoder_forward.10} parent=5 // pred_check_branch
      %168 = sbr.rel (%p166) target = $region28
    $region27: #{conv3d_encoder_forward.10} parent=5 // pred_region
      // Predicated region
      $region29: #{conv3d_encoder_forward.10} parent=27 // pred_check
        %p169 = pneg %p44
      $region30: #{conv3d_encoder_forward.10} parent=27 // pred_check_branch
        %171 = sbr.rel (%p169) target = $region32
      $region31: #{conv3d_encoder_forward.10} parent=27 // pred_region
        %p172 = scmp.lt.s32.totalorder %s17, 1
        %s173 = scalar_select %p172, %s17, 1
        %p174 = scmp.lt.s32.totalorder %s18, 7
        %s175 = scalar_select %p174, %s18, 7
        %s176 = smul.addr %s175, 8
        %s177 = smul.addr %s173, 64
        %s178 = sadd.s32 %s176, %s177
        %s179 = smul.addr %s178, 8
        %s180 = scalar_lea.vmem %s0, %s179
      $region32: #{conv3d_encoder_forward.10} parent=27 // pred_fallthru
        _
    $region28: #{conv3d_encoder_forward.10} parent=5 // pred_fallthru
      _
    %p181 = scmp.le.s32.totalorder 1, %s10
    %p182 = scmp.lt.s32.totalorder %s10, 17
    %p183 = pnand %p181, %p182
    %p184 = pneg %p183
    // Predicated region
    $region33: #{conv3d_encoder_forward.10} parent=5 // pred_check
      _
    $region34: #{conv3d_encoder_forward.10} parent=5 // pred_check_branch
      %186 = sbr.rel (%p183) target = $region36
    $region35: #{conv3d_encoder_forward.10} parent=5 // pred_region
      %s187 = ssub.s32 %s10, 1
      %p188 = scmp.lt.s32.totalorder %s19, 1
      %s189 = scalar_select %p188, %s19, 1
      %p190 = scmp.lt.s32.totalorder %s20, 7
      %s191 = scalar_select %p190, %s20, 7
      %s192 = smul.addr %s191, 8
      %s193 = smul.addr %s189, 64
      %s194 = sadd.s32 %s192, %s193
      %s195 = smul.addr %s194, 8
      %s196 = scalar_lea.vmem %s0, %s195
      %p197 = pneg %p50
      %p198 = pneg %p47
      %p199 = pneg %p71
      %p200 = pneg %p68
      %p201 = pneg %p92
      %p202 = pneg %p89
      %p203 = pneg %p113
      %p204 = pneg %p110
      %p205 = pneg %p141
      %p206 = pneg %p138
      %p207 = scmp.lt.s32.totalorder %s19, 1
      %s208 = scalar_select %p207, %s19, 1
      %p209 = scmp.lt.s32.totalorder %s20, 7
      %s210 = scalar_select %p209, %s20, 7
      %s211 = smul.addr %s210, 8
      %s212 = smul.addr %s208, 64
      %s213 = sadd.s32 %s211, %s212
      %s214 = smul.addr %s213, 4
      %s215 = scalar_lea.vmem %s4, %s214
      %p216 = scmp.lt.s32.totalorder %s19, 1
      %s217 = scalar_select %p216, %s19, 1
      %p218 = scmp.lt.s32.totalorder %s20, 7
      %s219 = scalar_select %p218, %s20, 7
      %s220 = smul.addr %s219, 8
      %s221 = smul.addr %s217, 64
      %s222 = sadd.s32 %s220, %s221
      %s223 = smul.addr %s222, 8
      %s224 = scalar_lea.vmem %s0, %s223
      %p225 = scmp.lt.s32.totalorder %s19, 1
      %s226 = scalar_select %p225, %s19, 1
      %p227 = scmp.lt.s32.totalorder %s20, 7
      %s228 = scalar_select %p227, %s20, 7
      %s229 = smul.addr %s228, 8
      %s230 = smul.addr %s226, 64
      %s231 = sadd.s32 %s229, %s230
      %s232 = smul.addr %s231, 4
      %s233 = scalar_lea.vmem %s4, %s232
      %v234 = vld [vmem:[%s1] sm:$0x3]
      %v235 = vld [vmem:[%s1 + $0x2] sm:$0x3]
      %v236 = vld [vmem:[%s1 + $0x4] sm:$0x3]
      %v237 = vld [vmem:[%s1 + $0x6] sm:$0x3]
      %v238 = vld [vmem:[%s1 + $0x8] sm:$0x3]
      %v239 = vld [vmem:[%s1 + $0xa] sm:$0x3]
      %v240 = vld [vmem:[%s1 + $0xc] sm:$0x3]
      %v241 = vld [vmem:[%s1 + $0xe] sm:$0x3]
      %v242 = vld [vmem:[%s1 + $0x10] sm:$0x3]
      %v243 = vld [vmem:[%s1 + $0x12] sm:$0x3]
      %v244 = vld [vmem:[%s1 + $0x14] sm:$0x3]
      %v245 = vld [vmem:[%s1 + $0x16] sm:$0x3]
      %v246 = vld [vmem:[%s1 + $0x18] sm:$0x3]
      %v247 = vld [vmem:[%s1 + $0x1a] sm:$0x3]
      %v248 = vld [vmem:[%s1 + $0x1c] sm:$0x3]
      %v249 = vld [vmem:[%s1 + $0x1e] sm:$0x3]
      %vm250 = vcmask 58368
      %v251 = vsel %vm250, %v234, 0.0
      %v252 = vsel %vm250, %v242, 0.0
      %v253 = vadd.f32 %v251, %v252
      %v254 = vsel %vm250, %v235, 0.0
      %v255 = vsel %vm250, %v243, 0.0
      %v256 = vadd.f32 %v254, %v255
      %v257 = vsel %vm250, %v236, 0.0
      %v258 = vsel %vm250, %v244, 0.0
      %v259 = vadd.f32 %v257, %v258
      %v260 = vsel %vm250, %v237, 0.0
      %v261 = vsel %vm250, %v245, 0.0
      %v262 = vadd.f32 %v260, %v261
      %v263 = vsel %vm250, %v238, 0.0
      %v264 = vsel %vm250, %v246, 0.0
      %v265 = vadd.f32 %v263, %v264
      %v266 = vsel %vm250, %v239, 0.0
      %v267 = vsel %vm250, %v247, 0.0
      %v268 = vadd.f32 %v266, %v267
      %v269 = vsel %vm250, %v240, 0.0
      %v270 = vsel %vm250, %v248, 0.0
      %v271 = vadd.f32 %v269, %v270
      %v272 = vsel %vm250, %v241, 0.0
      %v273 = vsel %vm250, %v249, 0.0
      %v274 = vadd.f32 %v272, %v273
      %v275 = vsel %vm250, %v253, 0.0
      %v276 = vsel %vm250, %v256, 0.0
      %v277 = vadd.f32 %v275, %v276
      %v278 = vsel %vm250, %v259, 0.0
      %v279 = vadd.f32 %v277, %v278
      %v280 = vsel %vm250, %v262, 0.0
      %v281 = vadd.f32 %v279, %v280
      %v282 = vsel %vm250, %v265, 0.0
      %v283 = vadd.f32 %v281, %v282
      %v284 = vsel %vm250, %v268, 0.0
      %v285 = vadd.f32 %v283, %v284
      %v286 = vsel %vm250, %v271, 0.0
      %v287 = vadd.f32 %v285, %v286
      %v288 = vsel %vm250, %v274, 0.0
      %v289 = vadd.f32 %v287, %v288
      %v290 = vmul.f32 %v289, 0.0009765625
      %v291 = vmul.f32 %v290, %v290
      %v293 = vrot.slane %v291, 7
      %v295 = vsub.f32 %v290, %v293
      %v296 = vadd.f32 %v295, 1e-05
      %v297 = vrsqrt.pop %v296
      %v298 = vld [vmem:[%s2] sm:$0x1]
      %v300 = vlaneseq
      %v301 = vshrl.u32 %v300, 7
      %v302 = vsub.s32 0, %v301
      %v303 = vrot.slane %v298, %v302
      %v305 = vmul.f32 %v297, %v303
      %v306 = vld [vmem:[%s224] sm:$0xff]
      %v307 = vld [vmem:[%s224 + $0x8] sm:$0xff]
      %v308 = vld [vmem:[%s224 + $0x10] sm:$0xff]
      %v309 = vld [vmem:[%s224 + $0x18] sm:$0xff]
      %v310 = vld [vmem:[%s224 + $0x20] sm:$0xff]
      %v311 = vld [vmem:[%s224 + $0x28] sm:$0xff]
      %v312 = vld [vmem:[%s224 + $0x30] sm:$0xff]
      %v313 = vld [vmem:[%s224 + $0x38] sm:$0xff]
      %v314 = vlaneseq
      %v315 = vshrl.u32 %v314, 7
      %v316 = vsub.s32 0, %v315
      %v317 = vrot.slane %v290, %v316
      %v318 = vsub.f32 %v306, %v317
      %v319 = vsub.f32 %v307, %v317
      %v320 = vsub.f32 %v308, %v317
      %v321 = vsub.f32 %v309, %v317
      %v322 = vsub.f32 %v310, %v317
      %v323 = vsub.f32 %v311, %v317
      %v324 = vsub.f32 %v312, %v317
      %v325 = vsub.f32 %v313, %v317
      %v326 = vlaneseq
      %v327 = vshrl.u32 %v326, 7
      %v328 = vsub.s32 1, %v327
      %v329 = vrot.slane %v305, %v328
      %v330 = vmul.f32 %v318, %v329
      %v331 = vmul.f32 %v319, %v329
      %v332 = vmul.f32 %v320, %v329
      %v333 = vmul.f32 %v321, %v329
      %v334 = vmul.f32 %v322, %v329
      %v335 = vmul.f32 %v323, %v329
      %v336 = vmul.f32 %v324, %v329
      %v337 = vmul.f32 %v325, %v329
      %v338 = vld [vmem:[%s3] sm:$0x1]
      %v340 = vlaneseq
      %v341 = vshrl.u32 %v340, 7
      %v342 = vsub.s32 0, %v341
      %v343 = vrot.slane %v338, %v342
      %v345 = vadd.f32 %v330, %v343
      %v346 = vadd.f32 %v331, %v343
      %v347 = vadd.f32 %v332, %v343
      %v348 = vadd.f32 %v333, %v343
      %v349 = vadd.f32 %v334, %v343
      %v350 = vadd.f32 %v335, %v343
      %v351 = vadd.f32 %v336, %v343
      %v352 = vadd.f32 %v337, %v343
      %vm353 = vcmp.ge.f32.partialorder %v345, 0.0
      %vm354 = vcmp.ge.f32.partialorder %v346, 0.0
      %vm355 = vcmp.ge.f32.partialorder %v347, 0.0
      %vm356 = vcmp.ge.f32.partialorder %v348, 0.0
      %vm357 = vcmp.ge.f32.partialorder %v349, 0.0
      %vm358 = vcmp.ge.f32.partialorder %v350, 0.0
      %vm359 = vcmp.ge.f32.partialorder %v351, 0.0
      %vm360 = vcmp.ge.f32.partialorder %v352, 0.0
      %v361 = vmul.f32 %v345, 0.2
      %v362 = vmul.f32 %v346, 0.2
      %v363 = vmul.f32 %v347, 0.2
      %v364 = vmul.f32 %v348, 0.2
      %v365 = vmul.f32 %v349, 0.2
      %v366 = vmul.f32 %v350, 0.2
      %v367 = vmul.f32 %v351, 0.2
      %v368 = vmul.f32 %v352, 0.2
      %v369 = vsel %vm353, %v345, %v361
      %v370 = vsel %vm354, %v346, %v362
      %v371 = vsel %vm355, %v347, %v363
      %v372 = vsel %vm356, %v348, %v364
      %v373 = vsel %vm357, %v349, %v365
      %v374 = vsel %vm358, %v350, %v366
      %v375 = vsel %vm359, %v351, %v367
      %v376 = vsel %vm360, %v352, %v368
      %v377 = vpack.c.bf16 %v370, %v369
      %v378 = vpack.c.bf16 %v372, %v371
      %v379 = vpack.c.bf16 %v374, %v373
      %v380 = vpack.c.bf16 %v376, %v375
      %v385 = vunpack.c.l.b16 %v377
      %v386 = vunpack.c.h.b16 %v377
      %v387 = vunpack.c.l.b16 %v378
      %v388 = vunpack.c.h.b16 %v378
      %v389 = vunpack.c.l.b16 %v379
      %v390 = vunpack.c.h.b16 %v379
      %v391 = vunpack.c.l.b16 %v380
      %v392 = vunpack.c.h.b16 %v380
      %v393 = vpack.c.b16 %v385, %v385
      %v394 = vpack.c.b16 %v386, %v386
      %v395 = vpack.c.b16 %v387, %v387
      %v396 = vpack.c.b16 %v388, %v388
      %v397 = vpack.c.b16 %v389, %v389
      %v398 = vpack.c.b16 %v390, %v390
      %v399 = vpack.c.b16 %v391, %v391
      %v400 = vpack.c.b16 %v392, %v392
      %vm409 = vcmask 60416
      %410 = vst.msk [vmem:[%s233] sm:$0xf] %vm409, %v393
      %411 = vst.msk [vmem:[%s233 + $0x4] sm:$0xf] %vm409, %v394
      %412 = vst.msk [vmem:[%s233 + $0x8] sm:$0xf] %vm409, %v395
      %413 = vst.msk [vmem:[%s233 + $0xc] sm:$0xf] %vm409, %v396
      %414 = vst.msk [vmem:[%s233 + $0x10] sm:$0xf] %vm409, %v397
      %415 = vst.msk [vmem:[%s233 + $0x14] sm:$0xf] %vm409, %v398
      %416 = vst.msk [vmem:[%s233 + $0x18] sm:$0xf] %vm409, %v399
      %417 = vst.msk [vmem:[%s233 + $0x1c] sm:$0xf] %vm409, %v400
      %p418 = scmp.lt.s32.totalorder %s19, 1
      %s419 = scalar_select %p418, %s19, 1
      %p420 = scmp.lt.s32.totalorder %s20, 7
      %s421 = scalar_select %p420, %s20, 7
      %s422 = smul.addr %s421, 8
      %s423 = smul.addr %s419, 64
      %s424 = sadd.s32 %s422, %s423
      %s425 = smul.addr %s424, 4
      %s426 = scalar_lea.vmem %s4, %s425
      // Predicated region
      $region37: #{conv3d_encoder_forward.10} parent=35 // pred_check
        %p427 = pneg %p138
      $region38: #{conv3d_encoder_forward.10} parent=35 // pred_check_branch
        %429 = sbr.rel (%p427) target = $region40
      $region39: #{conv3d_encoder_forward.10} parent=35 // pred_region
        _
      $region40: #{conv3d_encoder_forward.10} parent=35 // pred_fallthru
        _
    $region36: #{conv3d_encoder_forward.10} parent=5 // pred_fallthru
      _
    %p430 = scmp.le.s32.totalorder 2, %s10
    // Predicated region
    $region41: #{conv3d_encoder_forward.10} parent=5 // pred_check
      %p431 = pneg %p430
    $region42: #{conv3d_encoder_forward.10} parent=5 // pred_check_branch
      %433 = sbr.rel (%p431) target = $region44
    $region43: #{conv3d_encoder_forward.10} parent=5 // pred_region
      %s434 = ssub.s32 %s10, 2
      // Predicated region
      $region45: #{conv3d_encoder_forward.10} parent=43 // pred_check
        %p435 = pneg %p144
      $region46: #{conv3d_encoder_forward.10} parent=43 // pred_check_branch
        %437 = sbr.rel (%p435) target = $region48
      $region47: #{conv3d_encoder_forward.10} parent=43 // pred_region
        %p438 = scmp.lt.s32.totalorder %s21, 1
        %s439 = scalar_select %p438, %s21, 1
        %p440 = scmp.lt.s32.totalorder %s22, 7
        %s441 = scalar_select %p440, %s22, 7
        %s442 = smul.addr %s441, 8
        %s443 = smul.addr %s439, 64
        %s444 = sadd.s32 %s442, %s443
        %s445 = smul.addr %s444, 4
        %s446 = scalar_lea.vmem %s4, %s445
      $region48: #{conv3d_encoder_forward.10} parent=43 // pred_fallthru
        _
    $region44: #{conv3d_encoder_forward.10} parent=5 // pred_fallthru
      _
  $region6: #{conv3d_encoder_forward.10} parent=0 // loop_footer
    %s14 = sadd.s32 1, %s10
  $region7: #{conv3d_encoder_forward.10} parent=0 // loop_footer_branch
    %9 = sbr.rel target = $region3
  $region8: #{conv3d_encoder_forward.10} parent=0 // loop_exit
    _

// kernel: conv3d_encoder_forward.9
$region0: #{conv3d_encoder_forward.9}
  #allocation0 [shape = 'u32[]', space=smem, size = 0x4, offset = 0x4, fixed_abs, tag = 'smem constant byte address 0x4 - core index']
  #allocation1 [shape = 'u32[144,128]{1,0:T(1,128)}', space=vmem, size = 0x12000, scoped, tag = 'internal scratch']
  %s0 = inlined_call_operand.vmem [shape: bf16[2,2,9,64,48], index: 0, kind: input, shape index: {}]
  %s1 = inlined_call_operand.vmem [shape: bf16[4,48,8], index: 1, kind: input, shape index: {}]
  %s2 = inlined_call_operand.vmem [shape: f32[2,8,64,8], index: 2, kind: output, shape index: {0}]
  %s3 = inlined_call_operand.vmem [shape: f32[2,8,2,8], index: 3, kind: output, shape index: {1}]
  %4 = xla_tuple %s2, %s3
  %s5 = sld [smem:[#allocation0]]
  $region49: #{conv3d_encoder_forward.9} parent=0
    _
  %s7 = ssub.s32 1, %s5
  %s8 = scalar_select 0, %s7, %s5
  loop: start=0, step=1, limit=18
  $region2: #{conv3d_encoder_forward.9} parent=0 // loop_pre_header
    _
  $region3: #{conv3d_encoder_forward.9} parent=0 // loop_header
    %s10 = sphi 0, %s14
    %p11 = scmp.ge.s32.totalorder %s10, 18
    %s17 = sphi 0, %s29
    %s18 = sphi 0, %s25
    %s19 = sphi 0, %s17
    %s20 = sphi 0, %s18
    %s21 = sphi 0, %s19
    %s22 = sphi 0, %s20
    %s32 = sphi 0, %s34
    %s35 = sphi 0, %s32
    %s36 = sphi 0, %s35
    %s52 = sphi 0, %s36
    %s56 = sphi 0, %s56
    %s58 = sphi 0, %s56
    %s59 = sphi 0, %s58
    %s73 = sphi 0, %s59
    %s81 = sphi 0, %s83
    %s84 = sphi 0, %s81
    %s85 = sphi 0, %s84
    %s101 = sphi 0, %s85
    %s109 = sphi 0, %s111
    %s112 = sphi 0, %s109
    %s113 = sphi 0, %s112
    %s129 = sphi 0, %s113
  $region4: #{conv3d_encoder_forward.9} parent=0 // loop_header_branch
    %13 = sbr.rel (%p11) target = $region8
  $region5: #{conv3d_encoder_forward.9} parent=0 // loop_body
    %s15 = ssub.s32 %s10, 1
    %s16 = ssub.s32 %s10, 2
    %s23 = sadd.s32 1, %s18
    %p24 = scmp.ge.s32.totalorder %s23, 8
    %s25 = scalar_select %p24, 0, %s23
    %s26 = sadd.s32 1, %s17
    %s27 = scalar_select %p24, %s26, %s17
    %p28 = scmp.ge.s32.totalorder %s27, 2
    %s29 = scalar_select %p28, 0, %s27
    %s30 = ssub.s32 %s17, %s29
    %p31 = scmp.eq.s32.totalorder %s30, 0
    %s33 = sadd.s32 %s32, 1
    %s34 = scalar_select %p31, %s32, %s33
    %p37 = pneg %p31
    %p38 = scmp.eq.s32.totalorder %s10, 15
    %p39 = por %p37, %p38
    %p40 = scmp.ne.s32.totalorder %s32, %s35
    %p41 = scmp.eq.s32.totalorder %s10, 0
    %p42 = por %p40, %p41
    %p43 = scmp.ne.s32.totalorder %s32, %s35
    %p44 = scmp.eq.s32.totalorder %s15, 15
    %p45 = por %p43, %p44
    %p46 = scmp.ne.s32.totalorder %s35, %s36
    %p47 = scmp.eq.s32.totalorder %s15, 0
    %p48 = por %p46, %p47
    %p49 = scmp.ne.s32.totalorder %s35, %s36
    %p50 = scmp.eq.s32.totalorder %s16, 15
    %p51 = por %p49, %p50
    %p53 = scmp.ne.s32.totalorder %s36, %s52
    %p54 = scmp.eq.s32.totalorder %s16, 0
    %p55 = por %p53, %p54
    %s57 = sadd.s32 %s56, 1
    %p60 = scmp.eq.s32.totalorder %s10, 15
    %p61 = scmp.ne.s32.totalorder %s56, %s58
    %p62 = scmp.eq.s32.totalorder %s10, 0
    %p63 = por %p61, %p62
    %p64 = scmp.ne.s32.totalorder %s56, %s58
    %p65 = scmp.eq.s32.totalorder %s15, 15
    %p66 = por %p64, %p65
    %p67 = scmp.ne.s32.totalorder %s58, %s59
    %p68 = scmp.eq.s32.totalorder %s15, 0
    %p69 = por %p67, %p68
    %p70 = scmp.ne.s32.totalorder %s58, %s59
    %p71 = scmp.eq.s32.totalorder %s16, 15
    %p72 = por %p70, %p71
    %p74 = scmp.ne.s32.totalorder %s59, %s73
    %p75 = scmp.eq.s32.totalorder %s16, 0
    %p76 = por %p74, %p75
    %s77 = ssub.s32 %s17, %s29
    %s78 = ssub.s32 %s18, %s25
    %s79 = sor.u32 %s77, %s78
    %p80 = scmp.eq.s32.totalorder %s79, 0
    %s82 = sadd.s32 %s81, 1
    %s83 = scalar_select %p80, %s81, %s82
    %p86 = pneg %p80
    %p87 = scmp.eq.s32.totalorder %s10, 15
    %p88 = por %p86, %p87
    %p89 = scmp.ne.s32.totalorder %s81, %s84
    %p90 = scmp.eq.s32.totalorder %s10, 0
    %p91 = por %p89, %p90
    %p92 = scmp.ne.s32.totalorder %s81, %s84
    %p93 = scmp.eq.s32.totalorder %s15, 15
    %p94 = por %p92, %p93
    %p95 = scmp.ne.s32.totalorder %s84, %s85
    %p96 = scmp.eq.s32.totalorder %s15, 0
    %p97 = por %p95, %p96
    %p98 = scmp.ne.s32.totalorder %s84, %s85
    %p99 = scmp.eq.s32.totalorder %s16, 15
    %p100 = por %p98, %p99
    %p102 = scmp.ne.s32.totalorder %s85, %s101
    %p103 = scmp.eq.s32.totalorder %s16, 0
    %p104 = por %p102, %p103
    %s105 = ssub.s32 %s17, %s29
    %s106 = ssub.s32 %s18, %s25
    %s107 = sor.u32 %s105, %s106
    %p108 = scmp.eq.s32.totalorder %s107, 0
    %s110 = sadd.s32 %s109, 1
    %s111 = scalar_select %p108, %s109, %s110
    %p114 = pneg %p108
    %p115 = scmp.eq.s32.totalorder %s10, 15
    %p116 = por %p114, %p115
    %p117 = scmp.ne.s32.totalorder %s109, %s112
    %p118 = scmp.eq.s32.totalorder %s10, 0
    %p119 = por %p117, %p118
    %p120 = scmp.ne.s32.totalorder %s109, %s112
    %p121 = scmp.eq.s32.totalorder %s15, 15
    %p122 = por %p120, %p121
    %p123 = scmp.ne.s32.totalorder %s112, %s113
    %p124 = scmp.eq.s32.totalorder %s15, 0
    %p125 = por %p123, %p124
    %p126 = scmp.ne.s32.totalorder %s112, %s113
    %p127 = scmp.eq.s32.totalorder %s16, 15
    %p128 = por %p126, %p127
    %p130 = scmp.ne.s32.totalorder %s113, %s129
    %p131 = scmp.eq.s32.totalorder %s16, 0
    %p132 = por %p130, %p131
    %p133 = scmp.le.s32.totalorder 1, %s10
    %p134 = scmp.lt.s32.totalorder %s10, 17
    %p135 = pnand %p133, %p134
    %p136 = pneg %p135
    // Predicated region
    $region9: #{conv3d_encoder_forward.9} parent=5 // pred_check
      _
    $region10: #{conv3d_encoder_forward.9} parent=5 // pred_check_branch
      %138 = sbr.rel (%p135) target = $region12
    $region11: #{conv3d_encoder_forward.9} parent=5 // pred_region
      %s139 = ssub.s32 %s10, 1
      // Predicated region
      $region13: #{conv3d_encoder_forward.9} parent=11 // pred_check
        %p140 = pneg %p69
      $region14: #{conv3d_encoder_forward.9} parent=11 // pred_check_branch
        %142 = sbr.rel (%p140) target = $region16
      $region15: #{conv3d_encoder_forward.9} parent=11 // pred_region
        _
      $region16: #{conv3d_encoder_forward.9} parent=11 // pred_fallthru
        _
    $region12: #{conv3d_encoder_forward.9} parent=5 // pred_fallthru
      _
    %p143 = scmp.lt.s32.totalorder %s10, 16
    // Predicated region
    $region17: #{conv3d_encoder_forward.9} parent=5 // pred_check
      %p144 = pneg %p143
    $region18: #{conv3d_encoder_forward.9} parent=5 // pred_check_branch
      %146 = sbr.rel (%p144) target = $region20
    $region19: #{conv3d_encoder_forward.9} parent=5 // pred_region
      // Predicated region
      $region21: #{conv3d_encoder_forward.9} parent=19 // pred_check
        %p147 = pneg %p42
      $region22: #{conv3d_encoder_forward.9} parent=19 // pred_check_branch
        %149 = sbr.rel (%p147) target = $region24
      $region23: #{conv3d_encoder_forward.9} parent=19 // pred_region
        %p150 = scmp.lt.s32.totalorder %s17, 1
        %s151 = scalar_select %p150, %s17, 1
        %s152 = smul.addr %s151, 144
        %s153 = smul.addr %s152, 4
        %s154 = scalar_lea.vmem %s0, %s153
      $region24: #{conv3d_encoder_forward.9} parent=19 // pred_fallthru
        _
    $region20: #{conv3d_encoder_forward.9} parent=5 // pred_fallthru
      _
    %p155 = scmp.le.s32.totalorder 1, %s10
    %p156 = scmp.lt.s32.totalorder %s10, 17
    %p157 = pnand %p155, %p156
    %p158 = pneg %p157
    // Predicated region
    $region25: #{conv3d_encoder_forward.9} parent=5 // pred_check
      _
    $region26: #{conv3d_encoder_forward.9} parent=5 // pred_check_branch
      %160 = sbr.rel (%p157) target = $region28
    $region27: #{conv3d_encoder_forward.9} parent=5 // pred_region
      %s161 = ssub.s32 %s10, 1
      %p162 = scmp.lt.s32.totalorder %s19, 1
      %s163 = scalar_select %p162, %s19, 1
      %s164 = smul.addr %s163, 144
      %s165 = smul.addr %s164, 4
      %s166 = scalar_lea.vmem %s0, %s165
      %p167 = pneg %p48
      %p168 = pneg %p45
      %p169 = pneg %p69
      %p170 = pneg %p66
      %p171 = pneg %p97
      %p172 = pneg %p94
      %p173 = scmp.lt.s32.totalorder %s19, 1
      %s174 = scalar_select %p173, %s19, 1
      %p175 = scmp.lt.s32.totalorder %s20, 7
      %s176 = scalar_select %p175, %s20, 7
      %s177 = smul.addr %s176, 8
      %s178 = smul.addr %s174, 64
      %s179 = sadd.s32 %s177, %s178
      %s180 = smul.addr %s179, 8
      %s181 = scalar_lea.vmem %s2, %s180
      %p182 = pneg %p125
      %p183 = pneg %p122
      %p184 = scmp.lt.s32.totalorder %s19, 1
      %s185 = scalar_select %p184, %s19, 1
      %p186 = scmp.lt.s32.totalorder %s20, 7
      %s187 = scalar_select %p186, %s20, 7
      %s188 = smul.addr %s185, 8
      %s189 = sadd.s32 %s187, %s188
      %s190 = smul.addr %s189, 2
      %s191 = scalar_lea.vmem %s3, %s190
      %p192 = scmp.lt.s32.totalorder %s19, 1
      %s193 = scalar_select %p192, %s19, 1
      %s194 = smul.addr %s193, 144
      %s195 = smul.addr %s194, 4
      %s196 = scalar_lea.vmem %s0, %s195
      %p197 = scmp.lt.s32.totalorder %s19, 1
      %s198 = scalar_select %p197, %s19, 1
      %p199 = scmp.lt.s32.totalorder %s20, 7
      %s200 = scalar_select %p199, %s20, 7
      %s201 = smul.addr %s200, 8
      %s202 = smul.addr %s198, 64
      %s203 = sadd.s32 %s201, %s202
      %s204 = smul.addr %s203, 8
      %s205 = scalar_lea.vmem %s2, %s204
      %p206 = scmp.lt.s32.totalorder %s19, 1
      %s207 = scalar_select %p206, %s19, 1
      %p208 = scmp.lt.s32.totalorder %s20, 7
      %s209 = scalar_select %p208, %s20, 7
      %s210 = smul.addr %s207, 8
      %s211 = sadd.s32 %s209, %s210
      %s212 = smul.addr %s211, 2
      %s213 = scalar_lea.vmem %s3, %s212
      %s215 = smul.u32 %s20, 8
      %s216 = smul.addr %s215, 4
      %s217 = scalar_lea.vmem %s196, %s216
      %v218 = vld [vmem:[%s217] sm:$0xf]
      %v219 = vld [vmem:[%s217 + $0x4] sm:$0xf]
      %v220 = vld [vmem:[%s217 + $0x8] sm:$0xf]
      %v221 = vld [vmem:[%s217 + $0xc] sm:$0xf]
      %v222 = vld [vmem:[%s217 + $0x10] sm:$0xf]
      %v223 = vld [vmem:[%s217 + $0x14] sm:$0xf]
      %v224 = vld [vmem:[%s217 + $0x18] sm:$0xf]
      %v225 = vld [vmem:[%s217 + $0x1c] sm:$0xf]
      %v226 = vld [vmem:[%s1] sm:$0xf]
      %v227 = vld [vmem:[%s1 + $0x4] sm:$0xf]
      %v228 = vld [vmem:[%s1 + $0x8] sm:$0xf]
      %v229 = vld [vmem:[%s1 + $0xc] sm:$0xf]
      %v230 = vld [vmem:[%s1 + $0x10] sm:$0xf]
      %v231 = vld [vmem:[%s1 + $0x14] sm:$0xf]
      %s232 = sadd.s32 %s215, 72
      %s233 = smul.addr %s232, 4
      %s234 = scalar_lea.vmem %s196, %s233
      %v235 = vld [vmem:[%s234] sm:$0xf]
      %v236 = vld [vmem:[%s234 + $0x4] sm:$0xf]
      %v237 = vld [vmem:[%s234 + $0x8] sm:$0xf]
      %v238 = vld [vmem:[%s234 + $0xc] sm:$0xf]
      %v239 = vld [vmem:[%s234 + $0x10] sm:$0xf]
      %v240 = vld [vmem:[%s234 + $0x14] sm:$0xf]
      %v241 = vld [vmem:[%s234 + $0x18] sm:$0xf]
      %v242 = vld [vmem:[%s234 + $0x1c] sm:$0xf]
      %s243 = scalar_lea.vmem %s1, 24
      %v244 = vld [vmem:[%s243] sm:$0xf]
      %v245 = vld [vmem:[%s243 + $0x4] sm:$0xf]
      %v246 = vld [vmem:[%s243 + $0x8] sm:$0xf]
      %v247 = vld [vmem:[%s243 + $0xc] sm:$0xf]
      %v248 = vld [vmem:[%s243 + $0x10] sm:$0xf]
      %v249 = vld [vmem:[%s243 + $0x14] sm:$0xf]
      %v258 = vunpack.c.l.b16 %v235
      %v259 = vunpack.c.l.b16 %v236
      %v260 = vunpack.c.l.b16 %v237
      %v261 = vunpack.c.l.b16 %v238
      %v262 = vunpack.c.l.b16 %v239
      %v263 = vunpack.c.l.b16 %v240
      %v264 = vunpack.c.l.b16 %v241
      %v265 = vunpack.c.l.b16 %v242
      %v266 = vpack.c.b16 %v259, %v258
      %v267 = vpack.c.b16 %v261, %v260
      %v268 = vpack.c.b16 %v263, %v262
      %v269 = vpack.c.b16 %v265, %v264
      %v276 = vunpack.c.l.b16 %v244
      %v277 = vunpack.c.l.b16 %v245
      %v278 = vunpack.c.l.b16 %v246
      %v279 = vunpack.c.l.b16 %v247
      %v280 = vunpack.c.l.b16 %v248
      %v281 = vunpack.c.l.b16 %v249
      %v282 = vpack.c.b16 %v277, %v276
      %v283 = vpack.c.b16 %v279, %v278
      %v284 = vpack.c.b16 %v281, %v280
      %vm288 = vcmask 392192
      %v290 = vsel %vm288, %v266, 0
      %v293 = vsel %vm288, %v267, 0
      %v296 = vsel %vm288, %v268, 0
      %v299 = vsel %vm288, %v269, 0
      %301 = vmatprep.subr.bf16.mxu0 0
      %302 = vmatpush1.bf16.msra.mxu0 %v282
      %303 = vmatprep.subr.bf16.mxu0 0
      %304 = vmatpush1.bf16.msra.mxu0 %v283
      %305 = vmatprep.subr.bf16.mxu0 0
      %306 = vmatpush1.bf16.msra.mxu0 %v284
      %307 = vmatprep.subr.bf16.mxu0 0
      %308 = vmatpush1.bf16.msra.mxu0 0
      %309 = vmatprep.subr.bf16.mxu0 0
      %310 = vmatpush1.bf16.msra.mxu0 0
      %311 = vmatprep.subr.bf16.mxu0 0
      %312 = vmatpush1.bf16.msra.mxu0 0
      %313 = vmatprep.subr.bf16.mxu0 0
      %314 = vmatpush1.bf16.msra.mxu0 0
      %315 = vmatprep.subr.bf16.mxu0 0
      %316 = vmatpush1.bf16.msra.mxu0 0
      %317 = vmatprep.subr.bf16.mxu0 0
      %318 = vmatpush1.bf16.msra.mxu0 0
      %319 = vmatprep.subr.bf16.mxu0 0
      %320 = vmatpush1.bf16.msra.mxu0 0
      %321 = vmatprep.subr.bf16.mxu0 0
      %322 = vmatpush1.bf16.msra.mxu0 0
      %323 = vmatprep.subr.bf16.mxu0 0
      %324 = vmatpush1.bf16.msra.mxu0 0
      %325 = vmatprep.subr.bf16.mxu0 0
      %326 = vmatpush1.bf16.msra.mxu0 0
      %327 = vmatprep.subr.bf16.mxu0 0
      %328 = vmatpush1.bf16.msra.mxu0 0
      %329 = vmatprep.subr.bf16.mxu0 0
      %330 = vmatpush1.bf16.msra.mxu0 0
      %331 = vmatprep.subr.bf16.mxu0 0
      %332 = vmatpush1.bf16.msra.mxu0 0
      %333 = vmatprep.mubr.bf16.mxu0 0
      %334 = vmatmul.mubr.bf16.gmra.mrb[0].mxu0 %v290
      %v335 = vpop.f32.mrb[0].mxu0
      %v336 = vadd.f32 0.0, %v335
      %v337 = vpop.f32.mrb[0].mxu0
      %v338 = vpop.f32.mrb[0].mxu0
      %v339 = vadd.f32 0.0, %v338
      %v340 = vpop.f32.mrb[0].mxu0
      %341 = vmatprep.mubr.bf16.mxu0 0
      %342 = vmatmul.mubr.bf16.gmra.mrb[0].mxu0 %v293
      %v343 = vpop.f32.mrb[0].mxu0
      %v344 = vadd.f32 0.0, %v343
      %v345 = vpop.f32.mrb[0].mxu0
      %v346 = vpop.f32.mrb[0].mxu0
      %v347 = vadd.f32 0.0, %v346
      %v348 = vpop.f32.mrb[0].mxu0
      %349 = vmatprep.mubr.bf16.mxu0 0
      %350 = vmatmul.mubr.bf16.gmra.mrb[0].mxu0 %v296
      %v351 = vpop.f32.mrb[0].mxu0
      %v352 = vadd.f32 0.0, %v351
      %v353 = vpop.f32.mrb[0].mxu0
      %v354 = vpop.f32.mrb[0].mxu0
      %v355 = vadd.f32 0.0, %v354
      %v356 = vpop.f32.mrb[0].mxu0
      %357 = vmatprep.mubr.bf16.mxu0 0
      %358 = vmatmul.mubr.bf16.gmra.mrb[0].mxu0 %v299
      %v359 = vpop.f32.mrb[0].mxu0
      %v360 = vadd.f32 0.0, %v359
      %v361 = vpop.f32.mrb[0].mxu0
      %v362 = vpop.f32.mrb[0].mxu0
      %v363 = vadd.f32 0.0, %v362
      %v364 = vpop.f32.mrb[0].mxu0
      %365 = vdwg.mxu0
      %v374 = vunpack.c.l.b16 %v218
      %v375 = vunpack.c.l.b16 %v219
      %v376 = vunpack.c.l.b16 %v220
      %v377 = vunpack.c.l.b16 %v221
      %v378 = vunpack.c.l.b16 %v222
      %v379 = vunpack.c.l.b16 %v223
      %v380 = vunpack.c.l.b16 %v224
      %v381 = vunpack.c.l.b16 %v225
      %v382 = vpack.c.b16 %v375, %v374
      %v383 = vpack.c.b16 %v377, %v376
      %v384 = vpack.c.b16 %v379, %v378
      %v385 = vpack.c.b16 %v381, %v380
      %v392 = vunpack.c.l.b16 %v226
      %v393 = vunpack.c.l.b16 %v227
      %v394 = vunpack.c.l.b16 %v228
      %v395 = vunpack.c.l.b16 %v229
      %v396 = vunpack.c.l.b16 %v230
      %v397 = vunpack.c.l.b16 %v231
      %v398 = vpack.c.b16 %v393, %v392
      %v399 = vpack.c.b16 %v395, %v394
      %v400 = vpack.c.b16 %v397, %v396
      %v405 = vsel %vm288, %v382, 0
      %v408 = vsel %vm288, %v383, 0
      %v411 = vsel %vm288, %v384, 0
      %v414 = vsel %vm288, %v385, 0
      %416 = vmatprep.subr.bf16.mxu0 0
      %417 = vmatpush1.bf16.msra.mxu0 %v398
      %418 = vmatprep.subr.bf16.mxu0 0
      %419 = vmatpush1.bf16.msra.mxu0 %v399
      %420 = vmatprep.subr.bf16.mxu0 0
      %421 = vmatpush1.bf16.msra.mxu0 %v400
      %422 = vmatprep.subr.bf16.mxu0 0
      %423 = vmatpush1.bf16.msra.mxu0 0
      %424 = vmatprep.subr.bf16.mxu0 0
      %425 = vmatpush1.bf16.msra.mxu0 0
      %426 = vmatprep.subr.bf16.mxu0 0
      %427 = vmatpush1.bf16.msra.mxu0 0
      %428 = vmatprep.subr.bf16.mxu0 0
      %429 = vmatpush1.bf16.msra.mxu0 0
      %430 = vmatprep.subr.bf16.mxu0 0
      %431 = vmatpush1.bf16.msra.mxu0 0
      %432 = vmatprep.subr.bf16.mxu0 0
      %433 = vmatpush1.bf16.msra.mxu0 0
      %434 = vmatprep.subr.bf16.mxu0 0
      %435 = vmatpush1.bf16.msra.mxu0 0
      %436 = vmatprep.subr.bf16.mxu0 0
      %437 = vmatpush1.bf16.msra.mxu0 0
      %438 = vmatprep.subr.bf16.mxu0 0
      %439 = vmatpush1.bf16.msra.mxu0 0
      %440 = vmatprep.subr.bf16.mxu0 0
      %441 = vmatpush1.bf16.msra.mxu0 0
      %442 = vmatprep.subr.bf16.mxu0 0
      %443 = vmatpush1.bf16.msra.mxu0 0
      %444 = vmatprep.subr.bf16.mxu0 0
      %445 = vmatpush1.bf16.msra.mxu0 0
      %446 = vmatprep.subr.bf16.mxu0 0
      %447 = vmatpush1.bf16.msra.mxu0 0
      %448 = vmatprep.mubr.bf16.mxu0 0
      %449 = vmatmul.mubr.bf16.gmra.mrb[0].mxu0 %v405
      %v450 = vpop.f32.mrb[0].mxu0
      %v451 = vadd.f32 %v336, %v450
      %v452 = vpop.f32.mrb[0].mxu0
      %v453 = vpop.f32.mrb[0].mxu0
      %v454 = vadd.f32 %v339, %v453
      %v455 = vpop.f32.mrb[0].mxu0
      %456 = vmatprep.mubr.bf16.mxu0 0
      %457 = vmatmul.mubr.bf16.gmra.mrb[0].mxu0 %v408
      %v458 = vpop.f32.mrb[0].mxu0
      %v459 = vadd.f32 %v344, %v458
      %v460 = vpop.f32.mrb[0].mxu0
      %v461 = vpop.f32.mrb[0].mxu0
      %v462 = vadd.f32 %v347, %v461
      %v463 = vpop.f32.mrb[0].mxu0
      %464 = vmatprep.mubr.bf16.mxu0 0
      %465 = vmatmul.mubr.bf16.gmra.mrb[0].mxu0 %v411
      %v466 = vpop.f32.mrb[0].mxu0
      %v467 = vadd.f32 %v352, %v466
      %v468 = vpop.f32.mrb[0].mxu0
      %v469 = vpop.f32.mrb[0].mxu0
      %v470 = vadd.f32 %v355, %v469
      %v471 = vpop.f32.mrb[0].mxu0
      %472 = vmatprep.mubr.bf16.mxu0 0
      %473 = vmatmul.mubr.bf16.gmra.mrb[0].mxu0 %v414
      %v474 = vpop.f32.mrb[0].mxu0
      %v475 = vadd.f32 %v360, %v474
      %v476 = vpop.f32.mrb[0].mxu0
      %v477 = vpop.f32.mrb[0].mxu0
      %v478 = vadd.f32 %v363, %v477
      %v479 = vpop.f32.mrb[0].mxu0
      %480 = vdwg.mxu0
      %s481 = sadd.s32 %s20, 1
      %s482 = smul.u32 %s481, 8
      %s483 = smul.addr %s482, 4
      %s484 = scalar_lea.vmem %s196, %s483
      %v485 = vld [vmem:[%s484] sm:$0xf]
      %v486 = vld [vmem:[%s484 + $0x4] sm:$0xf]
      %v487 = vld [vmem:[%s484 + $0x8] sm:$0xf]
      %v488 = vld [vmem:[%s484 + $0xc] sm:$0xf]
      %v489 = vld [vmem:[%s484 + $0x10] sm:$0xf]
      %v490 = vld [vmem:[%s484 + $0x14] sm:$0xf]
      %v491 = vld [vmem:[%s484 + $0x18] sm:$0xf]
      %v492 = vld [vmem:[%s484 + $0x1c] sm:$0xf]
      %s493 = scalar_lea.vmem %s1, 48
      %v494 = vld [vmem:[%s493] sm:$0xf]
      %v495 = vld [vmem:[%s493 + $0x4] sm:$0xf]
      %v496 = vld [vmem:[%s493 + $0x8] sm:$0xf]
      %v497 = vld [vmem:[%s493 + $0xc] sm:$0xf]
      %v498 = vld [vmem:[%s493 + $0x10] sm:$0xf]
      %v499 = vld [vmem:[%s493 + $0x14] sm:$0xf]
      %v508 = vunpack.c.l.b16 %v485
      %v509 = vunpack.c.l.b16 %v486
      %v510 = vunpack.c.l.b16 %v487
      %v511 = vunpack.c.l.b16 %v488
      %v512 = vunpack.c.l.b16 %v489
      %v513 = vunpack.c.l.b16 %v490
      %v514 = vunpack.c.l.b16 %v491
      %v515 = vunpack.c.l.b16 %v492
      %v516 = vpack.c.b16 %v509, %v508
      %v517 = vpack.c.b16 %v511, %v510
      %v518 = vpack.c.b16 %v513, %v512
      %v519 = vpack.c.b16 %v515, %v514
      %v526 = vunpack.c.l.b16 %v494
      %v527 = vunpack.c.l.b16 %v495
      %v528 = vunpack.c.l.b16 %v496
      %v529 = vunpack.c.l.b16 %v497
      %v530 = vunpack.c.l.b16 %v498
      %v531 = vunpack.c.l.b16 %v499
      %v532 = vpack.c.b16 %v527, %v526
      %v533 = vpack.c.b16 %v529, %v528
      %v534 = vpack.c.b16 %v531, %v530
      %v539 = vsel %vm288, %v516, 0
      %v542 = vsel %vm288, %v517, 0
      %v545 = vsel %vm288, %v518, 0
      %v548 = vsel %vm288, %v519, 0
      %550 = vmatprep.subr.bf16.mxu0 0
      %551 = vmatpush1.bf16.msra.mxu0 %v532
      %552 = vmatprep.subr.bf16.mxu0 0
      %553 = vmatpush1.bf16.msra.mxu0 %v533
      %554 = vmatprep.subr.bf16.mxu0 0
      %555 = vmatpush1.bf16.msra.mxu0 %v534
      %556 = vmatprep.subr.bf16.mxu0 0
      %557 = vmatpush1.bf16.msra.mxu0 0
      %558 = vmatprep.subr.bf16.mxu0 0
      %559 = vmatpush1.bf16.msra.mxu0 0
      %560 = vmatprep.subr.bf16.mxu0 0
      %561 = vmatpush1.bf16.msra.mxu0 0
      %562 = vmatprep.subr.bf16.mxu0 0
      %563 = vmatpush1.bf16.msra.mxu0 0
      %564 = vmatprep.subr.bf16.mxu0 0
      %565 = vmatpush1.bf16.msra.mxu0 0
      %566 = vmatprep.subr.bf16.mxu0 0
      %567 = vmatpush1.bf16.msra.mxu0 0
      %568 = vmatprep.subr.bf16.mxu0 0
      %569 = vmatpush1.bf16.msra.mxu0 0
      %570 = vmatprep.subr.bf16.mxu0 0
      %571 = vmatpush1.bf16.msra.mxu0 0
      %572 = vmatprep.subr.bf16.mxu0 0
      %573 = vmatpush1.bf16.msra.mxu0 0
      %574 = vmatprep.subr.bf16.mxu0 0
      %575 = vmatpush1.bf16.msra.mxu0 0
      %576 = vmatprep.subr.bf16.mxu0 0
      %577 = vmatpush1.bf16.msra.mxu0 0
      %578 = vmatprep.subr.bf16.mxu0 0
      %579 = vmatpush1.bf16.msra.mxu0 0
      %580 = vmatprep.subr.bf16.mxu0 0
      %581 = vmatpush1.bf16.msra.mxu0 0
      %582 = vmatprep.mubr.bf16.mxu0 0
      %583 = vmatmul.mubr.bf16.gmra.mrb[0].mxu0 %v539
      %v584 = vpop.f32.mrb[0].mxu0
      %v585 = vadd.f32 0.0, %v584
      %v586 = vpop.f32.mrb[0].mxu0
      %v587 = vpop.f32.mrb[0].mxu0
      %v588 = vadd.f32 0.0, %v587
      %v589 = vpop.f32.mrb[0].mxu0
      %590 = vmatprep.mubr.bf16.mxu0 0
      %591 = vmatmul.mubr.bf16.gmra.mrb[0].mxu0 %v542
      %v592 = vpop.f32.mrb[0].mxu0
      %v593 = vadd.f32 0.0, %v592
      %v594 = vpop.f32.mrb[0].mxu0
      %v595 = vpop.f32.mrb[0].mxu0
      %v596 = vadd.f32 0.0, %v595
      %v597 = vpop.f32.mrb[0].mxu0
      %598 = vmatprep.mubr.bf16.mxu0 0
      %599 = vmatmul.mubr.bf16.gmra.mrb[0].mxu0 %v545
      %v600 = vpop.f32.mrb[0].mxu0
      %v601 = vadd.f32 0.0, %v600
      %v602 = vpop.f32.mrb[0].mxu0
      %v603 = vpop.f32.mrb[0].mxu0
      %v604 = vadd.f32 0.0, %v603
      %v605 = vpop.f32.mrb[0].mxu0
      %606 = vmatprep.mubr.bf16.mxu0 0
      %607 = vmatmul.mubr.bf16.gmra.mrb[0].mxu0 %v548
      %v608 = vpop.f32.mrb[0].mxu0
      %v609 = vadd.f32 0.0, %v608
      %v610 = vpop.f32.mrb[0].mxu0
      %v611 = vpop.f32.mrb[0].mxu0
      %v612 = vadd.f32 0.0, %v611
      %v613 = vpop.f32.mrb[0].mxu0
      %614 = vdwg.mxu0
      %v615 = vadd.f32 %v451, %v585
      %v616 = vadd.f32 %v454, %v588
      %v617 = vadd.f32 %v459, %v593
      %v618 = vadd.f32 %v462, %v596
      %v619 = vadd.f32 %v467, %v601
      %v620 = vadd.f32 %v470, %v604
      %v621 = vadd.f32 %v475, %v609
      %v622 = vadd.f32 %v478, %v612
      %s623 = sadd.s32 %s482, 72
      %s624 = smul.addr %s623, 4
      %s625 = scalar_lea.vmem %s196, %s624
      %v626 = vld [vmem:[%s625] sm:$0xf]
      %v627 = vld [vmem:[%s625 + $0x4] sm:$0xf]
      %v628 = vld [vmem:[%s625 + $0x8] sm:$0xf]
      %v629 = vld [vmem:[%s625 + $0xc] sm:$0xf]
      %v630 = vld [vmem:[%s625 + $0x10] sm:$0xf]
      %v631 = vld [vmem:[%s625 + $0x14] sm:$0xf]
      %v632 = vld [vmem:[%s625 + $0x18] sm:$0xf]
      %v633 = vld [vmem:[%s625 + $0x1c] sm:$0xf]
      %s634 = scalar_lea.vmem %s1, 72
      %v635 = vld [vmem:[%s634] sm:$0xf]
      %v636 = vld [vmem:[%s634 + $0x4] sm:$0xf]
      %v637 = vld [vmem:[%s634 + $0x8] sm:$0xf]
      %v638 = vld [vmem:[%s634 + $0xc] sm:$0xf]
      %v639 = vld [vmem:[%s634 + $0x10] sm:$0xf]
      %v640 = vld [vmem:[%s634 + $0x14] sm:$0xf]
      %v649 = vunpack.c.l.b16 %v626
      %v650 = vunpack.c.l.b16 %v627
      %v651 = vunpack.c.l.b16 %v628
      %v652 = vunpack.c.l.b16 %v629
      %v653 = vunpack.c.l.b16 %v630
      %v654 = vunpack.c.l.b16 %v631
      %v655 = vunpack.c.l.b16 %v632
      %v656 = vunpack.c.l.b16 %v633
      %v657 = vpack.c.b16 %v650, %v649
      %v658 = vpack.c.b16 %v652, %v651
      %v659 = vpack.c.b16 %v654, %v653
      %v660 = vpack.c.b16 %v656, %v655
      %v667 = vunpack.c.l.b16 %v635
      %v668 = vunpack.c.l.b16 %v636
      %v669 = vunpack.c.l.b16 %v637
      %v670 = vunpack.c.l.b16 %v638
      %v671 = vunpack.c.l.b16 %v639
      %v672 = vunpack.c.l.b16 %v640
      %v673 = vpack.c.b16 %v668, %v667
      %v674 = vpack.c.b16 %v670, %v669
      %v675 = vpack.c.b16 %v672, %v671
      %v680 = vsel %vm288, %v657, 0
      %v683 = vsel %vm288, %v658, 0
      %v686 = vsel %vm288, %v659, 0
      %v689 = vsel %vm288, %v660, 0
      %691 = vmatprep.subr.bf16.mxu0 0
      %692 = vmatpush1.bf16.msra.mxu0 %v673
      %693 = vmatprep.subr.bf16.mxu0 0
      %694 = vmatpush1.bf16.msra.mxu0 %v674
      %695 = vmatprep.subr.bf16.mxu0 0
      %696 = vmatpush1.bf16.msra.mxu0 %v675
      %697 = vmatprep.subr.bf16.mxu0 0
      %698 = vmatpush1.bf16.msra.mxu0 0
      %699 = vmatprep.subr.bf16.mxu0 0
      %700 = vmatpush1.bf16.msra.mxu0 0
      %701 = vmatprep.subr.bf16.mxu0 0
      %702 = vmatpush1.bf16.msra.mxu0 0
      %703 = vmatprep.subr.bf16.mxu0 0
      %704 = vmatpush1.bf16.msra.mxu0 0
      %705 = vmatprep.subr.bf16.mxu0 0
      %706 = vmatpush1.bf16.msra.mxu0 0
      %707 = vmatprep.subr.bf16.mxu0 0
      %708 = vmatpush1.bf16.msra.mxu0 0
      %709 = vmatprep.subr.bf16.mxu0 0
      %710 = vmatpush1.bf16.msra.mxu0 0
      %711 = vmatprep.subr.bf16.mxu0 0
      %712 = vmatpush1.bf16.msra.mxu0 0
      %713 = vmatprep.subr.bf16.mxu0 0
      %714 = vmatpush1.bf16.msra.mxu0 0
      %715 = vmatprep.subr.bf16.mxu0 0
      %716 = vmatpush1.bf16.msra.mxu0 0
      %717 = vmatprep.subr.bf16.mxu0 0
      %718 = vmatpush1.bf16.msra.mxu0 0
      %719 = vmatprep.subr.bf16.mxu0 0
      %720 = vmatpush1.bf16.msra.mxu0 0
      %721 = vmatprep.subr.bf16.mxu0 0
      %722 = vmatpush1.bf16.msra.mxu0 0
      %723 = vmatprep.mubr.bf16.mxu0 0
      %724 = vmatmul.mubr.bf16.gmra.mrb[0].mxu0 %v680
      %v725 = vpop.f32.mrb[0].mxu0
      %v726 = vadd.f32 0.0, %v725
      %v727 = vpop.f32.mrb[0].mxu0
      %v728 = vpop.f32.mrb[0].mxu0
      %v729 = vadd.f32 0.0, %v728
      %v730 = vpop.f32.mrb[0].mxu0
      %731 = vmatprep.mubr.bf16.mxu0 0
      %732 = vmatmul.mubr.bf16.gmra.mrb[0].mxu0 %v683
      %v733 = vpop.f32.mrb[0].mxu0
      %v734 = vadd.f32 0.0, %v733
      %v735 = vpop.f32.mrb[0].mxu0
      %v736 = vpop.f32.mrb[0].mxu0
      %v737 = vadd.f32 0.0, %v736
      %v738 = vpop.f32.mrb[0].mxu0
      %739 = vmatprep.mubr.bf16.mxu0 0
      %740 = vmatmul.mubr.bf16.gmra.mrb[0].mxu0 %v686
      %v741 = vpop.f32.mrb[0].mxu0
      %v742 = vadd.f32 0.0, %v741
      %v743 = vpop.f32.mrb[0].mxu0
      %v744 = vpop.f32.mrb[0].mxu0
      %v745 = vadd.f32 0.0, %v744
      %v746 = vpop.f32.mrb[0].mxu0
      %747 = vmatprep.mubr.bf16.mxu0 0
      %748 = vmatmul.mubr.bf16.gmra.mrb[0].mxu0 %v689
      %v749 = vpop.f32.mrb[0].mxu0
      %v750 = vadd.f32 0.0, %v749
      %v751 = vpop.f32.mrb[0].mxu0
      %v752 = vpop.f32.mrb[0].mxu0
      %v753 = vadd.f32 0.0, %v752
      %v754 = vpop.f32.mrb[0].mxu0
      %755 = vdwg.mxu0
      %v756 = vadd.f32 %v615, %v726
      %v757 = vadd.f32 %v616, %v729
      %v758 = vadd.f32 %v617, %v734
      %v759 = vadd.f32 %v618, %v737
      %v760 = vadd.f32 %v619, %v742
      %v761 = vadd.f32 %v620, %v745
      %v762 = vadd.f32 %v621, %v750
      %v763 = vadd.f32 %v622, %v753
      %vm764 = vcmask 64512
      %765 = vst.msk [vmem:[%s205] sm:$0xff] %vm764, %v756
      %766 = vst.msk [vmem:[%s205 + $0x8] sm:$0xff] %vm764, %v757
      %767 = vst.msk [vmem:[%s205 + $0x10] sm:$0xff] %vm764, %v758
      %768 = vst.msk [vmem:[%s205 + $0x18] sm:$0xff] %vm764, %v759
      %769 = vst.msk [vmem:[%s205 + $0x20] sm:$0xff] %vm764, %v760
      %770 = vst.msk [vmem:[%s205 + $0x28] sm:$0xff] %vm764, %v761
      %771 = vst.msk [vmem:[%s205 + $0x30] sm:$0xff] %vm764, %v762
      %772 = vst.msk [vmem:[%s205 + $0x38] sm:$0xff] %vm764, %v763
      %v773 = vsel %vm764, %v756, 0.0
      %v774 = vsel %vm764, %v757, 0.0
      %v775 = vadd.f32 %v773, %v774
      %v776 = vsel %vm764, %v758, 0.0
      %v777 = vadd.f32 %v775, %v776
      %v778 = vsel %vm764, %v759, 0.0
      %v779 = vadd.f32 %v777, %v778
      %v780 = vsel %vm764, %v760, 0.0
      %v781 = vadd.f32 %v779, %v780
      %v782 = vsel %vm764, %v761, 0.0
      %v783 = vadd.f32 %v781, %v782
      %v784 = vsel %vm764, %v762, 0.0
      %v785 = vadd.f32 %v783, %v784
      %v786 = vsel %vm764, %v763, 0.0
      %v787 = vadd.f32 %v785, %v786
      %v788 = vrot.slane %v787, 4
      %v789 = vadd.f32 %v787, %v788
      %v790 = vrot.slane %v789, 2
      %v791 = vadd.f32 %v789, %v790
      %v792 = vrot.slane %v791, 1
      %v793 = vadd.f32 %v791, %v792
      %vm794 = vcmask 57344
      %795 = vst.msk [vmem:[%s213] sm:$0x1] %vm794, %v793
      %v796 = vmul.f32 %v756, %v756
      %v797 = vmul.f32 %v757, %v757
      %v798 = vmul.f32 %v758, %v758
      %v799 = vmul.f32 %v759, %v759
      %v800 = vmul.f32 %v760, %v760
      %v801 = vmul.f32 %v761, %v761
      %v802 = vmul.f32 %v762, %v762
      %v803 = vmul.f32 %v763, %v763
      %v804 = vsel %vm764, %v796, 0.0
      %v805 = vsel %vm764, %v797, 0.0
      %v806 = vadd.f32 %v804, %v805
      %v807 = vsel %vm764, %v798, 0.0
      %v808 = vadd.f32 %v806, %v807
      %v809 = vsel %vm764, %v799, 0.0
      %v810 = vadd.f32 %v808, %v809
      %v811 = vsel %vm764, %v800, 0.0
      %v812 = vadd.f32 %v810, %v811
      %v813 = vsel %vm764, %v801, 0.0
      %v814 = vadd.f32 %v812, %v813
      %v815 = vsel %vm764, %v802, 0.0
      %v816 = vadd.f32 %v814, %v815
      %v817 = vsel %vm764, %v803, 0.0
      %v818 = vadd.f32 %v816, %v817
      %v819 = vrot.slane %v818, 4
      %v820 = vadd.f32 %v818, %v819
      %v821 = vrot.slane %v820, 2
      %v822 = vadd.f32 %v820, %v821
      %v823 = vrot.slane %v822, 1
      %v824 = vadd.f32 %v822, %v823
      %825 = vst.msk [vmem:[%s213 + $0x1] sm:$0x1] %vm794, %v824
      %p826 = scmp.lt.s32.totalorder %s19, 1
      %s827 = scalar_select %p826, %s19, 1
      %p828 = scmp.lt.s32.totalorder %s20, 7
      %s829 = scalar_select %p828, %s20, 7
      %s830 = smul.addr %s829, 8
      %s831 = smul.addr %s827, 64
      %s832 = sadd.s32 %s830, %s831
      %s833 = smul.addr %s832, 8
      %s834 = scalar_lea.vmem %s2, %s833
      %p835 = scmp.lt.s32.totalorder %s19, 1
      %s836 = scalar_select %p835, %s19, 1
      %p837 = scmp.lt.s32.totalorder %s20, 7
      %s838 = scalar_select %p837, %s20, 7
      %s839 = smul.addr %s836, 8
      %s840 = sadd.s32 %s838, %s839
      %s841 = smul.addr %s840, 2
      %s842 = scalar_lea.vmem %s3, %s841
      // Predicated region
      $region29: #{conv3d_encoder_forward.9} parent=27 // pred_check
        %p843 = pneg %p94
      $region30: #{conv3d_encoder_forward.9} parent=27 // pred_check_branch
        %845 = sbr.rel (%p843) target = $region32
      $region31: #{conv3d_encoder_forward.9} parent=27 // pred_region
        _
      $region32: #{conv3d_encoder_forward.9} parent=27 // pred_fallthru
        _
      // Predicated region
      $region33: #{conv3d_encoder_forward.9} parent=27 // pred_check
        %p846 = pneg %p122
      $region34: #{conv3d_encoder_forward.9} parent=27 // pred_check_branch
        %848 = sbr.rel (%p846) target = $region36
      $region35: #{conv3d_encoder_forward.9} parent=27 // pred_region
        _
      $region36: #{conv3d_encoder_forward.9} parent=27 // pred_fallthru
        _
    $region28: #{conv3d_encoder_forward.9} parent=5 // pred_fallthru
      _
    %p849 = scmp.le.s32.totalorder 2, %s10
    // Predicated region
    $region37: #{conv3d_encoder_forward.9} parent=5 // pred_check
      %p850 = pneg %p849
    $region38: #{conv3d_encoder_forward.9} parent=5 // pred_check_branch
      %852 = sbr.rel (%p850) target = $region40
    $region39: #{conv3d_encoder_forward.9} parent=5 // pred_region
      %s853 = ssub.s32 %s10, 2
      // Predicated region
      $region41: #{conv3d_encoder_forward.9} parent=39 // pred_check
        %p854 = pneg %p100
      $region42: #{conv3d_encoder_forward.9} parent=39 // pred_check_branch
        %856 = sbr.rel (%p854) target = $region44
      $region43: #{conv3d_encoder_forward.9} parent=39 // pred_region
        %p857 = scmp.lt.s32.totalorder %s21, 1
        %s858 = scalar_select %p857, %s21, 1
        %p859 = scmp.lt.s32.totalorder %s22, 7
        %s860 = scalar_select %p859, %s22, 7
        %s861 = smul.addr %s860, 8
        %s862 = smul.addr %s858, 64
        %s863 = sadd.s32 %s861, %s862
        %s864 = smul.addr %s863, 8
        %s865 = scalar_lea.vmem %s2, %s864
      $region44: #{conv3d_encoder_forward.9} parent=39 // pred_fallthru
        _
      // Predicated region
      $region45: #{conv3d_encoder_forward.9} parent=39 // pred_check
        %p866 = pneg %p128
      $region46: #{conv3d_encoder_forward.9} parent=39 // pred_check_branch
        %868 = sbr.rel (%p866) target = $region48
      $region47: #{conv3d_encoder_forward.9} parent=39 // pred_region
        %p869 = scmp.lt.s32.totalorder %s21, 1
        %s870 = scalar_select %p869, %s21, 1
        %p871 = scmp.lt.s32.totalorder %s22, 7
        %s872 = scalar_select %p871, %s22, 7
        %s873 = smul.addr %s870, 8
        %s874 = sadd.s32 %s872, %s873
        %s875 = smul.addr %s874, 2
        %s876 = scalar_lea.vmem %s3, %s875
      $region48: #{conv3d_encoder_forward.9} parent=39 // pred_fallthru
        _
    $region40: #{conv3d_encoder_forward.9} parent=5 // pred_fallthru
      _
  $region6: #{conv3d_encoder_forward.9} parent=0 // loop_footer
    %s14 = sadd.s32 1, %s10
  $region7: #{conv3d_encoder_forward.9} parent=0 // loop_footer_branch
    %9 = sbr.rel target = $region3
  $region8: #{conv3d_encoder_forward.9} parent=0 // loop_exit
    _

// kernel: conv3d_encoder_forward.11
$region0: #{conv3d_encoder_forward.11}
  #allocation0 [shape = 'u32[]', space=smem, size = 0x4, offset = 0x4, fixed_abs, tag = 'smem constant byte address 0x4 - core index']
  #allocation1 [shape = 'u32[144,128]{1,0:T(1,128)}', space=vmem, size = 0x12000, scoped, tag = 'internal scratch']
  %s0 = inlined_call_operand.vmem [shape: bf16[2,2,5,16,128], index: 0, kind: input, shape index: {}]
  %s1 = inlined_call_operand.vmem [shape: bf16[4,128,16], index: 1, kind: input, shape index: {}]
  %s2 = inlined_call_operand.vmem [shape: f32[2,4,16,16], index: 2, kind: output, shape index: {0}]
  %s3 = inlined_call_operand.vmem [shape: f32[2,4,2,16], index: 3, kind: output, shape index: {1}]
  %4 = xla_tuple %s2, %s3
  %s5 = sld [smem:[#allocation0]]
  $region49: #{conv3d_encoder_forward.11} parent=0
    _
  %s7 = ssub.s32 1, %s5
  %s8 = scalar_select 0, %s7, %s5
  loop: start=0, step=1, limit=10
  $region2: #{conv3d_encoder_forward.11} parent=0 // loop_pre_header
    _
  $region3: #{conv3d_encoder_forward.11} parent=0 // loop_header
    %s10 = sphi 0, %s14
    %p11 = scmp.ge.s32.totalorder %s10, 10
    %s17 = sphi 0, %s29
    %s18 = sphi 0, %s25
    %s19 = sphi 0, %s17
    %s20 = sphi 0, %s18
    %s21 = sphi 0, %s19
    %s22 = sphi 0, %s20
    %s32 = sphi 0, %s34
    %s35 = sphi 0, %s32
    %s36 = sphi 0, %s35
    %s52 = sphi 0, %s36
    %s56 = sphi 0, %s56
    %s58 = sphi 0, %s56
    %s59 = sphi 0, %s58
    %s73 = sphi 0, %s59
    %s81 = sphi 0, %s83
    %s84 = sphi 0, %s81
    %s85 = sphi 0, %s84
    %s101 = sphi 0, %s85
    %s109 = sphi 0, %s111
    %s112 = sphi 0, %s109
    %s113 = sphi 0, %s112
    %s129 = sphi 0, %s113
  $region4: #{conv3d_encoder_forward.11} parent=0 // loop_header_branch
    %13 = sbr.rel (%p11) target = $region8
  $region5: #{conv3d_encoder_forward.11} parent=0 // loop_body
    %s15 = ssub.s32 %s10, 1
    %s16 = ssub.s32 %s10, 2
    %s23 = sadd.s32 1, %s18
    %p24 = scmp.ge.s32.totalorder %s23, 4
    %s25 = scalar_select %p24, 0, %s23
    %s26 = sadd.s32 1, %s17
    %s27 = scalar_select %p24, %s26, %s17
    %p28 = scmp.ge.s32.totalorder %s27, 2
    %s29 = scalar_select %p28, 0, %s27
    %s30 = ssub.s32 %s17, %s29
    %p31 = scmp.eq.s32.totalorder %s30, 0
    %s33 = sadd.s32 %s32, 1
    %s34 = scalar_select %p31, %s32, %s33
    %p37 = pneg %p31
    %p38 = scmp.eq.s32.totalorder %s10, 7
    %p39 = por %p37, %p38
    %p40 = scmp.ne.s32.totalorder %s32, %s35
    %p41 = scmp.eq.s32.totalorder %s10, 0
    %p42 = por %p40, %p41
    %p43 = scmp.ne.s32.totalorder %s32, %s35
    %p44 = scmp.eq.s32.totalorder %s15, 7
    %p45 = por %p43, %p44
    %p46 = scmp.ne.s32.totalorder %s35, %s36
    %p47 = scmp.eq.s32.totalorder %s15, 0
    %p48 = por %p46, %p47
    %p49 = scmp.ne.s32.totalorder %s35, %s36
    %p50 = scmp.eq.s32.totalorder %s16, 7
    %p51 = por %p49, %p50
    %p53 = scmp.ne.s32.totalorder %s36, %s52
    %p54 = scmp.eq.s32.totalorder %s16, 0
    %p55 = por %p53, %p54
    %s57 = sadd.s32 %s56, 1
    %p60 = scmp.eq.s32.totalorder %s10, 7
    %p61 = scmp.ne.s32.totalorder %s56, %s58
    %p62 = scmp.eq.s32.totalorder %s10, 0
    %p63 = por %p61, %p62
    %p64 = scmp.ne.s32.totalorder %s56, %s58
    %p65 = scmp.eq.s32.totalorder %s15, 7
    %p66 = por %p64, %p65
    %p67 = scmp.ne.s32.totalorder %s58, %s59
    %p68 = scmp.eq.s32.totalorder %s15, 0
    %p69 = por %p67, %p68
    %p70 = scmp.ne.s32.totalorder %s58, %s59
    %p71 = scmp.eq.s32.totalorder %s16, 7
    %p72 = por %p70, %p71
    %p74 = scmp.ne.s32.totalorder %s59, %s73
    %p75 = scmp.eq.s32.totalorder %s16, 0
    %p76 = por %p74, %p75
    %s77 = ssub.s32 %s17, %s29
    %s78 = ssub.s32 %s18, %s25
    %s79 = sor.u32 %s77, %s78
    %p80 = scmp.eq.s32.totalorder %s79, 0
    %s82 = sadd.s32 %s81, 1
    %s83 = scalar_select %p80, %s81, %s82
    %p86 = pneg %p80
    %p87 = scmp.eq.s32.totalorder %s10, 7
    %p88 = por %p86, %p87
    %p89 = scmp.ne.s32.totalorder %s81, %s84
    %p90 = scmp.eq.s32.totalorder %s10, 0
    %p91 = por %p89, %p90
    %p92 = scmp.ne.s32.totalorder %s81, %s84
    %p93 = scmp.eq.s32.totalorder %s15, 7
    %p94 = por %p92, %p93
    %p95 = scmp.ne.s32.totalorder %s84, %s85
    %p96 = scmp.eq.s32.totalorder %s15, 0
    %p97 = por %p95, %p96
    %p98 = scmp.ne.s32.totalorder %s84, %s85
    %p99 = scmp.eq.s32.totalorder %s16, 7
    %p100 = por %p98, %p99
    %p102 = scmp.ne.s32.totalorder %s85, %s101
    %p103 = scmp.eq.s32.totalorder %s16, 0
    %p104 = por %p102, %p103
    %s105 = ssub.s32 %s17, %s29
    %s106 = ssub.s32 %s18, %s25
    %s107 = sor.u32 %s105, %s106
    %p108 = scmp.eq.s32.totalorder %s107, 0
    %s110 = sadd.s32 %s109, 1
    %s111 = scalar_select %p108, %s109, %s110
    %p114 = pneg %p108
    %p115 = scmp.eq.s32.totalorder %s10, 7
    %p116 = por %p114, %p115
    %p117 = scmp.ne.s32.totalorder %s109, %s112
    %p118 = scmp.eq.s32.totalorder %s10, 0
    %p119 = por %p117, %p118
    %p120 = scmp.ne.s32.totalorder %s109, %s112
    %p121 = scmp.eq.s32.totalorder %s15, 7
    %p122 = por %p120, %p121
    %p123 = scmp.ne.s32.totalorder %s112, %s113
    %p124 = scmp.eq.s32.totalorder %s15, 0
    %p125 = por %p123, %p124
    %p126 = scmp.ne.s32.totalorder %s112, %s113
    %p127 = scmp.eq.s32.totalorder %s16, 7
    %p128 = por %p126, %p127
    %p130 = scmp.ne.s32.totalorder %s113, %s129
    %p131 = scmp.eq.s32.totalorder %s16, 0
    %p132 = por %p130, %p131
    %p133 = scmp.le.s32.totalorder 1, %s10
    %p134 = scmp.lt.s32.totalorder %s10, 9
    %p135 = pnand %p133, %p134
    %p136 = pneg %p135
    // Predicated region
    $region9: #{conv3d_encoder_forward.11} parent=5 // pred_check
      _
    $region10: #{conv3d_encoder_forward.11} parent=5 // pred_check_branch
      %138 = sbr.rel (%p135) target = $region12
    $region11: #{conv3d_encoder_forward.11} parent=5 // pred_region
      %s139 = ssub.s32 %s10, 1
      // Predicated region
      $region13: #{conv3d_encoder_forward.11} parent=11 // pred_check
        %p140 = pneg %p69
      $region14: #{conv3d_encoder_forward.11} parent=11 // pred_check_branch
        %142 = sbr.rel (%p140) target = $region16
      $region15: #{conv3d_encoder_forward.11} parent=11 // pred_region
        _
      $region16: #{conv3d_encoder_forward.11} parent=11 // pred_fallthru
        _
    $region12: #{conv3d_encoder_forward.11} parent=5 // pred_fallthru
      _
    %p143 = scmp.lt.s32.totalorder %s10, 8
    // Predicated region
    $region17: #{conv3d_encoder_forward.11} parent=5 // pred_check
      %p144 = pneg %p143
    $region18: #{conv3d_encoder_forward.11} parent=5 // pred_check_branch
      %146 = sbr.rel (%p144) target = $region20
    $region19: #{conv3d_encoder_forward.11} parent=5 // pred_region
      // Predicated region
      $region21: #{conv3d_encoder_forward.11} parent=19 // pred_check
        %p147 = pneg %p42
      $region22: #{conv3d_encoder_forward.11} parent=19 // pred_check_branch
        %149 = sbr.rel (%p147) target = $region24
      $region23: #{conv3d_encoder_forward.11} parent=19 // pred_region
        %p150 = scmp.lt.s32.totalorder %s17, 1
        %s151 = scalar_select %p150, %s17, 1
        %s152 = smul.addr %s151, 20
        %s153 = smul.addr %s152, 4
        %s154 = scalar_lea.vmem %s0, %s153
      $region24: #{conv3d_encoder_forward.11} parent=19 // pred_fallthru
        _
    $region20: #{conv3d_encoder_forward.11} parent=5 // pred_fallthru
      _
    %p155 = scmp.le.s32.totalorder 1, %s10
    %p156 = scmp.lt.s32.totalorder %s10, 9
    %p157 = pnand %p155, %p156
    %p158 = pneg %p157
    // Predicated region
    $region25: #{conv3d_encoder_forward.11} parent=5 // pred_check
      _
    $region26: #{conv3d_encoder_forward.11} parent=5 // pred_check_branch
      %160 = sbr.rel (%p157) target = $region28
    $region27: #{conv3d_encoder_forward.11} parent=5 // pred_region
      %s161 = ssub.s32 %s10, 1
      %p162 = scmp.lt.s32.totalorder %s19, 1
      %s163 = scalar_select %p162, %s19, 1
      %s164 = smul.addr %s163, 20
      %s165 = smul.addr %s164, 4
      %s166 = scalar_lea.vmem %s0, %s165
      %p167 = pneg %p48
      %p168 = pneg %p45
      %p169 = pneg %p69
      %p170 = pneg %p66
      %p171 = pneg %p97
      %p172 = pneg %p94
      %p173 = scmp.lt.s32.totalorder %s19, 1
      %s174 = scalar_select %p173, %s19, 1
      %p175 = scmp.lt.s32.totalorder %s20, 3
      %s176 = scalar_select %p175, %s20, 3
      %s177 = smul.addr %s176, 2
      %s178 = smul.addr %s174, 8
      %s179 = sadd.s32 %s177, %s178
      %s180 = smul.addr %s179, 8
      %s181 = scalar_lea.vmem %s2, %s180
      %p182 = pneg %p125
      %p183 = pneg %p122
      %p184 = scmp.lt.s32.totalorder %s19, 1
      %s185 = scalar_select %p184, %s19, 1
      %p186 = scmp.lt.s32.totalorder %s20, 3
      %s187 = scalar_select %p186, %s20, 3
      %s188 = smul.addr %s185, 4
      %s189 = sadd.s32 %s187, %s188
      %s190 = smul.addr %s189, 2
      %s191 = scalar_lea.vmem %s3, %s190
      %p192 = scmp.lt.s32.totalorder %s19, 1
      %s193 = scalar_select %p192, %s19, 1
      %s194 = smul.addr %s193, 20
      %s195 = smul.addr %s194, 4
      %s196 = scalar_lea.vmem %s0, %s195
      %p197 = scmp.lt.s32.totalorder %s19, 1
      %s198 = scalar_select %p197, %s19, 1
      %p199 = scmp.lt.s32.totalorder %s20, 3
      %s200 = scalar_select %p199, %s20, 3
      %s201 = smul.addr %s200, 2
      %s202 = smul.addr %s198, 8
      %s203 = sadd.s32 %s201, %s202
      %s204 = smul.addr %s203, 8
      %s205 = scalar_lea.vmem %s2, %s204
      %p206 = scmp.lt.s32.totalorder %s19, 1
      %s207 = scalar_select %p206, %s19, 1
      %p208 = scmp.lt.s32.totalorder %s20, 3
      %s209 = scalar_select %p208, %s20, 3
      %s210 = smul.addr %s207, 4
      %s211 = sadd.s32 %s209, %s210
      %s212 = smul.addr %s211, 2
      %s213 = scalar_lea.vmem %s3, %s212
      %s215 = smul.u32 %s20, 2
      %s216 = smul.addr %s215, 4
      %s217 = scalar_lea.vmem %s196, %s216
      %v218 = vld [vmem:[%s217] sm:$0xf]
      %v219 = vld [vmem:[%s217 + $0x4] sm:$0xf]
      %v220 = vld [vmem:[%s1] sm:$0xf]
      %v221 = vld [vmem:[%s1 + $0x4] sm:$0xf]
      %v222 = vld [vmem:[%s1 + $0x8] sm:$0xf]
      %v223 = vld [vmem:[%s1 + $0xc] sm:$0xf]
      %v224 = vld [vmem:[%s1 + $0x10] sm:$0xf]
      %v225 = vld [vmem:[%s1 + $0x14] sm:$0xf]
      %v226 = vld [vmem:[%s1 + $0x18] sm:$0xf]
      %v227 = vld [vmem:[%s1 + $0x1c] sm:$0xf]
      %v228 = vld [vmem:[%s1 + $0x20] sm:$0xf]
      %v229 = vld [vmem:[%s1 + $0x24] sm:$0xf]
      %v230 = vld [vmem:[%s1 + $0x28] sm:$0xf]
      %v231 = vld [vmem:[%s1 + $0x2c] sm:$0xf]
      %v232 = vld [vmem:[%s1 + $0x30] sm:$0xf]
      %v233 = vld [vmem:[%s1 + $0x34] sm:$0xf]
      %v234 = vld [vmem:[%s1 + $0x38] sm:$0xf]
      %v235 = vld [vmem:[%s1 + $0x3c] sm:$0xf]
      %s236 = sadd.s32 %s215, 10
      %s237 = smul.addr %s236, 4
      %s238 = scalar_lea.vmem %s196, %s237
      %v239 = vld [vmem:[%s238] sm:$0xf]
      %v240 = vld [vmem:[%s238 + $0x4] sm:$0xf]
      %s241 = scalar_lea.vmem %s1, 64
      %v242 = vld [vmem:[%s241] sm:$0xf]
      %v243 = vld [vmem:[%s241 + $0x4] sm:$0xf]
      %v244 = vld [vmem:[%s241 + $0x8] sm:$0xf]
      %v245 = vld [vmem:[%s241 + $0xc] sm:$0xf]
      %v246 = vld [vmem:[%s241 + $0x10] sm:$0xf]
      %v247 = vld [vmem:[%s241 + $0x14] sm:$0xf]
      %v248 = vld [vmem:[%s241 + $0x18] sm:$0xf]
      %v249 = vld [vmem:[%s241 + $0x1c] sm:$0xf]
      %v250 = vld [vmem:[%s241 + $0x20] sm:$0xf]
      %v251 = vld [vmem:[%s241 + $0x24] sm:$0xf]
      %v252 = vld [vmem:[%s241 + $0x28] sm:$0xf]
      %v253 = vld [vmem:[%s241 + $0x2c] sm:$0xf]
      %v254 = vld [vmem:[%s241 + $0x30] sm:$0xf]
      %v255 = vld [vmem:[%s241 + $0x34] sm:$0xf]
      %v256 = vld [vmem:[%s241 + $0x38] sm:$0xf]
      %v257 = vld [vmem:[%s241 + $0x3c] sm:$0xf]
      %v260 = vunpack.c.l.b16 %v239
      %v261 = vunpack.c.l.b16 %v240
      %v262 = vpack.c.b16 %v261, %v260
      %v280 = vunpack.c.l.b16 %v242
      %v281 = vunpack.c.l.b16 %v243
      %v282 = vunpack.c.l.b16 %v244
      %v283 = vunpack.c.l.b16 %v245
      %v284 = vunpack.c.l.b16 %v246
      %v285 = vunpack.c.l.b16 %v247
      %v286 = vunpack.c.l.b16 %v248
      %v287 = vunpack.c.l.b16 %v249
      %v288 = vunpack.c.l.b16 %v250
      %v289 = vunpack.c.l.b16 %v251
      %v290 = vunpack.c.l.b16 %v252
      %v291 = vunpack.c.l.b16 %v253
      %v292 = vunpack.c.l.b16 %v254
      %v293 = vunpack.c.l.b16 %v255
      %v294 = vunpack.c.l.b16 %v256
      %v295 = vunpack.c.l.b16 %v257
      %v296 = vpack.c.b16 %v281, %v280
      %v297 = vpack.c.b16 %v283, %v282
      %v298 = vpack.c.b16 %v285, %v284
      %v299 = vpack.c.b16 %v287, %v286
      %v300 = vpack.c.b16 %v289, %v288
      %v301 = vpack.c.b16 %v291, %v290
      %v302 = vpack.c.b16 %v293, %v292
      %v303 = vpack.c.b16 %v295, %v294
      %312 = vmatprep.subr.bf16.mxu0 0
      %313 = vmatpush1.bf16.msra.mxu0 %v296
      %314 = vmatprep.subr.bf16.mxu0 0
      %315 = vmatpush1.bf16.msra.mxu0 %v297
      %316 = vmatprep.subr.bf16.mxu0 0
      %317 = vmatpush1.bf16.msra.mxu0 %v298
      %318 = vmatprep.subr.bf16.mxu0 0
      %319 = vmatpush1.bf16.msra.mxu0 %v299
      %320 = vmatprep.subr.bf16.mxu0 0
      %321 = vmatpush1.bf16.msra.mxu0 %v300
      %322 = vmatprep.subr.bf16.mxu0 0
      %323 = vmatpush1.bf16.msra.mxu0 %v301
      %324 = vmatprep.subr.bf16.mxu0 0
      %325 = vmatpush1.bf16.msra.mxu0 %v302
      %326 = vmatprep.subr.bf16.mxu0 0
      %327 = vmatpush1.bf16.msra.mxu0 %v303
      %328 = vmatprep.subr.bf16.mxu0 0
      %329 = vmatpush1.bf16.msra.mxu0 0
      %330 = vmatprep.subr.bf16.mxu0 0
      %331 = vmatpush1.bf16.msra.mxu0 0
      %332 = vmatprep.subr.bf16.mxu0 0
      %333 = vmatpush1.bf16.msra.mxu0 0
      %334 = vmatprep.subr.bf16.mxu0 0
      %335 = vmatpush1.bf16.msra.mxu0 0
      %336 = vmatprep.subr.bf16.mxu0 0
      %337 = vmatpush1.bf16.msra.mxu0 0
      %338 = vmatprep.subr.bf16.mxu0 0
      %339 = vmatpush1.bf16.msra.mxu0 0
      %340 = vmatprep.subr.bf16.mxu0 0
      %341 = vmatpush1.bf16.msra.mxu0 0
      %342 = vmatprep.subr.bf16.mxu0 0
      %343 = vmatpush1.bf16.msra.mxu0 0
      %344 = vmatprep.mubr.bf16.mxu0 0
      %345 = vmatmul.mubr.bf16.gmra.mrb[0].mxu0 %v262
      %v346 = vpop.f32.mrb[0].mxu0
      %v347 = vadd.f32 0.0, %v346
      %v348 = vpop.f32.mrb[0].mxu0
      %v349 = vpop.f32.mrb[0].mxu0
      %v350 = vadd.f32 0.0, %v349
      %v351 = vpop.f32.mrb[0].mxu0
      %352 = vdwg.mxu0
      %v355 = vunpack.c.l.b16 %v218
      %v356 = vunpack.c.l.b16 %v219
      %v357 = vpack.c.b16 %v356, %v355
      %v375 = vunpack.c.l.b16 %v220
      %v376 = vunpack.c.l.b16 %v221
      %v377 = vunpack.c.l.b16 %v222
      %v378 = vunpack.c.l.b16 %v223
      %v379 = vunpack.c.l.b16 %v224
      %v380 = vunpack.c.l.b16 %v225
      %v381 = vunpack.c.l.b16 %v226
      %v382 = vunpack.c.l.b16 %v227
      %v383 = vunpack.c.l.b16 %v228
      %v384 = vunpack.c.l.b16 %v229
      %v385 = vunpack.c.l.b16 %v230
      %v386 = vunpack.c.l.b16 %v231
      %v387 = vunpack.c.l.b16 %v232
      %v388 = vunpack.c.l.b16 %v233
      %v389 = vunpack.c.l.b16 %v234
      %v390 = vunpack.c.l.b16 %v235
      %v391 = vpack.c.b16 %v376, %v375
      %v392 = vpack.c.b16 %v378, %v377
      %v393 = vpack.c.b16 %v380, %v379
      %v394 = vpack.c.b16 %v382, %v381
      %v395 = vpack.c.b16 %v384, %v383
      %v396 = vpack.c.b16 %v386, %v385
      %v397 = vpack.c.b16 %v388, %v387
      %v398 = vpack.c.b16 %v390, %v389
      %407 = vmatprep.subr.bf16.mxu0 0
      %408 = vmatpush1.bf16.msra.mxu0 %v391
      %409 = vmatprep.subr.bf16.mxu0 0
      %410 = vmatpush1.bf16.msra.mxu0 %v392
      %411 = vmatprep.subr.bf16.mxu0 0
      %412 = vmatpush1.bf16.msra.mxu0 %v393
      %413 = vmatprep.subr.bf16.mxu0 0
      %414 = vmatpush1.bf16.msra.mxu0 %v394
      %415 = vmatprep.subr.bf16.mxu0 0
      %416 = vmatpush1.bf16.msra.mxu0 %v395
      %417 = vmatprep.subr.bf16.mxu0 0
      %418 = vmatpush1.bf16.msra.mxu0 %v396
      %419 = vmatprep.subr.bf16.mxu0 0
      %420 = vmatpush1.bf16.msra.mxu0 %v397
      %421 = vmatprep.subr.bf16.mxu0 0
      %422 = vmatpush1.bf16.msra.mxu0 %v398
      %423 = vmatprep.subr.bf16.mxu0 0
      %424 = vmatpush1.bf16.msra.mxu0 0
      %425 = vmatprep.subr.bf16.mxu0 0
      %426 = vmatpush1.bf16.msra.mxu0 0
      %427 = vmatprep.subr.bf16.mxu0 0
      %428 = vmatpush1.bf16.msra.mxu0 0
      %429 = vmatprep.subr.bf16.mxu0 0
      %430 = vmatpush1.bf16.msra.mxu0 0
      %431 = vmatprep.subr.bf16.mxu0 0
      %432 = vmatpush1.bf16.msra.mxu0 0
      %433 = vmatprep.subr.bf16.mxu0 0
      %434 = vmatpush1.bf16.msra.mxu0 0
      %435 = vmatprep.subr.bf16.mxu0 0
      %436 = vmatpush1.bf16.msra.mxu0 0
      %437 = vmatprep.subr.bf16.mxu0 0
      %438 = vmatpush1.bf16.msra.mxu0 0
      %439 = vmatprep.mubr.bf16.mxu0 0
      %440 = vmatmul.mubr.bf16.gmra.mrb[0].mxu0 %v357
      %v441 = vpop.f32.mrb[0].mxu0
      %v442 = vadd.f32 %v347, %v441
      %v443 = vpop.f32.mrb[0].mxu0
      %v444 = vpop.f32.mrb[0].mxu0
      %v445 = vadd.f32 %v350, %v444
      %v446 = vpop.f32.mrb[0].mxu0
      %447 = vdwg.mxu0
      %s448 = sadd.s32 %s20, 1
      %s449 = smul.u32 %s448, 2
      %s450 = smul.addr %s449, 4
      %s451 = scalar_lea.vmem %s196, %s450
      %v452 = vld [vmem:[%s451] sm:$0xf]
      %v453 = vld [vmem:[%s451 + $0x4] sm:$0xf]
      %s454 = scalar_lea.vmem %s1, 128
      %v455 = vld [vmem:[%s454] sm:$0xf]
      %v456 = vld [vmem:[%s454 + $0x4] sm:$0xf]
      %v457 = vld [vmem:[%s454 + $0x8] sm:$0xf]
      %v458 = vld [vmem:[%s454 + $0xc] sm:$0xf]
      %v459 = vld [vmem:[%s454 + $0x10] sm:$0xf]
      %v460 = vld [vmem:[%s454 + $0x14] sm:$0xf]
      %v461 = vld [vmem:[%s454 + $0x18] sm:$0xf]
      %v462 = vld [vmem:[%s454 + $0x1c] sm:$0xf]
      %v463 = vld [vmem:[%s454 + $0x20] sm:$0xf]
      %v464 = vld [vmem:[%s454 + $0x24] sm:$0xf]
      %v465 = vld [vmem:[%s454 + $0x28] sm:$0xf]
      %v466 = vld [vmem:[%s454 + $0x2c] sm:$0xf]
      %v467 = vld [vmem:[%s454 + $0x30] sm:$0xf]
      %v468 = vld [vmem:[%s454 + $0x34] sm:$0xf]
      %v469 = vld [vmem:[%s454 + $0x38] sm:$0xf]
      %v470 = vld [vmem:[%s454 + $0x3c] sm:$0xf]
      %v473 = vunpack.c.l.b16 %v452
      %v474 = vunpack.c.l.b16 %v453
      %v475 = vpack.c.b16 %v474, %v473
      %v493 = vunpack.c.l.b16 %v455
      %v494 = vunpack.c.l.b16 %v456
      %v495 = vunpack.c.l.b16 %v457
      %v496 = vunpack.c.l.b16 %v458
      %v497 = vunpack.c.l.b16 %v459
      %v498 = vunpack.c.l.b16 %v460
      %v499 = vunpack.c.l.b16 %v461
      %v500 = vunpack.c.l.b16 %v462
      %v501 = vunpack.c.l.b16 %v463
      %v502 = vunpack.c.l.b16 %v464
      %v503 = vunpack.c.l.b16 %v465
      %v504 = vunpack.c.l.b16 %v466
      %v505 = vunpack.c.l.b16 %v467
      %v506 = vunpack.c.l.b16 %v468
      %v507 = vunpack.c.l.b16 %v469
      %v508 = vunpack.c.l.b16 %v470
      %v509 = vpack.c.b16 %v494, %v493
      %v510 = vpack.c.b16 %v496, %v495
      %v511 = vpack.c.b16 %v498, %v497
      %v512 = vpack.c.b16 %v500, %v499
      %v513 = vpack.c.b16 %v502, %v501
      %v514 = vpack.c.b16 %v504, %v503
      %v515 = vpack.c.b16 %v506, %v505
      %v516 = vpack.c.b16 %v508, %v507
      %525 = vmatprep.subr.bf16.mxu0 0
      %526 = vmatpush1.bf16.msra.mxu0 %v509
      %527 = vmatprep.subr.bf16.mxu0 0
      %528 = vmatpush1.bf16.msra.mxu0 %v510
      %529 = vmatprep.subr.bf16.mxu0 0
      %530 = vmatpush1.bf16.msra.mxu0 %v511
      %531 = vmatprep.subr.bf16.mxu0 0
      %532 = vmatpush1.bf16.msra.mxu0 %v512
      %533 = vmatprep.subr.bf16.mxu0 0
      %534 = vmatpush1.bf16.msra.mxu0 %v513
      %535 = vmatprep.subr.bf16.mxu0 0
      %536 = vmatpush1.bf16.msra.mxu0 %v514
      %537 = vmatprep.subr.bf16.mxu0 0
      %538 = vmatpush1.bf16.msra.mxu0 %v515
      %539 = vmatprep.subr.bf16.mxu0 0
      %540 = vmatpush1.bf16.msra.mxu0 %v516
      %541 = vmatprep.subr.bf16.mxu0 0
      %542 = vmatpush1.bf16.msra.mxu0 0
      %543 = vmatprep.subr.bf16.mxu0 0
      %544 = vmatpush1.bf16.msra.mxu0 0
      %545 = vmatprep.subr.bf16.mxu0 0
      %546 = vmatpush1.bf16.msra.mxu0 0
      %547 = vmatprep.subr.bf16.mxu0 0
      %548 = vmatpush1.bf16.msra.mxu0 0
      %549 = vmatprep.subr.bf16.mxu0 0
      %550 = vmatpush1.bf16.msra.mxu0 0
      %551 = vmatprep.subr.bf16.mxu0 0
      %552 = vmatpush1.bf16.msra.mxu0 0
      %553 = vmatprep.subr.bf16.mxu0 0
      %554 = vmatpush1.bf16.msra.mxu0 0
      %555 = vmatprep.subr.bf16.mxu0 0
      %556 = vmatpush1.bf16.msra.mxu0 0
      %557 = vmatprep.mubr.bf16.mxu0 0
      %558 = vmatmul.mubr.bf16.gmra.mrb[0].mxu0 %v475
      %v559 = vpop.f32.mrb[0].mxu0
      %v560 = vadd.f32 0.0, %v559
      %v561 = vpop.f32.mrb[0].mxu0
      %v562 = vpop.f32.mrb[0].mxu0
      %v563 = vadd.f32 0.0, %v562
      %v564 = vpop.f32.mrb[0].mxu0
      %565 = vdwg.mxu0
      %v566 = vadd.f32 %v442, %v560
      %v567 = vadd.f32 %v445, %v563
      %s568 = sadd.s32 %s449, 10
      %s569 = smul.addr %s568, 4
      %s570 = scalar_lea.vmem %s196, %s569
      %v571 = vld [vmem:[%s570] sm:$0xf]
      %v572 = vld [vmem:[%s570 + $0x4] sm:$0xf]
      %s573 = scalar_lea.vmem %s1, 192
      %v574 = vld [vmem:[%s573] sm:$0xf]
      %v575 = vld [vmem:[%s573 + $0x4] sm:$0xf]
      %v576 = vld [vmem:[%s573 + $0x8] sm:$0xf]
      %v577 = vld [vmem:[%s573 + $0xc] sm:$0xf]
      %v578 = vld [vmem:[%s573 + $0x10] sm:$0xf]
      %v579 = vld [vmem:[%s573 + $0x14] sm:$0xf]
      %v580 = vld [vmem:[%s573 + $0x18] sm:$0xf]
      %v581 = vld [vmem:[%s573 + $0x1c] sm:$0xf]
      %v582 = vld [vmem:[%s573 + $0x20] sm:$0xf]
      %v583 = vld [vmem:[%s573 + $0x24] sm:$0xf]
      %v584 = vld [vmem:[%s573 + $0x28] sm:$0xf]
      %v585 = vld [vmem:[%s573 + $0x2c] sm:$0xf]
      %v586 = vld [vmem:[%s573 + $0x30] sm:$0xf]
      %v587 = vld [vmem:[%s573 + $0x34] sm:$0xf]
      %v588 = vld [vmem:[%s573 + $0x38] sm:$0xf]
      %v589 = vld [vmem:[%s573 + $0x3c] sm:$0xf]
      %v592 = vunpack.c.l.b16 %v571
      %v593 = vunpack.c.l.b16 %v572
      %v594 = vpack.c.b16 %v593, %v592
      %v612 = vunpack.c.l.b16 %v574
      %v613 = vunpack.c.l.b16 %v575
      %v614 = vunpack.c.l.b16 %v576
      %v615 = vunpack.c.l.b16 %v577
      %v616 = vunpack.c.l.b16 %v578
      %v617 = vunpack.c.l.b16 %v579
      %v618 = vunpack.c.l.b16 %v580
      %v619 = vunpack.c.l.b16 %v581
      %v620 = vunpack.c.l.b16 %v582
      %v621 = vunpack.c.l.b16 %v583
      %v622 = vunpack.c.l.b16 %v584
      %v623 = vunpack.c.l.b16 %v585
      %v624 = vunpack.c.l.b16 %v586
      %v625 = vunpack.c.l.b16 %v587
      %v626 = vunpack.c.l.b16 %v588
      %v627 = vunpack.c.l.b16 %v589
      %v628 = vpack.c.b16 %v613, %v612
      %v629 = vpack.c.b16 %v615, %v614
      %v630 = vpack.c.b16 %v617, %v616
      %v631 = vpack.c.b16 %v619, %v618
      %v632 = vpack.c.b16 %v621, %v620
      %v633 = vpack.c.b16 %v623, %v622
      %v634 = vpack.c.b16 %v625, %v624
      %v635 = vpack.c.b16 %v627, %v626
      %644 = vmatprep.subr.bf16.mxu0 0
      %645 = vmatpush1.bf16.msra.mxu0 %v628
      %646 = vmatprep.subr.bf16.mxu0 0
      %647 = vmatpush1.bf16.msra.mxu0 %v629
      %648 = vmatprep.subr.bf16.mxu0 0
      %649 = vmatpush1.bf16.msra.mxu0 %v630
      %650 = vmatprep.subr.bf16.mxu0 0
      %651 = vmatpush1.bf16.msra.mxu0 %v631
      %652 = vmatprep.subr.bf16.mxu0 0
      %653 = vmatpush1.bf16.msra.mxu0 %v632
      %654 = vmatprep.subr.bf16.mxu0 0
      %655 = vmatpush1.bf16.msra.mxu0 %v633
      %656 = vmatprep.subr.bf16.mxu0 0
      %657 = vmatpush1.bf16.msra.mxu0 %v634
      %658 = vmatprep.subr.bf16.mxu0 0
      %659 = vmatpush1.bf16.msra.mxu0 %v635
      %660 = vmatprep.subr.bf16.mxu0 0
      %661 = vmatpush1.bf16.msra.mxu0 0
      %662 = vmatprep.subr.bf16.mxu0 0
      %663 = vmatpush1.bf16.msra.mxu0 0
      %664 = vmatprep.subr.bf16.mxu0 0
      %665 = vmatpush1.bf16.msra.mxu0 0
      %666 = vmatprep.subr.bf16.mxu0 0
      %667 = vmatpush1.bf16.msra.mxu0 0
      %668 = vmatprep.subr.bf16.mxu0 0
      %669 = vmatpush1.bf16.msra.mxu0 0
      %670 = vmatprep.subr.bf16.mxu0 0
      %671 = vmatpush1.bf16.msra.mxu0 0
      %672 = vmatprep.subr.bf16.mxu0 0
      %673 = vmatpush1.bf16.msra.mxu0 0
      %674 = vmatprep.subr.bf16.mxu0 0
      %675 = vmatpush1.bf16.msra.mxu0 0
      %676 = vmatprep.mubr.bf16.mxu0 0
      %677 = vmatmul.mubr.bf16.gmra.mrb[0].mxu0 %v594
      %v678 = vpop.f32.mrb[0].mxu0
      %v679 = vadd.f32 0.0, %v678
      %v680 = vpop.f32.mrb[0].mxu0
      %v681 = vpop.f32.mrb[0].mxu0
      %v682 = vadd.f32 0.0, %v681
      %v683 = vpop.f32.mrb[0].mxu0
      %684 = vdwg.mxu0
      %v685 = vadd.f32 %v566, %v679
      %v686 = vadd.f32 %v567, %v682
      %vm687 = vcmask 130048
      %688 = vst.msk [vmem:[%s205] sm:$0xff] %vm687, %v685
      %689 = vst.msk [vmem:[%s205 + $0x8] sm:$0xff] %vm687, %v686
      %v690 = vsel %vm687, %v685, 0.0
      %v691 = vsel %vm687, %v686, 0.0
      %v692 = vadd.f32 %v690, %v691
      %v693 = vrot.slane %v692, 4
      %v694 = vadd.f32 %v692, %v693
      %v695 = vrot.slane %v694, 2
      %v696 = vadd.f32 %v694, %v695
      %v697 = vrot.slane %v696, 1
      %v698 = vadd.f32 %v696, %v697
      %vm699 = vcmask 122880
      %700 = vst.msk [vmem:[%s213] sm:$0x1] %vm699, %v698
      %v701 = vmul.f32 %v685, %v685
      %v702 = vmul.f32 %v686, %v686
      %v703 = vsel %vm687, %v701, 0.0
      %v704 = vsel %vm687, %v702, 0.0
      %v705 = vadd.f32 %v703, %v704
      %v706 = vrot.slane %v705, 4
      %v707 = vadd.f32 %v705, %v706
      %v708 = vrot.slane %v707, 2
      %v709 = vadd.f32 %v707, %v708
      %v710 = vrot.slane %v709, 1
      %v711 = vadd.f32 %v709, %v710
      %712 = vst.msk [vmem:[%s213 + $0x1] sm:$0x1] %vm699, %v711
      %p713 = scmp.lt.s32.totalorder %s19, 1
      %s714 = scalar_select %p713, %s19, 1
      %p715 = scmp.lt.s32.totalorder %s20, 3
      %s716 = scalar_select %p715, %s20, 3
      %s717 = smul.addr %s716, 2
      %s718 = smul.addr %s714, 8
      %s719 = sadd.s32 %s717, %s718
      %s720 = smul.addr %s719, 8
      %s721 = scalar_lea.vmem %s2, %s720
      %p722 = scmp.lt.s32.totalorder %s19, 1
      %s723 = scalar_select %p722, %s19, 1
      %p724 = scmp.lt.s32.totalorder %s20, 3
      %s725 = scalar_select %p724, %s20, 3
      %s726 = smul.addr %s723, 4
      %s727 = sadd.s32 %s725, %s726
      %s728 = smul.addr %s727, 2
      %s729 = scalar_lea.vmem %s3, %s728
      // Predicated region
      $region29: #{conv3d_encoder_forward.11} parent=27 // pred_check
        %p730 = pneg %p94
      $region30: #{conv3d_encoder_forward.11} parent=27 // pred_check_branch
        %732 = sbr.rel (%p730) target = $region32
      $region31: #{conv3d_encoder_forward.11} parent=27 // pred_region
        _
      $region32: #{conv3d_encoder_forward.11} parent=27 // pred_fallthru
        _
      // Predicated region
      $region33: #{conv3d_encoder_forward.11} parent=27 // pred_check
        %p733 = pneg %p122
      $region34: #{conv3d_encoder_forward.11} parent=27 // pred_check_branch
        %735 = sbr.rel (%p733) target = $region36
      $region35: #{conv3d_encoder_forward.11} parent=27 // pred_region
        _
      $region36: #{conv3d_encoder_forward.11} parent=27 // pred_fallthru
        _
    $region28: #{conv3d_encoder_forward.11} parent=5 // pred_fallthru
      _
    %p736 = scmp.le.s32.totalorder 2, %s10
    // Predicated region
    $region37: #{conv3d_encoder_forward.11} parent=5 // pred_check
      %p737 = pneg %p736
    $region38: #{conv3d_encoder_forward.11} parent=5 // pred_check_branch
      %739 = sbr.rel (%p737) target = $region40
    $region39: #{conv3d_encoder_forward.11} parent=5 // pred_region
      %s740 = ssub.s32 %s10, 2
      // Predicated region
      $region41: #{conv3d_encoder_forward.11} parent=39 // pred_check
        %p741 = pneg %p100
      $region42: #{conv3d_encoder_forward.11} parent=39 // pred_check_branch
        %743 = sbr.rel (%p741) target = $region44
      $region43: #{conv3d_encoder_forward.11} parent=39 // pred_region
        %p744 = scmp.lt.s32.totalorder %s21, 1
        %s745 = scalar_select %p744, %s21, 1
        %p746 = scmp.lt.s32.totalorder %s22, 3
        %s747 = scalar_select %p746, %s22, 3
        %s748 = smul.addr %s747, 2
        %s749 = smul.addr %s745, 8
        %s750 = sadd.s32 %s748, %s749
        %s751 = smul.addr %s750, 8
        %s752 = scalar_lea.vmem %s2, %s751
      $region44: #{conv3d_encoder_forward.11} parent=39 // pred_fallthru
        _
      // Predicated region
      $region45: #{conv3d_encoder_forward.11} parent=39 // pred_check
        %p753 = pneg %p128
      $region46: #{conv3d_encoder_forward.11} parent=39 // pred_check_branch
        %755 = sbr.rel (%p753) target = $region48
      $region47: #{conv3d_encoder_forward.11} parent=39 // pred_region
        %p756 = scmp.lt.s32.totalorder %s21, 1
        %s757 = scalar_select %p756, %s21, 1
        %p758 = scmp.lt.s32.totalorder %s22, 3
        %s759 = scalar_select %p758, %s22, 3
        %s760 = smul.addr %s757, 4
        %s761 = sadd.s32 %s759, %s760
        %s762 = smul.addr %s761, 2
        %s763 = scalar_lea.vmem %s3, %s762
      $region48: #{conv3d_encoder_forward.11} parent=39 // pred_fallthru
        _
    $region40: #{conv3d_encoder_forward.11} parent=5 // pred_fallthru
      _
  $region6: #{conv3d_encoder_forward.11} parent=0 // loop_footer
    %s14 = sadd.s32 1, %s10
  $region7: #{conv3d_encoder_forward.11} parent=0 // loop_footer_branch
    %9 = sbr.rel target = $region3
  $region8: #{conv3d_encoder_forward.11} parent=0 // loop_exit
    _

// kernel: conv3d_encoder_forward.12
$region0: #{conv3d_encoder_forward.12}
  #allocation0 [shape = 'u32[]', space=smem, size = 0x4, offset = 0x4, fixed_abs, tag = 'smem constant byte address 0x4 - core index']
  #allocation1 [shape = 'u32[144,128]{1,0:T(1,128)}', space=vmem, size = 0x12000, scoped, tag = 'internal scratch']
  %s0 = inlined_call_operand.vmem [shape: f32[2,4,16,16], index: 0, kind: input, shape index: {}]
  %s1 = inlined_call_operand.vmem [shape: f32[2,4,2,16], index: 1, kind: input, shape index: {}]
  %s2 = inlined_call_operand.vmem [shape: f32[1,16], index: 2, kind: input, shape index: {}]
  %s3 = inlined_call_operand.vmem [shape: f32[1,16], index: 3, kind: input, shape index: {}]
  %s4 = inlined_call_operand.vmem [shape: bf16[2,4,16,16], index: 4, kind: output, shape index: {}]
  %s5 = sld [smem:[#allocation0]]
  $region49: #{conv3d_encoder_forward.12} parent=0
    _
  %s7 = ssub.s32 1, %s5
  %s8 = scalar_select 0, %s7, %s5
  loop: start=0, step=1, limit=10
  $region2: #{conv3d_encoder_forward.12} parent=0 // loop_pre_header
    _
  $region3: #{conv3d_encoder_forward.12} parent=0 // loop_header
    %s10 = sphi 0, %s14
    %p11 = scmp.ge.s32.totalorder %s10, 10
    %s17 = sphi 0, %s29
    %s18 = sphi 0, %s25
    %s19 = sphi 0, %s17
    %s20 = sphi 0, %s18
    %s21 = sphi 0, %s19
    %s22 = sphi 0, %s20
    %s34 = sphi 0, %s36
    %s37 = sphi 0, %s34
    %s38 = sphi 0, %s37
    %s54 = sphi 0, %s38
    %s58 = sphi 0, %s58
    %s60 = sphi 0, %s58
    %s61 = sphi 0, %s60
    %s75 = sphi 0, %s61
    %s79 = sphi 0, %s79
    %s81 = sphi 0, %s79
    %s82 = sphi 0, %s81
    %s96 = sphi 0, %s82
    %s100 = sphi 0, %s100
    %s102 = sphi 0, %s100
    %s103 = sphi 0, %s102
    %s117 = sphi 0, %s103
    %s125 = sphi 0, %s127
    %s128 = sphi 0, %s125
    %s129 = sphi 0, %s128
    %s145 = sphi 0, %s129
  $region4: #{conv3d_encoder_forward.12} parent=0 // loop_header_branch
    %13 = sbr.rel (%p11) target = $region8
  $region5: #{conv3d_encoder_forward.12} parent=0 // loop_body
    %s15 = ssub.s32 %s10, 1
    %s16 = ssub.s32 %s10, 2
    %s23 = sadd.s32 1, %s18
    %p24 = scmp.ge.s32.totalorder %s23, 4
    %s25 = scalar_select %p24, 0, %s23
    %s26 = sadd.s32 1, %s17
    %s27 = scalar_select %p24, %s26, %s17
    %p28 = scmp.ge.s32.totalorder %s27, 2
    %s29 = scalar_select %p28, 0, %s27
    %s30 = ssub.s32 %s17, %s29
    %s31 = ssub.s32 %s18, %s25
    %s32 = sor.u32 %s30, %s31
    %p33 = scmp.eq.s32.totalorder %s32, 0
    %s35 = sadd.s32 %s34, 1
    %s36 = scalar_select %p33, %s34, %s35
    %p39 = pneg %p33
    %p40 = scmp.eq.s32.totalorder %s10, 7
    %p41 = por %p39, %p40
    %p42 = scmp.ne.s32.totalorder %s34, %s37
    %p43 = scmp.eq.s32.totalorder %s10, 0
    %p44 = por %p42, %p43
    %p45 = scmp.ne.s32.totalorder %s34, %s37
    %p46 = scmp.eq.s32.totalorder %s15, 7
    %p47 = por %p45, %p46
    %p48 = scmp.ne.s32.totalorder %s37, %s38
    %p49 = scmp.eq.s32.totalorder %s15, 0
    %p50 = por %p48, %p49
    %p51 = scmp.ne.s32.totalorder %s37, %s38
    %p52 = scmp.eq.s32.totalorder %s16, 7
    %p53 = por %p51, %p52
    %p55 = scmp.ne.s32.totalorder %s38, %s54
    %p56 = scmp.eq.s32.totalorder %s16, 0
    %p57 = por %p55, %p56
    %s59 = sadd.s32 %s58, 1
    %p62 = scmp.eq.s32.totalorder %s10, 7
    %p63 = scmp.ne.s32.totalorder %s58, %s60
    %p64 = scmp.eq.s32.totalorder %s10, 0
    %p65 = por %p63, %p64
    %p66 = scmp.ne.s32.totalorder %s58, %s60
    %p67 = scmp.eq.s32.totalorder %s15, 7
    %p68 = por %p66, %p67
    %p69 = scmp.ne.s32.totalorder %s60, %s61
    %p70 = scmp.eq.s32.totalorder %s15, 0
    %p71 = por %p69, %p70
    %p72 = scmp.ne.s32.totalorder %s60, %s61
    %p73 = scmp.eq.s32.totalorder %s16, 7
    %p74 = por %p72, %p73
    %p76 = scmp.ne.s32.totalorder %s61, %s75
    %p77 = scmp.eq.s32.totalorder %s16, 0
    %p78 = por %p76, %p77
    %s80 = sadd.s32 %s79, 1
    %p83 = scmp.eq.s32.totalorder %s10, 7
    %p84 = scmp.ne.s32.totalorder %s79, %s81
    %p85 = scmp.eq.s32.totalorder %s10, 0
    %p86 = por %p84, %p85
    %p87 = scmp.ne.s32.totalorder %s79, %s81
    %p88 = scmp.eq.s32.totalorder %s15, 7
    %p89 = por %p87, %p88
    %p90 = scmp.ne.s32.totalorder %s81, %s82
    %p91 = scmp.eq.s32.totalorder %s15, 0
    %p92 = por %p90, %p91
    %p93 = scmp.ne.s32.totalorder %s81, %s82
    %p94 = scmp.eq.s32.totalorder %s16, 7
    %p95 = por %p93, %p94
    %p97 = scmp.ne.s32.totalorder %s82, %s96
    %p98 = scmp.eq.s32.totalorder %s16, 0
    %p99 = por %p97, %p98
    %s101 = sadd.s32 %s100, 1
    %p104 = scmp.eq.s32.totalorder %s10, 7
    %p105 = scmp.ne.s32.totalorder %s100, %s102
    %p106 = scmp.eq.s32.totalorder %s10, 0
    %p107 = por %p105, %p106
    %p108 = scmp.ne.s32.totalorder %s100, %s102
    %p109 = scmp.eq.s32.totalorder %s15, 7
    %p110 = por %p108, %p109
    %p111 = scmp.ne.s32.totalorder %s102, %s103
    %p112 = scmp.eq.s32.totalorder %s15, 0
    %p113 = por %p111, %p112
    %p114 = scmp.ne.s32.totalorder %s102, %s103
    %p115 = scmp.eq.s32.totalorder %s16, 7
    %p116 = por %p114, %p115
    %p118 = scmp.ne.s32.totalorder %s103, %s117
    %p119 = scmp.eq.s32.totalorder %s16, 0
    %p120 = por %p118, %p119
    %s121 = ssub.s32 %s17, %s29
    %s122 = ssub.s32 %s18, %s25
    %s123 = sor.u32 %s121, %s122
    %p124 = scmp.eq.s32.totalorder %s123, 0
    %s126 = sadd.s32 %s125, 1
    %s127 = scalar_select %p124, %s125, %s126
    %p130 = pneg %p124
    %p131 = scmp.eq.s32.totalorder %s10, 7
    %p132 = por %p130, %p131
    %p133 = scmp.ne.s32.totalorder %s125, %s128
    %p134 = scmp.eq.s32.totalorder %s10, 0
    %p135 = por %p133, %p134
    %p136 = scmp.ne.s32.totalorder %s125, %s128
    %p137 = scmp.eq.s32.totalorder %s15, 7
    %p138 = por %p136, %p137
    %p139 = scmp.ne.s32.totalorder %s128, %s129
    %p140 = scmp.eq.s32.totalorder %s15, 0
    %p141 = por %p139, %p140
    %p142 = scmp.ne.s32.totalorder %s128, %s129
    %p143 = scmp.eq.s32.totalorder %s16, 7
    %p144 = por %p142, %p143
    %p146 = scmp.ne.s32.totalorder %s129, %s145
    %p147 = scmp.eq.s32.totalorder %s16, 0
    %p148 = por %p146, %p147
    %p149 = scmp.le.s32.totalorder 1, %s10
    %p150 = scmp.lt.s32.totalorder %s10, 9
    %p151 = pnand %p149, %p150
    %p152 = pneg %p151
    // Predicated region
    $region9: #{conv3d_encoder_forward.12} parent=5 // pred_check
      _
    $region10: #{conv3d_encoder_forward.12} parent=5 // pred_check_branch
      %154 = sbr.rel (%p151) target = $region12
    $region11: #{conv3d_encoder_forward.12} parent=5 // pred_region
      %s155 = ssub.s32 %s10, 1
      // Predicated region
      $region13: #{conv3d_encoder_forward.12} parent=11 // pred_check
        %p156 = pneg %p71
      $region14: #{conv3d_encoder_forward.12} parent=11 // pred_check_branch
        %158 = sbr.rel (%p156) target = $region16
      $region15: #{conv3d_encoder_forward.12} parent=11 // pred_region
        _
      $region16: #{conv3d_encoder_forward.12} parent=11 // pred_fallthru
        _
      // Predicated region
      $region17: #{conv3d_encoder_forward.12} parent=11 // pred_check
        %p159 = pneg %p92
      $region18: #{conv3d_encoder_forward.12} parent=11 // pred_check_branch
        %161 = sbr.rel (%p159) target = $region20
      $region19: #{conv3d_encoder_forward.12} parent=11 // pred_region
        _
      $region20: #{conv3d_encoder_forward.12} parent=11 // pred_fallthru
        _
      // Predicated region
      $region21: #{conv3d_encoder_forward.12} parent=11 // pred_check
        %p162 = pneg %p113
      $region22: #{conv3d_encoder_forward.12} parent=11 // pred_check_branch
        %164 = sbr.rel (%p162) target = $region24
      $region23: #{conv3d_encoder_forward.12} parent=11 // pred_region
        _
      $region24: #{conv3d_encoder_forward.12} parent=11 // pred_fallthru
        _
    $region12: #{conv3d_encoder_forward.12} parent=5 // pred_fallthru
      _
    %p165 = scmp.lt.s32.totalorder %s10, 8
    // Predicated region
    $region25: #{conv3d_encoder_forward.12} parent=5 // pred_check
      %p166 = pneg %p165
    $region26: #{conv3d_encoder_forward.12} parent=5 // pred_check_branch
      %168 = sbr.rel (%p166) target = $region28
    $region27: #{conv3d_encoder_forward.12} parent=5 // pred_region
      // Predicated region
      $region29: #{conv3d_encoder_forward.12} parent=27 // pred_check
        %p169 = pneg %p44
      $region30: #{conv3d_encoder_forward.12} parent=27 // pred_check_branch
        %171 = sbr.rel (%p169) target = $region32
      $region31: #{conv3d_encoder_forward.12} parent=27 // pred_region
        %p172 = scmp.lt.s32.totalorder %s17, 1
        %s173 = scalar_select %p172, %s17, 1
        %p174 = scmp.lt.s32.totalorder %s18, 3
        %s175 = scalar_select %p174, %s18, 3
        %s176 = smul.addr %s175, 2
        %s177 = smul.addr %s173, 8
        %s178 = sadd.s32 %s176, %s177
        %s179 = smul.addr %s178, 8
        %s180 = scalar_lea.vmem %s0, %s179
      $region32: #{conv3d_encoder_forward.12} parent=27 // pred_fallthru
        _
    $region28: #{conv3d_encoder_forward.12} parent=5 // pred_fallthru
      _
    %p181 = scmp.le.s32.totalorder 1, %s10
    %p182 = scmp.lt.s32.totalorder %s10, 9
    %p183 = pnand %p181, %p182
    %p184 = pneg %p183
    // Predicated region
    $region33: #{conv3d_encoder_forward.12} parent=5 // pred_check
      _
    $region34: #{conv3d_encoder_forward.12} parent=5 // pred_check_branch
      %186 = sbr.rel (%p183) target = $region36
    $region35: #{conv3d_encoder_forward.12} parent=5 // pred_region
      %s187 = ssub.s32 %s10, 1
      %p188 = scmp.lt.s32.totalorder %s19, 1
      %s189 = scalar_select %p188, %s19, 1
      %p190 = scmp.lt.s32.totalorder %s20, 3
      %s191 = scalar_select %p190, %s20, 3
      %s192 = smul.addr %s191, 2
      %s193 = smul.addr %s189, 8
      %s194 = sadd.s32 %s192, %s193
      %s195 = smul.addr %s194, 8
      %s196 = scalar_lea.vmem %s0, %s195
      %p197 = pneg %p50
      %p198 = pneg %p47
      %p199 = pneg %p71
      %p200 = pneg %p68
      %p201 = pneg %p92
      %p202 = pneg %p89
      %p203 = pneg %p113
      %p204 = pneg %p110
      %p205 = pneg %p141
      %p206 = pneg %p138
      %p207 = scmp.lt.s32.totalorder %s19, 1
      %s208 = scalar_select %p207, %s19, 1
      %p209 = scmp.lt.s32.totalorder %s20, 3
      %s210 = scalar_select %p209, %s20, 3
      %s211 = smul.addr %s210, 2
      %s212 = smul.addr %s208, 8
      %s213 = sadd.s32 %s211, %s212
      %s214 = smul.addr %s213, 4
      %s215 = scalar_lea.vmem %s4, %s214
      %p216 = scmp.lt.s32.totalorder %s19, 1
      %s217 = scalar_select %p216, %s19, 1
      %p218 = scmp.lt.s32.totalorder %s20, 3
      %s219 = scalar_select %p218, %s20, 3
      %s220 = smul.addr %s219, 2
      %s221 = smul.addr %s217, 8
      %s222 = sadd.s32 %s220, %s221
      %s223 = smul.addr %s222, 8
      %s224 = scalar_lea.vmem %s0, %s223
      %p225 = scmp.lt.s32.totalorder %s19, 1
      %s226 = scalar_select %p225, %s19, 1
      %p227 = scmp.lt.s32.totalorder %s20, 3
      %s228 = scalar_select %p227, %s20, 3
      %s229 = smul.addr %s228, 2
      %s230 = smul.addr %s226, 8
      %s231 = sadd.s32 %s229, %s230
      %s232 = smul.addr %s231, 4
      %s233 = scalar_lea.vmem %s4, %s232
      %v234 = vld [vmem:[%s1] sm:$0x3]
      %v235 = vld [vmem:[%s1 + $0x2] sm:$0x3]
      %v236 = vld [vmem:[%s1 + $0x4] sm:$0x3]
      %v237 = vld [vmem:[%s1 + $0x6] sm:$0x3]
      %v238 = vld [vmem:[%s1 + $0x8] sm:$0x3]
      %v239 = vld [vmem:[%s1 + $0xa] sm:$0x3]
      %v240 = vld [vmem:[%s1 + $0xc] sm:$0x3]
      %v241 = vld [vmem:[%s1 + $0xe] sm:$0x3]
      %vm242 = vcmask 123904
      %v243 = vsel %vm242, %v234, 0.0
      %v244 = vsel %vm242, %v238, 0.0
      %v245 = vadd.f32 %v243, %v244
      %v246 = vsel %vm242, %v235, 0.0
      %v247 = vsel %vm242, %v239, 0.0
      %v248 = vadd.f32 %v246, %v247
      %v249 = vsel %vm242, %v236, 0.0
      %v250 = vsel %vm242, %v240, 0.0
      %v251 = vadd.f32 %v249, %v250
      %v252 = vsel %vm242, %v237, 0.0
      %v253 = vsel %vm242, %v241, 0.0
      %v254 = vadd.f32 %v252, %v253
      %v255 = vsel %vm242, %v245, 0.0
      %v256 = vsel %vm242, %v248, 0.0
      %v257 = vadd.f32 %v255, %v256
      %v258 = vsel %vm242, %v251, 0.0
      %v259 = vadd.f32 %v257, %v258
      %v260 = vsel %vm242, %v254, 0.0
      %v261 = vadd.f32 %v259, %v260
      %v262 = vmul.f32 %v261, 0.0078125
      %v263 = vmul.f32 %v262, %v262
      %v265 = vrot.slane %v263, 7
      %v267 = vsub.f32 %v262, %v265
      %v268 = vadd.f32 %v267, 1e-05
      %v269 = vrsqrt.pop %v268
      %v270 = vld [vmem:[%s2] sm:$0x1]
      %v272 = vlaneseq
      %v273 = vshrl.u32 %v272, 7
      %v274 = vsub.s32 0, %v273
      %v275 = vrot.slane %v270, %v274
      %v277 = vmul.f32 %v269, %v275
      %v278 = vld [vmem:[%s224] sm:$0xff]
      %v279 = vld [vmem:[%s224 + $0x8] sm:$0xff]
      %v280 = vlaneseq
      %v281 = vshrl.u32 %v280, 7
      %v282 = vsub.s32 0, %v281
      %v283 = vrot.slane %v262, %v282
      %v284 = vsub.f32 %v278, %v283
      %v285 = vsub.f32 %v279, %v283
      %v286 = vlaneseq
      %v287 = vshrl.u32 %v286, 7
      %v288 = vsub.s32 1, %v287
      %v289 = vrot.slane %v277, %v288
      %v290 = vmul.f32 %v284, %v289
      %v291 = vmul.f32 %v285, %v289
      %v292 = vld [vmem:[%s3] sm:$0x1]
      %v294 = vlaneseq
      %v295 = vshrl.u32 %v294, 7
      %v296 = vsub.s32 0, %v295
      %v297 = vrot.slane %v292, %v296
      %v299 = vadd.f32 %v290, %v297
      %v300 = vadd.f32 %v291, %v297
      %vm301 = vcmp.ge.f32.partialorder %v299, 0.0
      %vm302 = vcmp.ge.f32.partialorder %v300, 0.0
      %v303 = vmul.f32 %v299, 0.2
      %v304 = vmul.f32 %v300, 0.2
      %v305 = vsel %vm301, %v299, %v303
      %v306 = vsel %vm302, %v300, %v304
      %v307 = vpack.c.bf16 %v306, %v305
      %v309 = vunpack.c.l.b16 %v307
      %v310 = vunpack.c.h.b16 %v307
      %v311 = vpack.c.b16 %v309, %v309
      %v312 = vpack.c.b16 %v310, %v310
      %vm315 = vcmask 125952
      %316 = vst.msk [vmem:[%s233] sm:$0xf] %vm315, %v311
      %317 = vst.msk [vmem:[%s233 + $0x4] sm:$0xf] %vm315, %v312
      %p318 = scmp.lt.s32.totalorder %s19, 1
      %s319 = scalar_select %p318, %s19, 1
      %p320 = scmp.lt.s32.totalorder %s20, 3
      %s321 = scalar_select %p320, %s20, 3
      %s322 = smul.addr %s321, 2
      %s323 = smul.addr %s319, 8
      %s324 = sadd.s32 %s322, %s323
      %s325 = smul.addr %s324, 4
      %s326 = scalar_lea.vmem %s4, %s325
      // Predicated region
      $region37: #{conv3d_encoder_forward.12} parent=35 // pred_check
        %p327 = pneg %p138
      $region38: #{conv3d_encoder_forward.12} parent=35 // pred_check_branch
        %329 = sbr.rel (%p327) target = $region40
      $region39: #{conv3d_encoder_forward.12} parent=35 // pred_region
        _
      $region40: #{conv3d_encoder_forward.12} parent=35 // pred_fallthru
        _
    $region36: #{conv3d_encoder_forward.12} parent=5 // pred_fallthru
      _
    %p330 = scmp.le.s32.totalorder 2, %s10
    // Predicated region
    $region41: #{conv3d_encoder_forward.12} parent=5 // pred_check
      %p331 = pneg %p330
    $region42: #{conv3d_encoder_forward.12} parent=5 // pred_check_branch
      %333 = sbr.rel (%p331) target = $region44
    $region43: #{conv3d_encoder_forward.12} parent=5 // pred_region
      %s334 = ssub.s32 %s10, 2
      // Predicated region
      $region45: #{conv3d_encoder_forward.12} parent=43 // pred_check
        %p335 = pneg %p144
      $region46: #{conv3d_encoder_forward.12} parent=43 // pred_check_branch
        %337 = sbr.rel (%p335) target = $region48
      $region47: #{conv3d_encoder_forward.12} parent=43 // pred_region
        %p338 = scmp.lt.s32.totalorder %s21, 1
        %s339 = scalar_select %p338, %s21, 1
        %p340 = scmp.lt.s32.totalorder %s22, 3
        %s341 = scalar_select %p340, %s22, 3
        %s342 = smul.addr %s341, 2
        %s343 = smul.addr %s339, 8
        %s344 = sadd.s32 %s342, %s343
        %s345 = smul.addr %s344, 4
        %s346 = scalar_lea.vmem %s4, %s345
      $region48: #{conv3d_encoder_forward.12} parent=43 // pred_fallthru
        _
    $region44: #{conv3d_encoder_forward.12} parent=5 // pred_fallthru
      _
  $region6: #{conv3d_encoder_forward.12} parent=0 // loop_footer
    %s14 = sadd.s32 1, %s10
  $region7: #{conv3d_encoder_forward.12} parent=0 // loop_footer_branch
    %9 = sbr.rel target = $region3
  $region8: #{conv3d_encoder_forward.12} parent=0 // loop_exit
    _

// kernel: conv3d_encoder_forward.14
$region0: #{conv3d_encoder_forward.14}
  #allocation0 [shape = 'u32[]', space=smem, size = 0x4, offset = 0x4, fixed_abs, tag = 'smem constant byte address 0x4 - core index']
  #allocation1 [shape = 'u32[144,128]{1,0:T(1,128)}', space=vmem, size = 0x12000, scoped, tag = 'internal scratch']
  %s0 = inlined_call_operand.vmem [shape: f32[2,2,4,32], index: 0, kind: input, shape index: {}]
  %s1 = inlined_call_operand.vmem [shape: f32[2,2,2,32], index: 1, kind: input, shape index: {}]
  %s2 = inlined_call_operand.vmem [shape: f32[1,32], index: 2, kind: input, shape index: {}]
  %s3 = inlined_call_operand.vmem [shape: f32[1,32], index: 3, kind: input, shape index: {}]
  %s4 = inlined_call_operand.vmem [shape: bf16[2,2,4,32], index: 4, kind: output, shape index: {}]
  %s5 = sld [smem:[#allocation0]]
  $region49: #{conv3d_encoder_forward.14} parent=0
    _
  %s7 = ssub.s32 1, %s5
  %s8 = scalar_select 0, %s7, %s5
  loop: start=0, step=1, limit=6
  $region2: #{conv3d_encoder_forward.14} parent=0 // loop_pre_header
    _
  $region3: #{conv3d_encoder_forward.14} parent=0 // loop_header
    %s10 = sphi 0, %s14
    %p11 = scmp.ge.s32.totalorder %s10, 6
    %s17 = sphi 0, %s29
    %s18 = sphi 0, %s25
    %s19 = sphi 0, %s17
    %s20 = sphi 0, %s18
    %s21 = sphi 0, %s19
    %s22 = sphi 0, %s20
    %s34 = sphi 0, %s36
    %s37 = sphi 0, %s34
    %s38 = sphi 0, %s37
    %s54 = sphi 0, %s38
    %s58 = sphi 0, %s58
    %s60 = sphi 0, %s58
    %s61 = sphi 0, %s60
    %s75 = sphi 0, %s61
    %s79 = sphi 0, %s79
    %s81 = sphi 0, %s79
    %s82 = sphi 0, %s81
    %s96 = sphi 0, %s82
    %s100 = sphi 0, %s100
    %s102 = sphi 0, %s100
    %s103 = sphi 0, %s102
    %s117 = sphi 0, %s103
    %s125 = sphi 0, %s127
    %s128 = sphi 0, %s125
    %s129 = sphi 0, %s128
    %s145 = sphi 0, %s129
  $region4: #{conv3d_encoder_forward.14} parent=0 // loop_header_branch
    %13 = sbr.rel (%p11) target = $region8
  $region5: #{conv3d_encoder_forward.14} parent=0 // loop_body
    %s15 = ssub.s32 %s10, 1
    %s16 = ssub.s32 %s10, 2
    %s23 = sadd.s32 1, %s18
    %p24 = scmp.ge.s32.totalorder %s23, 2
    %s25 = scalar_select %p24, 0, %s23
    %s26 = sadd.s32 1, %s17
    %s27 = scalar_select %p24, %s26, %s17
    %p28 = scmp.ge.s32.totalorder %s27, 2
    %s29 = scalar_select %p28, 0, %s27
    %s30 = ssub.s32 %s17, %s29
    %s31 = ssub.s32 %s18, %s25
    %s32 = sor.u32 %s30, %s31
    %p33 = scmp.eq.s32.totalorder %s32, 0
    %s35 = sadd.s32 %s34, 1
    %s36 = scalar_select %p33, %s34, %s35
    %p39 = pneg %p33
    %p40 = scmp.eq.s32.totalorder %s10, 3
    %p41 = por %p39, %p40
    %p42 = scmp.ne.s32.totalorder %s34, %s37
    %p43 = scmp.eq.s32.totalorder %s10, 0
    %p44 = por %p42, %p43
    %p45 = scmp.ne.s32.totalorder %s34, %s37
    %p46 = scmp.eq.s32.totalorder %s15, 3
    %p47 = por %p45, %p46
    %p48 = scmp.ne.s32.totalorder %s37, %s38
    %p49 = scmp.eq.s32.totalorder %s15, 0
    %p50 = por %p48, %p49
    %p51 = scmp.ne.s32.totalorder %s37, %s38
    %p52 = scmp.eq.s32.totalorder %s16, 3
    %p53 = por %p51, %p52
    %p55 = scmp.ne.s32.totalorder %s38, %s54
    %p56 = scmp.eq.s32.totalorder %s16, 0
    %p57 = por %p55, %p56
    %s59 = sadd.s32 %s58, 1
    %p62 = scmp.eq.s32.totalorder %s10, 3
    %p63 = scmp.ne.s32.totalorder %s58, %s60
    %p64 = scmp.eq.s32.totalorder %s10, 0
    %p65 = por %p63, %p64
    %p66 = scmp.ne.s32.totalorder %s58, %s60
    %p67 = scmp.eq.s32.totalorder %s15, 3
    %p68 = por %p66, %p67
    %p69 = scmp.ne.s32.totalorder %s60, %s61
    %p70 = scmp.eq.s32.totalorder %s15, 0
    %p71 = por %p69, %p70
    %p72 = scmp.ne.s32.totalorder %s60, %s61
    %p73 = scmp.eq.s32.totalorder %s16, 3
    %p74 = por %p72, %p73
    %p76 = scmp.ne.s32.totalorder %s61, %s75
    %p77 = scmp.eq.s32.totalorder %s16, 0
    %p78 = por %p76, %p77
    %s80 = sadd.s32 %s79, 1
    %p83 = scmp.eq.s32.totalorder %s10, 3
    %p84 = scmp.ne.s32.totalorder %s79, %s81
    %p85 = scmp.eq.s32.totalorder %s10, 0
    %p86 = por %p84, %p85
    %p87 = scmp.ne.s32.totalorder %s79, %s81
    %p88 = scmp.eq.s32.totalorder %s15, 3
    %p89 = por %p87, %p88
    %p90 = scmp.ne.s32.totalorder %s81, %s82
    %p91 = scmp.eq.s32.totalorder %s15, 0
    %p92 = por %p90, %p91
    %p93 = scmp.ne.s32.totalorder %s81, %s82
    %p94 = scmp.eq.s32.totalorder %s16, 3
    %p95 = por %p93, %p94
    %p97 = scmp.ne.s32.totalorder %s82, %s96
    %p98 = scmp.eq.s32.totalorder %s16, 0
    %p99 = por %p97, %p98
    %s101 = sadd.s32 %s100, 1
    %p104 = scmp.eq.s32.totalorder %s10, 3
    %p105 = scmp.ne.s32.totalorder %s100, %s102
    %p106 = scmp.eq.s32.totalorder %s10, 0
    %p107 = por %p105, %p106
    %p108 = scmp.ne.s32.totalorder %s100, %s102
    %p109 = scmp.eq.s32.totalorder %s15, 3
    %p110 = por %p108, %p109
    %p111 = scmp.ne.s32.totalorder %s102, %s103
    %p112 = scmp.eq.s32.totalorder %s15, 0
    %p113 = por %p111, %p112
    %p114 = scmp.ne.s32.totalorder %s102, %s103
    %p115 = scmp.eq.s32.totalorder %s16, 3
    %p116 = por %p114, %p115
    %p118 = scmp.ne.s32.totalorder %s103, %s117
    %p119 = scmp.eq.s32.totalorder %s16, 0
    %p120 = por %p118, %p119
    %s121 = ssub.s32 %s17, %s29
    %s122 = ssub.s32 %s18, %s25
    %s123 = sor.u32 %s121, %s122
    %p124 = scmp.eq.s32.totalorder %s123, 0
    %s126 = sadd.s32 %s125, 1
    %s127 = scalar_select %p124, %s125, %s126
    %p130 = pneg %p124
    %p131 = scmp.eq.s32.totalorder %s10, 3
    %p132 = por %p130, %p131
    %p133 = scmp.ne.s32.totalorder %s125, %s128
    %p134 = scmp.eq.s32.totalorder %s10, 0
    %p135 = por %p133, %p134
    %p136 = scmp.ne.s32.totalorder %s125, %s128
    %p137 = scmp.eq.s32.totalorder %s15, 3
    %p138 = por %p136, %p137
    %p139 = scmp.ne.s32.totalorder %s128, %s129
    %p140 = scmp.eq.s32.totalorder %s15, 0
    %p141 = por %p139, %p140
    %p142 = scmp.ne.s32.totalorder %s128, %s129
    %p143 = scmp.eq.s32.totalorder %s16, 3
    %p144 = por %p142, %p143
    %p146 = scmp.ne.s32.totalorder %s129, %s145
    %p147 = scmp.eq.s32.totalorder %s16, 0
    %p148 = por %p146, %p147
    %p149 = scmp.le.s32.totalorder 1, %s10
    %p150 = scmp.lt.s32.totalorder %s10, 5
    %p151 = pnand %p149, %p150
    %p152 = pneg %p151
    // Predicated region
    $region9: #{conv3d_encoder_forward.14} parent=5 // pred_check
      _
    $region10: #{conv3d_encoder_forward.14} parent=5 // pred_check_branch
      %154 = sbr.rel (%p151) target = $region12
    $region11: #{conv3d_encoder_forward.14} parent=5 // pred_region
      %s155 = ssub.s32 %s10, 1
      // Predicated region
      $region13: #{conv3d_encoder_forward.14} parent=11 // pred_check
        %p156 = pneg %p71
      $region14: #{conv3d_encoder_forward.14} parent=11 // pred_check_branch
        %158 = sbr.rel (%p156) target = $region16
      $region15: #{conv3d_encoder_forward.14} parent=11 // pred_region
        _
      $region16: #{conv3d_encoder_forward.14} parent=11 // pred_fallthru
        _
      // Predicated region
      $region17: #{conv3d_encoder_forward.14} parent=11 // pred_check
        %p159 = pneg %p92
      $region18: #{conv3d_encoder_forward.14} parent=11 // pred_check_branch
        %161 = sbr.rel (%p159) target = $region20
      $region19: #{conv3d_encoder_forward.14} parent=11 // pred_region
        _
      $region20: #{conv3d_encoder_forward.14} parent=11 // pred_fallthru
        _
      // Predicated region
      $region21: #{conv3d_encoder_forward.14} parent=11 // pred_check
        %p162 = pneg %p113
      $region22: #{conv3d_encoder_forward.14} parent=11 // pred_check_branch
        %164 = sbr.rel (%p162) target = $region24
      $region23: #{conv3d_encoder_forward.14} parent=11 // pred_region
        _
      $region24: #{conv3d_encoder_forward.14} parent=11 // pred_fallthru
        _
    $region12: #{conv3d_encoder_forward.14} parent=5 // pred_fallthru
      _
    %p165 = scmp.lt.s32.totalorder %s10, 4
    // Predicated region
    $region25: #{conv3d_encoder_forward.14} parent=5 // pred_check
      %p166 = pneg %p165
    $region26: #{conv3d_encoder_forward.14} parent=5 // pred_check_branch
      %168 = sbr.rel (%p166) target = $region28
    $region27: #{conv3d_encoder_forward.14} parent=5 // pred_region
      // Predicated region
      $region29: #{conv3d_encoder_forward.14} parent=27 // pred_check
        %p169 = pneg %p44
      $region30: #{conv3d_encoder_forward.14} parent=27 // pred_check_branch
        %171 = sbr.rel (%p169) target = $region32
      $region31: #{conv3d_encoder_forward.14} parent=27 // pred_region
        %p172 = scmp.lt.s32.totalorder %s17, 1
        %s173 = scalar_select %p172, %s17, 1
        %p174 = scmp.lt.s32.totalorder %s18, 1
        %s175 = scalar_select %p174, %s18, 1
        %s176 = smul.addr %s173, 2
        %s177 = sadd.s32 %s175, %s176
        %s178 = smul.addr %s177, 4
        %s179 = scalar_lea.vmem %s0, %s178
      $region32: #{conv3d_encoder_forward.14} parent=27 // pred_fallthru
        _
    $region28: #{conv3d_encoder_forward.14} parent=5 // pred_fallthru
      _
    %p180 = scmp.le.s32.totalorder 1, %s10
    %p181 = scmp.lt.s32.totalorder %s10, 5
    %p182 = pnand %p180, %p181
    %p183 = pneg %p182
    // Predicated region
    $region33: #{conv3d_encoder_forward.14} parent=5 // pred_check
      _
    $region34: #{conv3d_encoder_forward.14} parent=5 // pred_check_branch
      %185 = sbr.rel (%p182) target = $region36
    $region35: #{conv3d_encoder_forward.14} parent=5 // pred_region
      %s186 = ssub.s32 %s10, 1
      %p187 = scmp.lt.s32.totalorder %s19, 1
      %s188 = scalar_select %p187, %s19, 1
      %p189 = scmp.lt.s32.totalorder %s20, 1
      %s190 = scalar_select %p189, %s20, 1
      %s191 = smul.addr %s188, 2
      %s192 = sadd.s32 %s190, %s191
      %s193 = smul.addr %s192, 4
      %s194 = scalar_lea.vmem %s0, %s193
      %p195 = pneg %p50
      %p196 = pneg %p47
      %p197 = pneg %p71
      %p198 = pneg %p68
      %p199 = pneg %p92
      %p200 = pneg %p89
      %p201 = pneg %p113
      %p202 = pneg %p110
      %p203 = pneg %p141
      %p204 = pneg %p138
      %p205 = scmp.lt.s32.totalorder %s19, 1
      %s206 = scalar_select %p205, %s19, 1
      %p207 = scmp.lt.s32.totalorder %s20, 1
      %s208 = scalar_select %p207, %s20, 1
      %s209 = smul.addr %s206, 2
      %s210 = sadd.s32 %s208, %s209
      %s211 = smul.addr %s210, 2
      %s212 = scalar_lea.vmem %s4, %s211
      %p213 = scmp.lt.s32.totalorder %s19, 1
      %s214 = scalar_select %p213, %s19, 1
      %p215 = scmp.lt.s32.totalorder %s20, 1
      %s216 = scalar_select %p215, %s20, 1
      %s217 = smul.addr %s214, 2
      %s218 = sadd.s32 %s216, %s217
      %s219 = smul.addr %s218, 4
      %s220 = scalar_lea.vmem %s0, %s219
      %p221 = scmp.lt.s32.totalorder %s19, 1
      %s222 = scalar_select %p221, %s19, 1
      %p223 = scmp.lt.s32.totalorder %s20, 1
      %s224 = scalar_select %p223, %s20, 1
      %s225 = smul.addr %s222, 2
      %s226 = sadd.s32 %s224, %s225
      %s227 = smul.addr %s226, 2
      %s228 = scalar_lea.vmem %s4, %s227
      %v229 = vld [vmem:[%s1] sm:$0x3]
      %v230 = vld [vmem:[%s1 + $0x2] sm:$0x3]
      %v231 = vld [vmem:[%s1 + $0x4] sm:$0x3]
      %v232 = vld [vmem:[%s1 + $0x6] sm:$0x3]
      %vm233 = vcmask 254976
      %v234 = vsel %vm233, %v229, 0.0
      %v235 = vsel %vm233, %v231, 0.0
      %v236 = vadd.f32 %v234, %v235
      %v237 = vsel %vm233, %v230, 0.0
      %v238 = vsel %vm233, %v232, 0.0
      %v239 = vadd.f32 %v237, %v238
      %v240 = vsel %vm233, %v236, 0.0
      %v241 = vsel %vm233, %v239, 0.0
      %v242 = vadd.f32 %v240, %v241
      %v243 = vmul.f32 %v242, 0.0625
      %v244 = vmul.f32 %v243, %v243
      %v246 = vrot.slane %v244, 7
      %v248 = vsub.f32 %v243, %v246
      %v249 = vadd.f32 %v248, 1e-05
      %v250 = vrsqrt.pop %v249
      %v251 = vld [vmem:[%s2] sm:$0x1]
      %v253 = vlaneseq
      %v254 = vshrl.u32 %v253, 7
      %v255 = vsub.s32 0, %v254
      %v256 = vrot.slane %v251, %v255
      %v258 = vmul.f32 %v250, %v256
      %v259 = vld [vmem:[%s220] sm:$0xf]
      %v260 = vlaneseq
      %v261 = vshrl.u32 %v260, 7
      %v262 = vsub.s32 0, %v261
      %v263 = vrot.slane %v243, %v262
      %v264 = vsub.f32 %v259, %v263
      %v265 = vlaneseq
      %v266 = vshrl.u32 %v265, 7
      %v267 = vsub.s32 1, %v266
      %v268 = vrot.slane %v258, %v267
      %v269 = vmul.f32 %v264, %v268
      %v270 = vld [vmem:[%s3] sm:$0x1]
      %v272 = vlaneseq
      %v273 = vshrl.u32 %v272, 7
      %v274 = vsub.s32 0, %v273
      %v275 = vrot.slane %v270, %v274
      %v277 = vadd.f32 %v269, %v275
      %vm278 = vcmp.ge.f32.partialorder %v277, 0.0
      %v279 = vmul.f32 %v277, 0.2
      %v280 = vsel %vm278, %v277, %v279
      %v281 = vpack.c.bf16 %v280, %v280
      %282 = vst.msk [vmem:[%s228] sm:$0x3] %vm233, %v281
      %p283 = scmp.lt.s32.totalorder %s19, 1
      %s284 = scalar_select %p283, %s19, 1
      %p285 = scmp.lt.s32.totalorder %s20, 1
      %s286 = scalar_select %p285, %s20, 1
      %s287 = smul.addr %s284, 2
      %s288 = sadd.s32 %s286, %s287
      %s289 = smul.addr %s288, 2
      %s290 = scalar_lea.vmem %s4, %s289
      // Predicated region
      $region37: #{conv3d_encoder_forward.14} parent=35 // pred_check
        %p291 = pneg %p138
      $region38: #{conv3d_encoder_forward.14} parent=35 // pred_check_branch
        %293 = sbr.rel (%p291) target = $region40
      $region39: #{conv3d_encoder_forward.14} parent=35 // pred_region
        _
      $region40: #{conv3d_encoder_forward.14} parent=35 // pred_fallthru
        _
    $region36: #{conv3d_encoder_forward.14} parent=5 // pred_fallthru
      _
    %p294 = scmp.le.s32.totalorder 2, %s10
    // Predicated region
    $region41: #{conv3d_encoder_forward.14} parent=5 // pred_check
      %p295 = pneg %p294
    $region42: #{conv3d_encoder_forward.14} parent=5 // pred_check_branch
      %297 = sbr.rel (%p295) target = $region44
    $region43: #{conv3d_encoder_forward.14} parent=5 // pred_region
      %s298 = ssub.s32 %s10, 2
      // Predicated region
      $region45: #{conv3d_encoder_forward.14} parent=43 // pred_check
        %p299 = pneg %p144
      $region46: #{conv3d_encoder_forward.14} parent=43 // pred_check_branch
        %301 = sbr.rel (%p299) target = $region48
      $region47: #{conv3d_encoder_forward.14} parent=43 // pred_region
        %p302 = scmp.lt.s32.totalorder %s21, 1
        %s303 = scalar_select %p302, %s21, 1
        %p304 = scmp.lt.s32.totalorder %s22, 1
        %s305 = scalar_select %p304, %s22, 1
        %s306 = smul.addr %s303, 2
        %s307 = sadd.s32 %s305, %s306
        %s308 = smul.addr %s307, 2
        %s309 = scalar_lea.vmem %s4, %s308
      $region48: #{conv3d_encoder_forward.14} parent=43 // pred_fallthru
        _
    $region44: #{conv3d_encoder_forward.14} parent=5 // pred_fallthru
      _
  $region6: #{conv3d_encoder_forward.14} parent=0 // loop_footer
    %s14 = sadd.s32 1, %s10
  $region7: #{conv3d_encoder_forward.14} parent=0 // loop_footer_branch
    %9 = sbr.rel target = $region3
  $region8: #{conv3d_encoder_forward.14} parent=0 // loop_exit
    _

// kernel: conv3d_encoder_forward.13
$region0: #{conv3d_encoder_forward.13}
  #allocation0 [shape = 'u32[]', space=smem, size = 0x4, offset = 0x4, fixed_abs, tag = 'smem constant byte address 0x4 - core index']
  #allocation1 [shape = 'u32[144,128]{1,0:T(1,128)}', space=vmem, size = 0x12000, scoped, tag = 'internal scratch']
  %s0 = inlined_call_operand.vmem [shape: bf16[2,2,3,4,256], index: 0, kind: input, shape index: {}]
  %s1 = inlined_call_operand.vmem [shape: bf16[4,256,32], index: 1, kind: input, shape index: {}]
  %s2 = inlined_call_operand.vmem [shape: f32[2,2,4,32], index: 2, kind: output, shape index: {0}]
  %s3 = inlined_call_operand.vmem [shape: f32[2,2,2,32], index: 3, kind: output, shape index: {1}]
  %4 = xla_tuple %s2, %s3
  %s5 = sld [smem:[#allocation0]]
  $region49: #{conv3d_encoder_forward.13} parent=0
    _
  %s7 = ssub.s32 1, %s5
  %s8 = scalar_select 0, %s7, %s5
  loop: start=0, step=1, limit=6
  $region2: #{conv3d_encoder_forward.13} parent=0 // loop_pre_header
    _
  $region3: #{conv3d_encoder_forward.13} parent=0 // loop_header
    %s10 = sphi 0, %s14
    %p11 = scmp.ge.s32.totalorder %s10, 6
    %s17 = sphi 0, %s29
    %s18 = sphi 0, %s25
    %s19 = sphi 0, %s17
    %s20 = sphi 0, %s18
    %s21 = sphi 0, %s19
    %s22 = sphi 0, %s20
    %s32 = sphi 0, %s34
    %s35 = sphi 0, %s32
    %s36 = sphi 0, %s35
    %s52 = sphi 0, %s36
    %s56 = sphi 0, %s56
    %s58 = sphi 0, %s56
    %s59 = sphi 0, %s58
    %s73 = sphi 0, %s59
    %s81 = sphi 0, %s83
    %s84 = sphi 0, %s81
    %s85 = sphi 0, %s84
    %s101 = sphi 0, %s85
    %s109 = sphi 0, %s111
    %s112 = sphi 0, %s109
    %s113 = sphi 0, %s112
    %s129 = sphi 0, %s113
  $region4: #{conv3d_encoder_forward.13} parent=0 // loop_header_branch
    %13 = sbr.rel (%p11) target = $region8
  $region5: #{conv3d_encoder_forward.13} parent=0 // loop_body
    %s15 = ssub.s32 %s10, 1
    %s16 = ssub.s32 %s10, 2
    %s23 = sadd.s32 1, %s18
    %p24 = scmp.ge.s32.totalorder %s23, 2
    %s25 = scalar_select %p24, 0, %s23
    %s26 = sadd.s32 1, %s17
    %s27 = scalar_select %p24, %s26, %s17
    %p28 = scmp.ge.s32.totalorder %s27, 2
    %s29 = scalar_select %p28, 0, %s27
    %s30 = ssub.s32 %s17, %s29
    %p31 = scmp.eq.s32.totalorder %s30, 0
    %s33 = sadd.s32 %s32, 1
    %s34 = scalar_select %p31, %s32, %s33
    %p37 = pneg %p31
    %p38 = scmp.eq.s32.totalorder %s10, 3
    %p39 = por %p37, %p38
    %p40 = scmp.ne.s32.totalorder %s32, %s35
    %p41 = scmp.eq.s32.totalorder %s10, 0
    %p42 = por %p40, %p41
    %p43 = scmp.ne.s32.totalorder %s32, %s35
    %p44 = scmp.eq.s32.totalorder %s15, 3
    %p45 = por %p43, %p44
    %p46 = scmp.ne.s32.totalorder %s35, %s36
    %p47 = scmp.eq.s32.totalorder %s15, 0
    %p48 = por %p46, %p47
    %p49 = scmp.ne.s32.totalorder %s35, %s36
    %p50 = scmp.eq.s32.totalorder %s16, 3
    %p51 = por %p49, %p50
    %p53 = scmp.ne.s32.totalorder %s36, %s52
    %p54 = scmp.eq.s32.totalorder %s16, 0
    %p55 = por %p53, %p54
    %s57 = sadd.s32 %s56, 1
    %p60 = scmp.eq.s32.totalorder %s10, 3
    %p61 = scmp.ne.s32.totalorder %s56, %s58
    %p62 = scmp.eq.s32.totalorder %s10, 0
    %p63 = por %p61, %p62
    %p64 = scmp.ne.s32.totalorder %s56, %s58
    %p65 = scmp.eq.s32.totalorder %s15, 3
    %p66 = por %p64, %p65
    %p67 = scmp.ne.s32.totalorder %s58, %s59
    %p68 = scmp.eq.s32.totalorder %s15, 0
    %p69 = por %p67, %p68
    %p70 = scmp.ne.s32.totalorder %s58, %s59
    %p71 = scmp.eq.s32.totalorder %s16, 3
    %p72 = por %p70, %p71
    %p74 = scmp.ne.s32.totalorder %s59, %s73
    %p75 = scmp.eq.s32.totalorder %s16, 0
    %p76 = por %p74, %p75
    %s77 = ssub.s32 %s17, %s29
    %s78 = ssub.s32 %s18, %s25
    %s79 = sor.u32 %s77, %s78
    %p80 = scmp.eq.s32.totalorder %s79, 0
    %s82 = sadd.s32 %s81, 1
    %s83 = scalar_select %p80, %s81, %s82
    %p86 = pneg %p80
    %p87 = scmp.eq.s32.totalorder %s10, 3
    %p88 = por %p86, %p87
    %p89 = scmp.ne.s32.totalorder %s81, %s84
    %p90 = scmp.eq.s32.totalorder %s10, 0
    %p91 = por %p89, %p90
    %p92 = scmp.ne.s32.totalorder %s81, %s84
    %p93 = scmp.eq.s32.totalorder %s15, 3
    %p94 = por %p92, %p93
    %p95 = scmp.ne.s32.totalorder %s84, %s85
    %p96 = scmp.eq.s32.totalorder %s15, 0
    %p97 = por %p95, %p96
    %p98 = scmp.ne.s32.totalorder %s84, %s85
    %p99 = scmp.eq.s32.totalorder %s16, 3
    %p100 = por %p98, %p99
    %p102 = scmp.ne.s32.totalorder %s85, %s101
    %p103 = scmp.eq.s32.totalorder %s16, 0
    %p104 = por %p102, %p103
    %s105 = ssub.s32 %s17, %s29
    %s106 = ssub.s32 %s18, %s25
    %s107 = sor.u32 %s105, %s106
    %p108 = scmp.eq.s32.totalorder %s107, 0
    %s110 = sadd.s32 %s109, 1
    %s111 = scalar_select %p108, %s109, %s110
    %p114 = pneg %p108
    %p115 = scmp.eq.s32.totalorder %s10, 3
    %p116 = por %p114, %p115
    %p117 = scmp.ne.s32.totalorder %s109, %s112
    %p118 = scmp.eq.s32.totalorder %s10, 0
    %p119 = por %p117, %p118
    %p120 = scmp.ne.s32.totalorder %s109, %s112
    %p121 = scmp.eq.s32.totalorder %s15, 3
    %p122 = por %p120, %p121
    %p123 = scmp.ne.s32.totalorder %s112, %s113
    %p124 = scmp.eq.s32.totalorder %s15, 0
    %p125 = por %p123, %p124
    %p126 = scmp.ne.s32.totalorder %s112, %s113
    %p127 = scmp.eq.s32.totalorder %s16, 3
    %p128 = por %p126, %p127
    %p130 = scmp.ne.s32.totalorder %s113, %s129
    %p131 = scmp.eq.s32.totalorder %s16, 0
    %p132 = por %p130, %p131
    %p133 = scmp.le.s32.totalorder 1, %s10
    %p134 = scmp.lt.s32.totalorder %s10, 5
    %p135 = pnand %p133, %p134
    %p136 = pneg %p135
    // Predicated region
    $region9: #{conv3d_encoder_forward.13} parent=5 // pred_check
      _
    $region10: #{conv3d_encoder_forward.13} parent=5 // pred_check_branch
      %138 = sbr.rel (%p135) target = $region12
    $region11: #{conv3d_encoder_forward.13} parent=5 // pred_region
      %s139 = ssub.s32 %s10, 1
      // Predicated region
      $region13: #{conv3d_encoder_forward.13} parent=11 // pred_check
        %p140 = pneg %p69
      $region14: #{conv3d_encoder_forward.13} parent=11 // pred_check_branch
        %142 = sbr.rel (%p140) target = $region16
      $region15: #{conv3d_encoder_forward.13} parent=11 // pred_region
        _
      $region16: #{conv3d_encoder_forward.13} parent=11 // pred_fallthru
        _
    $region12: #{conv3d_encoder_forward.13} parent=5 // pred_fallthru
      _
    %p143 = scmp.lt.s32.totalorder %s10, 4
    // Predicated region
    $region17: #{conv3d_encoder_forward.13} parent=5 // pred_check
      %p144 = pneg %p143
    $region18: #{conv3d_encoder_forward.13} parent=5 // pred_check_branch
      %146 = sbr.rel (%p144) target = $region20
    $region19: #{conv3d_encoder_forward.13} parent=5 // pred_region
      // Predicated region
      $region21: #{conv3d_encoder_forward.13} parent=19 // pred_check
        %p147 = pneg %p42
      $region22: #{conv3d_encoder_forward.13} parent=19 // pred_check_branch
        %149 = sbr.rel (%p147) target = $region24
      $region23: #{conv3d_encoder_forward.13} parent=19 // pred_region
        %p150 = scmp.lt.s32.totalorder %s17, 1
        %s151 = scalar_select %p150, %s17, 1
        %s152 = smul.addr %s151, 12
        %s153 = smul.addr %s152, 2
        %s154 = scalar_lea.vmem %s0, %s153
      $region24: #{conv3d_encoder_forward.13} parent=19 // pred_fallthru
        _
    $region20: #{conv3d_encoder_forward.13} parent=5 // pred_fallthru
      _
    %p155 = scmp.le.s32.totalorder 1, %s10
    %p156 = scmp.lt.s32.totalorder %s10, 5
    %p157 = pnand %p155, %p156
    %p158 = pneg %p157
    // Predicated region
    $region25: #{conv3d_encoder_forward.13} parent=5 // pred_check
      _
    $region26: #{conv3d_encoder_forward.13} parent=5 // pred_check_branch
      %160 = sbr.rel (%p157) target = $region28
    $region27: #{conv3d_encoder_forward.13} parent=5 // pred_region
      %s161 = ssub.s32 %s10, 1
      %p162 = scmp.lt.s32.totalorder %s19, 1
      %s163 = scalar_select %p162, %s19, 1
      %s164 = smul.addr %s163, 12
      %s165 = smul.addr %s164, 2
      %s166 = scalar_lea.vmem %s0, %s165
      %p167 = pneg %p48
      %p168 = pneg %p45
      %p169 = pneg %p69
      %p170 = pneg %p66
      %p171 = pneg %p97
      %p172 = pneg %p94
      %p173 = scmp.lt.s32.totalorder %s19, 1
      %s174 = scalar_select %p173, %s19, 1
      %p175 = scmp.lt.s32.totalorder %s20, 1
      %s176 = scalar_select %p175, %s20, 1
      %s177 = smul.addr %s174, 2
      %s178 = sadd.s32 %s176, %s177
      %s179 = smul.addr %s178, 4
      %s180 = scalar_lea.vmem %s2, %s179
      %p181 = pneg %p125
      %p182 = pneg %p122
      %p183 = scmp.lt.s32.totalorder %s19, 1
      %s184 = scalar_select %p183, %s19, 1
      %p185 = scmp.lt.s32.totalorder %s20, 1
      %s186 = scalar_select %p185, %s20, 1
      %s187 = smul.addr %s184, 2
      %s188 = sadd.s32 %s186, %s187
      %s189 = smul.addr %s188, 2
      %s190 = scalar_lea.vmem %s3, %s189
      %p191 = scmp.lt.s32.totalorder %s19, 1
      %s192 = scalar_select %p191, %s19, 1
      %s193 = smul.addr %s192, 12
      %s194 = smul.addr %s193, 2
      %s195 = scalar_lea.vmem %s0, %s194
      %p196 = scmp.lt.s32.totalorder %s19, 1
      %s197 = scalar_select %p196, %s19, 1
      %p198 = scmp.lt.s32.totalorder %s20, 1
      %s199 = scalar_select %p198, %s20, 1
      %s200 = smul.addr %s197, 2
      %s201 = sadd.s32 %s199, %s200
      %s202 = smul.addr %s201, 4
      %s203 = scalar_lea.vmem %s2, %s202
      %p204 = scmp.lt.s32.totalorder %s19, 1
      %s205 = scalar_select %p204, %s19, 1
      %p206 = scmp.lt.s32.totalorder %s20, 1
      %s207 = scalar_select %p206, %s20, 1
      %s208 = smul.addr %s205, 2
      %s209 = sadd.s32 %s207, %s208
      %s210 = smul.addr %s209, 2
      %s211 = scalar_lea.vmem %s3, %s210
      %s213 = smul.u32 %s20, 2
      %s214 = smul.addr %s213, 2
      %s215 = scalar_lea.vmem %s195, %s214
      %v216 = vld [vmem:[%s215] sm:$0xf]
      %v217 = vld [vmem:[%s1] sm:$0xf]
      %v218 = vld [vmem:[%s1 + $0x4] sm:$0xf]
      %v219 = vld [vmem:[%s1 + $0x8] sm:$0xf]
      %v220 = vld [vmem:[%s1 + $0xc] sm:$0xf]
      %v221 = vld [vmem:[%s1 + $0x10] sm:$0xf]
      %v222 = vld [vmem:[%s1 + $0x14] sm:$0xf]
      %v223 = vld [vmem:[%s1 + $0x18] sm:$0xf]
      %v224 = vld [vmem:[%s1 + $0x1c] sm:$0xf]
      %v225 = vld [vmem:[%s1 + $0x20] sm:$0xf]
      %v226 = vld [vmem:[%s1 + $0x24] sm:$0xf]
      %v227 = vld [vmem:[%s1 + $0x28] sm:$0xf]
      %v228 = vld [vmem:[%s1 + $0x2c] sm:$0xf]
      %v229 = vld [vmem:[%s1 + $0x30] sm:$0xf]
      %v230 = vld [vmem:[%s1 + $0x34] sm:$0xf]
      %v231 = vld [vmem:[%s1 + $0x38] sm:$0xf]
      %v232 = vld [vmem:[%s1 + $0x3c] sm:$0xf]
      %v233 = vld [vmem:[%s1 + $0x40] sm:$0xf]
      %v234 = vld [vmem:[%s1 + $0x44] sm:$0xf]
      %v235 = vld [vmem:[%s1 + $0x48] sm:$0xf]
      %v236 = vld [vmem:[%s1 + $0x4c] sm:$0xf]
      %v237 = vld [vmem:[%s1 + $0x50] sm:$0xf]
      %v238 = vld [vmem:[%s1 + $0x54] sm:$0xf]
      %v239 = vld [vmem:[%s1 + $0x58] sm:$0xf]
      %v240 = vld [vmem:[%s1 + $0x5c] sm:$0xf]
      %v241 = vld [vmem:[%s1 + $0x60] sm:$0xf]
      %v242 = vld [vmem:[%s1 + $0x64] sm:$0xf]
      %v243 = vld [vmem:[%s1 + $0x68] sm:$0xf]
      %v244 = vld [vmem:[%s1 + $0x6c] sm:$0xf]
      %v245 = vld [vmem:[%s1 + $0x70] sm:$0xf]
      %v246 = vld [vmem:[%s1 + $0x74] sm:$0xf]
      %v247 = vld [vmem:[%s1 + $0x78] sm:$0xf]
      %v248 = vld [vmem:[%s1 + $0x7c] sm:$0xf]
      %s249 = sadd.s32 %s213, 6
      %s250 = smul.addr %s249, 2
      %s251 = scalar_lea.vmem %s195, %s250
      %v252 = vld [vmem:[%s251] sm:$0xf]
      %s253 = scalar_lea.vmem %s1, 128
      %v254 = vld [vmem:[%s253] sm:$0xf]
      %v255 = vld [vmem:[%s253 + $0x4] sm:$0xf]
      %v256 = vld [vmem:[%s253 + $0x8] sm:$0xf]
      %v257 = vld [vmem:[%s253 + $0xc] sm:$0xf]
      %v258 = vld [vmem:[%s253 + $0x10] sm:$0xf]
      %v259 = vld [vmem:[%s253 + $0x14] sm:$0xf]
      %v260 = vld [vmem:[%s253 + $0x18] sm:$0xf]
      %v261 = vld [vmem:[%s253 + $0x1c] sm:$0xf]
      %v262 = vld [vmem:[%s253 + $0x20] sm:$0xf]
      %v263 = vld [vmem:[%s253 + $0x24] sm:$0xf]
      %v264 = vld [vmem:[%s253 + $0x28] sm:$0xf]
      %v265 = vld [vmem:[%s253 + $0x2c] sm:$0xf]
      %v266 = vld [vmem:[%s253 + $0x30] sm:$0xf]
      %v267 = vld [vmem:[%s253 + $0x34] sm:$0xf]
      %v268 = vld [vmem:[%s253 + $0x38] sm:$0xf]
      %v269 = vld [vmem:[%s253 + $0x3c] sm:$0xf]
      %v270 = vld [vmem:[%s253 + $0x40] sm:$0xf]
      %v271 = vld [vmem:[%s253 + $0x44] sm:$0xf]
      %v272 = vld [vmem:[%s253 + $0x48] sm:$0xf]
      %v273 = vld [vmem:[%s253 + $0x4c] sm:$0xf]
      %v274 = vld [vmem:[%s253 + $0x50] sm:$0xf]
      %v275 = vld [vmem:[%s253 + $0x54] sm:$0xf]
      %v276 = vld [vmem:[%s253 + $0x58] sm:$0xf]
      %v277 = vld [vmem:[%s253 + $0x5c] sm:$0xf]
      %v278 = vld [vmem:[%s253 + $0x60] sm:$0xf]
      %v279 = vld [vmem:[%s253 + $0x64] sm:$0xf]
      %v280 = vld [vmem:[%s253 + $0x68] sm:$0xf]
      %v281 = vld [vmem:[%s253 + $0x6c] sm:$0xf]
      %v282 = vld [vmem:[%s253 + $0x70] sm:$0xf]
      %v283 = vld [vmem:[%s253 + $0x74] sm:$0xf]
      %v284 = vld [vmem:[%s253 + $0x78] sm:$0xf]
      %v285 = vld [vmem:[%s253 + $0x7c] sm:$0xf]
      %v288 = vunpack.c.l.s4 1983009808
      %v289 = vunpack.c.0.s8 %v288
      %v290 = vlaneseq
      %v291 = vshrl.u32 %v290, 7
      %v292 = vsub.s32 %v289, %v291
      %v293 = vrot.slane %v252, %v292
      %v294 = vcombine.high %v293, %v293
      %v329 = vunpack.c.l.b16 %v254
      %v330 = vunpack.c.l.b16 %v255
      %v331 = vunpack.c.l.b16 %v256
      %v332 = vunpack.c.l.b16 %v257
      %v333 = vunpack.c.l.b16 %v258
      %v334 = vunpack.c.l.b16 %v259
      %v335 = vunpack.c.l.b16 %v260
      %v336 = vunpack.c.l.b16 %v261
      %v337 = vunpack.c.l.b16 %v262
      %v338 = vunpack.c.l.b16 %v263
      %v339 = vunpack.c.l.b16 %v264
      %v340 = vunpack.c.l.b16 %v265
      %v341 = vunpack.c.l.b16 %v266
      %v342 = vunpack.c.l.b16 %v267
      %v343 = vunpack.c.l.b16 %v268
      %v344 = vunpack.c.l.b16 %v269
      %v345 = vunpack.c.l.b16 %v270
      %v346 = vunpack.c.l.b16 %v271
      %v347 = vunpack.c.l.b16 %v272
      %v348 = vunpack.c.l.b16 %v273
      %v349 = vunpack.c.l.b16 %v274
      %v350 = vunpack.c.l.b16 %v275
      %v351 = vunpack.c.l.b16 %v276
      %v352 = vunpack.c.l.b16 %v277
      %v353 = vunpack.c.l.b16 %v278
      %v354 = vunpack.c.l.b16 %v279
      %v355 = vunpack.c.l.b16 %v280
      %v356 = vunpack.c.l.b16 %v281
      %v357 = vunpack.c.l.b16 %v282
      %v358 = vunpack.c.l.b16 %v283
      %v359 = vunpack.c.l.b16 %v284
      %v360 = vunpack.c.l.b16 %v285
      %v361 = vpack.c.b16 %v330, %v329
      %v362 = vpack.c.b16 %v332, %v331
      %v363 = vpack.c.b16 %v334, %v333
      %v364 = vpack.c.b16 %v336, %v335
      %v365 = vpack.c.b16 %v338, %v337
      %v366 = vpack.c.b16 %v340, %v339
      %v367 = vpack.c.b16 %v342, %v341
      %v368 = vpack.c.b16 %v344, %v343
      %v369 = vpack.c.b16 %v346, %v345
      %v370 = vpack.c.b16 %v348, %v347
      %v371 = vpack.c.b16 %v350, %v349
      %v372 = vpack.c.b16 %v352, %v351
      %v373 = vpack.c.b16 %v354, %v353
      %v374 = vpack.c.b16 %v356, %v355
      %v375 = vpack.c.b16 %v358, %v357
      %v376 = vpack.c.b16 %v360, %v359
      %393 = vmatprep.subr.bf16.mxu0 0
      %394 = vmatpush1.bf16.msra.mxu0 %v361
      %395 = vmatprep.subr.bf16.mxu0 0
      %396 = vmatpush1.bf16.msra.mxu0 %v362
      %397 = vmatprep.subr.bf16.mxu0 0
      %398 = vmatpush1.bf16.msra.mxu0 %v363
      %399 = vmatprep.subr.bf16.mxu0 0
      %400 = vmatpush1.bf16.msra.mxu0 %v364
      %401 = vmatprep.subr.bf16.mxu0 0
      %402 = vmatpush1.bf16.msra.mxu0 %v365
      %403 = vmatprep.subr.bf16.mxu0 0
      %404 = vmatpush1.bf16.msra.mxu0 %v366
      %405 = vmatprep.subr.bf16.mxu0 0
      %406 = vmatpush1.bf16.msra.mxu0 %v367
      %407 = vmatprep.subr.bf16.mxu0 0
      %408 = vmatpush1.bf16.msra.mxu0 %v368
      %409 = vmatprep.subr.bf16.mxu0 0
      %410 = vmatpush1.bf16.msra.mxu0 %v369
      %411 = vmatprep.subr.bf16.mxu0 0
      %412 = vmatpush1.bf16.msra.mxu0 %v370
      %413 = vmatprep.subr.bf16.mxu0 0
      %414 = vmatpush1.bf16.msra.mxu0 %v371
      %415 = vmatprep.subr.bf16.mxu0 0
      %416 = vmatpush1.bf16.msra.mxu0 %v372
      %417 = vmatprep.subr.bf16.mxu0 0
      %418 = vmatpush1.bf16.msra.mxu0 %v373
      %419 = vmatprep.subr.bf16.mxu0 0
      %420 = vmatpush1.bf16.msra.mxu0 %v374
      %421 = vmatprep.subr.bf16.mxu0 0
      %422 = vmatpush1.bf16.msra.mxu0 %v375
      %423 = vmatprep.subr.bf16.mxu0 0
      %424 = vmatpush1.bf16.msra.mxu0 %v376
      %425 = vmatprep.mubr.bf16.mxu0 %v294
      %426 = vmatmul.mubr.bf16.gmra.mrb[0].mxu0 %v293
      %v427 = vpop.f32.mrb[0].mxu0
      %v428 = vadd.f32 0.0, %v427
      %v429 = vpop.f32.mrb[0].mxu0
      %v430 = vpop.f32.mrb[0].mxu0
      %v431 = vpop.f32.mrb[0].mxu0
      %432 = vdwg.mxu0
      %v435 = vunpack.c.l.s4 1983009808
      %v436 = vunpack.c.0.s8 %v435
      %v437 = vlaneseq
      %v438 = vshrl.u32 %v437, 7
      %v439 = vsub.s32 %v436, %v438
      %v440 = vrot.slane %v216, %v439
      %v441 = vcombine.high %v440, %v440
      %v476 = vunpack.c.l.b16 %v217
      %v477 = vunpack.c.l.b16 %v218
      %v478 = vunpack.c.l.b16 %v219
      %v479 = vunpack.c.l.b16 %v220
      %v480 = vunpack.c.l.b16 %v221
      %v481 = vunpack.c.l.b16 %v222
      %v482 = vunpack.c.l.b16 %v223
      %v483 = vunpack.c.l.b16 %v224
      %v484 = vunpack.c.l.b16 %v225
      %v485 = vunpack.c.l.b16 %v226
      %v486 = vunpack.c.l.b16 %v227
      %v487 = vunpack.c.l.b16 %v228
      %v488 = vunpack.c.l.b16 %v229
      %v489 = vunpack.c.l.b16 %v230
      %v490 = vunpack.c.l.b16 %v231
      %v491 = vunpack.c.l.b16 %v232
      %v492 = vunpack.c.l.b16 %v233
      %v493 = vunpack.c.l.b16 %v234
      %v494 = vunpack.c.l.b16 %v235
      %v495 = vunpack.c.l.b16 %v236
      %v496 = vunpack.c.l.b16 %v237
      %v497 = vunpack.c.l.b16 %v238
      %v498 = vunpack.c.l.b16 %v239
      %v499 = vunpack.c.l.b16 %v240
      %v500 = vunpack.c.l.b16 %v241
      %v501 = vunpack.c.l.b16 %v242
      %v502 = vunpack.c.l.b16 %v243
      %v503 = vunpack.c.l.b16 %v244
      %v504 = vunpack.c.l.b16 %v245
      %v505 = vunpack.c.l.b16 %v246
      %v506 = vunpack.c.l.b16 %v247
      %v507 = vunpack.c.l.b16 %v248
      %v508 = vpack.c.b16 %v477, %v476
      %v509 = vpack.c.b16 %v479, %v478
      %v510 = vpack.c.b16 %v481, %v480
      %v511 = vpack.c.b16 %v483, %v482
      %v512 = vpack.c.b16 %v485, %v484
      %v513 = vpack.c.b16 %v487, %v486
      %v514 = vpack.c.b16 %v489, %v488
      %v515 = vpack.c.b16 %v491, %v490
      %v516 = vpack.c.b16 %v493, %v492
      %v517 = vpack.c.b16 %v495, %v494
      %v518 = vpack.c.b16 %v497, %v496
      %v519 = vpack.c.b16 %v499, %v498
      %v520 = vpack.c.b16 %v501, %v500
      %v521 = vpack.c.b16 %v503, %v502
      %v522 = vpack.c.b16 %v505, %v504
      %v523 = vpack.c.b16 %v507, %v506
      %540 = vmatprep.subr.bf16.mxu0 0
      %541 = vmatpush1.bf16.msra.mxu0 %v508
      %542 = vmatprep.subr.bf16.mxu0 0
      %543 = vmatpush1.bf16.msra.mxu0 %v509
      %544 = vmatprep.subr.bf16.mxu0 0
      %545 = vmatpush1.bf16.msra.mxu0 %v510
      %546 = vmatprep.subr.bf16.mxu0 0
      %547 = vmatpush1.bf16.msra.mxu0 %v511
      %548 = vmatprep.subr.bf16.mxu0 0
      %549 = vmatpush1.bf16.msra.mxu0 %v512
      %550 = vmatprep.subr.bf16.mxu0 0
      %551 = vmatpush1.bf16.msra.mxu0 %v513
      %552 = vmatprep.subr.bf16.mxu0 0
      %553 = vmatpush1.bf16.msra.mxu0 %v514
      %554 = vmatprep.subr.bf16.mxu0 0
      %555 = vmatpush1.bf16.msra.mxu0 %v515
      %556 = vmatprep.subr.bf16.mxu0 0
      %557 = vmatpush1.bf16.msra.mxu0 %v516
      %558 = vmatprep.subr.bf16.mxu0 0
      %559 = vmatpush1.bf16.msra.mxu0 %v517
      %560 = vmatprep.subr.bf16.mxu0 0
      %561 = vmatpush1.bf16.msra.mxu0 %v518
      %562 = vmatprep.subr.bf16.mxu0 0
      %563 = vmatpush1.bf16.msra.mxu0 %v519
      %564 = vmatprep.subr.bf16.mxu0 0
      %565 = vmatpush1.bf16.msra.mxu0 %v520
      %566 = vmatprep.subr.bf16.mxu0 0
      %567 = vmatpush1.bf16.msra.mxu0 %v521
      %568 = vmatprep.subr.bf16.mxu0 0
      %569 = vmatpush1.bf16.msra.mxu0 %v522
      %570 = vmatprep.subr.bf16.mxu0 0
      %571 = vmatpush1.bf16.msra.mxu0 %v523
      %572 = vmatprep.mubr.bf16.mxu0 %v441
      %573 = vmatmul.mubr.bf16.gmra.mrb[0].mxu0 %v440
      %v574 = vpop.f32.mrb[0].mxu0
      %v575 = vadd.f32 %v428, %v574
      %v576 = vpop.f32.mrb[0].mxu0
      %v577 = vpop.f32.mrb[0].mxu0
      %v578 = vpop.f32.mrb[0].mxu0
      %579 = vdwg.mxu0
      %s580 = sadd.s32 %s20, 1
      %s581 = smul.u32 %s580, 2
      %s582 = smul.addr %s581, 2
      %s583 = scalar_lea.vmem %s195, %s582
      %v584 = vld [vmem:[%s583] sm:$0xf]
      %s585 = scalar_lea.vmem %s1, 256
      %v586 = vld [vmem:[%s585] sm:$0xf]
      %v587 = vld [vmem:[%s585 + $0x4] sm:$0xf]
      %v588 = vld [vmem:[%s585 + $0x8] sm:$0xf]
      %v589 = vld [vmem:[%s585 + $0xc] sm:$0xf]
      %v590 = vld [vmem:[%s585 + $0x10] sm:$0xf]
      %v591 = vld [vmem:[%s585 + $0x14] sm:$0xf]
      %v592 = vld [vmem:[%s585 + $0x18] sm:$0xf]
      %v593 = vld [vmem:[%s585 + $0x1c] sm:$0xf]
      %v594 = vld [vmem:[%s585 + $0x20] sm:$0xf]
      %v595 = vld [vmem:[%s585 + $0x24] sm:$0xf]
      %v596 = vld [vmem:[%s585 + $0x28] sm:$0xf]
      %v597 = vld [vmem:[%s585 + $0x2c] sm:$0xf]
      %v598 = vld [vmem:[%s585 + $0x30] sm:$0xf]
      %v599 = vld [vmem:[%s585 + $0x34] sm:$0xf]
      %v600 = vld [vmem:[%s585 + $0x38] sm:$0xf]
      %v601 = vld [vmem:[%s585 + $0x3c] sm:$0xf]
      %v602 = vld [vmem:[%s585 + $0x40] sm:$0xf]
      %v603 = vld [vmem:[%s585 + $0x44] sm:$0xf]
      %v604 = vld [vmem:[%s585 + $0x48] sm:$0xf]
      %v605 = vld [vmem:[%s585 + $0x4c] sm:$0xf]
      %v606 = vld [vmem:[%s585 + $0x50] sm:$0xf]
      %v607 = vld [vmem:[%s585 + $0x54] sm:$0xf]
      %v608 = vld [vmem:[%s585 + $0x58] sm:$0xf]
      %v609 = vld [vmem:[%s585 + $0x5c] sm:$0xf]
      %v610 = vld [vmem:[%s585 + $0x60] sm:$0xf]
      %v611 = vld [vmem:[%s585 + $0x64] sm:$0xf]
      %v612 = vld [vmem:[%s585 + $0x68] sm:$0xf]
      %v613 = vld [vmem:[%s585 + $0x6c] sm:$0xf]
      %v614 = vld [vmem:[%s585 + $0x70] sm:$0xf]
      %v615 = vld [vmem:[%s585 + $0x74] sm:$0xf]
      %v616 = vld [vmem:[%s585 + $0x78] sm:$0xf]
      %v617 = vld [vmem:[%s585 + $0x7c] sm:$0xf]
      %v620 = vunpack.c.l.s4 1983009808
      %v621 = vunpack.c.0.s8 %v620
      %v622 = vlaneseq
      %v623 = vshrl.u32 %v622, 7
      %v624 = vsub.s32 %v621, %v623
      %v625 = vrot.slane %v584, %v624
      %v626 = vcombine.high %v625, %v625
      %v661 = vunpack.c.l.b16 %v586
      %v662 = vunpack.c.l.b16 %v587
      %v663 = vunpack.c.l.b16 %v588
      %v664 = vunpack.c.l.b16 %v589
      %v665 = vunpack.c.l.b16 %v590
      %v666 = vunpack.c.l.b16 %v591
      %v667 = vunpack.c.l.b16 %v592
      %v668 = vunpack.c.l.b16 %v593
      %v669 = vunpack.c.l.b16 %v594
      %v670 = vunpack.c.l.b16 %v595
      %v671 = vunpack.c.l.b16 %v596
      %v672 = vunpack.c.l.b16 %v597
      %v673 = vunpack.c.l.b16 %v598
      %v674 = vunpack.c.l.b16 %v599
      %v675 = vunpack.c.l.b16 %v600
      %v676 = vunpack.c.l.b16 %v601
      %v677 = vunpack.c.l.b16 %v602
      %v678 = vunpack.c.l.b16 %v603
      %v679 = vunpack.c.l.b16 %v604
      %v680 = vunpack.c.l.b16 %v605
      %v681 = vunpack.c.l.b16 %v606
      %v682 = vunpack.c.l.b16 %v607
      %v683 = vunpack.c.l.b16 %v608
      %v684 = vunpack.c.l.b16 %v609
      %v685 = vunpack.c.l.b16 %v610
      %v686 = vunpack.c.l.b16 %v611
      %v687 = vunpack.c.l.b16 %v612
      %v688 = vunpack.c.l.b16 %v613
      %v689 = vunpack.c.l.b16 %v614
      %v690 = vunpack.c.l.b16 %v615
      %v691 = vunpack.c.l.b16 %v616
      %v692 = vunpack.c.l.b16 %v617
      %v693 = vpack.c.b16 %v662, %v661
      %v694 = vpack.c.b16 %v664, %v663
      %v695 = vpack.c.b16 %v666, %v665
      %v696 = vpack.c.b16 %v668, %v667
      %v697 = vpack.c.b16 %v670, %v669
      %v698 = vpack.c.b16 %v672, %v671
      %v699 = vpack.c.b16 %v674, %v673
      %v700 = vpack.c.b16 %v676, %v675
      %v701 = vpack.c.b16 %v678, %v677
      %v702 = vpack.c.b16 %v680, %v679
      %v703 = vpack.c.b16 %v682, %v681
      %v704 = vpack.c.b16 %v684, %v683
      %v705 = vpack.c.b16 %v686, %v685
      %v706 = vpack.c.b16 %v688, %v687
      %v707 = vpack.c.b16 %v690, %v689
      %v708 = vpack.c.b16 %v692, %v691
      %725 = vmatprep.subr.bf16.mxu0 0
      %726 = vmatpush1.bf16.msra.mxu0 %v693
      %727 = vmatprep.subr.bf16.mxu0 0
      %728 = vmatpush1.bf16.msra.mxu0 %v694
      %729 = vmatprep.subr.bf16.mxu0 0
      %730 = vmatpush1.bf16.msra.mxu0 %v695
      %731 = vmatprep.subr.bf16.mxu0 0
      %732 = vmatpush1.bf16.msra.mxu0 %v696
      %733 = vmatprep.subr.bf16.mxu0 0
      %734 = vmatpush1.bf16.msra.mxu0 %v697
      %735 = vmatprep.subr.bf16.mxu0 0
      %736 = vmatpush1.bf16.msra.mxu0 %v698
      %737 = vmatprep.subr.bf16.mxu0 0
      %738 = vmatpush1.bf16.msra.mxu0 %v699
      %739 = vmatprep.subr.bf16.mxu0 0
      %740 = vmatpush1.bf16.msra.mxu0 %v700
      %741 = vmatprep.subr.bf16.mxu0 0
      %742 = vmatpush1.bf16.msra.mxu0 %v701
      %743 = vmatprep.subr.bf16.mxu0 0
      %744 = vmatpush1.bf16.msra.mxu0 %v702
      %745 = vmatprep.subr.bf16.mxu0 0
      %746 = vmatpush1.bf16.msra.mxu0 %v703
      %747 = vmatprep.subr.bf16.mxu0 0
      %748 = vmatpush1.bf16.msra.mxu0 %v704
      %749 = vmatprep.subr.bf16.mxu0 0
      %750 = vmatpush1.bf16.msra.mxu0 %v705
      %751 = vmatprep.subr.bf16.mxu0 0
      %752 = vmatpush1.bf16.msra.mxu0 %v706
      %753 = vmatprep.subr.bf16.mxu0 0
      %754 = vmatpush1.bf16.msra.mxu0 %v707
      %755 = vmatprep.subr.bf16.mxu0 0
      %756 = vmatpush1.bf16.msra.mxu0 %v708
      %757 = vmatprep.mubr.bf16.mxu0 %v626
      %758 = vmatmul.mubr.bf16.gmra.mrb[0].mxu0 %v625
      %v759 = vpop.f32.mrb[0].mxu0
      %v760 = vadd.f32 0.0, %v759
      %v761 = vpop.f32.mrb[0].mxu0
      %v762 = vpop.f32.mrb[0].mxu0
      %v763 = vpop.f32.mrb[0].mxu0
      %764 = vdwg.mxu0
      %v765 = vadd.f32 %v575, %v760
      %s766 = sadd.s32 %s581, 6
      %s767 = smul.addr %s766, 2
      %s768 = scalar_lea.vmem %s195, %s767
      %v769 = vld [vmem:[%s768] sm:$0xf]
      %s770 = scalar_lea.vmem %s1, 384
      %v771 = vld [vmem:[%s770] sm:$0xf]
      %v772 = vld [vmem:[%s770 + $0x4] sm:$0xf]
      %v773 = vld [vmem:[%s770 + $0x8] sm:$0xf]
      %v774 = vld [vmem:[%s770 + $0xc] sm:$0xf]
      %v775 = vld [vmem:[%s770 + $0x10] sm:$0xf]
      %v776 = vld [vmem:[%s770 + $0x14] sm:$0xf]
      %v777 = vld [vmem:[%s770 + $0x18] sm:$0xf]
      %v778 = vld [vmem:[%s770 + $0x1c] sm:$0xf]
      %v779 = vld [vmem:[%s770 + $0x20] sm:$0xf]
      %v780 = vld [vmem:[%s770 + $0x24] sm:$0xf]
      %v781 = vld [vmem:[%s770 + $0x28] sm:$0xf]
      %v782 = vld [vmem:[%s770 + $0x2c] sm:$0xf]
      %v783 = vld [vmem:[%s770 + $0x30] sm:$0xf]
      %v784 = vld [vmem:[%s770 + $0x34] sm:$0xf]
      %v785 = vld [vmem:[%s770 + $0x38] sm:$0xf]
      %v786 = vld [vmem:[%s770 + $0x3c] sm:$0xf]
      %v787 = vld [vmem:[%s770 + $0x40] sm:$0xf]
      %v788 = vld [vmem:[%s770 + $0x44] sm:$0xf]
      %v789 = vld [vmem:[%s770 + $0x48] sm:$0xf]
      %v790 = vld [vmem:[%s770 + $0x4c] sm:$0xf]
      %v791 = vld [vmem:[%s770 + $0x50] sm:$0xf]
      %v792 = vld [vmem:[%s770 + $0x54] sm:$0xf]
      %v793 = vld [vmem:[%s770 + $0x58] sm:$0xf]
      %v794 = vld [vmem:[%s770 + $0x5c] sm:$0xf]
      %v795 = vld [vmem:[%s770 + $0x60] sm:$0xf]
      %v796 = vld [vmem:[%s770 + $0x64] sm:$0xf]
      %v797 = vld [vmem:[%s770 + $0x68] sm:$0xf]
      %v798 = vld [vmem:[%s770 + $0x6c] sm:$0xf]
      %v799 = vld [vmem:[%s770 + $0x70] sm:$0xf]
      %v800 = vld [vmem:[%s770 + $0x74] sm:$0xf]
      %v801 = vld [vmem:[%s770 + $0x78] sm:$0xf]
      %v802 = vld [vmem:[%s770 + $0x7c] sm:$0xf]
      %v805 = vunpack.c.l.s4 1983009808
      %v806 = vunpack.c.0.s8 %v805
      %v807 = vlaneseq
      %v808 = vshrl.u32 %v807, 7
      %v809 = vsub.s32 %v806, %v808
      %v810 = vrot.slane %v769, %v809
      %v811 = vcombine.high %v810, %v810
      %v846 = vunpack.c.l.b16 %v771
      %v847 = vunpack.c.l.b16 %v772
      %v848 = vunpack.c.l.b16 %v773
      %v849 = vunpack.c.l.b16 %v774
      %v850 = vunpack.c.l.b16 %v775
      %v851 = vunpack.c.l.b16 %v776
      %v852 = vunpack.c.l.b16 %v777
      %v853 = vunpack.c.l.b16 %v778
      %v854 = vunpack.c.l.b16 %v779
      %v855 = vunpack.c.l.b16 %v780
      %v856 = vunpack.c.l.b16 %v781
      %v857 = vunpack.c.l.b16 %v782
      %v858 = vunpack.c.l.b16 %v783
      %v859 = vunpack.c.l.b16 %v784
      %v860 = vunpack.c.l.b16 %v785
      %v861 = vunpack.c.l.b16 %v786
      %v862 = vunpack.c.l.b16 %v787
      %v863 = vunpack.c.l.b16 %v788
      %v864 = vunpack.c.l.b16 %v789
      %v865 = vunpack.c.l.b16 %v790
      %v866 = vunpack.c.l.b16 %v791
      %v867 = vunpack.c.l.b16 %v792
      %v868 = vunpack.c.l.b16 %v793
      %v869 = vunpack.c.l.b16 %v794
      %v870 = vunpack.c.l.b16 %v795
      %v871 = vunpack.c.l.b16 %v796
      %v872 = vunpack.c.l.b16 %v797
      %v873 = vunpack.c.l.b16 %v798
      %v874 = vunpack.c.l.b16 %v799
      %v875 = vunpack.c.l.b16 %v800
      %v876 = vunpack.c.l.b16 %v801
      %v877 = vunpack.c.l.b16 %v802
      %v878 = vpack.c.b16 %v847, %v846
      %v879 = vpack.c.b16 %v849, %v848
      %v880 = vpack.c.b16 %v851, %v850
      %v881 = vpack.c.b16 %v853, %v852
      %v882 = vpack.c.b16 %v855, %v854
      %v883 = vpack.c.b16 %v857, %v856
      %v884 = vpack.c.b16 %v859, %v858
      %v885 = vpack.c.b16 %v861, %v860
      %v886 = vpack.c.b16 %v863, %v862
      %v887 = vpack.c.b16 %v865, %v864
      %v888 = vpack.c.b16 %v867, %v866
      %v889 = vpack.c.b16 %v869, %v868
      %v890 = vpack.c.b16 %v871, %v870
      %v891 = vpack.c.b16 %v873, %v872
      %v892 = vpack.c.b16 %v875, %v874
      %v893 = vpack.c.b16 %v877, %v876
      %910 = vmatprep.subr.bf16.mxu0 0
      %911 = vmatpush1.bf16.msra.mxu0 %v878
      %912 = vmatprep.subr.bf16.mxu0 0
      %913 = vmatpush1.bf16.msra.mxu0 %v879
      %914 = vmatprep.subr.bf16.mxu0 0
      %915 = vmatpush1.bf16.msra.mxu0 %v880
      %916 = vmatprep.subr.bf16.mxu0 0
      %917 = vmatpush1.bf16.msra.mxu0 %v881
      %918 = vmatprep.subr.bf16.mxu0 0
      %919 = vmatpush1.bf16.msra.mxu0 %v882
      %920 = vmatprep.subr.bf16.mxu0 0
      %921 = vmatpush1.bf16.msra.mxu0 %v883
      %922 = vmatprep.subr.bf16.mxu0 0
      %923 = vmatpush1.bf16.msra.mxu0 %v884
      %924 = vmatprep.subr.bf16.mxu0 0
      %925 = vmatpush1.bf16.msra.mxu0 %v885
      %926 = vmatprep.subr.bf16.mxu0 0
      %927 = vmatpush1.bf16.msra.mxu0 %v886
      %928 = vmatprep.subr.bf16.mxu0 0
      %929 = vmatpush1.bf16.msra.mxu0 %v887
      %930 = vmatprep.subr.bf16.mxu0 0
      %931 = vmatpush1.bf16.msra.mxu0 %v888
      %932 = vmatprep.subr.bf16.mxu0 0
      %933 = vmatpush1.bf16.msra.mxu0 %v889
      %934 = vmatprep.subr.bf16.mxu0 0
      %935 = vmatpush1.bf16.msra.mxu0 %v890
      %936 = vmatprep.subr.bf16.mxu0 0
      %937 = vmatpush1.bf16.msra.mxu0 %v891
      %938 = vmatprep.subr.bf16.mxu0 0
      %939 = vmatpush1.bf16.msra.mxu0 %v892
      %940 = vmatprep.subr.bf16.mxu0 0
      %941 = vmatpush1.bf16.msra.mxu0 %v893
      %942 = vmatprep.mubr.bf16.mxu0 %v811
      %943 = vmatmul.mubr.bf16.gmra.mrb[0].mxu0 %v810
      %v944 = vpop.f32.mrb[0].mxu0
      %v945 = vadd.f32 0.0, %v944
      %v946 = vpop.f32.mrb[0].mxu0
      %v947 = vpop.f32.mrb[0].mxu0
      %v948 = vpop.f32.mrb[0].mxu0
      %949 = vdwg.mxu0
      %v950 = vadd.f32 %v765, %v945
      %vm951 = vcmask 257024
      %952 = vst.msk [vmem:[%s203] sm:$0xf] %vm951, %v950
      %v953 = vsel %vm951, %v950, 0.0
      %v954 = vrot.slane %v953, 4
      %v955 = vadd.f32 %v953, %v954
      %v956 = vrot.slane %v955, 2
      %v957 = vadd.f32 %v955, %v956
      %v958 = vrot.slane %v957, 1
      %v959 = vadd.f32 %v957, %v958
      %vm960 = vcmask 253952
      %961 = vst.msk [vmem:[%s211] sm:$0x1] %vm960, %v959
      %v962 = vmul.f32 %v950, %v950
      %v963 = vsel %vm951, %v962, 0.0
      %v964 = vrot.slane %v963, 4
      %v965 = vadd.f32 %v963, %v964
      %v966 = vrot.slane %v965, 2
      %v967 = vadd.f32 %v965, %v966
      %v968 = vrot.slane %v967, 1
      %v969 = vadd.f32 %v967, %v968
      %970 = vst.msk [vmem:[%s211 + $0x1] sm:$0x1] %vm960, %v969
      %p971 = scmp.lt.s32.totalorder %s19, 1
      %s972 = scalar_select %p971, %s19, 1
      %p973 = scmp.lt.s32.totalorder %s20, 1
      %s974 = scalar_select %p973, %s20, 1
      %s975 = smul.addr %s972, 2
      %s976 = sadd.s32 %s974, %s975
      %s977 = smul.addr %s976, 4
      %s978 = scalar_lea.vmem %s2, %s977
      %p979 = scmp.lt.s32.totalorder %s19, 1
      %s980 = scalar_select %p979, %s19, 1
      %p981 = scmp.lt.s32.totalorder %s20, 1
      %s982 = scalar_select %p981, %s20, 1
      %s983 = smul.addr %s980, 2
      %s984 = sadd.s32 %s982, %s983
      %s985 = smul.addr %s984, 2
      %s986 = scalar_lea.vmem %s3, %s985
      // Predicated region
      $region29: #{conv3d_encoder_forward.13} parent=27 // pred_check
        %p987 = pneg %p94
      $region30: #{conv3d_encoder_forward.13} parent=27 // pred_check_branch
        %989 = sbr.rel (%p987) target = $region32
      $region31: #{conv3d_encoder_forward.13} parent=27 // pred_region
        _
      $region32: #{conv3d_encoder_forward.13} parent=27 // pred_fallthru
        _
      // Predicated region
      $region33: #{conv3d_encoder_forward.13} parent=27 // pred_check
        %p990 = pneg %p122
      $region34: #{conv3d_encoder_forward.13} parent=27 // pred_check_branch
        %992 = sbr.rel (%p990) target = $region36
      $region35: #{conv3d_encoder_forward.13} parent=27 // pred_region
        _
      $region36: #{conv3d_encoder_forward.13} parent=27 // pred_fallthru
        _
    $region28: #{conv3d_encoder_forward.13} parent=5 // pred_fallthru
      _
    %p993 = scmp.le.s32.totalorder 2, %s10
    // Predicated region
    $region37: #{conv3d_encoder_forward.13} parent=5 // pred_check
      %p994 = pneg %p993
    $region38: #{conv3d_encoder_forward.13} parent=5 // pred_check_branch
      %996 = sbr.rel (%p994) target = $region40
    $region39: #{conv3d_encoder_forward.13} parent=5 // pred_region
      %s997 = ssub.s32 %s10, 2
      // Predicated region
      $region41: #{conv3d_encoder_forward.13} parent=39 // pred_check
        %p998 = pneg %p100
      $region42: #{conv3d_encoder_forward.13} parent=39 // pred_check_branch
        %1000 = sbr.rel (%p998) target = $region44
      $region43: #{conv3d_encoder_forward.13} parent=39 // pred_region
        %p1001 = scmp.lt.s32.totalorder %s21, 1
        %s1002 = scalar_select %p1001, %s21, 1
        %p1003 = scmp.lt.s32.totalorder %s22, 1
        %s1004 = scalar_select %p1003, %s22, 1
        %s1005 = smul.addr %s1002, 2
        %s1006 = sadd.s32 %s1004, %s1005
        %s1007 = smul.addr %s1006, 4
        %s1008 = scalar_lea.vmem %s2, %s1007
      $region44: #{conv3d_encoder_forward.13} parent=39 // pred_fallthru
        _
      // Predicated region
      $region45: #{conv3d_encoder_forward.13} parent=39 // pred_check
        %p1009 = pneg %p128
      $region46: #{conv3d_encoder_forward.13} parent=39 // pred_check_branch
        %1011 = sbr.rel (%p1009) target = $region48
      $region47: #{conv3d_encoder_forward.13} parent=39 // pred_region
        %p1012 = scmp.lt.s32.totalorder %s21, 1
        %s1013 = scalar_select %p1012, %s21, 1
        %p1014 = scmp.lt.s32.totalorder %s22, 1
        %s1015 = scalar_select %p1014, %s22, 1
        %s1016 = smul.addr %s1013, 2
        %s1017 = sadd.s32 %s1015, %s1016
        %s1018 = smul.addr %s1017, 2
        %s1019 = scalar_lea.vmem %s3, %s1018
      $region48: #{conv3d_encoder_forward.13} parent=39 // pred_fallthru
        _
    $region40: #{conv3d_encoder_forward.13} parent=5 // pred_fallthru
      _
  $region6: #{conv3d_encoder_forward.13} parent=0 // loop_footer
    %s14 = sadd.s32 1, %s10
  $region7: #{conv3d_encoder_forward.13} parent=0 // loop_footer_branch
    %9 = sbr.rel target = $region3
  $region8: #{conv3d_encoder_forward.13} parent=0 // loop_exit
    _

// kernel: conv3d_encoder_forward.16
$region0: #{conv3d_encoder_forward.16}
  #allocation0 [shape = 'u32[]', space=smem, size = 0x4, offset = 0x4, fixed_abs, tag = 'smem constant byte address 0x4 - core index']
  #allocation1 [shape = 'u32[144,128]{1,0:T(1,128)}', space=vmem, size = 0x12000, scoped, tag = 'internal scratch']
  %s0 = inlined_call_operand.vmem [shape: f32[2,1,1,64], index: 0, kind: input, shape index: {}]
  %s1 = inlined_call_operand.vmem [shape: f32[2,1,2,64], index: 1, kind: input, shape index: {}]
  %s2 = inlined_call_operand.vmem [shape: f32[1,64], index: 2, kind: input, shape index: {}]
  %s3 = inlined_call_operand.vmem [shape: f32[1,64], index: 3, kind: input, shape index: {}]
  %s4 = inlined_call_operand.vmem [shape: bf16[2,1,1,64], index: 4, kind: output, shape index: {}]
  %s5 = sld [smem:[#allocation0]]
  $region49: #{conv3d_encoder_forward.16} parent=0
    _
  %s7 = ssub.s32 1, %s5
  %s8 = scalar_select 0, %s7, %s5
  loop: start=0, step=1, limit=4
  $region2: #{conv3d_encoder_forward.16} parent=0 // loop_pre_header
    _
  $region3: #{conv3d_encoder_forward.16} parent=0 // loop_header
    %s10 = sphi 0, %s14
    %p11 = scmp.ge.s32.totalorder %s10, 4
    %s17 = sphi 0, %s29
    %s18 = sphi 0, %s25
    %s19 = sphi 0, %s17
    %s20 = sphi 0, %s18
    %s21 = sphi 0, %s19
    %s22 = sphi 0, %s20
    %s34 = sphi 0, %s36
    %s37 = sphi 0, %s34
    %s38 = sphi 0, %s37
    %s54 = sphi 0, %s38
    %s58 = sphi 0, %s58
    %s60 = sphi 0, %s58
    %s61 = sphi 0, %s60
    %s75 = sphi 0, %s61
    %s79 = sphi 0, %s79
    %s81 = sphi 0, %s79
    %s82 = sphi 0, %s81
    %s96 = sphi 0, %s82
    %s100 = sphi 0, %s100
    %s102 = sphi 0, %s100
    %s103 = sphi 0, %s102
    %s117 = sphi 0, %s103
    %s125 = sphi 0, %s127
    %s128 = sphi 0, %s125
    %s129 = sphi 0, %s128
    %s145 = sphi 0, %s129
  $region4: #{conv3d_encoder_forward.16} parent=0 // loop_header_branch
    %13 = sbr.rel (%p11) target = $region8
  $region5: #{conv3d_encoder_forward.16} parent=0 // loop_body
    %s15 = ssub.s32 %s10, 1
    %s16 = ssub.s32 %s10, 2
    %s23 = sadd.s32 1, %s18
    %p24 = scmp.ge.s32.totalorder %s23, 1
    %s25 = scalar_select %p24, 0, %s23
    %s26 = sadd.s32 1, %s17
    %s27 = scalar_select %p24, %s26, %s17
    %p28 = scmp.ge.s32.totalorder %s27, 2
    %s29 = scalar_select %p28, 0, %s27
    %s30 = ssub.s32 %s17, %s29
    %s31 = ssub.s32 %s18, %s25
    %s32 = sor.u32 %s30, %s31
    %p33 = scmp.eq.s32.totalorder %s32, 0
    %s35 = sadd.s32 %s34, 1
    %s36 = scalar_select %p33, %s34, %s35
    %p39 = pneg %p33
    %p40 = scmp.eq.s32.totalorder %s10, 1
    %p41 = por %p39, %p40
    %p42 = scmp.ne.s32.totalorder %s34, %s37
    %p43 = scmp.eq.s32.totalorder %s10, 0
    %p44 = por %p42, %p43
    %p45 = scmp.ne.s32.totalorder %s34, %s37
    %p46 = scmp.eq.s32.totalorder %s15, 1
    %p47 = por %p45, %p46
    %p48 = scmp.ne.s32.totalorder %s37, %s38
    %p49 = scmp.eq.s32.totalorder %s15, 0
    %p50 = por %p48, %p49
    %p51 = scmp.ne.s32.totalorder %s37, %s38
    %p52 = scmp.eq.s32.totalorder %s16, 1
    %p53 = por %p51, %p52
    %p55 = scmp.ne.s32.totalorder %s38, %s54
    %p56 = scmp.eq.s32.totalorder %s16, 0
    %p57 = por %p55, %p56
    %s59 = sadd.s32 %s58, 1
    %p62 = scmp.eq.s32.totalorder %s10, 1
    %p63 = scmp.ne.s32.totalorder %s58, %s60
    %p64 = scmp.eq.s32.totalorder %s10, 0
    %p65 = por %p63, %p64
    %p66 = scmp.ne.s32.totalorder %s58, %s60
    %p67 = scmp.eq.s32.totalorder %s15, 1
    %p68 = por %p66, %p67
    %p69 = scmp.ne.s32.totalorder %s60, %s61
    %p70 = scmp.eq.s32.totalorder %s15, 0
    %p71 = por %p69, %p70
    %p72 = scmp.ne.s32.totalorder %s60, %s61
    %p73 = scmp.eq.s32.totalorder %s16, 1
    %p74 = por %p72, %p73
    %p76 = scmp.ne.s32.totalorder %s61, %s75
    %p77 = scmp.eq.s32.totalorder %s16, 0
    %p78 = por %p76, %p77
    %s80 = sadd.s32 %s79, 1
    %p83 = scmp.eq.s32.totalorder %s10, 1
    %p84 = scmp.ne.s32.totalorder %s79, %s81
    %p85 = scmp.eq.s32.totalorder %s10, 0
    %p86 = por %p84, %p85
    %p87 = scmp.ne.s32.totalorder %s79, %s81
    %p88 = scmp.eq.s32.totalorder %s15, 1
    %p89 = por %p87, %p88
    %p90 = scmp.ne.s32.totalorder %s81, %s82
    %p91 = scmp.eq.s32.totalorder %s15, 0
    %p92 = por %p90, %p91
    %p93 = scmp.ne.s32.totalorder %s81, %s82
    %p94 = scmp.eq.s32.totalorder %s16, 1
    %p95 = por %p93, %p94
    %p97 = scmp.ne.s32.totalorder %s82, %s96
    %p98 = scmp.eq.s32.totalorder %s16, 0
    %p99 = por %p97, %p98
    %s101 = sadd.s32 %s100, 1
    %p104 = scmp.eq.s32.totalorder %s10, 1
    %p105 = scmp.ne.s32.totalorder %s100, %s102
    %p106 = scmp.eq.s32.totalorder %s10, 0
    %p107 = por %p105, %p106
    %p108 = scmp.ne.s32.totalorder %s100, %s102
    %p109 = scmp.eq.s32.totalorder %s15, 1
    %p110 = por %p108, %p109
    %p111 = scmp.ne.s32.totalorder %s102, %s103
    %p112 = scmp.eq.s32.totalorder %s15, 0
    %p113 = por %p111, %p112
    %p114 = scmp.ne.s32.totalorder %s102, %s103
    %p115 = scmp.eq.s32.totalorder %s16, 1
    %p116 = por %p114, %p115
    %p118 = scmp.ne.s32.totalorder %s103, %s117
    %p119 = scmp.eq.s32.totalorder %s16, 0
    %p120 = por %p118, %p119
    %s121 = ssub.s32 %s17, %s29
    %s122 = ssub.s32 %s18, %s25
    %s123 = sor.u32 %s121, %s122
    %p124 = scmp.eq.s32.totalorder %s123, 0
    %s126 = sadd.s32 %s125, 1
    %s127 = scalar_select %p124, %s125, %s126
    %p130 = pneg %p124
    %p131 = scmp.eq.s32.totalorder %s10, 1
    %p132 = por %p130, %p131
    %p133 = scmp.ne.s32.totalorder %s125, %s128
    %p134 = scmp.eq.s32.totalorder %s10, 0
    %p135 = por %p133, %p134
    %p136 = scmp.ne.s32.totalorder %s125, %s128
    %p137 = scmp.eq.s32.totalorder %s15, 1
    %p138 = por %p136, %p137
    %p139 = scmp.ne.s32.totalorder %s128, %s129
    %p140 = scmp.eq.s32.totalorder %s15, 0
    %p141 = por %p139, %p140
    %p142 = scmp.ne.s32.totalorder %s128, %s129
    %p143 = scmp.eq.s32.totalorder %s16, 1
    %p144 = por %p142, %p143
    %p146 = scmp.ne.s32.totalorder %s129, %s145
    %p147 = scmp.eq.s32.totalorder %s16, 0
    %p148 = por %p146, %p147
    %p149 = scmp.le.s32.totalorder 1, %s10
    %p150 = scmp.lt.s32.totalorder %s10, 3
    %p151 = pnand %p149, %p150
    %p152 = pneg %p151
    // Predicated region
    $region9: #{conv3d_encoder_forward.16} parent=5 // pred_check
      _
    $region10: #{conv3d_encoder_forward.16} parent=5 // pred_check_branch
      %154 = sbr.rel (%p151) target = $region12
    $region11: #{conv3d_encoder_forward.16} parent=5 // pred_region
      %s155 = ssub.s32 %s10, 1
      // Predicated region
      $region13: #{conv3d_encoder_forward.16} parent=11 // pred_check
        %p156 = pneg %p71
      $region14: #{conv3d_encoder_forward.16} parent=11 // pred_check_branch
        %158 = sbr.rel (%p156) target = $region16
      $region15: #{conv3d_encoder_forward.16} parent=11 // pred_region
        _
      $region16: #{conv3d_encoder_forward.16} parent=11 // pred_fallthru
        _
      // Predicated region
      $region17: #{conv3d_encoder_forward.16} parent=11 // pred_check
        %p159 = pneg %p92
      $region18: #{conv3d_encoder_forward.16} parent=11 // pred_check_branch
        %161 = sbr.rel (%p159) target = $region20
      $region19: #{conv3d_encoder_forward.16} parent=11 // pred_region
        _
      $region20: #{conv3d_encoder_forward.16} parent=11 // pred_fallthru
        _
      // Predicated region
      $region21: #{conv3d_encoder_forward.16} parent=11 // pred_check
        %p162 = pneg %p113
      $region22: #{conv3d_encoder_forward.16} parent=11 // pred_check_branch
        %164 = sbr.rel (%p162) target = $region24
      $region23: #{conv3d_encoder_forward.16} parent=11 // pred_region
        _
      $region24: #{conv3d_encoder_forward.16} parent=11 // pred_fallthru
        _
    $region12: #{conv3d_encoder_forward.16} parent=5 // pred_fallthru
      _
    %p165 = scmp.lt.s32.totalorder %s10, 2
    // Predicated region
    $region25: #{conv3d_encoder_forward.16} parent=5 // pred_check
      %p166 = pneg %p165
    $region26: #{conv3d_encoder_forward.16} parent=5 // pred_check_branch
      %168 = sbr.rel (%p166) target = $region28
    $region27: #{conv3d_encoder_forward.16} parent=5 // pred_region
      // Predicated region
      $region29: #{conv3d_encoder_forward.16} parent=27 // pred_check
        %p169 = pneg %p44
      $region30: #{conv3d_encoder_forward.16} parent=27 // pred_check_branch
        %171 = sbr.rel (%p169) target = $region32
      $region31: #{conv3d_encoder_forward.16} parent=27 // pred_region
        %p172 = scmp.lt.s32.totalorder %s17, 1
        %s173 = scalar_select %p172, %s17, 1
        %p174 = scmp.lt.s32.totalorder %s18, 0
        %s175 = scalar_select %p174, %s18, 0
        %s176 = sadd.s32 %s175, %s173
        %s177 = scalar_lea.vmem %s0, %s176
      $region32: #{conv3d_encoder_forward.16} parent=27 // pred_fallthru
        _
    $region28: #{conv3d_encoder_forward.16} parent=5 // pred_fallthru
      _
    %p178 = scmp.le.s32.totalorder 1, %s10
    %p179 = scmp.lt.s32.totalorder %s10, 3
    %p180 = pnand %p178, %p179
    %p181 = pneg %p180
    // Predicated region
    $region33: #{conv3d_encoder_forward.16} parent=5 // pred_check
      _
    $region34: #{conv3d_encoder_forward.16} parent=5 // pred_check_branch
      %183 = sbr.rel (%p180) target = $region36
    $region35: #{conv3d_encoder_forward.16} parent=5 // pred_region
      %s184 = ssub.s32 %s10, 1
      %p185 = scmp.lt.s32.totalorder %s19, 1
      %s186 = scalar_select %p185, %s19, 1
      %p187 = scmp.lt.s32.totalorder %s20, 0
      %s188 = scalar_select %p187, %s20, 0
      %s189 = sadd.s32 %s188, %s186
      %s190 = scalar_lea.vmem %s0, %s189
      %p191 = pneg %p50
      %p192 = pneg %p47
      %p193 = pneg %p71
      %p194 = pneg %p68
      %p195 = pneg %p92
      %p196 = pneg %p89
      %p197 = pneg %p113
      %p198 = pneg %p110
      %p199 = pneg %p141
      %p200 = pneg %p138
      %p201 = scmp.lt.s32.totalorder %s19, 1
      %s202 = scalar_select %p201, %s19, 1
      %p203 = scmp.lt.s32.totalorder %s20, 0
      %s204 = scalar_select %p203, %s20, 0
      %s205 = sadd.s32 %s204, %s202
      %s206 = scalar_lea.vmem %s4, %s205
      %p207 = scmp.lt.s32.totalorder %s19, 1
      %s208 = scalar_select %p207, %s19, 1
      %p209 = scmp.lt.s32.totalorder %s20, 0
      %s210 = scalar_select %p209, %s20, 0
      %s211 = sadd.s32 %s210, %s208
      %s212 = scalar_lea.vmem %s0, %s211
      %p213 = scmp.lt.s32.totalorder %s19, 1
      %s214 = scalar_select %p213, %s19, 1
      %p215 = scmp.lt.s32.totalorder %s20, 0
      %s216 = scalar_select %p215, %s20, 0
      %s217 = sadd.s32 %s216, %s214
      %s218 = scalar_lea.vmem %s4, %s217
      %v219 = vld [vmem:[%s1] sm:$0x3]
      %v220 = vld [vmem:[%s1 + $0x2] sm:$0x3]
      %vm221 = vcmask 517120
      %v222 = vsel %vm221, %v219, 0.0
      %v223 = vsel %vm221, %v220, 0.0
      %v224 = vadd.f32 %v222, %v223
      %v225 = vadd.f32 %v224, 0.0
      %v226 = vmul.f32 %v225, 0.5
      %v227 = vmul.f32 %v226, %v226
      %v229 = vrot.slane %v227, 7
      %v231 = vsub.f32 %v226, %v229
      %v232 = vadd.f32 %v231, 1e-05
      %v233 = vrsqrt.pop %v232
      %v234 = vld [vmem:[%s2] sm:$0x1]
      %v236 = vlaneseq
      %v237 = vshrl.u32 %v236, 7
      %v238 = vsub.s32 0, %v237
      %v239 = vrot.slane %v234, %v238
      %v241 = vmul.f32 %v233, %v239
      %v242 = vld [vmem:[%s212] sm:$0x1]
      %v243 = vsub.f32 %v242, %v226
      %v246 = vunpack.c.l.s4 1966171168
      %v247 = vunpack.c.0.s8 %v246
      %v248 = vlaneseq
      %v249 = vshrl.u32 %v248, 7
      %v250 = vsub.s32 %v247, %v249
      %v251 = vrot.slane %v241, %v250
      %v252 = vcombine.high %v251, %v251
      %v254 = vunpack.c.l.s4 1966171168
      %v255 = vunpack.c.0.s8 %v254
      %v256 = vlaneseq
      %v257 = vshrl.u32 %v256, 7
      %v258 = vsub.s32 %v255, %v257
      %v259 = vrot.slane %v252, %v258
      %v261 = vmul.f32 %v243, %v259
      %v262 = vld [vmem:[%s3] sm:$0x1]
      %v263 = vadd.f32 %v261, %v262
      %vm264 = vcmp.ge.f32.partialorder %v263, 0.0
      %v265 = vmul.f32 %v263, 0.2
      %v266 = vsel %vm264, %v263, %v265
      %v267 = vpack.c.bf16 %v266, %v266
      %vm268 = vcmask 516096
      %vm269 = vsmask.f32 256
      %vm270 = vmand %vm268, %vm269
      %v271 = vld [vmem:[%s218] sm:$0x1]
      %v272 = vsel %vm270, %v267, %v271
      %273 = vst [vmem:[%s218] sm:$0x1] %v272
      %p274 = scmp.lt.s32.totalorder %s19, 1
      %s275 = scalar_select %p274, %s19, 1
      %p276 = scmp.lt.s32.totalorder %s20, 0
      %s277 = scalar_select %p276, %s20, 0
      %s278 = sadd.s32 %s277, %s275
      %s279 = scalar_lea.vmem %s4, %s278
      // Predicated region
      $region37: #{conv3d_encoder_forward.16} parent=35 // pred_check
        %p280 = pneg %p138
      $region38: #{conv3d_encoder_forward.16} parent=35 // pred_check_branch
        %282 = sbr.rel (%p280) target = $region40
      $region39: #{conv3d_encoder_forward.16} parent=35 // pred_region
        _
      $region40: #{conv3d_encoder_forward.16} parent=35 // pred_fallthru
        _
    $region36: #{conv3d_encoder_forward.16} parent=5 // pred_fallthru
      _
    %p283 = scmp.le.s32.totalorder 2, %s10
    // Predicated region
    $region41: #{conv3d_encoder_forward.16} parent=5 // pred_check
      %p284 = pneg %p283
    $region42: #{conv3d_encoder_forward.16} parent=5 // pred_check_branch
      %286 = sbr.rel (%p284) target = $region44
    $region43: #{conv3d_encoder_forward.16} parent=5 // pred_region
      %s287 = ssub.s32 %s10, 2
      // Predicated region
      $region45: #{conv3d_encoder_forward.16} parent=43 // pred_check
        %p288 = pneg %p144
      $region46: #{conv3d_encoder_forward.16} parent=43 // pred_check_branch
        %290 = sbr.rel (%p288) target = $region48
      $region47: #{conv3d_encoder_forward.16} parent=43 // pred_region
        %p291 = scmp.lt.s32.totalorder %s21, 1
        %s292 = scalar_select %p291, %s21, 1
        %p293 = scmp.lt.s32.totalorder %s22, 0
        %s294 = scalar_select %p293, %s22, 0
        %s295 = sadd.s32 %s294, %s292
        %s296 = scalar_lea.vmem %s4, %s295
      $region48: #{conv3d_encoder_forward.16} parent=43 // pred_fallthru
        _
    $region44: #{conv3d_encoder_forward.16} parent=5 // pred_fallthru
      _
  $region6: #{conv3d_encoder_forward.16} parent=0 // loop_footer
    %s14 = sadd.s32 1, %s10
  $region7: #{conv3d_encoder_forward.16} parent=0 // loop_footer_branch
    %9 = sbr.rel target = $region3
  $region8: #{conv3d_encoder_forward.16} parent=0 // loop_exit
    _

// kernel: conv3d_encoder_forward.15
$region0: #{conv3d_encoder_forward.15}
  #allocation0 [shape = 'u32[]', space=smem, size = 0x4, offset = 0x4, fixed_abs, tag = 'smem constant byte address 0x4 - core index']
  #allocation1 [shape = 'u32[144,128]{1,0:T(1,128)}', space=vmem, size = 0x12000, scoped, tag = 'internal scratch']
  %s0 = inlined_call_operand.vmem [shape: bf16[2,2,2,1,512], index: 0, kind: input, shape index: {}]
  %s1 = inlined_call_operand.vmem [shape: bf16[4,512,64], index: 1, kind: input, shape index: {}]
  %s2 = inlined_call_operand.vmem [shape: f32[2,1,1,64], index: 2, kind: output, shape index: {0}]
  %s3 = inlined_call_operand.vmem [shape: f32[2,1,2,64], index: 3, kind: output, shape index: {1}]
  %4 = xla_tuple %s2, %s3
  %s5 = sld [smem:[#allocation0]]
  $region49: #{conv3d_encoder_forward.15} parent=0
    _
  %s7 = ssub.s32 1, %s5
  %s8 = scalar_select 0, %s7, %s5
  loop: start=0, step=1, limit=4
  $region2: #{conv3d_encoder_forward.15} parent=0 // loop_pre_header
    _
  $region3: #{conv3d_encoder_forward.15} parent=0 // loop_header
    %s10 = sphi 0, %s14
    %p11 = scmp.ge.s32.totalorder %s10, 4
    %s17 = sphi 0, %s29
    %s18 = sphi 0, %s25
    %s19 = sphi 0, %s17
    %s20 = sphi 0, %s18
    %s21 = sphi 0, %s19
    %s22 = sphi 0, %s20
    %s32 = sphi 0, %s34
    %s35 = sphi 0, %s32
    %s36 = sphi 0, %s35
    %s52 = sphi 0, %s36
    %s56 = sphi 0, %s56
    %s58 = sphi 0, %s56
    %s59 = sphi 0, %s58
    %s73 = sphi 0, %s59
    %s81 = sphi 0, %s83
    %s84 = sphi 0, %s81
    %s85 = sphi 0, %s84
    %s101 = sphi 0, %s85
    %s109 = sphi 0, %s111
    %s112 = sphi 0, %s109
    %s113 = sphi 0, %s112
    %s129 = sphi 0, %s113
  $region4: #{conv3d_encoder_forward.15} parent=0 // loop_header_branch
    %13 = sbr.rel (%p11) target = $region8
  $region5: #{conv3d_encoder_forward.15} parent=0 // loop_body
    %s15 = ssub.s32 %s10, 1
    %s16 = ssub.s32 %s10, 2
    %s23 = sadd.s32 1, %s18
    %p24 = scmp.ge.s32.totalorder %s23, 1
    %s25 = scalar_select %p24, 0, %s23
    %s26 = sadd.s32 1, %s17
    %s27 = scalar_select %p24, %s26, %s17
    %p28 = scmp.ge.s32.totalorder %s27, 2
    %s29 = scalar_select %p28, 0, %s27
    %s30 = ssub.s32 %s17, %s29
    %p31 = scmp.eq.s32.totalorder %s30, 0
    %s33 = sadd.s32 %s32, 1
    %s34 = scalar_select %p31, %s32, %s33
    %p37 = pneg %p31
    %p38 = scmp.eq.s32.totalorder %s10, 1
    %p39 = por %p37, %p38
    %p40 = scmp.ne.s32.totalorder %s32, %s35
    %p41 = scmp.eq.s32.totalorder %s10, 0
    %p42 = por %p40, %p41
    %p43 = scmp.ne.s32.totalorder %s32, %s35
    %p44 = scmp.eq.s32.totalorder %s15, 1
    %p45 = por %p43, %p44
    %p46 = scmp.ne.s32.totalorder %s35, %s36
    %p47 = scmp.eq.s32.totalorder %s15, 0
    %p48 = por %p46, %p47
    %p49 = scmp.ne.s32.totalorder %s35, %s36
    %p50 = scmp.eq.s32.totalorder %s16, 1
    %p51 = por %p49, %p50
    %p53 = scmp.ne.s32.totalorder %s36, %s52
    %p54 = scmp.eq.s32.totalorder %s16, 0
    %p55 = por %p53, %p54
    %s57 = sadd.s32 %s56, 1
    %p60 = scmp.eq.s32.totalorder %s10, 1
    %p61 = scmp.ne.s32.totalorder %s56, %s58
    %p62 = scmp.eq.s32.totalorder %s10, 0
    %p63 = por %p61, %p62
    %p64 = scmp.ne.s32.totalorder %s56, %s58
    %p65 = scmp.eq.s32.totalorder %s15, 1
    %p66 = por %p64, %p65
    %p67 = scmp.ne.s32.totalorder %s58, %s59
    %p68 = scmp.eq.s32.totalorder %s15, 0
    %p69 = por %p67, %p68
    %p70 = scmp.ne.s32.totalorder %s58, %s59
    %p71 = scmp.eq.s32.totalorder %s16, 1
    %p72 = por %p70, %p71
    %p74 = scmp.ne.s32.totalorder %s59, %s73
    %p75 = scmp.eq.s32.totalorder %s16, 0
    %p76 = por %p74, %p75
    %s77 = ssub.s32 %s17, %s29
    %s78 = ssub.s32 %s18, %s25
    %s79 = sor.u32 %s77, %s78
    %p80 = scmp.eq.s32.totalorder %s79, 0
    %s82 = sadd.s32 %s81, 1
    %s83 = scalar_select %p80, %s81, %s82
    %p86 = pneg %p80
    %p87 = scmp.eq.s32.totalorder %s10, 1
    %p88 = por %p86, %p87
    %p89 = scmp.ne.s32.totalorder %s81, %s84
    %p90 = scmp.eq.s32.totalorder %s10, 0
    %p91 = por %p89, %p90
    %p92 = scmp.ne.s32.totalorder %s81, %s84
    %p93 = scmp.eq.s32.totalorder %s15, 1
    %p94 = por %p92, %p93
    %p95 = scmp.ne.s32.totalorder %s84, %s85
    %p96 = scmp.eq.s32.totalorder %s15, 0
    %p97 = por %p95, %p96
    %p98 = scmp.ne.s32.totalorder %s84, %s85
    %p99 = scmp.eq.s32.totalorder %s16, 1
    %p100 = por %p98, %p99
    %p102 = scmp.ne.s32.totalorder %s85, %s101
    %p103 = scmp.eq.s32.totalorder %s16, 0
    %p104 = por %p102, %p103
    %s105 = ssub.s32 %s17, %s29
    %s106 = ssub.s32 %s18, %s25
    %s107 = sor.u32 %s105, %s106
    %p108 = scmp.eq.s32.totalorder %s107, 0
    %s110 = sadd.s32 %s109, 1
    %s111 = scalar_select %p108, %s109, %s110
    %p114 = pneg %p108
    %p115 = scmp.eq.s32.totalorder %s10, 1
    %p116 = por %p114, %p115
    %p117 = scmp.ne.s32.totalorder %s109, %s112
    %p118 = scmp.eq.s32.totalorder %s10, 0
    %p119 = por %p117, %p118
    %p120 = scmp.ne.s32.totalorder %s109, %s112
    %p121 = scmp.eq.s32.totalorder %s15, 1
    %p122 = por %p120, %p121
    %p123 = scmp.ne.s32.totalorder %s112, %s113
    %p124 = scmp.eq.s32.totalorder %s15, 0
    %p125 = por %p123, %p124
    %p126 = scmp.ne.s32.totalorder %s112, %s113
    %p127 = scmp.eq.s32.totalorder %s16, 1
    %p128 = por %p126, %p127
    %p130 = scmp.ne.s32.totalorder %s113, %s129
    %p131 = scmp.eq.s32.totalorder %s16, 0
    %p132 = por %p130, %p131
    %p133 = scmp.le.s32.totalorder 1, %s10
    %p134 = scmp.lt.s32.totalorder %s10, 3
    %p135 = pnand %p133, %p134
    %p136 = pneg %p135
    // Predicated region
    $region9: #{conv3d_encoder_forward.15} parent=5 // pred_check
      _
    $region10: #{conv3d_encoder_forward.15} parent=5 // pred_check_branch
      %138 = sbr.rel (%p135) target = $region12
    $region11: #{conv3d_encoder_forward.15} parent=5 // pred_region
      %s139 = ssub.s32 %s10, 1
      // Predicated region
      $region13: #{conv3d_encoder_forward.15} parent=11 // pred_check
        %p140 = pneg %p69
      $region14: #{conv3d_encoder_forward.15} parent=11 // pred_check_branch
        %142 = sbr.rel (%p140) target = $region16
      $region15: #{conv3d_encoder_forward.15} parent=11 // pred_region
        _
      $region16: #{conv3d_encoder_forward.15} parent=11 // pred_fallthru
        _
    $region12: #{conv3d_encoder_forward.15} parent=5 // pred_fallthru
      _
    %p143 = scmp.lt.s32.totalorder %s10, 2
    // Predicated region
    $region17: #{conv3d_encoder_forward.15} parent=5 // pred_check
      %p144 = pneg %p143
    $region18: #{conv3d_encoder_forward.15} parent=5 // pred_check_branch
      %146 = sbr.rel (%p144) target = $region20
    $region19: #{conv3d_encoder_forward.15} parent=5 // pred_region
      // Predicated region
      $region21: #{conv3d_encoder_forward.15} parent=19 // pred_check
        %p147 = pneg %p42
      $region22: #{conv3d_encoder_forward.15} parent=19 // pred_check_branch
        %149 = sbr.rel (%p147) target = $region24
      $region23: #{conv3d_encoder_forward.15} parent=19 // pred_region
        %p150 = scmp.lt.s32.totalorder %s17, 1
        %s151 = scalar_select %p150, %s17, 1
        %s152 = smul.addr %s151, 16
        %s153 = scalar_lea.vmem %s0, %s152
      $region24: #{conv3d_encoder_forward.15} parent=19 // pred_fallthru
        _
    $region20: #{conv3d_encoder_forward.15} parent=5 // pred_fallthru
      _
    %p154 = scmp.le.s32.totalorder 1, %s10
    %p155 = scmp.lt.s32.totalorder %s10, 3
    %p156 = pnand %p154, %p155
    %p157 = pneg %p156
    // Predicated region
    $region25: #{conv3d_encoder_forward.15} parent=5 // pred_check
      _
    $region26: #{conv3d_encoder_forward.15} parent=5 // pred_check_branch
      %159 = sbr.rel (%p156) target = $region28
    $region27: #{conv3d_encoder_forward.15} parent=5 // pred_region
      %s160 = ssub.s32 %s10, 1
      %p161 = scmp.lt.s32.totalorder %s19, 1
      %s162 = scalar_select %p161, %s19, 1
      %s163 = smul.addr %s162, 16
      %s164 = scalar_lea.vmem %s0, %s163
      %p165 = pneg %p48
      %p166 = pneg %p45
      %p167 = pneg %p69
      %p168 = pneg %p66
      %p169 = pneg %p97
      %p170 = pneg %p94
      %p171 = scmp.lt.s32.totalorder %s19, 1
      %s172 = scalar_select %p171, %s19, 1
      %p173 = scmp.lt.s32.totalorder %s20, 0
      %s174 = scalar_select %p173, %s20, 0
      %s175 = sadd.s32 %s174, %s172
      %s176 = scalar_lea.vmem %s2, %s175
      %p177 = pneg %p125
      %p178 = pneg %p122
      %p179 = scmp.lt.s32.totalorder %s19, 1
      %s180 = scalar_select %p179, %s19, 1
      %p181 = scmp.lt.s32.totalorder %s20, 0
      %s182 = scalar_select %p181, %s20, 0
      %s183 = sadd.s32 %s182, %s180
      %s184 = smul.addr %s183, 2
      %s185 = scalar_lea.vmem %s3, %s184
      %p186 = scmp.lt.s32.totalorder %s19, 1
      %s187 = scalar_select %p186, %s19, 1
      %s188 = smul.addr %s187, 16
      %s189 = scalar_lea.vmem %s0, %s188
      %p190 = scmp.lt.s32.totalorder %s19, 1
      %s191 = scalar_select %p190, %s19, 1
      %p192 = scmp.lt.s32.totalorder %s20, 0
      %s193 = scalar_select %p192, %s20, 0
      %s194 = sadd.s32 %s193, %s191
      %s195 = scalar_lea.vmem %s2, %s194
      %p196 = scmp.lt.s32.totalorder %s19, 1
      %s197 = scalar_select %p196, %s19, 1
      %p198 = scmp.lt.s32.totalorder %s20, 0
      %s199 = scalar_select %p198, %s20, 0
      %s200 = sadd.s32 %s199, %s197
      %s201 = smul.addr %s200, 2
      %s202 = scalar_lea.vmem %s3, %s201
      %s204 = smul.u32 %s20, 4
      %s205 = scalar_lea.vmem %s189, %s204
      %v206 = vld [vmem:[%s205] sm:$0xf]
      %v207 = vld [vmem:[%s1] sm:$0xf]
      %v208 = vld [vmem:[%s1 + $0x4] sm:$0xf]
      %v209 = vld [vmem:[%s1 + $0x8] sm:$0xf]
      %v210 = vld [vmem:[%s1 + $0xc] sm:$0xf]
      %v211 = vld [vmem:[%s1 + $0x10] sm:$0xf]
      %v212 = vld [vmem:[%s1 + $0x14] sm:$0xf]
      %v213 = vld [vmem:[%s1 + $0x18] sm:$0xf]
      %v214 = vld [vmem:[%s1 + $0x1c] sm:$0xf]
      %v215 = vld [vmem:[%s1 + $0x20] sm:$0xf]
      %v216 = vld [vmem:[%s1 + $0x24] sm:$0xf]
      %v217 = vld [vmem:[%s1 + $0x28] sm:$0xf]
      %v218 = vld [vmem:[%s1 + $0x2c] sm:$0xf]
      %v219 = vld [vmem:[%s1 + $0x30] sm:$0xf]
      %v220 = vld [vmem:[%s1 + $0x34] sm:$0xf]
      %v221 = vld [vmem:[%s1 + $0x38] sm:$0xf]
      %v222 = vld [vmem:[%s1 + $0x3c] sm:$0xf]
      %v223 = vld [vmem:[%s1 + $0x40] sm:$0xf]
      %v224 = vld [vmem:[%s1 + $0x44] sm:$0xf]
      %v225 = vld [vmem:[%s1 + $0x48] sm:$0xf]
      %v226 = vld [vmem:[%s1 + $0x4c] sm:$0xf]
      %v227 = vld [vmem:[%s1 + $0x50] sm:$0xf]
      %v228 = vld [vmem:[%s1 + $0x54] sm:$0xf]
      %v229 = vld [vmem:[%s1 + $0x58] sm:$0xf]
      %v230 = vld [vmem:[%s1 + $0x5c] sm:$0xf]
      %v231 = vld [vmem:[%s1 + $0x60] sm:$0xf]
      %v232 = vld [vmem:[%s1 + $0x64] sm:$0xf]
      %v233 = vld [vmem:[%s1 + $0x68] sm:$0xf]
      %v234 = vld [vmem:[%s1 + $0x6c] sm:$0xf]
      %v235 = vld [vmem:[%s1 + $0x70] sm:$0xf]
      %v236 = vld [vmem:[%s1 + $0x74] sm:$0xf]
      %v237 = vld [vmem:[%s1 + $0x78] sm:$0xf]
      %v238 = vld [vmem:[%s1 + $0x7c] sm:$0xf]
      %v239 = vld [vmem:[%s1 + $0x80] sm:$0xf]
      %v240 = vld [vmem:[%s1 + $0x84] sm:$0xf]
      %v241 = vld [vmem:[%s1 + $0x88] sm:$0xf]
      %v242 = vld [vmem:[%s1 + $0x8c] sm:$0xf]
      %v243 = vld [vmem:[%s1 + $0x90] sm:$0xf]
      %v244 = vld [vmem:[%s1 + $0x94] sm:$0xf]
      %v245 = vld [vmem:[%s1 + $0x98] sm:$0xf]
      %v246 = vld [vmem:[%s1 + $0x9c] sm:$0xf]
      %v247 = vld [vmem:[%s1 + $0xa0] sm:$0xf]
      %v248 = vld [vmem:[%s1 + $0xa4] sm:$0xf]
      %v249 = vld [vmem:[%s1 + $0xa8] sm:$0xf]
      %v250 = vld [vmem:[%s1 + $0xac] sm:$0xf]
      %v251 = vld [vmem:[%s1 + $0xb0] sm:$0xf]
      %v252 = vld [vmem:[%s1 + $0xb4] sm:$0xf]
      %v253 = vld [vmem:[%s1 + $0xb8] sm:$0xf]
      %v254 = vld [vmem:[%s1 + $0xbc] sm:$0xf]
      %v255 = vld [vmem:[%s1 + $0xc0] sm:$0xf]
      %v256 = vld [vmem:[%s1 + $0xc4] sm:$0xf]
      %v257 = vld [vmem:[%s1 + $0xc8] sm:$0xf]
      %v258 = vld [vmem:[%s1 + $0xcc] sm:$0xf]
      %v259 = vld [vmem:[%s1 + $0xd0] sm:$0xf]
      %v260 = vld [vmem:[%s1 + $0xd4] sm:$0xf]
      %v261 = vld [vmem:[%s1 + $0xd8] sm:$0xf]
      %v262 = vld [vmem:[%s1 + $0xdc] sm:$0xf]
      %v263 = vld [vmem:[%s1 + $0xe0] sm:$0xf]
      %v264 = vld [vmem:[%s1 + $0xe4] sm:$0xf]
      %v265 = vld [vmem:[%s1 + $0xe8] sm:$0xf]
      %v266 = vld [vmem:[%s1 + $0xec] sm:$0xf]
      %v267 = vld [vmem:[%s1 + $0xf0] sm:$0xf]
      %v268 = vld [vmem:[%s1 + $0xf4] sm:$0xf]
      %v269 = vld [vmem:[%s1 + $0xf8] sm:$0xf]
      %v270 = vld [vmem:[%s1 + $0xfc] sm:$0xf]
      %s271 = sadd.s32 %s204, 8
      %s272 = scalar_lea.vmem %s189, %s271
      %v273 = vld [vmem:[%s272] sm:$0xf]
      %s274 = scalar_lea.vmem %s1, 256
      %v275 = vld [vmem:[%s274] sm:$0xf]
      %v276 = vld [vmem:[%s274 + $0x4] sm:$0xf]
      %v277 = vld [vmem:[%s274 + $0x8] sm:$0xf]
      %v278 = vld [vmem:[%s274 + $0xc] sm:$0xf]
      %v279 = vld [vmem:[%s274 + $0x10] sm:$0xf]
      %v280 = vld [vmem:[%s274 + $0x14] sm:$0xf]
      %v281 = vld [vmem:[%s274 + $0x18] sm:$0xf]
      %v282 = vld [vmem:[%s274 + $0x1c] sm:$0xf]
      %v283 = vld [vmem:[%s274 + $0x20] sm:$0xf]
      %v284 = vld [vmem:[%s274 + $0x24] sm:$0xf]
      %v285 = vld [vmem:[%s274 + $0x28] sm:$0xf]
      %v286 = vld [vmem:[%s274 + $0x2c] sm:$0xf]
      %v287 = vld [vmem:[%s274 + $0x30] sm:$0xf]
      %v288 = vld [vmem:[%s274 + $0x34] sm:$0xf]
      %v289 = vld [vmem:[%s274 + $0x38] sm:$0xf]
      %v290 = vld [vmem:[%s274 + $0x3c] sm:$0xf]
      %v291 = vld [vmem:[%s274 + $0x40] sm:$0xf]
      %v292 = vld [vmem:[%s274 + $0x44] sm:$0xf]
      %v293 = vld [vmem:[%s274 + $0x48] sm:$0xf]
      %v294 = vld [vmem:[%s274 + $0x4c] sm:$0xf]
      %v295 = vld [vmem:[%s274 + $0x50] sm:$0xf]
      %v296 = vld [vmem:[%s274 + $0x54] sm:$0xf]
      %v297 = vld [vmem:[%s274 + $0x58] sm:$0xf]
      %v298 = vld [vmem:[%s274 + $0x5c] sm:$0xf]
      %v299 = vld [vmem:[%s274 + $0x60] sm:$0xf]
      %v300 = vld [vmem:[%s274 + $0x64] sm:$0xf]
      %v301 = vld [vmem:[%s274 + $0x68] sm:$0xf]
      %v302 = vld [vmem:[%s274 + $0x6c] sm:$0xf]
      %v303 = vld [vmem:[%s274 + $0x70] sm:$0xf]
      %v304 = vld [vmem:[%s274 + $0x74] sm:$0xf]
      %v305 = vld [vmem:[%s274 + $0x78] sm:$0xf]
      %v306 = vld [vmem:[%s274 + $0x7c] sm:$0xf]
      %v307 = vld [vmem:[%s274 + $0x80] sm:$0xf]
      %v308 = vld [vmem:[%s274 + $0x84] sm:$0xf]
      %v309 = vld [vmem:[%s274 + $0x88] sm:$0xf]
      %v310 = vld [vmem:[%s274 + $0x8c] sm:$0xf]
      %v311 = vld [vmem:[%s274 + $0x90] sm:$0xf]
      %v312 = vld [vmem:[%s274 + $0x94] sm:$0xf]
      %v313 = vld [vmem:[%s274 + $0x98] sm:$0xf]
      %v314 = vld [vmem:[%s274 + $0x9c] sm:$0xf]
      %v315 = vld [vmem:[%s274 + $0xa0] sm:$0xf]
      %v316 = vld [vmem:[%s274 + $0xa4] sm:$0xf]
      %v317 = vld [vmem:[%s274 + $0xa8] sm:$0xf]
      %v318 = vld [vmem:[%s274 + $0xac] sm:$0xf]
      %v319 = vld [vmem:[%s274 + $0xb0] sm:$0xf]
      %v320 = vld [vmem:[%s274 + $0xb4] sm:$0xf]
      %v321 = vld [vmem:[%s274 + $0xb8] sm:$0xf]
      %v322 = vld [vmem:[%s274 + $0xbc] sm:$0xf]
      %v323 = vld [vmem:[%s274 + $0xc0] sm:$0xf]
      %v324 = vld [vmem:[%s274 + $0xc4] sm:$0xf]
      %v325 = vld [vmem:[%s274 + $0xc8] sm:$0xf]
      %v326 = vld [vmem:[%s274 + $0xcc] sm:$0xf]
      %v327 = vld [vmem:[%s274 + $0xd0] sm:$0xf]
      %v328 = vld [vmem:[%s274 + $0xd4] sm:$0xf]
      %v329 = vld [vmem:[%s274 + $0xd8] sm:$0xf]
      %v330 = vld [vmem:[%s274 + $0xdc] sm:$0xf]
      %v331 = vld [vmem:[%s274 + $0xe0] sm:$0xf]
      %v332 = vld [vmem:[%s274 + $0xe4] sm:$0xf]
      %v333 = vld [vmem:[%s274 + $0xe8] sm:$0xf]
      %v334 = vld [vmem:[%s274 + $0xec] sm:$0xf]
      %v335 = vld [vmem:[%s274 + $0xf0] sm:$0xf]
      %v336 = vld [vmem:[%s274 + $0xf4] sm:$0xf]
      %v337 = vld [vmem:[%s274 + $0xf8] sm:$0xf]
      %v338 = vld [vmem:[%s274 + $0xfc] sm:$0xf]
      %v341 = vunpack.c.l.s4 1966171168
      %v342 = vunpack.c.0.s8 %v341
      %v343 = vlaneseq
      %v344 = vshrl.u32 %v343, 7
      %v345 = vsub.s32 %v342, %v344
      %v346 = vrot.slane %v273, %v345
      %v347 = vcombine.high %v346, %v346
      %v349 = vunpack.c.l.s4 1966171168
      %v350 = vunpack.c.0.s8 %v349
      %v351 = vlaneseq
      %v352 = vshrl.u32 %v351, 7
      %v353 = vsub.s32 %v350, %v352
      %v354 = vrot.slane %v346, %v353
      %v356 = vunpack.c.l.s4 1966171168
      %v357 = vunpack.c.0.s8 %v356
      %v358 = vlaneseq
      %v359 = vshrl.u32 %v358, 7
      %v360 = vsub.s32 %v357, %v359
      %v361 = vrot.slane %v347, %v360
      %v362 = vcombine.high %v354, %v354
      %v363 = vcombine.high %v361, %v361
      %v432 = vunpack.c.l.b16 %v275
      %v433 = vunpack.c.l.b16 %v276
      %v434 = vunpack.c.l.b16 %v277
      %v435 = vunpack.c.l.b16 %v278
      %v436 = vunpack.c.l.b16 %v279
      %v437 = vunpack.c.l.b16 %v280
      %v438 = vunpack.c.l.b16 %v281
      %v439 = vunpack.c.l.b16 %v282
      %v440 = vunpack.c.l.b16 %v283
      %v441 = vunpack.c.l.b16 %v284
      %v442 = vunpack.c.l.b16 %v285
      %v443 = vunpack.c.l.b16 %v286
      %v444 = vunpack.c.l.b16 %v287
      %v445 = vunpack.c.l.b16 %v288
      %v446 = vunpack.c.l.b16 %v289
      %v447 = vunpack.c.l.b16 %v290
      %v448 = vunpack.c.l.b16 %v291
      %v449 = vunpack.c.l.b16 %v292
      %v450 = vunpack.c.l.b16 %v293
      %v451 = vunpack.c.l.b16 %v294
      %v452 = vunpack.c.l.b16 %v295
      %v453 = vunpack.c.l.b16 %v296
      %v454 = vunpack.c.l.b16 %v297
      %v455 = vunpack.c.l.b16 %v298
      %v456 = vunpack.c.l.b16 %v299
      %v457 = vunpack.c.l.b16 %v300
      %v458 = vunpack.c.l.b16 %v301
      %v459 = vunpack.c.l.b16 %v302
      %v460 = vunpack.c.l.b16 %v303
      %v461 = vunpack.c.l.b16 %v304
      %v462 = vunpack.c.l.b16 %v305
      %v463 = vunpack.c.l.b16 %v306
      %v464 = vunpack.c.l.b16 %v307
      %v465 = vunpack.c.l.b16 %v308
      %v466 = vunpack.c.l.b16 %v309
      %v467 = vunpack.c.l.b16 %v310
      %v468 = vunpack.c.l.b16 %v311
      %v469 = vunpack.c.l.b16 %v312
      %v470 = vunpack.c.l.b16 %v313
      %v471 = vunpack.c.l.b16 %v314
      %v472 = vunpack.c.l.b16 %v315
      %v473 = vunpack.c.l.b16 %v316
      %v474 = vunpack.c.l.b16 %v317
      %v475 = vunpack.c.l.b16 %v318
      %v476 = vunpack.c.l.b16 %v319
      %v477 = vunpack.c.l.b16 %v320
      %v478 = vunpack.c.l.b16 %v321
      %v479 = vunpack.c.l.b16 %v322
      %v480 = vunpack.c.l.b16 %v323
      %v481 = vunpack.c.l.b16 %v324
      %v482 = vunpack.c.l.b16 %v325
      %v483 = vunpack.c.l.b16 %v326
      %v484 = vunpack.c.l.b16 %v327
      %v485 = vunpack.c.l.b16 %v328
      %v486 = vunpack.c.l.b16 %v329
      %v487 = vunpack.c.l.b16 %v330
      %v488 = vunpack.c.l.b16 %v331
      %v489 = vunpack.c.l.b16 %v332
      %v490 = vunpack.c.l.b16 %v333
      %v491 = vunpack.c.l.b16 %v334
      %v492 = vunpack.c.l.b16 %v335
      %v493 = vunpack.c.l.b16 %v336
      %v494 = vunpack.c.l.b16 %v337
      %v495 = vunpack.c.l.b16 %v338
      %v496 = vpack.c.b16 %v433, %v432
      %v497 = vpack.c.b16 %v435, %v434
      %v498 = vpack.c.b16 %v437, %v436
      %v499 = vpack.c.b16 %v439, %v438
      %v500 = vpack.c.b16 %v441, %v440
      %v501 = vpack.c.b16 %v443, %v442
      %v502 = vpack.c.b16 %v445, %v444
      %v503 = vpack.c.b16 %v447, %v446
      %v504 = vpack.c.b16 %v449, %v448
      %v505 = vpack.c.b16 %v451, %v450
      %v506 = vpack.c.b16 %v453, %v452
      %v507 = vpack.c.b16 %v455, %v454
      %v508 = vpack.c.b16 %v457, %v456
      %v509 = vpack.c.b16 %v459, %v458
      %v510 = vpack.c.b16 %v461, %v460
      %v511 = vpack.c.b16 %v463, %v462
      %v512 = vpack.c.b16 %v465, %v464
      %v513 = vpack.c.b16 %v467, %v466
      %v514 = vpack.c.b16 %v469, %v468
      %v515 = vpack.c.b16 %v471, %v470
      %v516 = vpack.c.b16 %v473, %v472
      %v517 = vpack.c.b16 %v475, %v474
      %v518 = vpack.c.b16 %v477, %v476
      %v519 = vpack.c.b16 %v479, %v478
      %v520 = vpack.c.b16 %v481, %v480
      %v521 = vpack.c.b16 %v483, %v482
      %v522 = vpack.c.b16 %v485, %v484
      %v523 = vpack.c.b16 %v487, %v486
      %v524 = vpack.c.b16 %v489, %v488
      %v525 = vpack.c.b16 %v491, %v490
      %v526 = vpack.c.b16 %v493, %v492
      %v527 = vpack.c.b16 %v495, %v494
      %560 = vmatprep.subr.bf16.mxu0 0
      %561 = vmatpush1.bf16.msra.mxu0 %v496
      %562 = vmatprep.subr.bf16.mxu0 0
      %563 = vmatpush1.bf16.msra.mxu0 %v497
      %564 = vmatprep.subr.bf16.mxu0 0
      %565 = vmatpush1.bf16.msra.mxu0 %v498
      %566 = vmatprep.subr.bf16.mxu0 0
      %567 = vmatpush1.bf16.msra.mxu0 %v499
      %568 = vmatprep.subr.bf16.mxu0 0
      %569 = vmatpush1.bf16.msra.mxu0 %v500
      %570 = vmatprep.subr.bf16.mxu0 0
      %571 = vmatpush1.bf16.msra.mxu0 %v501
      %572 = vmatprep.subr.bf16.mxu0 0
      %573 = vmatpush1.bf16.msra.mxu0 %v502
      %574 = vmatprep.subr.bf16.mxu0 0
      %575 = vmatpush1.bf16.msra.mxu0 %v503
      %576 = vmatprep.subr.bf16.mxu0 0
      %577 = vmatpush1.bf16.msra.mxu0 %v504
      %578 = vmatprep.subr.bf16.mxu0 0
      %579 = vmatpush1.bf16.msra.mxu0 %v505
      %580 = vmatprep.subr.bf16.mxu0 0
      %581 = vmatpush1.bf16.msra.mxu0 %v506
      %582 = vmatprep.subr.bf16.mxu0 0
      %583 = vmatpush1.bf16.msra.mxu0 %v507
      %584 = vmatprep.subr.bf16.mxu0 0
      %585 = vmatpush1.bf16.msra.mxu0 %v508
      %586 = vmatprep.subr.bf16.mxu0 0
      %587 = vmatpush1.bf16.msra.mxu0 %v509
      %588 = vmatprep.subr.bf16.mxu0 0
      %589 = vmatpush1.bf16.msra.mxu0 %v510
      %590 = vmatprep.subr.bf16.mxu0 0
      %591 = vmatpush1.bf16.msra.mxu0 %v511
      %592 = vmatprep.mubr.bf16.mxu0 %v361
      %593 = vmatmul.mubr.bf16.gmra.mrb[0].mxu0 %v354
      %v594 = vpop.f32.mrb[0].mxu0
      %v595 = vadd.f32 0.0, %v594
      %v596 = vpop.f32.mrb[0].mxu0
      %v597 = vpop.f32.mrb[0].mxu0
      %v598 = vpop.f32.mrb[0].mxu0
      %599 = vdwg.mxu0
      %600 = vmatprep.subr.bf16.mxu0 0
      %601 = vmatpush1.bf16.msra.mxu0 %v512
      %602 = vmatprep.subr.bf16.mxu0 0
      %603 = vmatpush1.bf16.msra.mxu0 %v513
      %604 = vmatprep.subr.bf16.mxu0 0
      %605 = vmatpush1.bf16.msra.mxu0 %v514
      %606 = vmatprep.subr.bf16.mxu0 0
      %607 = vmatpush1.bf16.msra.mxu0 %v515
      %608 = vmatprep.subr.bf16.mxu0 0
      %609 = vmatpush1.bf16.msra.mxu0 %v516
      %610 = vmatprep.subr.bf16.mxu0 0
      %611 = vmatpush1.bf16.msra.mxu0 %v517
      %612 = vmatprep.subr.bf16.mxu0 0
      %613 = vmatpush1.bf16.msra.mxu0 %v518
      %614 = vmatprep.subr.bf16.mxu0 0
      %615 = vmatpush1.bf16.msra.mxu0 %v519
      %616 = vmatprep.subr.bf16.mxu0 0
      %617 = vmatpush1.bf16.msra.mxu0 %v520
      %618 = vmatprep.subr.bf16.mxu0 0
      %619 = vmatpush1.bf16.msra.mxu0 %v521
      %620 = vmatprep.subr.bf16.mxu0 0
      %621 = vmatpush1.bf16.msra.mxu0 %v522
      %622 = vmatprep.subr.bf16.mxu0 0
      %623 = vmatpush1.bf16.msra.mxu0 %v523
      %624 = vmatprep.subr.bf16.mxu0 0
      %625 = vmatpush1.bf16.msra.mxu0 %v524
      %626 = vmatprep.subr.bf16.mxu0 0
      %627 = vmatpush1.bf16.msra.mxu0 %v525
      %628 = vmatprep.subr.bf16.mxu0 0
      %629 = vmatpush1.bf16.msra.mxu0 %v526
      %630 = vmatprep.subr.bf16.mxu0 0
      %631 = vmatpush1.bf16.msra.mxu0 %v527
      %632 = vmatprep.mubr.bf16.mxu0 %v363
      %633 = vmatmul.mubr.bf16.gmra.mrb[0].mxu0 %v362
      %v634 = vpop.f32.mrb[0].mxu0
      %v635 = vadd.f32 %v595, %v634
      %v636 = vpop.f32.mrb[0].mxu0
      %v637 = vpop.f32.mrb[0].mxu0
      %v638 = vpop.f32.mrb[0].mxu0
      %639 = vdwg.mxu0
      %v642 = vunpack.c.l.s4 1966171168
      %v643 = vunpack.c.0.s8 %v642
      %v644 = vlaneseq
      %v645 = vshrl.u32 %v644, 7
      %v646 = vsub.s32 %v643, %v645
      %v647 = vrot.slane %v206, %v646
      %v648 = vcombine.high %v647, %v647
      %v650 = vunpack.c.l.s4 1966171168
      %v651 = vunpack.c.0.s8 %v650
      %v652 = vlaneseq
      %v653 = vshrl.u32 %v652, 7
      %v654 = vsub.s32 %v651, %v653
      %v655 = vrot.slane %v647, %v654
      %v657 = vunpack.c.l.s4 1966171168
      %v658 = vunpack.c.0.s8 %v657
      %v659 = vlaneseq
      %v660 = vshrl.u32 %v659, 7
      %v661 = vsub.s32 %v658, %v660
      %v662 = vrot.slane %v648, %v661
      %v663 = vcombine.high %v655, %v655
      %v664 = vcombine.high %v662, %v662
      %v733 = vunpack.c.l.b16 %v207
      %v734 = vunpack.c.l.b16 %v208
      %v735 = vunpack.c.l.b16 %v209
      %v736 = vunpack.c.l.b16 %v210
      %v737 = vunpack.c.l.b16 %v211
      %v738 = vunpack.c.l.b16 %v212
      %v739 = vunpack.c.l.b16 %v213
      %v740 = vunpack.c.l.b16 %v214
      %v741 = vunpack.c.l.b16 %v215
      %v742 = vunpack.c.l.b16 %v216
      %v743 = vunpack.c.l.b16 %v217
      %v744 = vunpack.c.l.b16 %v218
      %v745 = vunpack.c.l.b16 %v219
      %v746 = vunpack.c.l.b16 %v220
      %v747 = vunpack.c.l.b16 %v221
      %v748 = vunpack.c.l.b16 %v222
      %v749 = vunpack.c.l.b16 %v223
      %v750 = vunpack.c.l.b16 %v224
      %v751 = vunpack.c.l.b16 %v225
      %v752 = vunpack.c.l.b16 %v226
      %v753 = vunpack.c.l.b16 %v227
      %v754 = vunpack.c.l.b16 %v228
      %v755 = vunpack.c.l.b16 %v229
      %v756 = vunpack.c.l.b16 %v230
      %v757 = vunpack.c.l.b16 %v231
      %v758 = vunpack.c.l.b16 %v232
      %v759 = vunpack.c.l.b16 %v233
      %v760 = vunpack.c.l.b16 %v234
      %v761 = vunpack.c.l.b16 %v235
      %v762 = vunpack.c.l.b16 %v236
      %v763 = vunpack.c.l.b16 %v237
      %v764 = vunpack.c.l.b16 %v238
      %v765 = vunpack.c.l.b16 %v239
      %v766 = vunpack.c.l.b16 %v240
      %v767 = vunpack.c.l.b16 %v241
      %v768 = vunpack.c.l.b16 %v242
      %v769 = vunpack.c.l.b16 %v243
      %v770 = vunpack.c.l.b16 %v244
      %v771 = vunpack.c.l.b16 %v245
      %v772 = vunpack.c.l.b16 %v246
      %v773 = vunpack.c.l.b16 %v247
      %v774 = vunpack.c.l.b16 %v248
      %v775 = vunpack.c.l.b16 %v249
      %v776 = vunpack.c.l.b16 %v250
      %v777 = vunpack.c.l.b16 %v251
      %v778 = vunpack.c.l.b16 %v252
      %v779 = vunpack.c.l.b16 %v253
      %v780 = vunpack.c.l.b16 %v254
      %v781 = vunpack.c.l.b16 %v255
      %v782 = vunpack.c.l.b16 %v256
      %v783 = vunpack.c.l.b16 %v257
      %v784 = vunpack.c.l.b16 %v258
      %v785 = vunpack.c.l.b16 %v259
      %v786 = vunpack.c.l.b16 %v260
      %v787 = vunpack.c.l.b16 %v261
      %v788 = vunpack.c.l.b16 %v262
      %v789 = vunpack.c.l.b16 %v263
      %v790 = vunpack.c.l.b16 %v264
      %v791 = vunpack.c.l.b16 %v265
      %v792 = vunpack.c.l.b16 %v266
      %v793 = vunpack.c.l.b16 %v267
      %v794 = vunpack.c.l.b16 %v268
      %v795 = vunpack.c.l.b16 %v269
      %v796 = vunpack.c.l.b16 %v270
      %v797 = vpack.c.b16 %v734, %v733
      %v798 = vpack.c.b16 %v736, %v735
      %v799 = vpack.c.b16 %v738, %v737
      %v800 = vpack.c.b16 %v740, %v739
      %v801 = vpack.c.b16 %v742, %v741
      %v802 = vpack.c.b16 %v744, %v743
      %v803 = vpack.c.b16 %v746, %v745
      %v804 = vpack.c.b16 %v748, %v747
      %v805 = vpack.c.b16 %v750, %v749
      %v806 = vpack.c.b16 %v752, %v751
      %v807 = vpack.c.b16 %v754, %v753
      %v808 = vpack.c.b16 %v756, %v755
      %v809 = vpack.c.b16 %v758, %v757
      %v810 = vpack.c.b16 %v760, %v759
      %v811 = vpack.c.b16 %v762, %v761
      %v812 = vpack.c.b16 %v764, %v763
      %v813 = vpack.c.b16 %v766, %v765
      %v814 = vpack.c.b16 %v768, %v767
      %v815 = vpack.c.b16 %v770, %v769
      %v816 = vpack.c.b16 %v772, %v771
      %v817 = vpack.c.b16 %v774, %v773
      %v818 = vpack.c.b16 %v776, %v775
      %v819 = vpack.c.b16 %v778, %v777
      %v820 = vpack.c.b16 %v780, %v779
      %v821 = vpack.c.b16 %v782, %v781
      %v822 = vpack.c.b16 %v784, %v783
      %v823 = vpack.c.b16 %v786, %v785
      %v824 = vpack.c.b16 %v788, %v787
      %v825 = vpack.c.b16 %v790, %v789
      %v826 = vpack.c.b16 %v792, %v791
      %v827 = vpack.c.b16 %v794, %v793
      %v828 = vpack.c.b16 %v796, %v795
      %861 = vmatprep.subr.bf16.mxu0 0
      %862 = vmatpush1.bf16.msra.mxu0 %v797
      %863 = vmatprep.subr.bf16.mxu0 0
      %864 = vmatpush1.bf16.msra.mxu0 %v798
      %865 = vmatprep.subr.bf16.mxu0 0
      %866 = vmatpush1.bf16.msra.mxu0 %v799
      %867 = vmatprep.subr.bf16.mxu0 0
      %868 = vmatpush1.bf16.msra.mxu0 %v800
      %869 = vmatprep.subr.bf16.mxu0 0
      %870 = vmatpush1.bf16.msra.mxu0 %v801
      %871 = vmatprep.subr.bf16.mxu0 0
      %872 = vmatpush1.bf16.msra.mxu0 %v802
      %873 = vmatprep.subr.bf16.mxu0 0
      %874 = vmatpush1.bf16.msra.mxu0 %v803
      %875 = vmatprep.subr.bf16.mxu0 0
      %876 = vmatpush1.bf16.msra.mxu0 %v804
      %877 = vmatprep.subr.bf16.mxu0 0
      %878 = vmatpush1.bf16.msra.mxu0 %v805
      %879 = vmatprep.subr.bf16.mxu0 0
      %880 = vmatpush1.bf16.msra.mxu0 %v806
      %881 = vmatprep.subr.bf16.mxu0 0
      %882 = vmatpush1.bf16.msra.mxu0 %v807
      %883 = vmatprep.subr.bf16.mxu0 0
      %884 = vmatpush1.bf16.msra.mxu0 %v808
      %885 = vmatprep.subr.bf16.mxu0 0
      %886 = vmatpush1.bf16.msra.mxu0 %v809
      %887 = vmatprep.subr.bf16.mxu0 0
      %888 = vmatpush1.bf16.msra.mxu0 %v810
      %889 = vmatprep.subr.bf16.mxu0 0
      %890 = vmatpush1.bf16.msra.mxu0 %v811
      %891 = vmatprep.subr.bf16.mxu0 0
      %892 = vmatpush1.bf16.msra.mxu0 %v812
      %893 = vmatprep.mubr.bf16.mxu0 %v662
      %894 = vmatmul.mubr.bf16.gmra.mrb[0].mxu0 %v655
      %v895 = vpop.f32.mrb[0].mxu0
      %v896 = vadd.f32 %v635, %v895
      %v897 = vpop.f32.mrb[0].mxu0
      %v898 = vpop.f32.mrb[0].mxu0
      %v899 = vpop.f32.mrb[0].mxu0
      %900 = vdwg.mxu0
      %901 = vmatprep.subr.bf16.mxu0 0
      %902 = vmatpush1.bf16.msra.mxu0 %v813
      %903 = vmatprep.subr.bf16.mxu0 0
      %904 = vmatpush1.bf16.msra.mxu0 %v814
      %905 = vmatprep.subr.bf16.mxu0 0
      %906 = vmatpush1.bf16.msra.mxu0 %v815
      %907 = vmatprep.subr.bf16.mxu0 0
      %908 = vmatpush1.bf16.msra.mxu0 %v816
      %909 = vmatprep.subr.bf16.mxu0 0
      %910 = vmatpush1.bf16.msra.mxu0 %v817
      %911 = vmatprep.subr.bf16.mxu0 0
      %912 = vmatpush1.bf16.msra.mxu0 %v818
      %913 = vmatprep.subr.bf16.mxu0 0
      %914 = vmatpush1.bf16.msra.mxu0 %v819
      %915 = vmatprep.subr.bf16.mxu0 0
      %916 = vmatpush1.bf16.msra.mxu0 %v820
      %917 = vmatprep.subr.bf16.mxu0 0
      %918 = vmatpush1.bf16.msra.mxu0 %v821
      %919 = vmatprep.subr.bf16.mxu0 0
      %920 = vmatpush1.bf16.msra.mxu0 %v822
      %921 = vmatprep.subr.bf16.mxu0 0
      %922 = vmatpush1.bf16.msra.mxu0 %v823
      %923 = vmatprep.subr.bf16.mxu0 0
      %924 = vmatpush1.bf16.msra.mxu0 %v824
      %925 = vmatprep.subr.bf16.mxu0 0
      %926 = vmatpush1.bf16.msra.mxu0 %v825
      %927 = vmatprep.subr.bf16.mxu0 0
      %928 = vmatpush1.bf16.msra.mxu0 %v826
      %929 = vmatprep.subr.bf16.mxu0 0
      %930 = vmatpush1.bf16.msra.mxu0 %v827
      %931 = vmatprep.subr.bf16.mxu0 0
      %932 = vmatpush1.bf16.msra.mxu0 %v828
      %933 = vmatprep.mubr.bf16.mxu0 %v664
      %934 = vmatmul.mubr.bf16.gmra.mrb[0].mxu0 %v663
      %v935 = vpop.f32.mrb[0].mxu0
      %v936 = vadd.f32 %v896, %v935
      %v937 = vpop.f32.mrb[0].mxu0
      %v938 = vpop.f32.mrb[0].mxu0
      %v939 = vpop.f32.mrb[0].mxu0
      %940 = vdwg.mxu0
      %s941 = sadd.s32 %s20, 1
      %s942 = smul.u32 %s941, 4
      %s943 = scalar_lea.vmem %s189, %s942
      %v944 = vld [vmem:[%s943] sm:$0xf]
      %s945 = scalar_lea.vmem %s1, 512
      %v946 = vld [vmem:[%s945] sm:$0xf]
      %v947 = vld [vmem:[%s945 + $0x4] sm:$0xf]
      %v948 = vld [vmem:[%s945 + $0x8] sm:$0xf]
      %v949 = vld [vmem:[%s945 + $0xc] sm:$0xf]
      %v950 = vld [vmem:[%s945 + $0x10] sm:$0xf]
      %v951 = vld [vmem:[%s945 + $0x14] sm:$0xf]
      %v952 = vld [vmem:[%s945 + $0x18] sm:$0xf]
      %v953 = vld [vmem:[%s945 + $0x1c] sm:$0xf]
      %v954 = vld [vmem:[%s945 + $0x20] sm:$0xf]
      %v955 = vld [vmem:[%s945 + $0x24] sm:$0xf]
      %v956 = vld [vmem:[%s945 + $0x28] sm:$0xf]
      %v957 = vld [vmem:[%s945 + $0x2c] sm:$0xf]
      %v958 = vld [vmem:[%s945 + $0x30] sm:$0xf]
      %v959 = vld [vmem:[%s945 + $0x34] sm:$0xf]
      %v960 = vld [vmem:[%s945 + $0x38] sm:$0xf]
      %v961 = vld [vmem:[%s945 + $0x3c] sm:$0xf]
      %v962 = vld [vmem:[%s945 + $0x40] sm:$0xf]
      %v963 = vld [vmem:[%s945 + $0x44] sm:$0xf]
      %v964 = vld [vmem:[%s945 + $0x48] sm:$0xf]
      %v965 = vld [vmem:[%s945 + $0x4c] sm:$0xf]
      %v966 = vld [vmem:[%s945 + $0x50] sm:$0xf]
      %v967 = vld [vmem:[%s945 + $0x54] sm:$0xf]
      %v968 = vld [vmem:[%s945 + $0x58] sm:$0xf]
      %v969 = vld [vmem:[%s945 + $0x5c] sm:$0xf]
      %v970 = vld [vmem:[%s945 + $0x60] sm:$0xf]
      %v971 = vld [vmem:[%s945 + $0x64] sm:$0xf]
      %v972 = vld [vmem:[%s945 + $0x68] sm:$0xf]
      %v973 = vld [vmem:[%s945 + $0x6c] sm:$0xf]
      %v974 = vld [vmem:[%s945 + $0x70] sm:$0xf]
      %v975 = vld [vmem:[%s945 + $0x74] sm:$0xf]
      %v976 = vld [vmem:[%s945 + $0x78] sm:$0xf]
      %v977 = vld [vmem:[%s945 + $0x7c] sm:$0xf]
      %v978 = vld [vmem:[%s945 + $0x80] sm:$0xf]
      %v979 = vld [vmem:[%s945 + $0x84] sm:$0xf]
      %v980 = vld [vmem:[%s945 + $0x88] sm:$0xf]
      %v981 = vld [vmem:[%s945 + $0x8c] sm:$0xf]
      %v982 = vld [vmem:[%s945 + $0x90] sm:$0xf]
      %v983 = vld [vmem:[%s945 + $0x94] sm:$0xf]
      %v984 = vld [vmem:[%s945 + $0x98] sm:$0xf]
      %v985 = vld [vmem:[%s945 + $0x9c] sm:$0xf]
      %v986 = vld [vmem:[%s945 + $0xa0] sm:$0xf]
      %v987 = vld [vmem:[%s945 + $0xa4] sm:$0xf]
      %v988 = vld [vmem:[%s945 + $0xa8] sm:$0xf]
      %v989 = vld [vmem:[%s945 + $0xac] sm:$0xf]
      %v990 = vld [vmem:[%s945 + $0xb0] sm:$0xf]
      %v991 = vld [vmem:[%s945 + $0xb4] sm:$0xf]
      %v992 = vld [vmem:[%s945 + $0xb8] sm:$0xf]
      %v993 = vld [vmem:[%s945 + $0xbc] sm:$0xf]
      %v994 = vld [vmem:[%s945 + $0xc0] sm:$0xf]
      %v995 = vld [vmem:[%s945 + $0xc4] sm:$0xf]
      %v996 = vld [vmem:[%s945 + $0xc8] sm:$0xf]
      %v997 = vld [vmem:[%s945 + $0xcc] sm:$0xf]
      %v998 = vld [vmem:[%s945 + $0xd0] sm:$0xf]
      %v999 = vld [vmem:[%s945 + $0xd4] sm:$0xf]
      %v1000 = vld [vmem:[%s945 + $0xd8] sm:$0xf]
      %v1001 = vld [vmem:[%s945 + $0xdc] sm:$0xf]
      %v1002 = vld [vmem:[%s945 + $0xe0] sm:$0xf]
      %v1003 = vld [vmem:[%s945 + $0xe4] sm:$0xf]
      %v1004 = vld [vmem:[%s945 + $0xe8] sm:$0xf]
      %v1005 = vld [vmem:[%s945 + $0xec] sm:$0xf]
      %v1006 = vld [vmem:[%s945 + $0xf0] sm:$0xf]
      %v1007 = vld [vmem:[%s945 + $0xf4] sm:$0xf]
      %v1008 = vld [vmem:[%s945 + $0xf8] sm:$0xf]
      %v1009 = vld [vmem:[%s945 + $0xfc] sm:$0xf]
      %v1012 = vunpack.c.l.s4 1966171168
      %v1013 = vunpack.c.0.s8 %v1012
      %v1014 = vlaneseq
      %v1015 = vshrl.u32 %v1014, 7
      %v1016 = vsub.s32 %v1013, %v1015
      %v1017 = vrot.slane %v944, %v1016
      %v1018 = vcombine.high %v1017, %v1017
      %v1020 = vunpack.c.l.s4 1966171168
      %v1021 = vunpack.c.0.s8 %v1020
      %v1022 = vlaneseq
      %v1023 = vshrl.u32 %v1022, 7
      %v1024 = vsub.s32 %v1021, %v1023
      %v1025 = vrot.slane %v1017, %v1024
      %v1027 = vunpack.c.l.s4 1966171168
      %v1028 = vunpack.c.0.s8 %v1027
      %v1029 = vlaneseq
      %v1030 = vshrl.u32 %v1029, 7
      %v1031 = vsub.s32 %v1028, %v1030
      %v1032 = vrot.slane %v1018, %v1031
      %v1033 = vcombine.high %v1025, %v1025
      %v1034 = vcombine.high %v1032, %v1032
      %v1103 = vunpack.c.l.b16 %v946
      %v1104 = vunpack.c.l.b16 %v947
      %v1105 = vunpack.c.l.b16 %v948
      %v1106 = vunpack.c.l.b16 %v949
      %v1107 = vunpack.c.l.b16 %v950
      %v1108 = vunpack.c.l.b16 %v951
      %v1109 = vunpack.c.l.b16 %v952
      %v1110 = vunpack.c.l.b16 %v953
      %v1111 = vunpack.c.l.b16 %v954
      %v1112 = vunpack.c.l.b16 %v955
      %v1113 = vunpack.c.l.b16 %v956
      %v1114 = vunpack.c.l.b16 %v957
      %v1115 = vunpack.c.l.b16 %v958
      %v1116 = vunpack.c.l.b16 %v959
      %v1117 = vunpack.c.l.b16 %v960
      %v1118 = vunpack.c.l.b16 %v961
      %v1119 = vunpack.c.l.b16 %v962
      %v1120 = vunpack.c.l.b16 %v963
      %v1121 = vunpack.c.l.b16 %v964
      %v1122 = vunpack.c.l.b16 %v965
      %v1123 = vunpack.c.l.b16 %v966
      %v1124 = vunpack.c.l.b16 %v967
      %v1125 = vunpack.c.l.b16 %v968
      %v1126 = vunpack.c.l.b16 %v969
      %v1127 = vunpack.c.l.b16 %v970
      %v1128 = vunpack.c.l.b16 %v971
      %v1129 = vunpack.c.l.b16 %v972
      %v1130 = vunpack.c.l.b16 %v973
      %v1131 = vunpack.c.l.b16 %v974
      %v1132 = vunpack.c.l.b16 %v975
      %v1133 = vunpack.c.l.b16 %v976
      %v1134 = vunpack.c.l.b16 %v977
      %v1135 = vunpack.c.l.b16 %v978
      %v1136 = vunpack.c.l.b16 %v979
      %v1137 = vunpack.c.l.b16 %v980
      %v1138 = vunpack.c.l.b16 %v981
      %v1139 = vunpack.c.l.b16 %v982
      %v1140 = vunpack.c.l.b16 %v983
      %v1141 = vunpack.c.l.b16 %v984
      %v1142 = vunpack.c.l.b16 %v985
      %v1143 = vunpack.c.l.b16 %v986
      %v1144 = vunpack.c.l.b16 %v987
      %v1145 = vunpack.c.l.b16 %v988
      %v1146 = vunpack.c.l.b16 %v989
      %v1147 = vunpack.c.l.b16 %v990
      %v1148 = vunpack.c.l.b16 %v991
      %v1149 = vunpack.c.l.b16 %v992
      %v1150 = vunpack.c.l.b16 %v993
      %v1151 = vunpack.c.l.b16 %v994
      %v1152 = vunpack.c.l.b16 %v995
      %v1153 = vunpack.c.l.b16 %v996
      %v1154 = vunpack.c.l.b16 %v997
      %v1155 = vunpack.c.l.b16 %v998
      %v1156 = vunpack.c.l.b16 %v999
      %v1157 = vunpack.c.l.b16 %v1000
      %v1158 = vunpack.c.l.b16 %v1001
      %v1159 = vunpack.c.l.b16 %v1002
      %v1160 = vunpack.c.l.b16 %v1003
      %v1161 = vunpack.c.l.b16 %v1004
      %v1162 = vunpack.c.l.b16 %v1005
      %v1163 = vunpack.c.l.b16 %v1006
      %v1164 = vunpack.c.l.b16 %v1007
      %v1165 = vunpack.c.l.b16 %v1008
      %v1166 = vunpack.c.l.b16 %v1009
      %v1167 = vpack.c.b16 %v1104, %v1103
      %v1168 = vpack.c.b16 %v1106, %v1105
      %v1169 = vpack.c.b16 %v1108, %v1107
      %v1170 = vpack.c.b16 %v1110, %v1109
      %v1171 = vpack.c.b16 %v1112, %v1111
      %v1172 = vpack.c.b16 %v1114, %v1113
      %v1173 = vpack.c.b16 %v1116, %v1115
      %v1174 = vpack.c.b16 %v1118, %v1117
      %v1175 = vpack.c.b16 %v1120, %v1119
      %v1176 = vpack.c.b16 %v1122, %v1121
      %v1177 = vpack.c.b16 %v1124, %v1123
      %v1178 = vpack.c.b16 %v1126, %v1125
      %v1179 = vpack.c.b16 %v1128, %v1127
      %v1180 = vpack.c.b16 %v1130, %v1129
      %v1181 = vpack.c.b16 %v1132, %v1131
      %v1182 = vpack.c.b16 %v1134, %v1133
      %v1183 = vpack.c.b16 %v1136, %v1135
      %v1184 = vpack.c.b16 %v1138, %v1137
      %v1185 = vpack.c.b16 %v1140, %v1139
      %v1186 = vpack.c.b16 %v1142, %v1141
      %v1187 = vpack.c.b16 %v1144, %v1143
      %v1188 = vpack.c.b16 %v1146, %v1145
      %v1189 = vpack.c.b16 %v1148, %v1147
      %v1190 = vpack.c.b16 %v1150, %v1149
      %v1191 = vpack.c.b16 %v1152, %v1151
      %v1192 = vpack.c.b16 %v1154, %v1153
      %v1193 = vpack.c.b16 %v1156, %v1155
      %v1194 = vpack.c.b16 %v1158, %v1157
      %v1195 = vpack.c.b16 %v1160, %v1159
      %v1196 = vpack.c.b16 %v1162, %v1161
      %v1197 = vpack.c.b16 %v1164, %v1163
      %v1198 = vpack.c.b16 %v1166, %v1165
      %1231 = vmatprep.subr.bf16.mxu0 0
      %1232 = vmatpush1.bf16.msra.mxu0 %v1167
      %1233 = vmatprep.subr.bf16.mxu0 0
      %1234 = vmatpush1.bf16.msra.mxu0 %v1168
      %1235 = vmatprep.subr.bf16.mxu0 0
      %1236 = vmatpush1.bf16.msra.mxu0 %v1169
      %1237 = vmatprep.subr.bf16.mxu0 0
      %1238 = vmatpush1.bf16.msra.mxu0 %v1170
      %1239 = vmatprep.subr.bf16.mxu0 0
      %1240 = vmatpush1.bf16.msra.mxu0 %v1171
      %1241 = vmatprep.subr.bf16.mxu0 0
      %1242 = vmatpush1.bf16.msra.mxu0 %v1172
      %1243 = vmatprep.subr.bf16.mxu0 0
      %1244 = vmatpush1.bf16.msra.mxu0 %v1173
      %1245 = vmatprep.subr.bf16.mxu0 0
      %1246 = vmatpush1.bf16.msra.mxu0 %v1174
      %1247 = vmatprep.subr.bf16.mxu0 0
      %1248 = vmatpush1.bf16.msra.mxu0 %v1175
      %1249 = vmatprep.subr.bf16.mxu0 0
      %1250 = vmatpush1.bf16.msra.mxu0 %v1176
      %1251 = vmatprep.subr.bf16.mxu0 0
      %1252 = vmatpush1.bf16.msra.mxu0 %v1177
      %1253 = vmatprep.subr.bf16.mxu0 0
      %1254 = vmatpush1.bf16.msra.mxu0 %v1178
      %1255 = vmatprep.subr.bf16.mxu0 0
      %1256 = vmatpush1.bf16.msra.mxu0 %v1179
      %1257 = vmatprep.subr.bf16.mxu0 0
      %1258 = vmatpush1.bf16.msra.mxu0 %v1180
      %1259 = vmatprep.subr.bf16.mxu0 0
      %1260 = vmatpush1.bf16.msra.mxu0 %v1181
      %1261 = vmatprep.subr.bf16.mxu0 0
      %1262 = vmatpush1.bf16.msra.mxu0 %v1182
      %1263 = vmatprep.mubr.bf16.mxu0 %v1032
      %1264 = vmatmul.mubr.bf16.gmra.mrb[0].mxu0 %v1025
      %v1265 = vpop.f32.mrb[0].mxu0
      %v1266 = vadd.f32 0.0, %v1265
      %v1267 = vpop.f32.mrb[0].mxu0
      %v1268 = vpop.f32.mrb[0].mxu0
      %v1269 = vpop.f32.mrb[0].mxu0
      %1270 = vdwg.mxu0
      %1271 = vmatprep.subr.bf16.mxu0 0
      %1272 = vmatpush1.bf16.msra.mxu0 %v1183
      %1273 = vmatprep.subr.bf16.mxu0 0
      %1274 = vmatpush1.bf16.msra.mxu0 %v1184
      %1275 = vmatprep.subr.bf16.mxu0 0
      %1276 = vmatpush1.bf16.msra.mxu0 %v1185
      %1277 = vmatprep.subr.bf16.mxu0 0
      %1278 = vmatpush1.bf16.msra.mxu0 %v1186
      %1279 = vmatprep.subr.bf16.mxu0 0
      %1280 = vmatpush1.bf16.msra.mxu0 %v1187
      %1281 = vmatprep.subr.bf16.mxu0 0
      %1282 = vmatpush1.bf16.msra.mxu0 %v1188
      %1283 = vmatprep.subr.bf16.mxu0 0
      %1284 = vmatpush1.bf16.msra.mxu0 %v1189
      %1285 = vmatprep.subr.bf16.mxu0 0
      %1286 = vmatpush1.bf16.msra.mxu0 %v1190
      %1287 = vmatprep.subr.bf16.mxu0 0
      %1288 = vmatpush1.bf16.msra.mxu0 %v1191
      %1289 = vmatprep.subr.bf16.mxu0 0
      %1290 = vmatpush1.bf16.msra.mxu0 %v1192
      %1291 = vmatprep.subr.bf16.mxu0 0
      %1292 = vmatpush1.bf16.msra.mxu0 %v1193
      %1293 = vmatprep.subr.bf16.mxu0 0
      %1294 = vmatpush1.bf16.msra.mxu0 %v1194
      %1295 = vmatprep.subr.bf16.mxu0 0
      %1296 = vmatpush1.bf16.msra.mxu0 %v1195
      %1297 = vmatprep.subr.bf16.mxu0 0
      %1298 = vmatpush1.bf16.msra.mxu0 %v1196
      %1299 = vmatprep.subr.bf16.mxu0 0
      %1300 = vmatpush1.bf16.msra.mxu0 %v1197
      %1301 = vmatprep.subr.bf16.mxu0 0
      %1302 = vmatpush1.bf16.msra.mxu0 %v1198
      %1303 = vmatprep.mubr.bf16.mxu0 %v1034
      %1304 = vmatmul.mubr.bf16.gmra.mrb[0].mxu0 %v1033
      %v1305 = vpop.f32.mrb[0].mxu0
      %v1306 = vadd.f32 %v1266, %v1305
      %v1307 = vpop.f32.mrb[0].mxu0
      %v1308 = vpop.f32.mrb[0].mxu0
      %v1309 = vpop.f32.mrb[0].mxu0
      %1310 = vdwg.mxu0
      %v1311 = vadd.f32 %v936, %v1306
      %s1312 = sadd.s32 %s942, 8
      %s1313 = scalar_lea.vmem %s189, %s1312
      %v1314 = vld [vmem:[%s1313] sm:$0xf]
      %s1315 = scalar_lea.vmem %s1, 768
      %v1316 = vld [vmem:[%s1315] sm:$0xf]
      %v1317 = vld [vmem:[%s1315 + $0x4] sm:$0xf]
      %v1318 = vld [vmem:[%s1315 + $0x8] sm:$0xf]
      %v1319 = vld [vmem:[%s1315 + $0xc] sm:$0xf]
      %v1320 = vld [vmem:[%s1315 + $0x10] sm:$0xf]
      %v1321 = vld [vmem:[%s1315 + $0x14] sm:$0xf]
      %v1322 = vld [vmem:[%s1315 + $0x18] sm:$0xf]
      %v1323 = vld [vmem:[%s1315 + $0x1c] sm:$0xf]
      %v1324 = vld [vmem:[%s1315 + $0x20] sm:$0xf]
      %v1325 = vld [vmem:[%s1315 + $0x24] sm:$0xf]
      %v1326 = vld [vmem:[%s1315 + $0x28] sm:$0xf]
      %v1327 = vld [vmem:[%s1315 + $0x2c] sm:$0xf]
      %v1328 = vld [vmem:[%s1315 + $0x30] sm:$0xf]
      %v1329 = vld [vmem:[%s1315 + $0x34] sm:$0xf]
      %v1330 = vld [vmem:[%s1315 + $0x38] sm:$0xf]
      %v1331 = vld [vmem:[%s1315 + $0x3c] sm:$0xf]
      %v1332 = vld [vmem:[%s1315 + $0x40] sm:$0xf]
      %v1333 = vld [vmem:[%s1315 + $0x44] sm:$0xf]
      %v1334 = vld [vmem:[%s1315 + $0x48] sm:$0xf]
      %v1335 = vld [vmem:[%s1315 + $0x4c] sm:$0xf]
      %v1336 = vld [vmem:[%s1315 + $0x50] sm:$0xf]
      %v1337 = vld [vmem:[%s1315 + $0x54] sm:$0xf]
      %v1338 = vld [vmem:[%s1315 + $0x58] sm:$0xf]
      %v1339 = vld [vmem:[%s1315 + $0x5c] sm:$0xf]
      %v1340 = vld [vmem:[%s1315 + $0x60] sm:$0xf]
      %v1341 = vld [vmem:[%s1315 + $0x64] sm:$0xf]
      %v1342 = vld [vmem:[%s1315 + $0x68] sm:$0xf]
      %v1343 = vld [vmem:[%s1315 + $0x6c] sm:$0xf]
      %v1344 = vld [vmem:[%s1315 + $0x70] sm:$0xf]
      %v1345 = vld [vmem:[%s1315 + $0x74] sm:$0xf]
      %v1346 = vld [vmem:[%s1315 + $0x78] sm:$0xf]
      %v1347 = vld [vmem:[%s1315 + $0x7c] sm:$0xf]
      %v1348 = vld [vmem:[%s1315 + $0x80] sm:$0xf]
      %v1349 = vld [vmem:[%s1315 + $0x84] sm:$0xf]
      %v1350 = vld [vmem:[%s1315 + $0x88] sm:$0xf]
      %v1351 = vld [vmem:[%s1315 + $0x8c] sm:$0xf]
      %v1352 = vld [vmem:[%s1315 + $0x90] sm:$0xf]
      %v1353 = vld [vmem:[%s1315 + $0x94] sm:$0xf]
      %v1354 = vld [vmem:[%s1315 + $0x98] sm:$0xf]
      %v1355 = vld [vmem:[%s1315 + $0x9c] sm:$0xf]
      %v1356 = vld [vmem:[%s1315 + $0xa0] sm:$0xf]
      %v1357 = vld [vmem:[%s1315 + $0xa4] sm:$0xf]
      %v1358 = vld [vmem:[%s1315 + $0xa8] sm:$0xf]
      %v1359 = vld [vmem:[%s1315 + $0xac] sm:$0xf]
      %v1360 = vld [vmem:[%s1315 + $0xb0] sm:$0xf]
      %v1361 = vld [vmem:[%s1315 + $0xb4] sm:$0xf]
      %v1362 = vld [vmem:[%s1315 + $0xb8] sm:$0xf]
      %v1363 = vld [vmem:[%s1315 + $0xbc] sm:$0xf]
      %v1364 = vld [vmem:[%s1315 + $0xc0] sm:$0xf]
      %v1365 = vld [vmem:[%s1315 + $0xc4] sm:$0xf]
      %v1366 = vld [vmem:[%s1315 + $0xc8] sm:$0xf]
      %v1367 = vld [vmem:[%s1315 + $0xcc] sm:$0xf]
      %v1368 = vld [vmem:[%s1315 + $0xd0] sm:$0xf]
      %v1369 = vld [vmem:[%s1315 + $0xd4] sm:$0xf]
      %v1370 = vld [vmem:[%s1315 + $0xd8] sm:$0xf]
      %v1371 = vld [vmem:[%s1315 + $0xdc] sm:$0xf]
      %v1372 = vld [vmem:[%s1315 + $0xe0] sm:$0xf]
      %v1373 = vld [vmem:[%s1315 + $0xe4] sm:$0xf]
      %v1374 = vld [vmem:[%s1315 + $0xe8] sm:$0xf]
      %v1375 = vld [vmem:[%s1315 + $0xec] sm:$0xf]
      %v1376 = vld [vmem:[%s1315 + $0xf0] sm:$0xf]
      %v1377 = vld [vmem:[%s1315 + $0xf4] sm:$0xf]
      %v1378 = vld [vmem:[%s1315 + $0xf8] sm:$0xf]
      %v1379 = vld [vmem:[%s1315 + $0xfc] sm:$0xf]
      %v1382 = vunpack.c.l.s4 1966171168
      %v1383 = vunpack.c.0.s8 %v1382
      %v1384 = vlaneseq
      %v1385 = vshrl.u32 %v1384, 7
      %v1386 = vsub.s32 %v1383, %v1385
      %v1387 = vrot.slane %v1314, %v1386
      %v1388 = vcombine.high %v1387, %v1387
      %v1390 = vunpack.c.l.s4 1966171168
      %v1391 = vunpack.c.0.s8 %v1390
      %v1392 = vlaneseq
      %v1393 = vshrl.u32 %v1392, 7
      %v1394 = vsub.s32 %v1391, %v1393
      %v1395 = vrot.slane %v1387, %v1394
      %v1397 = vunpack.c.l.s4 1966171168
      %v1398 = vunpack.c.0.s8 %v1397
      %v1399 = vlaneseq
      %v1400 = vshrl.u32 %v1399, 7
      %v1401 = vsub.s32 %v1398, %v1400
      %v1402 = vrot.slane %v1388, %v1401
      %v1403 = vcombine.high %v1395, %v1395
      %v1404 = vcombine.high %v1402, %v1402
      %v1473 = vunpack.c.l.b16 %v1316
      %v1474 = vunpack.c.l.b16 %v1317
      %v1475 = vunpack.c.l.b16 %v1318
      %v1476 = vunpack.c.l.b16 %v1319
      %v1477 = vunpack.c.l.b16 %v1320
      %v1478 = vunpack.c.l.b16 %v1321
      %v1479 = vunpack.c.l.b16 %v1322
      %v1480 = vunpack.c.l.b16 %v1323
      %v1481 = vunpack.c.l.b16 %v1324
      %v1482 = vunpack.c.l.b16 %v1325
      %v1483 = vunpack.c.l.b16 %v1326
      %v1484 = vunpack.c.l.b16 %v1327
      %v1485 = vunpack.c.l.b16 %v1328
      %v1486 = vunpack.c.l.b16 %v1329
      %v1487 = vunpack.c.l.b16 %v1330
      %v1488 = vunpack.c.l.b16 %v1331
      %v1489 = vunpack.c.l.b16 %v1332
      %v1490 = vunpack.c.l.b16 %v1333
      %v1491 = vunpack.c.l.b16 %v1334
      %v1492 = vunpack.c.l.b16 %v1335
      %v1493 = vunpack.c.l.b16 %v1336
      %v1494 = vunpack.c.l.b16 %v1337
      %v1495 = vunpack.c.l.b16 %v1338
      %v1496 = vunpack.c.l.b16 %v1339
      %v1497 = vunpack.c.l.b16 %v1340
      %v1498 = vunpack.c.l.b16 %v1341
      %v1499 = vunpack.c.l.b16 %v1342
      %v1500 = vunpack.c.l.b16 %v1343
      %v1501 = vunpack.c.l.b16 %v1344
      %v1502 = vunpack.c.l.b16 %v1345
      %v1503 = vunpack.c.l.b16 %v1346
      %v1504 = vunpack.c.l.b16 %v1347
      %v1505 = vunpack.c.l.b16 %v1348
      %v1506 = vunpack.c.l.b16 %v1349
      %v1507 = vunpack.c.l.b16 %v1350
      %v1508 = vunpack.c.l.b16 %v1351
      %v1509 = vunpack.c.l.b16 %v1352
      %v1510 = vunpack.c.l.b16 %v1353
      %v1511 = vunpack.c.l.b16 %v1354
      %v1512 = vunpack.c.l.b16 %v1355
      %v1513 = vunpack.c.l.b16 %v1356
      %v1514 = vunpack.c.l.b16 %v1357
      %v1515 = vunpack.c.l.b16 %v1358
      %v1516 = vunpack.c.l.b16 %v1359
      %v1517 = vunpack.c.l.b16 %v1360
      %v1518 = vunpack.c.l.b16 %v1361
      %v1519 = vunpack.c.l.b16 %v1362
      %v1520 = vunpack.c.l.b16 %v1363
      %v1521 = vunpack.c.l.b16 %v1364
      %v1522 = vunpack.c.l.b16 %v1365
      %v1523 = vunpack.c.l.b16 %v1366
      %v1524 = vunpack.c.l.b16 %v1367
      %v1525 = vunpack.c.l.b16 %v1368
      %v1526 = vunpack.c.l.b16 %v1369
      %v1527 = vunpack.c.l.b16 %v1370
      %v1528 = vunpack.c.l.b16 %v1371
      %v1529 = vunpack.c.l.b16 %v1372
      %v1530 = vunpack.c.l.b16 %v1373
      %v1531 = vunpack.c.l.b16 %v1374
      %v1532 = vunpack.c.l.b16 %v1375
      %v1533 = vunpack.c.l.b16 %v1376
      %v1534 = vunpack.c.l.b16 %v1377
      %v1535 = vunpack.c.l.b16 %v1378
      %v1536 = vunpack.c.l.b16 %v1379
      %v1537 = vpack.c.b16 %v1474, %v1473
      %v1538 = vpack.c.b16 %v1476, %v1475
      %v1539 = vpack.c.b16 %v1478, %v1477
      %v1540 = vpack.c.b16 %v1480, %v1479
      %v1541 = vpack.c.b16 %v1482, %v1481
      %v1542 = vpack.c.b16 %v1484, %v1483
      %v1543 = vpack.c.b16 %v1486, %v1485
      %v1544 = vpack.c.b16 %v1488, %v1487
      %v1545 = vpack.c.b16 %v1490, %v1489
      %v1546 = vpack.c.b16 %v1492, %v1491
      %v1547 = vpack.c.b16 %v1494, %v1493
      %v1548 = vpack.c.b16 %v1496, %v1495
      %v1549 = vpack.c.b16 %v1498, %v1497
      %v1550 = vpack.c.b16 %v1500, %v1499
      %v1551 = vpack.c.b16 %v1502, %v1501
      %v1552 = vpack.c.b16 %v1504, %v1503
      %v1553 = vpack.c.b16 %v1506, %v1505
      %v1554 = vpack.c.b16 %v1508, %v1507
      %v1555 = vpack.c.b16 %v1510, %v1509
      %v1556 = vpack.c.b16 %v1512, %v1511
      %v1557 = vpack.c.b16 %v1514, %v1513
      %v1558 = vpack.c.b16 %v1516, %v1515
      %v1559 = vpack.c.b16 %v1518, %v1517
      %v1560 = vpack.c.b16 %v1520, %v1519
      %v1561 = vpack.c.b16 %v1522, %v1521
      %v1562 = vpack.c.b16 %v1524, %v1523
      %v1563 = vpack.c.b16 %v1526, %v1525
      %v1564 = vpack.c.b16 %v1528, %v1527
      %v1565 = vpack.c.b16 %v1530, %v1529
      %v1566 = vpack.c.b16 %v1532, %v1531
      %v1567 = vpack.c.b16 %v1534, %v1533
      %v1568 = vpack.c.b16 %v1536, %v1535
      %1601 = vmatprep.subr.bf16.mxu0 0
      %1602 = vmatpush1.bf16.msra.mxu0 %v1537
      %1603 = vmatprep.subr.bf16.mxu0 0
      %1604 = vmatpush1.bf16.msra.mxu0 %v1538
      %1605 = vmatprep.subr.bf16.mxu0 0
      %1606 = vmatpush1.bf16.msra.mxu0 %v1539
      %1607 = vmatprep.subr.bf16.mxu0 0
      %1608 = vmatpush1.bf16.msra.mxu0 %v1540
      %1609 = vmatprep.subr.bf16.mxu0 0
      %1610 = vmatpush1.bf16.msra.mxu0 %v1541
      %1611 = vmatprep.subr.bf16.mxu0 0
      %1612 = vmatpush1.bf16.msra.mxu0 %v1542
      %1613 = vmatprep.subr.bf16.mxu0 0
      %1614 = vmatpush1.bf16.msra.mxu0 %v1543
      %1615 = vmatprep.subr.bf16.mxu0 0
      %1616 = vmatpush1.bf16.msra.mxu0 %v1544
      %1617 = vmatprep.subr.bf16.mxu0 0
      %1618 = vmatpush1.bf16.msra.mxu0 %v1545
      %1619 = vmatprep.subr.bf16.mxu0 0
      %1620 = vmatpush1.bf16.msra.mxu0 %v1546
      %1621 = vmatprep.subr.bf16.mxu0 0
      %1622 = vmatpush1.bf16.msra.mxu0 %v1547
      %1623 = vmatprep.subr.bf16.mxu0 0
      %1624 = vmatpush1.bf16.msra.mxu0 %v1548
      %1625 = vmatprep.subr.bf16.mxu0 0
      %1626 = vmatpush1.bf16.msra.mxu0 %v1549
      %1627 = vmatprep.subr.bf16.mxu0 0
      %1628 = vmatpush1.bf16.msra.mxu0 %v1550
      %1629 = vmatprep.subr.bf16.mxu0 0
      %1630 = vmatpush1.bf16.msra.mxu0 %v1551
      %1631 = vmatprep.subr.bf16.mxu0 0
      %1632 = vmatpush1.bf16.msra.mxu0 %v1552
      %1633 = vmatprep.mubr.bf16.mxu0 %v1402
      %1634 = vmatmul.mubr.bf16.gmra.mrb[0].mxu0 %v1395
      %v1635 = vpop.f32.mrb[0].mxu0
      %v1636 = vadd.f32 0.0, %v1635
      %v1637 = vpop.f32.mrb[0].mxu0
      %v1638 = vpop.f32.mrb[0].mxu0
      %v1639 = vpop.f32.mrb[0].mxu0
      %1640 = vdwg.mxu0
      %1641 = vmatprep.subr.bf16.mxu0 0
      %1642 = vmatpush1.bf16.msra.mxu0 %v1553
      %1643 = vmatprep.subr.bf16.mxu0 0
      %1644 = vmatpush1.bf16.msra.mxu0 %v1554
      %1645 = vmatprep.subr.bf16.mxu0 0
      %1646 = vmatpush1.bf16.msra.mxu0 %v1555
      %1647 = vmatprep.subr.bf16.mxu0 0
      %1648 = vmatpush1.bf16.msra.mxu0 %v1556
      %1649 = vmatprep.subr.bf16.mxu0 0
      %1650 = vmatpush1.bf16.msra.mxu0 %v1557
      %1651 = vmatprep.subr.bf16.mxu0 0
      %1652 = vmatpush1.bf16.msra.mxu0 %v1558
      %1653 = vmatprep.subr.bf16.mxu0 0
      %1654 = vmatpush1.bf16.msra.mxu0 %v1559
      %1655 = vmatprep.subr.bf16.mxu0 0
      %1656 = vmatpush1.bf16.msra.mxu0 %v1560
      %1657 = vmatprep.subr.bf16.mxu0 0
      %1658 = vmatpush1.bf16.msra.mxu0 %v1561
      %1659 = vmatprep.subr.bf16.mxu0 0
      %1660 = vmatpush1.bf16.msra.mxu0 %v1562
      %1661 = vmatprep.subr.bf16.mxu0 0
      %1662 = vmatpush1.bf16.msra.mxu0 %v1563
      %1663 = vmatprep.subr.bf16.mxu0 0
      %1664 = vmatpush1.bf16.msra.mxu0 %v1564
      %1665 = vmatprep.subr.bf16.mxu0 0
      %1666 = vmatpush1.bf16.msra.mxu0 %v1565
      %1667 = vmatprep.subr.bf16.mxu0 0
      %1668 = vmatpush1.bf16.msra.mxu0 %v1566
      %1669 = vmatprep.subr.bf16.mxu0 0
      %1670 = vmatpush1.bf16.msra.mxu0 %v1567
      %1671 = vmatprep.subr.bf16.mxu0 0
      %1672 = vmatpush1.bf16.msra.mxu0 %v1568
      %1673 = vmatprep.mubr.bf16.mxu0 %v1404
      %1674 = vmatmul.mubr.bf16.gmra.mrb[0].mxu0 %v1403
      %v1675 = vpop.f32.mrb[0].mxu0
      %v1676 = vadd.f32 %v1636, %v1675
      %v1677 = vpop.f32.mrb[0].mxu0
      %v1678 = vpop.f32.mrb[0].mxu0
      %v1679 = vpop.f32.mrb[0].mxu0
      %1680 = vdwg.mxu0
      %v1681 = vadd.f32 %v1311, %v1676
      %vm1682 = vcmask 516096
      %1683 = vst.msk [vmem:[%s195] sm:$0x1] %vm1682, %v1681
      %v1684 = vadd.f32 %v1681, 0.0
      %1685 = vst.msk [vmem:[%s202] sm:$0x1] %vm1682, %v1684
      %v1686 = vmul.f32 %v1681, %v1681
      %v1687 = vadd.f32 %v1686, 0.0
      %1688 = vst.msk [vmem:[%s202 + $0x1] sm:$0x1] %vm1682, %v1687
      %p1689 = scmp.lt.s32.totalorder %s19, 1
      %s1690 = scalar_select %p1689, %s19, 1
      %p1691 = scmp.lt.s32.totalorder %s20, 0
      %s1692 = scalar_select %p1691, %s20, 0
      %s1693 = sadd.s32 %s1692, %s1690
      %s1694 = scalar_lea.vmem %s2, %s1693
      %p1695 = scmp.lt.s32.totalorder %s19, 1
      %s1696 = scalar_select %p1695, %s19, 1
      %p1697 = scmp.lt.s32.totalorder %s20, 0
      %s1698 = scalar_select %p1697, %s20, 0
      %s1699 = sadd.s32 %s1698, %s1696
      %s1700 = smul.addr %s1699, 2
      %s1701 = scalar_lea.vmem %s3, %s1700
      // Predicated region
      $region29: #{conv3d_encoder_forward.15} parent=27 // pred_check
        %p1702 = pneg %p94
      $region30: #{conv3d_encoder_forward.15} parent=27 // pred_check_branch
        %1704 = sbr.rel (%p1702) target = $region32
      $region31: #{conv3d_encoder_forward.15} parent=27 // pred_region
        _
      $region32: #{conv3d_encoder_forward.15} parent=27 // pred_fallthru
        _
      // Predicated region
      $region33: #{conv3d_encoder_forward.15} parent=27 // pred_check
        %p1705 = pneg %p122
      $region34: #{conv3d_encoder_forward.15} parent=27 // pred_check_branch
        %1707 = sbr.rel (%p1705) target = $region36
      $region35: #{conv3d_encoder_forward.15} parent=27 // pred_region
        _
      $region36: #{conv3d_encoder_forward.15} parent=27 // pred_fallthru
        _
    $region28: #{conv3d_encoder_forward.15} parent=5 // pred_fallthru
      _
    %p1708 = scmp.le.s32.totalorder 2, %s10
    // Predicated region
    $region37: #{conv3d_encoder_forward.15} parent=5 // pred_check
      %p1709 = pneg %p1708
    $region38: #{conv3d_encoder_forward.15} parent=5 // pred_check_branch
      %1711 = sbr.rel (%p1709) target = $region40
    $region39: #{conv3d_encoder_forward.15} parent=5 // pred_region
      %s1712 = ssub.s32 %s10, 2
      // Predicated region
      $region41: #{conv3d_encoder_forward.15} parent=39 // pred_check
        %p1713 = pneg %p100
      $region42: #{conv3d_encoder_forward.15} parent=39 // pred_check_branch
        %1715 = sbr.rel (%p1713) target = $region44
      $region43: #{conv3d_encoder_forward.15} parent=39 // pred_region
        %p1716 = scmp.lt.s32.totalorder %s21, 1
        %s1717 = scalar_select %p1716, %s21, 1
        %p1718 = scmp.lt.s32.totalorder %s22, 0
        %s1719 = scalar_select %p1718, %s22, 0
        %s1720 = sadd.s32 %s1719, %s1717
        %s1721 = scalar_lea.vmem %s2, %s1720
      $region44: #{conv3d_encoder_forward.15} parent=39 // pred_fallthru
        _
      // Predicated region
      $region45: #{conv3d_encoder_forward.15} parent=39 // pred_check
        %p1722 = pneg %p128
      $region46: #{conv3d_encoder_forward.15} parent=39 // pred_check_branch
        %1724 = sbr.rel (%p1722) target = $region48
      $region47: #{conv3d_encoder_forward.15} parent=39 // pred_region
        %p1725 = scmp.lt.s32.totalorder %s21, 1
        %s1726 = scalar_select %p1725, %s21, 1
        %p1727 = scmp.lt.s32.totalorder %s22, 0
        %s1728 = scalar_select %p1727, %s22, 0
        %s1729 = sadd.s32 %s1728, %s1726
        %s1730 = smul.addr %s1729, 2
        %s1731 = scalar_lea.vmem %s3, %s1730
      $region48: #{conv3d_encoder_forward.15} parent=39 // pred_fallthru
        _
    $region40: #{conv3d_encoder_forward.15} parent=5 // pred_fallthru
      _
  $region6: #{conv3d_encoder_forward.15} parent=0 // loop_footer
    %s14 = sadd.s32 1, %s10
  $region7: #{conv3d_encoder_forward.15} parent=0 // loop_footer_branch
    %9 = sbr.rel target = $region3
  $region8: #{conv3d_encoder_forward.15} parent=0 // loop_exit
    _

// kernel: conv3d_encoder_forward.17
$region0: #{conv3d_encoder_forward.17}
  #allocation0 [shape = 'u32[]', space=smem, size = 0x4, offset = 0x4, fixed_abs, tag = 'smem constant byte address 0x4 - core index']
  #allocation1 [shape = 'u32[144,128]{1,0:T(1,128)}', space=vmem, size = 0x12000, scoped, tag = 'internal scratch']
  %s0 = inlined_call_operand.vmem [shape: bf16[2,64], index: 0, kind: input, shape index: {}]
  %s1 = inlined_call_operand.vmem [shape: bf16[32,64], index: 1, kind: input, shape index: {}]
  %s2 = inlined_call_operand.vmem [shape: f32[1,32], index: 2, kind: input, shape index: {}]
  %s3 = inlined_call_operand.hbm [shape: f32[2,32], index: 3, kind: output, shape index: {}]
  %s4 = sld [smem:[#allocation0]]
  $region22: #{conv3d_encoder_forward.17} parent=0
    _
  %s6 = ssub.s32 1, %s4
  %s7 = scalar_select 0, %s6, %s4
  $region1: #{conv3d_encoder_forward.17} parent=0
    #allocation2 [shape = 'u8[1024]{0}', space=vmem, size = 0x400, scoped, tag = 'output window, operand 0, single buffered']
    #allocation3 [shape = 's32[1]{0}', space=sflag, size = 0x4, scoped, tag = 'scoped memory for conv3d_encoder_forward.17']
    %8 = vsyncpa [#allocation3], 0
    // Predicated region
    $region2: #{conv3d_encoder_forward.17} parent=1 // pred_check
      _
    $region3: #{conv3d_encoder_forward.17} parent=1 // pred_check_branch
      %10 = sbr.rel (0) target = $region5
    $region4: #{conv3d_encoder_forward.17} parent=1 // pred_region
      _
    $region5: #{conv3d_encoder_forward.17} parent=1 // pred_fallthru
      _
    // Predicated region
    $region6: #{conv3d_encoder_forward.17} parent=1 // pred_check
      _
    $region7: #{conv3d_encoder_forward.17} parent=1 // pred_check_branch
      %12 = sbr.rel (0) target = $region9
    $region8: #{conv3d_encoder_forward.17} parent=1 // pred_region
      _
    $region9: #{conv3d_encoder_forward.17} parent=1 // pred_fallthru
      _
    // Predicated region
    $region10: #{conv3d_encoder_forward.17} parent=1 // pred_check
      _
    $region11: #{conv3d_encoder_forward.17} parent=1 // pred_check_branch
      %14 = sbr.rel (0) target = $region13
    $region12: #{conv3d_encoder_forward.17} parent=1 // pred_region
      _
    $region13: #{conv3d_encoder_forward.17} parent=1 // pred_fallthru
      _
    %v16 = vld [vmem:[%s0] sm:$0x1]
    %v17 = vld [vmem:[%s1] sm:$0xf]
    %v18 = vld [vmem:[%s1 + $0x4] sm:$0xf]
    %v19 = vld [vmem:[%s1 + $0x8] sm:$0xf]
    %v20 = vld [vmem:[%s1 + $0xc] sm:$0xf]
    %v21 = vld [vmem:[%s2] sm:$0x1]
    %v23 = vlaneseq
    %v24 = vshrl.u32 %v23, 7
    %v25 = vsub.s32 0, %v24
    %v26 = vrot.slane %v21, %v25
    %v32 = vunpack.c.l.b16 %v17
    %v33 = vunpack.c.l.b16 %v18
    %v34 = vunpack.c.l.b16 %v19
    %v35 = vunpack.c.l.b16 %v20
    %v36 = vpack.c.b16 %v33, %v32
    %v37 = vpack.c.b16 %v35, %v34
    %vm38 = vcmask 523264
    %v40 = vsel %vm38, %v16, 0
    %v43 = vsel %vm38, %v36, 0
    %v46 = vsel %vm38, %v37, 0
    %48 = vmatprep.subr.bf16.mxu0 0
    %49 = vmatpush1.bf16.xpose.msra.mxu0 %v43
    %50 = vmatprep.subr.bf16.mxu0 0
    %51 = vmatpush1.bf16.xpose.msra.mxu0 %v46
    %52 = vmatprep.subr.bf16.mxu0 0
    %53 = vmatpush1.bf16.xpose.msra.mxu0 0
    %54 = vmatprep.subr.bf16.mxu0 0
    %55 = vmatpush1.bf16.xpose.msra.mxu0 0
    %56 = vmatprep.subr.bf16.mxu0 0
    %57 = vmatpush1.bf16.xpose.msra.mxu0 0
    %58 = vmatprep.subr.bf16.mxu0 0
    %59 = vmatpush1.bf16.xpose.msra.mxu0 0
    %60 = vmatprep.subr.bf16.mxu0 0
    %61 = vmatpush1.bf16.xpose.msra.mxu0 0
    %62 = vmatprep.subr.bf16.mxu0 0
    %63 = vmatpush1.bf16.xpose.msra.mxu0 0
    %64 = vmatprep.subr.bf16.mxu0 0
    %65 = vmatpush1.bf16.xpose.msra.mxu0 0
    %66 = vmatprep.subr.bf16.mxu0 0
    %67 = vmatpush1.bf16.xpose.msra.mxu0 0
    %68 = vmatprep.subr.bf16.mxu0 0
    %69 = vmatpush1.bf16.xpose.msra.mxu0 0
    %70 = vmatprep.subr.bf16.mxu0 0
    %71 = vmatpush1.bf16.xpose.msra.mxu0 0
    %72 = vmatprep.subr.bf16.mxu0 0
    %73 = vmatpush1.bf16.xpose.msra.mxu0 0
    %74 = vmatprep.subr.bf16.mxu0 0
    %75 = vmatpush1.bf16.xpose.msra.mxu0 0
    %76 = vmatprep.subr.bf16.mxu0 0
    %77 = vmatpush1.bf16.xpose.msra.mxu0 0
    %78 = vmatprep.subr.bf16.mxu0 0
    %79 = vmatpush1.bf16.xpose.msra.mxu0 0
    %80 = vmatprep.mubr.bf16.mxu0 0
    %81 = vmatmul.mubr.bf16.gmra.mrb[0].mxu0 %v40
    %v82 = vpop.f32.mrb[0].mxu0
    %v83 = vadd.f32 %v26, %v82
    %v84 = vpop.f32.mrb[0].mxu0
    %v85 = vpop.f32.mrb[0].mxu0
    %v86 = vpop.f32.mrb[0].mxu0
    %87 = vdwg.mxu0
    %vm88 = vcmask 254976
    %89 = vst.msk [vmem:[#allocation2] sm:$0x3] %vm88, %v83
    // Predicated region
    $region14: #{conv3d_encoder_forward.17} parent=1 // pred_check
      _
    $region15: #{conv3d_encoder_forward.17} parent=1 // pred_check_branch
      %91 = sbr.rel (0) target = $region17
    $region16: #{conv3d_encoder_forward.17} parent=1 // pred_region
      %s93 = ssub.s32 32, 32
      %94 = vsyncadd [#allocation3], %s93
      %s96 = sshll.u32 [#allocation2], 4
      %s97 = int_to_ptr.vmem [resolvable:$true] %s96
      %99 = dma.vmem_to_hbm [thread:$0]  %s97, 32, %s3, [#allocation3]
    $region17: #{conv3d_encoder_forward.17} parent=1 // pred_fallthru
      _
    // Predicated region
    $region18: #{conv3d_encoder_forward.17} parent=1 // pred_check
      _
    $region19: #{conv3d_encoder_forward.17} parent=1 // pred_check_branch
      %101 = sbr.rel (0) target = $region21
    $region20: #{conv3d_encoder_forward.17} parent=1 // pred_region
      %102 = dma.done [#allocation3], 32
    $region21: #{conv3d_encoder_forward.17} parent=1 // pred_fallthru
      _
    %103 = vsyncpa [#allocation3], 1

</llo_original>
